<compile_context>
chip_gen: v5e
topology: v5e:2x2
jax: 0.10.0
libtpu: 0.0.40
codegen_flags: <defaults>
</compile_context>

<pallas_src>
import functools

import jax
import jax.numpy as jnp
from jax import lax
from jax.experimental import pallas as pl
from jax.experimental.pallas import tpu as pltpu


# ----------------------------- Pallas kernel ------------------------------- #

def _dncnn_fused_kernel(x_ref, mask_ref, w_ref, s_ref, b_ref, o_ref, buf_ref,
                        *, img_w, relu):
    """Fused DnCNN forward for one batch element.

    x_ref   : (1, P, F)    bf16  flattened zero-padded input, P=(H+2)*(W+2)
    mask_ref: (P, 1)       f32   1.0 at interior pixels, 0.0 on the 1-px border
    w_ref   : (L, 9*F, F)  bf16  per-layer im2col weights, row = (dy*3+dx)*F+ci
    s_ref   : (L, 1, F)    f32   folded BN scale (1 where the layer has no BN)
    b_ref   : (L, 1, F)    f32   folded BN bias  (0 where the layer has no BN)
    o_ref   : (1, M, F)    f32   last-layer activations for flat rows
                                 [W+3, P-W-3); wrapper extracts the interior
    buf_ref : (P, F)       f32   VMEM-resident padded activations (border == 0)
    """
    n_layers = len(relu)
    wp2 = img_w + 2
    m_rows = o_ref.shape[1]                # = P - 2*(img_w + 3)
    out_start = img_w + 3                  # flat index of the first interior px

    # Layer-0 input: the zero-padded image (borders are true zeros).
    buf_ref[...] = x_ref[0].astype(jnp.float32)
    border = mask_ref[pl.ds(out_start, m_rows), :]           # (M, 1) f32

    for l in range(n_layers):
        # im2col: tap (dy, dx) for every computed pixel is the contiguous
        # flat-buffer slice starting at dy*(W+2)+dx -> no per-tap relayout.
        taps = []
        for dy in range(3):
            for dx in range(3):
                taps.append(buf_ref[pl.ds(dy * wp2 + dx, m_rows), :])
        patch = jnp.concatenate(taps, axis=1).astype(jnp.bfloat16)   # (M, 9F)

        # One K=9*F MXU matmul per layer (bf16 in, f32 accumulate).
        acc = jnp.dot(patch, w_ref[l], preferred_element_type=jnp.float32)

        # f32 epilogue: folded eval-mode BN + activation.
        y = acc * s_ref[l] + b_ref[l]
        if relu[l]:
            y = jnp.maximum(y, 0.0)

        if l < n_layers - 1:
            # Write back; the border mask keeps the 1-px zero border intact,
            # so the next layer sees correct zero padding.
            buf_ref[pl.ds(out_start, m_rows), :] = y * border
        else:
            o_ref[0] = y


# --------------------------- Parameter creation ----------------------------- #

def make_dncnn_params(key, channels, num_of_layers=17, features=64):
    """Deterministic synthetic parameters mirroring the PyTorch __init__ shapes.

    Returns per-layer dicts with:
      w     : (Cout, Cin, 3, 3) f32 conv weight (PyTorch layout, bias=False)
      scale : (Cout,) f32 folded eval-mode BN scale (ones if no BN)
      bias  : (Cout,) f32 folded eval-mode BN bias  (zeros if no BN)
      relu  : bool
    """
    eps = 1e-5
    layers = []
    keys = jax.random.split(key, 5 * num_of_layers)
    ki = 0

    def nxt():
        nonlocal ki
        k = keys[ki]
        ki += 1
        return k

    # first layer: conv(channels -> features) + ReLU (no BN)
    w = 0.05 * jax.random.normal(nxt(), (features, channels, 3, 3), jnp.float32)
    layers.append(dict(w=w, scale=jnp.ones((features,), jnp.float32),
                       bias=jnp.zeros((features,), jnp.float32), relu=True))

    # middle layers: conv(features -> features) + BN(features) + ReLU
    for _ in range(num_of_layers - 2):
        w = 0.05 * jax.random.normal(nxt(), (features, features, 3, 3),
                                     jnp.float32)
        gamma = 1.0 + 0.1 * jax.random.normal(nxt(), (features,), jnp.float32)
        beta = 0.1 * jax.random.normal(nxt(), (features,), jnp.float32)
        rmean = 0.1 * jax.random.normal(nxt(), (features,), jnp.float32)
        rvar = jnp.abs(1.0 + 0.1 * jax.random.normal(nxt(), (features,),
                                                     jnp.float32))
        scale = gamma / jnp.sqrt(rvar + eps)
        bias = beta - rmean * scale
        layers.append(dict(w=w, scale=scale, bias=bias, relu=True))

    # last layer: conv(features -> channels), last_activ=False -> no activation
    w = 0.05 * jax.random.normal(nxt(), (channels, features, 3, 3), jnp.float32)
    layers.append(dict(w=w, scale=jnp.ones((channels,), jnp.float32),
                       bias=jnp.zeros((channels,), jnp.float32), relu=False))
    return layers


def pack_params_for_kernel(params, features=64):
    """Stack and channel-pad all layer parameters for the fused kernel."""
    ws, ss, bs = [], [], []
    for p in params:
        w = p["w"]                                            # (Cout, Cin, 3, 3)
        cout, cin = w.shape[0], w.shape[1]
        w9 = jnp.transpose(w, (2, 3, 1, 0))                   # (3, 3, Cin, Cout)
        w9 = jnp.pad(w9, ((0, 0), (0, 0),
                          (0, features - cin), (0, features - cout)))
        ws.append(w9.reshape(9 * features, features))
        ss.append(jnp.pad(p["scale"], (0, features - cout), constant_values=1.0))
        bs.append(jnp.pad(p["bias"], (0, features - cout), constant_values=0.0))
    n_layers = len(params)
    w_all = jnp.stack(ws).astype(jnp.bfloat16)                # (L, 9F, F)
    s_all = jnp.stack(ss).reshape(n_layers, 1, features).astype(jnp.float32)
    b_all = jnp.stack(bs).reshape(n_layers, 1, features).astype(jnp.float32)
    relu_flags = tuple(bool(p["relu"]) for p in params)
    return w_all, s_all, b_all, relu_flags


# ------------------------------ Forward pass -------------------------------- #

def dncnn_forward(x_nchw, packed):
    """x_nchw: (N, C, H, W) f32 -> (N, C, H, W) f32 via the fused Pallas kernel."""
    w_all, s_all, b_all, relu_flags = packed
    N, C, H, W = x_nchw.shape
    L, _, F = w_all.shape
    P = (H + 2) * (W + 2)
    M = P - 2 * (W + 3)

    # NCHW -> NHWC, zero-pad 1px spatially, zero-pad channels C -> F, and
    # flatten the padded spatial grid to a (P, F) lane-friendly layout.
    x = jnp.transpose(x_nchw, (0, 2, 3, 1))
    xp = jnp.pad(x, ((0, 0), (1, 1), (1, 1), (0, F - C)))
    xp = xp.reshape(N, P, F).astype(jnp.bfloat16)

    # Interior mask over the flattened padded grid (1 inside, 0 on border).
    ii = jnp.arange(H + 2)[:, None]
    jj = jnp.arange(W + 2)[None, :]
    interior = (ii >= 1) & (ii <= H) & (jj >= 1) & (jj <= W)
    mask = interior.astype(jnp.float32).reshape(P, 1)

    kernel = functools.partial(_dncnn_fused_kernel, img_w=W, relu=relu_flags)
    y = pl.pallas_call(
        kernel,
        out_shape=jax.ShapeDtypeStruct((N, M, F), jnp.float32),
        grid=(N,),
        in_specs=[
            pl.BlockSpec((1, P, F), lambda n: (n, 0, 0)),
            pl.BlockSpec((P, 1), lambda n: (0, 0)),
            pl.BlockSpec((L, 9 * F, F), lambda n: (0, 0, 0)),
            pl.BlockSpec((L, 1, F), lambda n: (0, 0, 0)),
            pl.BlockSpec((L, 1, F), lambda n: (0, 0, 0)),
        ],
        out_specs=pl.BlockSpec((1, M, F), lambda n: (n, 0, 0)),
        scratch_shapes=[pltpu.VMEM((P, F), jnp.float32)],
        compiler_params=pltpu.CompilerParams(
            dimension_semantics=("parallel",),
            vmem_limit_bytes=32 * 1024 * 1024),
    )(xp, mask, w_all, s_all, b_all)

    # Un-flatten, drop the junk border rows and the channel padding.
    y = jnp.pad(y, ((0, 0), (W + 3, W + 3), (0, 0)))          # (N, P, F)
    y = y.reshape(N, H + 2, W + 2, F)[:, 1:H + 1, 1:W + 1, :C]
    return jnp.transpose(y, (0, 3, 1, 2))


def dncnn_forward_ref(x_nchw, params):
    """Pure-JAX f32 reference (lax conv, unpadded per-layer params)."""
    x = jnp.transpose(x_nchw, (0, 2, 3, 1))
    for p in params:
        w_hwio = jnp.transpose(p["w"], (2, 3, 1, 0))
        y = lax.conv_general_dilated(
            x, w_hwio, window_strides=(1, 1), padding=((1, 1), (1, 1)),
            dimension_numbers=("NHWC", "HWIO", "NHWC"))
        y = y * p["scale"] + p["bias"]
        if p["relu"]:
            y = jnp.maximum(y, 0.0)
        x = y
    return jnp.transpose(x, (0, 3, 1, 2))


# ---------------------------------- Main ------------------------------------ #

if __name__ == "__main__":
    key = jax.random.PRNGKey(0)
    k_x, k_p = jax.random.split(key)

    N, C, H, W = 2, 4, 16, 16          # small shapes
    NUM_LAYERS = 5                     # DnCNN(channels=4, num_of_layers=5)

    x = jax.random.normal(k_x, (N, C, H, W), jnp.float32)
    params = make_dncnn_params(k_p, channels=C, num_of_layers=NUM_LAYERS)
    packed = pack_params_for_kernel(params, features=64)

    out = jax.block_until_ready(dncnn_forward(x, packed))
    ref = jax.block_until_ready(dncnn_forward_ref(x, params))

    assert out.shape == (N, C, H, W)
    max_err = float(jnp.max(jnp.abs(out - ref)))
    # bf16 MXU inputs with f32 accumulation/epilogue -> loose-ish tolerance
    # against the pure-f32 reference.
    assert jnp.allclose(out, ref, rtol=3e-2, atol=3e-2), max_err
    print("KERNEL_OK")
</pallas_src>

<mosaic_0001>
module attributes {stable_mosaic.version = 11 : i64} {
  func.func @_dncnn_fused_kernel(%arg0: i32, %arg1: memref<1x324x64xbf16, #tpu.memory_space<vmem>>, %arg2: memref<324x1xf32, #tpu.memory_space<vmem>>, %arg3: memref<5x576x64xbf16, #tpu.memory_space<vmem>>, %arg4: memref<5x1x64xf32, #tpu.memory_space<vmem>>, %arg5: memref<5x1x64xf32, #tpu.memory_space<vmem>>, %arg6: memref<1x286x64xf32, #tpu.memory_space<vmem>>, %arg7: memref<324x64xf32, #tpu.memory_space<vmem>>) attributes {dimension_semantics = [#tpu.dimension_semantics<parallel>], iteration_bounds = array<i64: 2>, scalar_prefetch = 0 : i64, scratch_operands = 1 : i64, tpu.core_type = #tpu.core_type<tc>, window_params = [{transform_indices = @transform_0, window_bounds = array<i64: 1, 324, 64>}, {pipeline_mode = #tpu.pipeline_mode<synchronous>, transform_indices = @transform_1, window_bounds = array<i64: 324, 1>}, {pipeline_mode = #tpu.pipeline_mode<synchronous>, transform_indices = @transform_2, window_bounds = array<i64: 5, 576, 64>}, {pipeline_mode = #tpu.pipeline_mode<synchronous>, transform_indices = @transform_3, window_bounds = array<i64: 5, 1, 64>}, {pipeline_mode = #tpu.pipeline_mode<synchronous>, transform_indices = @transform_4, window_bounds = array<i64: 5, 1, 64>}, {transform_indices = @transform_5, window_bounds = array<i64: 1, 286, 64>}]} {
    %c0 = arith.constant 0 : index
    %c0_0 = arith.constant 0 : index
    %c0_1 = arith.constant 0 : index
    %0 = vector.load %arg1[%c0, %c0_0, %c0_1] : memref<1x324x64xbf16, #tpu.memory_space<vmem>>, vector<1x324x64xbf16>
    %1 = vector.shape_cast %0 : vector<1x324x64xbf16> to vector<324x64xbf16>
    %2 = arith.extf %1 : vector<324x64xbf16> to vector<324x64xf32>
    %c0_2 = arith.constant 0 : index
    %c0_3 = arith.constant 0 : index
    %3 = vector.load %arg7[%c0_2, %c0_3] : memref<324x64xf32, #tpu.memory_space<vmem>>, vector<324x64xf32>
    tpu.vector_store %arg7[%c0_2, %c0_3], %2 {strides = array<i32>} : memref<324x64xf32, #tpu.memory_space<vmem>>, vector<324x64xf32>,
    %c19 = arith.constant 19 : index
    %c0_4 = arith.constant 0 : index
    %4 = vector.load %arg2[%c19, %c0_4] : memref<324x1xf32, #tpu.memory_space<vmem>>, vector<286x1xf32>
    %c0_5 = arith.constant 0 : index
    %c0_6 = arith.constant 0 : index
    %5 = vector.load %arg7[%c0_5, %c0_6] : memref<324x64xf32, #tpu.memory_space<vmem>>, vector<286x64xf32>
    %c1 = arith.constant 1 : index
    %c0_7 = arith.constant 0 : index
    %6 = vector.load %arg7[%c1, %c0_7] : memref<324x64xf32, #tpu.memory_space<vmem>>, vector<286x64xf32>
    %c2 = arith.constant 2 : index
    %c0_8 = arith.constant 0 : index
    %7 = vector.load %arg7[%c2, %c0_8] : memref<324x64xf32, #tpu.memory_space<vmem>>, vector<286x64xf32>
    %c18 = arith.constant 18 : index
    %c0_9 = arith.constant 0 : index
    %8 = vector.load %arg7[%c18, %c0_9] : memref<324x64xf32, #tpu.memory_space<vmem>>, vector<286x64xf32>
    %c19_10 = arith.constant 19 : index
    %c0_11 = arith.constant 0 : index
    %9 = vector.load %arg7[%c19_10, %c0_11] : memref<324x64xf32, #tpu.memory_space<vmem>>, vector<286x64xf32>
    %c20 = arith.constant 20 : index
    %c0_12 = arith.constant 0 : index
    %10 = vector.load %arg7[%c20, %c0_12] : memref<324x64xf32, #tpu.memory_space<vmem>>, vector<286x64xf32>
    %c36 = arith.constant 36 : index
    %c0_13 = arith.constant 0 : index
    %11 = vector.load %arg7[%c36, %c0_13] : memref<324x64xf32, #tpu.memory_space<vmem>>, vector<286x64xf32>
    %c37 = arith.constant 37 : index
    %c0_14 = arith.constant 0 : index
    %12 = vector.load %arg7[%c37, %c0_14] : memref<324x64xf32, #tpu.memory_space<vmem>>, vector<286x64xf32>
    %c38 = arith.constant 38 : index
    %c0_15 = arith.constant 0 : index
    %13 = vector.load %arg7[%c38, %c0_15] : memref<324x64xf32, #tpu.memory_space<vmem>>, vector<286x64xf32>
    %14 = tpu.concatenate %5, %6, %7, %8, %9, %10, %11, %12, %13 in 1 : vector<286x64xf32>, vector<286x64xf32>, vector<286x64xf32>, vector<286x64xf32>, vector<286x64xf32>, vector<286x64xf32>, vector<286x64xf32>, vector<286x64xf32>, vector<286x64xf32> -> vector<286x576xf32>
    %15 = arith.truncf %14 : vector<286x576xf32> to vector<286x576xbf16>
    %c0_16 = arith.constant 0 : index
    %c0_17 = arith.constant 0 : index
    %c0_18 = arith.constant 0 : index
    %16 = vector.load %arg3[%c0_16, %c0_17, %c0_18] : memref<5x576x64xbf16, #tpu.memory_space<vmem>>, vector<1x576x64xbf16>
    %17 = vector.shape_cast %16 : vector<1x576x64xbf16> to vector<576x64xbf16>
    %cst = arith.constant dense<0.000000e+00> : vector<286x64xf32>
    %18 = tpu.matmul %15, %17, %cst {dimension_numbers = #tpu.dot_dimension_numbers<[1], [0], [0], [1], [0, 0, 1, 1], [], []>} : vector<286x576xbf16>, vector<576x64xbf16>, vector<286x64xf32> -> vector<286x64xf32>
    %c0_19 = arith.constant 0 : index
    %c0_20 = arith.constant 0 : index
    %c0_21 = arith.constant 0 : index
    %19 = vector.load %arg4[%c0_19, %c0_20, %c0_21] : memref<5x1x64xf32, #tpu.memory_space<vmem>>, vector<1x1x64xf32>
    %20 = vector.shape_cast %19 : vector<1x1x64xf32> to vector<1x64xf32>
    %21 = vector.broadcast %20 : vector<1x64xf32> to vector<286x64xf32>
    %22 = arith.mulf %18, %21 : vector<286x64xf32>
    %c0_22 = arith.constant 0 : index
    %c0_23 = arith.constant 0 : index
    %c0_24 = arith.constant 0 : index
    %23 = vector.load %arg5[%c0_22, %c0_23, %c0_24] : memref<5x1x64xf32, #tpu.memory_space<vmem>>, vector<1x1x64xf32>
    %24 = vector.shape_cast %23 : vector<1x1x64xf32> to vector<1x64xf32>
    %25 = vector.broadcast %24 : vector<1x64xf32> to vector<286x64xf32>
    %26 = arith.addf %22, %25 : vector<286x64xf32>
    %cst_25 = arith.constant 0.000000e+00 : f32
    %27 = vector.broadcast %cst_25 : f32 to vector<286x64xf32>
    %28 = arith.maximumf %26, %27 : vector<286x64xf32>
    %29 = vector.broadcast %4 : vector<286x1xf32> to vector<286x64xf32>
    %30 = arith.mulf %28, %29 : vector<286x64xf32>
    %c19_26 = arith.constant 19 : index
    %c0_27 = arith.constant 0 : index
    %31 = vector.load %arg7[%c19_26, %c0_27] : memref<324x64xf32, #tpu.memory_space<vmem>>, vector<286x64xf32>
    tpu.vector_store %arg7[%c19_26, %c0_27], %30 {strides = array<i32>} : memref<324x64xf32, #tpu.memory_space<vmem>>, vector<286x64xf32>,
    %c0_28 = arith.constant 0 : index
    %c0_29 = arith.constant 0 : index
    %32 = vector.load %arg7[%c0_28, %c0_29] : memref<324x64xf32, #tpu.memory_space<vmem>>, vector<286x64xf32>
    %c1_30 = arith.constant 1 : index
    %c0_31 = arith.constant 0 : index
    %33 = vector.load %arg7[%c1_30, %c0_31] : memref<324x64xf32, #tpu.memory_space<vmem>>, vector<286x64xf32>
    %c2_32 = arith.constant 2 : index
    %c0_33 = arith.constant 0 : index
    %34 = vector.load %arg7[%c2_32, %c0_33] : memref<324x64xf32, #tpu.memory_space<vmem>>, vector<286x64xf32>
    %c18_34 = arith.constant 18 : index
    %c0_35 = arith.constant 0 : index
    %35 = vector.load %arg7[%c18_34, %c0_35] : memref<324x64xf32, #tpu.memory_space<vmem>>, vector<286x64xf32>
    %c19_36 = arith.constant 19 : index
    %c0_37 = arith.constant 0 : index
    %36 = vector.load %arg7[%c19_36, %c0_37] : memref<324x64xf32, #tpu.memory_space<vmem>>, vector<286x64xf32>
    %c20_38 = arith.constant 20 : index
    %c0_39 = arith.constant 0 : index
    %37 = vector.load %arg7[%c20_38, %c0_39] : memref<324x64xf32, #tpu.memory_space<vmem>>, vector<286x64xf32>
    %c36_40 = arith.constant 36 : index
    %c0_41 = arith.constant 0 : index
    %38 = vector.load %arg7[%c36_40, %c0_41] : memref<324x64xf32, #tpu.memory_space<vmem>>, vector<286x64xf32>
    %c37_42 = arith.constant 37 : index
    %c0_43 = arith.constant 0 : index
    %39 = vector.load %arg7[%c37_42, %c0_43] : memref<324x64xf32, #tpu.memory_space<vmem>>, vector<286x64xf32>
    %c38_44 = arith.constant 38 : index
    %c0_45 = arith.constant 0 : index
    %40 = vector.load %arg7[%c38_44, %c0_45] : memref<324x64xf32, #tpu.memory_space<vmem>>, vector<286x64xf32>
    %41 = tpu.concatenate %32, %33, %34, %35, %36, %37, %38, %39, %40 in 1 : vector<286x64xf32>, vector<286x64xf32>, vector<286x64xf32>, vector<286x64xf32>, vector<286x64xf32>, vector<286x64xf32>, vector<286x64xf32>, vector<286x64xf32>, vector<286x64xf32> -> vector<286x576xf32>
    %42 = arith.truncf %41 : vector<286x576xf32> to vector<286x576xbf16>
    %c1_46 = arith.constant 1 : index
    %c0_47 = arith.constant 0 : index
    %c0_48 = arith.constant 0 : index
    %43 = vector.load %arg3[%c1_46, %c0_47, %c0_48] : memref<5x576x64xbf16, #tpu.memory_space<vmem>>, vector<1x576x64xbf16>
    %44 = vector.shape_cast %43 : vector<1x576x64xbf16> to vector<576x64xbf16>
    %cst_49 = arith.constant dense<0.000000e+00> : vector<286x64xf32>
    %45 = tpu.matmul %42, %44, %cst_49 {dimension_numbers = #tpu.dot_dimension_numbers<[1], [0], [0], [1], [0, 0, 1, 1], [], []>} : vector<286x576xbf16>, vector<576x64xbf16>, vector<286x64xf32> -> vector<286x64xf32>
    %c1_50 = arith.constant 1 : index
    %c0_51 = arith.constant 0 : index
    %c0_52 = arith.constant 0 : index
    %46 = vector.load %arg4[%c1_50, %c0_51, %c0_52] : memref<5x1x64xf32, #tpu.memory_space<vmem>>, vector<1x1x64xf32>
    %47 = vector.shape_cast %46 : vector<1x1x64xf32> to vector<1x64xf32>
    %48 = vector.broadcast %47 : vector<1x64xf32> to vector<286x64xf32>
    %49 = arith.mulf %45, %48 : vector<286x64xf32>
    %c1_53 = arith.constant 1 : index
    %c0_54 = arith.constant 0 : index
    %c0_55 = arith.constant 0 : index
    %50 = vector.load %arg5[%c1_53, %c0_54, %c0_55] : memref<5x1x64xf32, #tpu.memory_space<vmem>>, vector<1x1x64xf32>
    %51 = vector.shape_cast %50 : vector<1x1x64xf32> to vector<1x64xf32>
    %52 = vector.broadcast %51 : vector<1x64xf32> to vector<286x64xf32>
    %53 = arith.addf %49, %52 : vector<286x64xf32>
    %cst_56 = arith.constant 0.000000e+00 : f32
    %54 = vector.broadcast %cst_56 : f32 to vector<286x64xf32>
    %55 = arith.maximumf %53, %54 : vector<286x64xf32>
    %56 = vector.broadcast %4 : vector<286x1xf32> to vector<286x64xf32>
    %57 = arith.mulf %55, %56 : vector<286x64xf32>
    %c19_57 = arith.constant 19 : index
    %c0_58 = arith.constant 0 : index
    %58 = vector.load %arg7[%c19_57, %c0_58] : memref<324x64xf32, #tpu.memory_space<vmem>>, vector<286x64xf32>
    tpu.vector_store %arg7[%c19_57, %c0_58], %57 {strides = array<i32>} : memref<324x64xf32, #tpu.memory_space<vmem>>, vector<286x64xf32>,
    %c0_59 = arith.constant 0 : index
    %c0_60 = arith.constant 0 : index
    %59 = vector.load %arg7[%c0_59, %c0_60] : memref<324x64xf32, #tpu.memory_space<vmem>>, vector<286x64xf32>
    %c1_61 = arith.constant 1 : index
    %c0_62 = arith.constant 0 : index
    %60 = vector.load %arg7[%c1_61, %c0_62] : memref<324x64xf32, #tpu.memory_space<vmem>>, vector<286x64xf32>
    %c2_63 = arith.constant 2 : index
    %c0_64 = arith.constant 0 : index
    %61 = vector.load %arg7[%c2_63, %c0_64] : memref<324x64xf32, #tpu.memory_space<vmem>>, vector<286x64xf32>
    %c18_65 = arith.constant 18 : index
    %c0_66 = arith.constant 0 : index
    %62 = vector.load %arg7[%c18_65, %c0_66] : memref<324x64xf32, #tpu.memory_space<vmem>>, vector<286x64xf32>
    %c19_67 = arith.constant 19 : index
    %c0_68 = arith.constant 0 : index
    %63 = vector.load %arg7[%c19_67, %c0_68] : memref<324x64xf32, #tpu.memory_space<vmem>>, vector<286x64xf32>
    %c20_69 = arith.constant 20 : index
    %c0_70 = arith.constant 0 : index
    %64 = vector.load %arg7[%c20_69, %c0_70] : memref<324x64xf32, #tpu.memory_space<vmem>>, vector<286x64xf32>
    %c36_71 = arith.constant 36 : index
    %c0_72 = arith.constant 0 : index
    %65 = vector.load %arg7[%c36_71, %c0_72] : memref<324x64xf32, #tpu.memory_space<vmem>>, vector<286x64xf32>
    %c37_73 = arith.constant 37 : index
    %c0_74 = arith.constant 0 : index
    %66 = vector.load %arg7[%c37_73, %c0_74] : memref<324x64xf32, #tpu.memory_space<vmem>>, vector<286x64xf32>
    %c38_75 = arith.constant 38 : index
    %c0_76 = arith.constant 0 : index
    %67 = vector.load %arg7[%c38_75, %c0_76] : memref<324x64xf32, #tpu.memory_space<vmem>>, vector<286x64xf32>
    %68 = tpu.concatenate %59, %60, %61, %62, %63, %64, %65, %66, %67 in 1 : vector<286x64xf32>, vector<286x64xf32>, vector<286x64xf32>, vector<286x64xf32>, vector<286x64xf32>, vector<286x64xf32>, vector<286x64xf32>, vector<286x64xf32>, vector<286x64xf32> -> vector<286x576xf32>
    %69 = arith.truncf %68 : vector<286x576xf32> to vector<286x576xbf16>
    %c2_77 = arith.constant 2 : index
    %c0_78 = arith.constant 0 : index
    %c0_79 = arith.constant 0 : index
    %70 = vector.load %arg3[%c2_77, %c0_78, %c0_79] : memref<5x576x64xbf16, #tpu.memory_space<vmem>>, vector<1x576x64xbf16>
    %71 = vector.shape_cast %70 : vector<1x576x64xbf16> to vector<576x64xbf16>
    %cst_80 = arith.constant dense<0.000000e+00> : vector<286x64xf32>
    %72 = tpu.matmul %69, %71, %cst_80 {dimension_numbers = #tpu.dot_dimension_numbers<[1], [0], [0], [1], [0, 0, 1, 1], [], []>} : vector<286x576xbf16>, vector<576x64xbf16>, vector<286x64xf32> -> vector<286x64xf32>
    %c2_81 = arith.constant 2 : index
    %c0_82 = arith.constant 0 : index
    %c0_83 = arith.constant 0 : index
    %73 = vector.load %arg4[%c2_81, %c0_82, %c0_83] : memref<5x1x64xf32, #tpu.memory_space<vmem>>, vector<1x1x64xf32>
    %74 = vector.shape_cast %73 : vector<1x1x64xf32> to vector<1x64xf32>
    %75 = vector.broadcast %74 : vector<1x64xf32> to vector<286x64xf32>
    %76 = arith.mulf %72, %75 : vector<286x64xf32>
    %c2_84 = arith.constant 2 : index
    %c0_85 = arith.constant 0 : index
    %c0_86 = arith.constant 0 : index
    %77 = vector.load %arg5[%c2_84, %c0_85, %c0_86] : memref<5x1x64xf32, #tpu.memory_space<vmem>>, vector<1x1x64xf32>
    %78 = vector.shape_cast %77 : vector<1x1x64xf32> to vector<1x64xf32>
    %79 = vector.broadcast %78 : vector<1x64xf32> to vector<286x64xf32>
    %80 = arith.addf %76, %79 : vector<286x64xf32>
    %cst_87 = arith.constant 0.000000e+00 : f32
    %81 = vector.broadcast %cst_87 : f32 to vector<286x64xf32>
    %82 = arith.maximumf %80, %81 : vector<286x64xf32>
    %83 = vector.broadcast %4 : vector<286x1xf32> to vector<286x64xf32>
    %84 = arith.mulf %82, %83 : vector<286x64xf32>
    %c19_88 = arith.constant 19 : index
    %c0_89 = arith.constant 0 : index
    %85 = vector.load %arg7[%c19_88, %c0_89] : memref<324x64xf32, #tpu.memory_space<vmem>>, vector<286x64xf32>
    tpu.vector_store %arg7[%c19_88, %c0_89], %84 {strides = array<i32>} : memref<324x64xf32, #tpu.memory_space<vmem>>, vector<286x64xf32>,
    %c0_90 = arith.constant 0 : index
    %c0_91 = arith.constant 0 : index
    %86 = vector.load %arg7[%c0_90, %c0_91] : memref<324x64xf32, #tpu.memory_space<vmem>>, vector<286x64xf32>
    %c1_92 = arith.constant 1 : index
    %c0_93 = arith.constant 0 : index
    %87 = vector.load %arg7[%c1_92, %c0_93] : memref<324x64xf32, #tpu.memory_space<vmem>>, vector<286x64xf32>
    %c2_94 = arith.constant 2 : index
    %c0_95 = arith.constant 0 : index
    %88 = vector.load %arg7[%c2_94, %c0_95] : memref<324x64xf32, #tpu.memory_space<vmem>>, vector<286x64xf32>
    %c18_96 = arith.constant 18 : index
    %c0_97 = arith.constant 0 : index
    %89 = vector.load %arg7[%c18_96, %c0_97] : memref<324x64xf32, #tpu.memory_space<vmem>>, vector<286x64xf32>
    %c19_98 = arith.constant 19 : index
    %c0_99 = arith.constant 0 : index
    %90 = vector.load %arg7[%c19_98, %c0_99] : memref<324x64xf32, #tpu.memory_space<vmem>>, vector<286x64xf32>
    %c20_100 = arith.constant 20 : index
    %c0_101 = arith.constant 0 : index
    %91 = vector.load %arg7[%c20_100, %c0_101] : memref<324x64xf32, #tpu.memory_space<vmem>>, vector<286x64xf32>
    %c36_102 = arith.constant 36 : index
    %c0_103 = arith.constant 0 : index
    %92 = vector.load %arg7[%c36_102, %c0_103] : memref<324x64xf32, #tpu.memory_space<vmem>>, vector<286x64xf32>
    %c37_104 = arith.constant 37 : index
    %c0_105 = arith.constant 0 : index
    %93 = vector.load %arg7[%c37_104, %c0_105] : memref<324x64xf32, #tpu.memory_space<vmem>>, vector<286x64xf32>
    %c38_106 = arith.constant 38 : index
    %c0_107 = arith.constant 0 : index
    %94 = vector.load %arg7[%c38_106, %c0_107] : memref<324x64xf32, #tpu.memory_space<vmem>>, vector<286x64xf32>
    %95 = tpu.concatenate %86, %87, %88, %89, %90, %91, %92, %93, %94 in 1 : vector<286x64xf32>, vector<286x64xf32>, vector<286x64xf32>, vector<286x64xf32>, vector<286x64xf32>, vector<286x64xf32>, vector<286x64xf32>, vector<286x64xf32>, vector<286x64xf32> -> vector<286x576xf32>
    %96 = arith.truncf %95 : vector<286x576xf32> to vector<286x576xbf16>
    %c3 = arith.constant 3 : index
    %c0_108 = arith.constant 0 : index
    %c0_109 = arith.constant 0 : index
    %97 = vector.load %arg3[%c3, %c0_108, %c0_109] : memref<5x576x64xbf16, #tpu.memory_space<vmem>>, vector<1x576x64xbf16>
    %98 = vector.shape_cast %97 : vector<1x576x64xbf16> to vector<576x64xbf16>
    %cst_110 = arith.constant dense<0.000000e+00> : vector<286x64xf32>
    %99 = tpu.matmul %96, %98, %cst_110 {dimension_numbers = #tpu.dot_dimension_numbers<[1], [0], [0], [1], [0, 0, 1, 1], [], []>} : vector<286x576xbf16>, vector<576x64xbf16>, vector<286x64xf32> -> vector<286x64xf32>
    %c3_111 = arith.constant 3 : index
    %c0_112 = arith.constant 0 : index
    %c0_113 = arith.constant 0 : index
    %100 = vector.load %arg4[%c3_111, %c0_112, %c0_113] : memref<5x1x64xf32, #tpu.memory_space<vmem>>, vector<1x1x64xf32>
    %101 = vector.shape_cast %100 : vector<1x1x64xf32> to vector<1x64xf32>
    %102 = vector.broadcast %101 : vector<1x64xf32> to vector<286x64xf32>
    %103 = arith.mulf %99, %102 : vector<286x64xf32>
    %c3_114 = arith.constant 3 : index
    %c0_115 = arith.constant 0 : index
    %c0_116 = arith.constant 0 : index
    %104 = vector.load %arg5[%c3_114, %c0_115, %c0_116] : memref<5x1x64xf32, #tpu.memory_space<vmem>>, vector<1x1x64xf32>
    %105 = vector.shape_cast %104 : vector<1x1x64xf32> to vector<1x64xf32>
    %106 = vector.broadcast %105 : vector<1x64xf32> to vector<286x64xf32>
    %107 = arith.addf %103, %106 : vector<286x64xf32>
    %cst_117 = arith.constant 0.000000e+00 : f32
    %108 = vector.broadcast %cst_117 : f32 to vector<286x64xf32>
    %109 = arith.maximumf %107, %108 : vector<286x64xf32>
    %110 = vector.broadcast %4 : vector<286x1xf32> to vector<286x64xf32>
    %111 = arith.mulf %109, %110 : vector<286x64xf32>
    %c19_118 = arith.constant 19 : index
    %c0_119 = arith.constant 0 : index
    %112 = vector.load %arg7[%c19_118, %c0_119] : memref<324x64xf32, #tpu.memory_space<vmem>>, vector<286x64xf32>
    tpu.vector_store %arg7[%c19_118, %c0_119], %111 {strides = array<i32>} : memref<324x64xf32, #tpu.memory_space<vmem>>, vector<286x64xf32>,
    %c0_120 = arith.constant 0 : index
    %c0_121 = arith.constant 0 : index
    %113 = vector.load %arg7[%c0_120, %c0_121] : memref<324x64xf32, #tpu.memory_space<vmem>>, vector<286x64xf32>
    %c1_122 = arith.constant 1 : index
    %c0_123 = arith.constant 0 : index
    %114 = vector.load %arg7[%c1_122, %c0_123] : memref<324x64xf32, #tpu.memory_space<vmem>>, vector<286x64xf32>
    %c2_124 = arith.constant 2 : index
    %c0_125 = arith.constant 0 : index
    %115 = vector.load %arg7[%c2_124, %c0_125] : memref<324x64xf32, #tpu.memory_space<vmem>>, vector<286x64xf32>
    %c18_126 = arith.constant 18 : index
    %c0_127 = arith.constant 0 : index
    %116 = vector.load %arg7[%c18_126, %c0_127] : memref<324x64xf32, #tpu.memory_space<vmem>>, vector<286x64xf32>
    %c19_128 = arith.constant 19 : index
    %c0_129 = arith.constant 0 : index
    %117 = vector.load %arg7[%c19_128, %c0_129] : memref<324x64xf32, #tpu.memory_space<vmem>>, vector<286x64xf32>
    %c20_130 = arith.constant 20 : index
    %c0_131 = arith.constant 0 : index
    %118 = vector.load %arg7[%c20_130, %c0_131] : memref<324x64xf32, #tpu.memory_space<vmem>>, vector<286x64xf32>
    %c36_132 = arith.constant 36 : index
    %c0_133 = arith.constant 0 : index
    %119 = vector.load %arg7[%c36_132, %c0_133] : memref<324x64xf32, #tpu.memory_space<vmem>>, vector<286x64xf32>
    %c37_134 = arith.constant 37 : index
    %c0_135 = arith.constant 0 : index
    %120 = vector.load %arg7[%c37_134, %c0_135] : memref<324x64xf32, #tpu.memory_space<vmem>>, vector<286x64xf32>
    %c38_136 = arith.constant 38 : index
    %c0_137 = arith.constant 0 : index
    %121 = vector.load %arg7[%c38_136, %c0_137] : memref<324x64xf32, #tpu.memory_space<vmem>>, vector<286x64xf32>
    %122 = tpu.concatenate %113, %114, %115, %116, %117, %118, %119, %120, %121 in 1 : vector<286x64xf32>, vector<286x64xf32>, vector<286x64xf32>, vector<286x64xf32>, vector<286x64xf32>, vector<286x64xf32>, vector<286x64xf32>, vector<286x64xf32>, vector<286x64xf32> -> vector<286x576xf32>
    %123 = arith.truncf %122 : vector<286x576xf32> to vector<286x576xbf16>
    %c4 = arith.constant 4 : index
    %c0_138 = arith.constant 0 : index
    %c0_139 = arith.constant 0 : index
    %124 = vector.load %arg3[%c4, %c0_138, %c0_139] : memref<5x576x64xbf16, #tpu.memory_space<vmem>>, vector<1x576x64xbf16>
    %125 = vector.shape_cast %124 : vector<1x576x64xbf16> to vector<576x64xbf16>
    %cst_140 = arith.constant dense<0.000000e+00> : vector<286x64xf32>
    %126 = tpu.matmul %123, %125, %cst_140 {dimension_numbers = #tpu.dot_dimension_numbers<[1], [0], [0], [1], [0, 0, 1, 1], [], []>} : vector<286x576xbf16>, vector<576x64xbf16>, vector<286x64xf32> -> vector<286x64xf32>
    %c4_141 = arith.constant 4 : index
    %c0_142 = arith.constant 0 : index
    %c0_143 = arith.constant 0 : index
    %127 = vector.load %arg4[%c4_141, %c0_142, %c0_143] : memref<5x1x64xf32, #tpu.memory_space<vmem>>, vector<1x1x64xf32>
    %128 = vector.shape_cast %127 : vector<1x1x64xf32> to vector<1x64xf32>
    %129 = vector.broadcast %128 : vector<1x64xf32> to vector<286x64xf32>
    %130 = arith.mulf %126, %129 : vector<286x64xf32>
    %c4_144 = arith.constant 4 : index
    %c0_145 = arith.constant 0 : index
    %c0_146 = arith.constant 0 : index
    %131 = vector.load %arg5[%c4_144, %c0_145, %c0_146] : memref<5x1x64xf32, #tpu.memory_space<vmem>>, vector<1x1x64xf32>
    %132 = vector.shape_cast %131 : vector<1x1x64xf32> to vector<1x64xf32>
    %133 = vector.broadcast %132 : vector<1x64xf32> to vector<286x64xf32>
    %134 = arith.addf %130, %133 : vector<286x64xf32>
    %c0_147 = arith.constant 0 : index
    %c0_148 = arith.constant 0 : index
    %c0_149 = arith.constant 0 : index
    %135 = vector.load %arg6[%c0_147, %c0_148, %c0_149] : memref<1x286x64xf32, #tpu.memory_space<vmem>>, vector<1x286x64xf32>
    %136 = vector.shape_cast %135 : vector<1x286x64xf32> to vector<286x64xf32>
    %137 = vector.shape_cast %134 : vector<286x64xf32> to vector<1x286x64xf32>
    tpu.vector_store %arg6[%c0_147, %c0_148, %c0_149], %137 {strides = array<i32>} : memref<1x286x64xf32, #tpu.memory_space<vmem>>, vector<1x286x64xf32>,
    return
  }
  func.func @transform_0(%arg0: i32) -> (i32, i32, i32) {
    %c0_i32 = arith.constant 0 : i32
    %c0_i32_0 = arith.constant 0 : i32
    %c0_i32_1 = arith.constant 0 : i32
    return %arg0, %c0_i32, %c0_i32_0 : i32, i32, i32
  }
  func.func @transform_1(%arg0: i32) -> (i32, i32) {
    %c0_i32 = arith.constant 0 : i32
    %c0_i32_0 = arith.constant 0 : i32
    %c0_i32_1 = arith.constant 0 : i32
    return %c0_i32, %c0_i32_0 : i32, i32
  }
  func.func @transform_2(%arg0: i32) -> (i32, i32, i32) {
    %c0_i32 = arith.constant 0 : i32
    %c0_i32_0 = arith.constant 0 : i32
    %c0_i32_1 = arith.constant 0 : i32
    %c0_i32_2 = arith.constant 0 : i32
    return %c0_i32, %c0_i32_0, %c0_i32_1 : i32, i32, i32
  }
  func.func @transform_3(%arg0: i32) -> (i32, i32, i32) {
    %c0_i32 = arith.constant 0 : i32
    %c0_i32_0 = arith.constant 0 : i32
    %c0_i32_1 = arith.constant 0 : i32
    %c0_i32_2 = arith.constant 0 : i32
    return %c0_i32, %c0_i32_0, %c0_i32_1 : i32, i32, i32
  }
  func.func @transform_4(%arg0: i32) -> (i32, i32, i32) {
    %c0_i32 = arith.constant 0 : i32
    %c0_i32_0 = arith.constant 0 : i32
    %c0_i32_1 = arith.constant 0 : i32
    %c0_i32_2 = arith.constant 0 : i32
    return %c0_i32, %c0_i32_0, %c0_i32_1 : i32, i32, i32
  }
  func.func @transform_5(%arg0: i32) -> (i32, i32, i32) {
    %c0_i32 = arith.constant 0 : i32
    %c0_i32_0 = arith.constant 0 : i32
    %c0_i32_1 = arith.constant 0 : i32
    return %arg0, %c0_i32, %c0_i32_0 : i32, i32, i32
  }
}

</mosaic_0001>

<llo_original>
// kernel: tpu_custom_call.1
$region0: #{tpu_custom_call.1}
  #allocation0 [shape = 'u32[]', space=smem, size = 0x4, offset = 0x4, fixed_abs, tag = 'smem constant byte address 0x4 - core index']
  #allocation1 [shape = 'u32[72,128]{1,0:T(1,128)}', space=vmem, size = 0x9000, scoped, tag = 'internal scratch']
  #allocation2 [shape = 'f32[324,64]{1,0:T(8,128)}', space=vmem, size = 0x29000, scoped, tag = 'scratch operand']
  %s0 = inlined_call_operand.vmem [shape: bf16[2,324,64], index: 0, kind: input, shape index: {}]
  %s1 = inlined_call_operand.vmem [shape: f32[324,1], index: 1, kind: input, shape index: {}]
  %s2 = inlined_call_operand.vmem [shape: bf16[5,576,64], index: 2, kind: input, shape index: {}]
  %s3 = inlined_call_operand.vmem [shape: f32[5,1,64], index: 3, kind: input, shape index: {}]
  %s4 = inlined_call_operand.vmem [shape: f32[5,1,64], index: 4, kind: input, shape index: {}]
  %s5 = inlined_call_operand.vmem [shape: f32[2,286,64], index: 5, kind: output, shape index: {}]
  %s6 = sld [smem:[#allocation0]]
  $region53: #{tpu_custom_call.1} parent=0
    _
  %s8 = ssub.s32 1, %s6
  %s9 = scalar_select 0, %s8, %s6
  loop: start=0, step=1, limit=4
  $region2: #{tpu_custom_call.1} parent=0 // loop_pre_header
    _
  $region3: #{tpu_custom_call.1} parent=0 // loop_header
    %s11 = sphi 0, %s15
    %p12 = scmp.ge.s32.totalorder %s11, 4
    %s21 = sphi 0, %s23
    %s24 = sphi 0, %s21
    %s25 = sphi 0, %s24
    %s41 = sphi 0, %s25
    %s45 = sphi 0, %s45
    %s47 = sphi 0, %s45
    %s48 = sphi 0, %s47
    %s62 = sphi 0, %s48
    %s66 = sphi 0, %s66
    %s68 = sphi 0, %s66
    %s69 = sphi 0, %s68
    %s83 = sphi 0, %s69
    %s87 = sphi 0, %s87
    %s89 = sphi 0, %s87
    %s90 = sphi 0, %s89
    %s104 = sphi 0, %s90
    %s108 = sphi 0, %s108
    %s110 = sphi 0, %s108
    %s111 = sphi 0, %s110
    %s125 = sphi 0, %s111
    %s131 = sphi 0, %s133
    %s134 = sphi 0, %s131
    %s135 = sphi 0, %s134
    %s151 = sphi 0, %s135
  $region4: #{tpu_custom_call.1} parent=0 // loop_header_branch
    %14 = sbr.rel (%p12) target = $region8
  $region5: #{tpu_custom_call.1} parent=0 // loop_body
    %s16 = ssub.s32 %s11, 1
    %s17 = ssub.s32 %s11, 2
    %s18 = sadd.s32 %s11, 1
    %s19 = ssub.s32 %s11, %s18
    %p20 = scmp.eq.s32.totalorder %s19, 0
    %s22 = sadd.s32 %s21, 1
    %s23 = scalar_select %p20, %s21, %s22
    %p26 = pneg %p20
    %p27 = scmp.eq.s32.totalorder %s11, 1
    %p28 = por %p26, %p27
    %p29 = scmp.ne.s32.totalorder %s21, %s24
    %p30 = scmp.eq.s32.totalorder %s11, 0
    %p31 = por %p29, %p30
    %p32 = scmp.ne.s32.totalorder %s21, %s24
    %p33 = scmp.eq.s32.totalorder %s16, 1
    %p34 = por %p32, %p33
    %p35 = scmp.ne.s32.totalorder %s24, %s25
    %p36 = scmp.eq.s32.totalorder %s16, 0
    %p37 = por %p35, %p36
    %p38 = scmp.ne.s32.totalorder %s24, %s25
    %p39 = scmp.eq.s32.totalorder %s17, 1
    %p40 = por %p38, %p39
    %p42 = scmp.ne.s32.totalorder %s25, %s41
    %p43 = scmp.eq.s32.totalorder %s17, 0
    %p44 = por %p42, %p43
    %s46 = sadd.s32 %s45, 1
    %p49 = scmp.eq.s32.totalorder %s11, 1
    %p50 = scmp.ne.s32.totalorder %s45, %s47
    %p51 = scmp.eq.s32.totalorder %s11, 0
    %p52 = por %p50, %p51
    %p53 = scmp.ne.s32.totalorder %s45, %s47
    %p54 = scmp.eq.s32.totalorder %s16, 1
    %p55 = por %p53, %p54
    %p56 = scmp.ne.s32.totalorder %s47, %s48
    %p57 = scmp.eq.s32.totalorder %s16, 0
    %p58 = por %p56, %p57
    %p59 = scmp.ne.s32.totalorder %s47, %s48
    %p60 = scmp.eq.s32.totalorder %s17, 1
    %p61 = por %p59, %p60
    %p63 = scmp.ne.s32.totalorder %s48, %s62
    %p64 = scmp.eq.s32.totalorder %s17, 0
    %p65 = por %p63, %p64
    %s67 = sadd.s32 %s66, 1
    %p70 = scmp.eq.s32.totalorder %s11, 1
    %p71 = scmp.ne.s32.totalorder %s66, %s68
    %p72 = scmp.eq.s32.totalorder %s11, 0
    %p73 = por %p71, %p72
    %p74 = scmp.ne.s32.totalorder %s66, %s68
    %p75 = scmp.eq.s32.totalorder %s16, 1
    %p76 = por %p74, %p75
    %p77 = scmp.ne.s32.totalorder %s68, %s69
    %p78 = scmp.eq.s32.totalorder %s16, 0
    %p79 = por %p77, %p78
    %p80 = scmp.ne.s32.totalorder %s68, %s69
    %p81 = scmp.eq.s32.totalorder %s17, 1
    %p82 = por %p80, %p81
    %p84 = scmp.ne.s32.totalorder %s69, %s83
    %p85 = scmp.eq.s32.totalorder %s17, 0
    %p86 = por %p84, %p85
    %s88 = sadd.s32 %s87, 1
    %p91 = scmp.eq.s32.totalorder %s11, 1
    %p92 = scmp.ne.s32.totalorder %s87, %s89
    %p93 = scmp.eq.s32.totalorder %s11, 0
    %p94 = por %p92, %p93
    %p95 = scmp.ne.s32.totalorder %s87, %s89
    %p96 = scmp.eq.s32.totalorder %s16, 1
    %p97 = por %p95, %p96
    %p98 = scmp.ne.s32.totalorder %s89, %s90
    %p99 = scmp.eq.s32.totalorder %s16, 0
    %p100 = por %p98, %p99
    %p101 = scmp.ne.s32.totalorder %s89, %s90
    %p102 = scmp.eq.s32.totalorder %s17, 1
    %p103 = por %p101, %p102
    %p105 = scmp.ne.s32.totalorder %s90, %s104
    %p106 = scmp.eq.s32.totalorder %s17, 0
    %p107 = por %p105, %p106
    %s109 = sadd.s32 %s108, 1
    %p112 = scmp.eq.s32.totalorder %s11, 1
    %p113 = scmp.ne.s32.totalorder %s108, %s110
    %p114 = scmp.eq.s32.totalorder %s11, 0
    %p115 = por %p113, %p114
    %p116 = scmp.ne.s32.totalorder %s108, %s110
    %p117 = scmp.eq.s32.totalorder %s16, 1
    %p118 = por %p116, %p117
    %p119 = scmp.ne.s32.totalorder %s110, %s111
    %p120 = scmp.eq.s32.totalorder %s16, 0
    %p121 = por %p119, %p120
    %p122 = scmp.ne.s32.totalorder %s110, %s111
    %p123 = scmp.eq.s32.totalorder %s17, 1
    %p124 = por %p122, %p123
    %p126 = scmp.ne.s32.totalorder %s111, %s125
    %p127 = scmp.eq.s32.totalorder %s17, 0
    %p128 = por %p126, %p127
    %s129 = ssub.s32 %s11, %s18
    %p130 = scmp.eq.s32.totalorder %s129, 0
    %s132 = sadd.s32 %s131, 1
    %s133 = scalar_select %p130, %s131, %s132
    %p136 = pneg %p130
    %p137 = scmp.eq.s32.totalorder %s11, 1
    %p138 = por %p136, %p137
    %p139 = scmp.ne.s32.totalorder %s131, %s134
    %p140 = scmp.eq.s32.totalorder %s11, 0
    %p141 = por %p139, %p140
    %p142 = scmp.ne.s32.totalorder %s131, %s134
    %p143 = scmp.eq.s32.totalorder %s16, 1
    %p144 = por %p142, %p143
    %p145 = scmp.ne.s32.totalorder %s134, %s135
    %p146 = scmp.eq.s32.totalorder %s16, 0
    %p147 = por %p145, %p146
    %p148 = scmp.ne.s32.totalorder %s134, %s135
    %p149 = scmp.eq.s32.totalorder %s17, 1
    %p150 = por %p148, %p149
    %p152 = scmp.ne.s32.totalorder %s135, %s151
    %p153 = scmp.eq.s32.totalorder %s17, 0
    %p154 = por %p152, %p153
    %p155 = scmp.le.s32.totalorder 1, %s11
    %p156 = scmp.lt.s32.totalorder %s11, 3
    %p157 = pnand %p155, %p156
    %p158 = pneg %p157
    // Predicated region
    $region9: #{tpu_custom_call.1} parent=5 // pred_check
      _
    $region10: #{tpu_custom_call.1} parent=5 // pred_check_branch
      %160 = sbr.rel (%p157) target = $region12
    $region11: #{tpu_custom_call.1} parent=5 // pred_region
      %s161 = ssub.s32 %s11, 1
      // Predicated region
      $region13: #{tpu_custom_call.1} parent=11 // pred_check
        %p162 = pneg %p58
      $region14: #{tpu_custom_call.1} parent=11 // pred_check_branch
        %164 = sbr.rel (%p162) target = $region16
      $region15: #{tpu_custom_call.1} parent=11 // pred_region
        _
      $region16: #{tpu_custom_call.1} parent=11 // pred_fallthru
        _
      // Predicated region
      $region17: #{tpu_custom_call.1} parent=11 // pred_check
        %p165 = pneg %p79
      $region18: #{tpu_custom_call.1} parent=11 // pred_check_branch
        %167 = sbr.rel (%p165) target = $region20
      $region19: #{tpu_custom_call.1} parent=11 // pred_region
        _
      $region20: #{tpu_custom_call.1} parent=11 // pred_fallthru
        _
      // Predicated region
      $region21: #{tpu_custom_call.1} parent=11 // pred_check
        %p168 = pneg %p100
      $region22: #{tpu_custom_call.1} parent=11 // pred_check_branch
        %170 = sbr.rel (%p168) target = $region24
      $region23: #{tpu_custom_call.1} parent=11 // pred_region
        _
      $region24: #{tpu_custom_call.1} parent=11 // pred_fallthru
        _
      // Predicated region
      $region25: #{tpu_custom_call.1} parent=11 // pred_check
        %p171 = pneg %p121
      $region26: #{tpu_custom_call.1} parent=11 // pred_check_branch
        %173 = sbr.rel (%p171) target = $region28
      $region27: #{tpu_custom_call.1} parent=11 // pred_region
        _
      $region28: #{tpu_custom_call.1} parent=11 // pred_fallthru
        _
    $region12: #{tpu_custom_call.1} parent=5 // pred_fallthru
      _
    %p174 = scmp.lt.s32.totalorder %s11, 2
    // Predicated region
    $region29: #{tpu_custom_call.1} parent=5 // pred_check
      %p175 = pneg %p174
    $region30: #{tpu_custom_call.1} parent=5 // pred_check_branch
      %177 = sbr.rel (%p175) target = $region32
    $region31: #{tpu_custom_call.1} parent=5 // pred_region
      // Predicated region
      $region33: #{tpu_custom_call.1} parent=31 // pred_check
        %p178 = pneg %p31
      $region34: #{tpu_custom_call.1} parent=31 // pred_check_branch
        %180 = sbr.rel (%p178) target = $region36
      $region35: #{tpu_custom_call.1} parent=31 // pred_region
        %p181 = scmp.lt.s32.totalorder %s11, 1
        %s182 = scalar_select %p181, %s11, 1
        %s183 = smul.addr %s182, 41
        %s184 = smul.addr %s183, 4
        %s185 = scalar_lea.vmem %s0, %s184
      $region36: #{tpu_custom_call.1} parent=31 // pred_fallthru
        _
    $region32: #{tpu_custom_call.1} parent=5 // pred_fallthru
      _
    %p186 = scmp.le.s32.totalorder 1, %s11
    %p187 = scmp.lt.s32.totalorder %s11, 3
    %p188 = pnand %p186, %p187
    %p189 = pneg %p188
    // Predicated region
    $region37: #{tpu_custom_call.1} parent=5 // pred_check
      _
    $region38: #{tpu_custom_call.1} parent=5 // pred_check_branch
      %191 = sbr.rel (%p188) target = $region40
    $region39: #{tpu_custom_call.1} parent=5 // pred_region
      %s192 = ssub.s32 %s11, 1
      %p193 = scmp.lt.s32.totalorder %s16, 1
      %s194 = scalar_select %p193, %s16, 1
      %s195 = smul.addr %s194, 41
      %s196 = smul.addr %s195, 4
      %s197 = scalar_lea.vmem %s0, %s196
      %p198 = pneg %p37
      %p199 = pneg %p34
      %p200 = pneg %p58
      %p201 = pneg %p55
      %p202 = pneg %p79
      %p203 = pneg %p76
      %p204 = pneg %p100
      %p205 = pneg %p97
      %p206 = pneg %p121
      %p207 = pneg %p118
      %p208 = pneg %p147
      %p209 = pneg %p144
      %p210 = scmp.lt.s32.totalorder %s16, 1
      %s211 = scalar_select %p210, %s16, 1
      %s212 = smul.addr %s211, 36
      %s213 = smul.addr %s212, 8
      %s214 = scalar_lea.vmem %s5, %s213
      %p215 = scmp.lt.s32.totalorder %s16, 1
      %s216 = scalar_select %p215, %s16, 1
      %s217 = smul.addr %s216, 41
      %s218 = smul.addr %s217, 4
      %s219 = scalar_lea.vmem %s0, %s218
      %p220 = scmp.lt.s32.totalorder %s16, 1
      %s221 = scalar_select %p220, %s16, 1
      %s222 = smul.addr %s221, 36
      %s223 = smul.addr %s222, 8
      %s224 = scalar_lea.vmem %s5, %s223
      %v226 = vld [vmem:[%s219] sm:$0xf]
      %v227 = vld [vmem:[%s219 + $0x4] sm:$0xf]
      %v228 = vld [vmem:[%s219 + $0x8] sm:$0xf]
      %v229 = vld [vmem:[%s219 + $0xc] sm:$0xf]
      %v230 = vld [vmem:[%s219 + $0x10] sm:$0xf]
      %v231 = vld [vmem:[%s219 + $0x14] sm:$0xf]
      %v232 = vld [vmem:[%s219 + $0x18] sm:$0xf]
      %v233 = vld [vmem:[%s219 + $0x1c] sm:$0xf]
      %v234 = vld [vmem:[%s219 + $0x20] sm:$0xf]
      %v235 = vld [vmem:[%s219 + $0x24] sm:$0xf]
      %v236 = vld [vmem:[%s219 + $0x28] sm:$0xf]
      %v237 = vld [vmem:[%s219 + $0x2c] sm:$0xf]
      %v238 = vld [vmem:[%s219 + $0x30] sm:$0xf]
      %v239 = vld [vmem:[%s219 + $0x34] sm:$0xf]
      %v240 = vld [vmem:[%s219 + $0x38] sm:$0xf]
      %v241 = vld [vmem:[%s219 + $0x3c] sm:$0xf]
      %v242 = vld [vmem:[%s219 + $0x40] sm:$0xf]
      %v243 = vld [vmem:[%s219 + $0x44] sm:$0xf]
      %v244 = vld [vmem:[%s219 + $0x48] sm:$0xf]
      %v245 = vld [vmem:[%s219 + $0x4c] sm:$0xf]
      %v246 = vld [vmem:[%s219 + $0x50] sm:$0xf]
      %v247 = vld [vmem:[%s219 + $0x54] sm:$0xf]
      %v248 = vld [vmem:[%s219 + $0x58] sm:$0xf]
      %v249 = vld [vmem:[%s219 + $0x5c] sm:$0xf]
      %v250 = vld [vmem:[%s219 + $0x60] sm:$0xf]
      %v251 = vld [vmem:[%s219 + $0x64] sm:$0xf]
      %v252 = vld [vmem:[%s219 + $0x68] sm:$0xf]
      %v253 = vld [vmem:[%s219 + $0x6c] sm:$0xf]
      %v254 = vld [vmem:[%s219 + $0x70] sm:$0xf]
      %v255 = vld [vmem:[%s219 + $0x74] sm:$0xf]
      %v256 = vld [vmem:[%s219 + $0x78] sm:$0xf]
      %v257 = vld [vmem:[%s219 + $0x7c] sm:$0xf]
      %v258 = vld [vmem:[%s219 + $0x80] sm:$0xf]
      %v259 = vld [vmem:[%s219 + $0x84] sm:$0xf]
      %v260 = vld [vmem:[%s219 + $0x88] sm:$0xf]
      %v261 = vld [vmem:[%s219 + $0x8c] sm:$0xf]
      %v262 = vld [vmem:[%s219 + $0x90] sm:$0xf]
      %v263 = vld [vmem:[%s219 + $0x94] sm:$0xf]
      %v264 = vld [vmem:[%s219 + $0x98] sm:$0xf]
      %v265 = vld [vmem:[%s219 + $0x9c] sm:$0xf]
      %v266 = vld [vmem:[%s219 + $0xa0] sm:$0x3]
      %v267 = vunpack.c.l.bf16 %v226
      %v268 = vunpack.c.l.bf16 %v227
      %v269 = vunpack.c.l.bf16 %v228
      %v270 = vunpack.c.l.bf16 %v229
      %v271 = vunpack.c.l.bf16 %v230
      %v272 = vunpack.c.l.bf16 %v231
      %v273 = vunpack.c.l.bf16 %v232
      %v274 = vunpack.c.l.bf16 %v233
      %v275 = vunpack.c.l.bf16 %v234
      %v276 = vunpack.c.l.bf16 %v235
      %v277 = vunpack.c.l.bf16 %v236
      %v278 = vunpack.c.l.bf16 %v237
      %v279 = vunpack.c.l.bf16 %v238
      %v280 = vunpack.c.l.bf16 %v239
      %v281 = vunpack.c.l.bf16 %v240
      %v282 = vunpack.c.l.bf16 %v241
      %v283 = vunpack.c.l.bf16 %v242
      %v284 = vunpack.c.l.bf16 %v243
      %v285 = vunpack.c.l.bf16 %v244
      %v286 = vunpack.c.l.bf16 %v245
      %v287 = vunpack.c.l.bf16 %v246
      %v288 = vunpack.c.l.bf16 %v247
      %v289 = vunpack.c.l.bf16 %v248
      %v290 = vunpack.c.l.bf16 %v249
      %v291 = vunpack.c.l.bf16 %v250
      %v292 = vunpack.c.l.bf16 %v251
      %v293 = vunpack.c.l.bf16 %v252
      %v294 = vunpack.c.l.bf16 %v253
      %v295 = vunpack.c.l.bf16 %v254
      %v296 = vunpack.c.l.bf16 %v255
      %v297 = vunpack.c.l.bf16 %v256
      %v298 = vunpack.c.l.bf16 %v257
      %v299 = vunpack.c.l.bf16 %v258
      %v300 = vunpack.c.l.bf16 %v259
      %v301 = vunpack.c.l.bf16 %v260
      %v302 = vunpack.c.l.bf16 %v261
      %v303 = vunpack.c.l.bf16 %v262
      %v304 = vunpack.c.l.bf16 %v263
      %v305 = vunpack.c.l.bf16 %v264
      %v306 = vunpack.c.l.bf16 %v265
      %v307 = vunpack.c.l.bf16 %v266
      %vm308 = vcmask 523264
      %309 = vst.msk [vmem:[#allocation2] sm:$0xff] %vm308, %v267
      %310 = vst.msk [vmem:[#allocation2 + $0x8] sm:$0xff] %vm308, %v268
      %311 = vst.msk [vmem:[#allocation2 + $0x10] sm:$0xff] %vm308, %v269
      %312 = vst.msk [vmem:[#allocation2 + $0x18] sm:$0xff] %vm308, %v270
      %313 = vst.msk [vmem:[#allocation2 + $0x20] sm:$0xff] %vm308, %v271
      %314 = vst.msk [vmem:[#allocation2 + $0x28] sm:$0xff] %vm308, %v272
      %315 = vst.msk [vmem:[#allocation2 + $0x30] sm:$0xff] %vm308, %v273
      %316 = vst.msk [vmem:[#allocation2 + $0x38] sm:$0xff] %vm308, %v274
      %317 = vst.msk [vmem:[#allocation2 + $0x40] sm:$0xff] %vm308, %v275
      %318 = vst.msk [vmem:[#allocation2 + $0x48] sm:$0xff] %vm308, %v276
      %319 = vst.msk [vmem:[#allocation2 + $0x50] sm:$0xff] %vm308, %v277
      %320 = vst.msk [vmem:[#allocation2 + $0x58] sm:$0xff] %vm308, %v278
      %321 = vst.msk [vmem:[#allocation2 + $0x60] sm:$0xff] %vm308, %v279
      %322 = vst.msk [vmem:[#allocation2 + $0x68] sm:$0xff] %vm308, %v280
      %323 = vst.msk [vmem:[#allocation2 + $0x70] sm:$0xff] %vm308, %v281
      %324 = vst.msk [vmem:[#allocation2 + $0x78] sm:$0xff] %vm308, %v282
      %325 = vst.msk [vmem:[#allocation2 + $0x80] sm:$0xff] %vm308, %v283
      %326 = vst.msk [vmem:[#allocation2 + $0x88] sm:$0xff] %vm308, %v284
      %327 = vst.msk [vmem:[#allocation2 + $0x90] sm:$0xff] %vm308, %v285
      %328 = vst.msk [vmem:[#allocation2 + $0x98] sm:$0xff] %vm308, %v286
      %329 = vst.msk [vmem:[#allocation2 + $0xa0] sm:$0xff] %vm308, %v287
      %330 = vst.msk [vmem:[#allocation2 + $0xa8] sm:$0xff] %vm308, %v288
      %331 = vst.msk [vmem:[#allocation2 + $0xb0] sm:$0xff] %vm308, %v289
      %332 = vst.msk [vmem:[#allocation2 + $0xb8] sm:$0xff] %vm308, %v290
      %333 = vst.msk [vmem:[#allocation2 + $0xc0] sm:$0xff] %vm308, %v291
      %334 = vst.msk [vmem:[#allocation2 + $0xc8] sm:$0xff] %vm308, %v292
      %335 = vst.msk [vmem:[#allocation2 + $0xd0] sm:$0xff] %vm308, %v293
      %336 = vst.msk [vmem:[#allocation2 + $0xd8] sm:$0xff] %vm308, %v294
      %337 = vst.msk [vmem:[#allocation2 + $0xe0] sm:$0xff] %vm308, %v295
      %338 = vst.msk [vmem:[#allocation2 + $0xe8] sm:$0xff] %vm308, %v296
      %339 = vst.msk [vmem:[#allocation2 + $0xf0] sm:$0xff] %vm308, %v297
      %340 = vst.msk [vmem:[#allocation2 + $0xf8] sm:$0xff] %vm308, %v298
      %341 = vst.msk [vmem:[#allocation2 + $0x100] sm:$0xff] %vm308, %v299
      %342 = vst.msk [vmem:[#allocation2 + $0x108] sm:$0xff] %vm308, %v300
      %343 = vst.msk [vmem:[#allocation2 + $0x110] sm:$0xff] %vm308, %v301
      %344 = vst.msk [vmem:[#allocation2 + $0x118] sm:$0xff] %vm308, %v302
      %345 = vst.msk [vmem:[#allocation2 + $0x120] sm:$0xff] %vm308, %v303
      %346 = vst.msk [vmem:[#allocation2 + $0x128] sm:$0xff] %vm308, %v304
      %347 = vst.msk [vmem:[#allocation2 + $0x130] sm:$0xff] %vm308, %v305
      %348 = vst.msk [vmem:[#allocation2 + $0x138] sm:$0xff] %vm308, %v306
      %vm349 = vcmask 519168
      %350 = vst.msk [vmem:[#allocation2 + $0x140] sm:$0xf] %vm349, %v307
      %v351 = vld [vmem:[%s1 + $0x13] sm:$0xff]
      %v352 = vld [vmem:[%s1 + $0x1b] sm:$0xff]
      %v353 = vld [vmem:[%s1 + $0x23] sm:$0xff]
      %v354 = vld [vmem:[%s1 + $0x2b] sm:$0xff]
      %v355 = vld [vmem:[%s1 + $0x33] sm:$0xff]
      %v356 = vld [vmem:[%s1 + $0x3b] sm:$0xff]
      %v357 = vld [vmem:[%s1 + $0x43] sm:$0xff]
      %v358 = vld [vmem:[%s1 + $0x4b] sm:$0xff]
      %v359 = vld [vmem:[%s1 + $0x53] sm:$0xff]
      %v360 = vld [vmem:[%s1 + $0x5b] sm:$0xff]
      %v361 = vld [vmem:[%s1 + $0x63] sm:$0xff]
      %v362 = vld [vmem:[%s1 + $0x6b] sm:$0xff]
      %v363 = vld [vmem:[%s1 + $0x73] sm:$0xff]
      %v364 = vld [vmem:[%s1 + $0x7b] sm:$0xff]
      %v365 = vld [vmem:[%s1 + $0x83] sm:$0xff]
      %v366 = vld [vmem:[%s1 + $0x8b] sm:$0xff]
      %v367 = vld [vmem:[%s1 + $0x93] sm:$0xff]
      %v368 = vld [vmem:[%s1 + $0x9b] sm:$0xff]
      %v369 = vld [vmem:[%s1 + $0xa3] sm:$0xff]
      %v370 = vld [vmem:[%s1 + $0xab] sm:$0xff]
      %v371 = vld [vmem:[%s1 + $0xb3] sm:$0xff]
      %v372 = vld [vmem:[%s1 + $0xbb] sm:$0xff]
      %v373 = vld [vmem:[%s1 + $0xc3] sm:$0xff]
      %v374 = vld [vmem:[%s1 + $0xcb] sm:$0xff]
      %v375 = vld [vmem:[%s1 + $0xd3] sm:$0xff]
      %v376 = vld [vmem:[%s1 + $0xdb] sm:$0xff]
      %v377 = vld [vmem:[%s1 + $0xe3] sm:$0xff]
      %v378 = vld [vmem:[%s1 + $0xeb] sm:$0xff]
      %v379 = vld [vmem:[%s1 + $0xf3] sm:$0xff]
      %v380 = vld [vmem:[%s1 + $0xfb] sm:$0xff]
      %v381 = vld [vmem:[%s1 + $0x103] sm:$0xff]
      %v382 = vld [vmem:[%s1 + $0x10b] sm:$0xff]
      %v383 = vld [vmem:[%s1 + $0x113] sm:$0xff]
      %v384 = vld [vmem:[%s1 + $0x11b] sm:$0xff]
      %v385 = vld [vmem:[%s1 + $0x123] sm:$0xff]
      %v386 = vld [vmem:[%s1 + $0x12b] sm:$0x3f]
      %v387 = vld [vmem:[#allocation2] sm:$0xff]
      %v388 = vld [vmem:[#allocation2 + $0x8] sm:$0xff]
      %v389 = vld [vmem:[#allocation2 + $0x10] sm:$0xff]
      %v390 = vld [vmem:[#allocation2 + $0x18] sm:$0xff]
      %v391 = vld [vmem:[#allocation2 + $0x20] sm:$0xff]
      %v392 = vld [vmem:[#allocation2 + $0x28] sm:$0xff]
      %v393 = vld [vmem:[#allocation2 + $0x30] sm:$0xff]
      %v394 = vld [vmem:[#allocation2 + $0x38] sm:$0xff]
      %v395 = vld [vmem:[#allocation2 + $0x40] sm:$0xff]
      %v396 = vld [vmem:[#allocation2 + $0x48] sm:$0xff]
      %v397 = vld [vmem:[#allocation2 + $0x50] sm:$0xff]
      %v398 = vld [vmem:[#allocation2 + $0x58] sm:$0xff]
      %v399 = vld [vmem:[#allocation2 + $0x60] sm:$0xff]
      %v400 = vld [vmem:[#allocation2 + $0x68] sm:$0xff]
      %v401 = vld [vmem:[#allocation2 + $0x70] sm:$0xff]
      %v402 = vld [vmem:[#allocation2 + $0x78] sm:$0xff]
      %v403 = vld [vmem:[#allocation2 + $0x80] sm:$0xff]
      %v404 = vld [vmem:[#allocation2 + $0x88] sm:$0xff]
      %v405 = vld [vmem:[#allocation2 + $0x90] sm:$0xff]
      %v406 = vld [vmem:[#allocation2 + $0x98] sm:$0xff]
      %v407 = vld [vmem:[#allocation2 + $0xa0] sm:$0xff]
      %v408 = vld [vmem:[#allocation2 + $0xa8] sm:$0xff]
      %v409 = vld [vmem:[#allocation2 + $0xb0] sm:$0xff]
      %v410 = vld [vmem:[#allocation2 + $0xb8] sm:$0xff]
      %v411 = vld [vmem:[#allocation2 + $0xc0] sm:$0xff]
      %v412 = vld [vmem:[#allocation2 + $0xc8] sm:$0xff]
      %v413 = vld [vmem:[#allocation2 + $0xd0] sm:$0xff]
      %v414 = vld [vmem:[#allocation2 + $0xd8] sm:$0xff]
      %v415 = vld [vmem:[#allocation2 + $0xe0] sm:$0xff]
      %v416 = vld [vmem:[#allocation2 + $0xe8] sm:$0xff]
      %v417 = vld [vmem:[#allocation2 + $0xf0] sm:$0xff]
      %v418 = vld [vmem:[#allocation2 + $0xf8] sm:$0xff]
      %v419 = vld [vmem:[#allocation2 + $0x100] sm:$0xff]
      %v420 = vld [vmem:[#allocation2 + $0x108] sm:$0xff]
      %v421 = vld [vmem:[#allocation2 + $0x110] sm:$0xff]
      %v422 = vld [vmem:[#allocation2 + $0x118] sm:$0x3f]
      %v423 = vld [vmem:[#allocation2 + $0x1] sm:$0xff]
      %v424 = vld [vmem:[#allocation2 + $0x9] sm:$0xff]
      %v425 = vld [vmem:[#allocation2 + $0x11] sm:$0xff]
      %v426 = vld [vmem:[#allocation2 + $0x19] sm:$0xff]
      %v427 = vld [vmem:[#allocation2 + $0x21] sm:$0xff]
      %v428 = vld [vmem:[#allocation2 + $0x29] sm:$0xff]
      %v429 = vld [vmem:[#allocation2 + $0x31] sm:$0xff]
      %v430 = vld [vmem:[#allocation2 + $0x39] sm:$0xff]
      %v431 = vld [vmem:[#allocation2 + $0x41] sm:$0xff]
      %v432 = vld [vmem:[#allocation2 + $0x49] sm:$0xff]
      %v433 = vld [vmem:[#allocation2 + $0x51] sm:$0xff]
      %v434 = vld [vmem:[#allocation2 + $0x59] sm:$0xff]
      %v435 = vld [vmem:[#allocation2 + $0x61] sm:$0xff]
      %v436 = vld [vmem:[#allocation2 + $0x69] sm:$0xff]
      %v437 = vld [vmem:[#allocation2 + $0x71] sm:$0xff]
      %v438 = vld [vmem:[#allocation2 + $0x79] sm:$0xff]
      %v439 = vld [vmem:[#allocation2 + $0x81] sm:$0xff]
      %v440 = vld [vmem:[#allocation2 + $0x89] sm:$0xff]
      %v441 = vld [vmem:[#allocation2 + $0x91] sm:$0xff]
      %v442 = vld [vmem:[#allocation2 + $0x99] sm:$0xff]
      %v443 = vld [vmem:[#allocation2 + $0xa1] sm:$0xff]
      %v444 = vld [vmem:[#allocation2 + $0xa9] sm:$0xff]
      %v445 = vld [vmem:[#allocation2 + $0xb1] sm:$0xff]
      %v446 = vld [vmem:[#allocation2 + $0xb9] sm:$0xff]
      %v447 = vld [vmem:[#allocation2 + $0xc1] sm:$0xff]
      %v448 = vld [vmem:[#allocation2 + $0xc9] sm:$0xff]
      %v449 = vld [vmem:[#allocation2 + $0xd1] sm:$0xff]
      %v450 = vld [vmem:[#allocation2 + $0xd9] sm:$0xff]
      %v451 = vld [vmem:[#allocation2 + $0xe1] sm:$0xff]
      %v452 = vld [vmem:[#allocation2 + $0xe9] sm:$0xff]
      %v453 = vld [vmem:[#allocation2 + $0xf1] sm:$0xff]
      %v454 = vld [vmem:[#allocation2 + $0xf9] sm:$0xff]
      %v455 = vld [vmem:[#allocation2 + $0x101] sm:$0xff]
      %v456 = vld [vmem:[#allocation2 + $0x109] sm:$0xff]
      %v457 = vld [vmem:[#allocation2 + $0x111] sm:$0xff]
      %v458 = vld [vmem:[#allocation2 + $0x119] sm:$0x3f]
      %v459 = vld [vmem:[#allocation2 + $0x2] sm:$0xff]
      %v460 = vld [vmem:[#allocation2 + $0xa] sm:$0xff]
      %v461 = vld [vmem:[#allocation2 + $0x12] sm:$0xff]
      %v462 = vld [vmem:[#allocation2 + $0x1a] sm:$0xff]
      %v463 = vld [vmem:[#allocation2 + $0x22] sm:$0xff]
      %v464 = vld [vmem:[#allocation2 + $0x2a] sm:$0xff]
      %v465 = vld [vmem:[#allocation2 + $0x32] sm:$0xff]
      %v466 = vld [vmem:[#allocation2 + $0x3a] sm:$0xff]
      %v467 = vld [vmem:[#allocation2 + $0x42] sm:$0xff]
      %v468 = vld [vmem:[#allocation2 + $0x4a] sm:$0xff]
      %v469 = vld [vmem:[#allocation2 + $0x52] sm:$0xff]
      %v470 = vld [vmem:[#allocation2 + $0x5a] sm:$0xff]
      %v471 = vld [vmem:[#allocation2 + $0x62] sm:$0xff]
      %v472 = vld [vmem:[#allocation2 + $0x6a] sm:$0xff]
      %v473 = vld [vmem:[#allocation2 + $0x72] sm:$0xff]
      %v474 = vld [vmem:[#allocation2 + $0x7a] sm:$0xff]
      %v475 = vld [vmem:[#allocation2 + $0x82] sm:$0xff]
      %v476 = vld [vmem:[#allocation2 + $0x8a] sm:$0xff]
      %v477 = vld [vmem:[#allocation2 + $0x92] sm:$0xff]
      %v478 = vld [vmem:[#allocation2 + $0x9a] sm:$0xff]
      %v479 = vld [vmem:[#allocation2 + $0xa2] sm:$0xff]
      %v480 = vld [vmem:[#allocation2 + $0xaa] sm:$0xff]
      %v481 = vld [vmem:[#allocation2 + $0xb2] sm:$0xff]
      %v482 = vld [vmem:[#allocation2 + $0xba] sm:$0xff]
      %v483 = vld [vmem:[#allocation2 + $0xc2] sm:$0xff]
      %v484 = vld [vmem:[#allocation2 + $0xca] sm:$0xff]
      %v485 = vld [vmem:[#allocation2 + $0xd2] sm:$0xff]
      %v486 = vld [vmem:[#allocation2 + $0xda] sm:$0xff]
      %v487 = vld [vmem:[#allocation2 + $0xe2] sm:$0xff]
      %v488 = vld [vmem:[#allocation2 + $0xea] sm:$0xff]
      %v489 = vld [vmem:[#allocation2 + $0xf2] sm:$0xff]
      %v490 = vld [vmem:[#allocation2 + $0xfa] sm:$0xff]
      %v491 = vld [vmem:[#allocation2 + $0x102] sm:$0xff]
      %v492 = vld [vmem:[#allocation2 + $0x10a] sm:$0xff]
      %v493 = vld [vmem:[#allocation2 + $0x112] sm:$0xff]
      %v494 = vld [vmem:[#allocation2 + $0x11a] sm:$0x3f]
      %v495 = vld [vmem:[#allocation2 + $0x11a] sm:$0xff]
      %v496 = vld [vmem:[#allocation2 + $0x122] sm:$0xff]
      %v497 = vld [vmem:[#allocation2 + $0x12a] sm:$0x3f]
      %v498 = vld [vmem:[#allocation2 + $0x13] sm:$0xff]
      %v499 = vld [vmem:[#allocation2 + $0x1b] sm:$0xff]
      %v500 = vld [vmem:[#allocation2 + $0x23] sm:$0xff]
      %v501 = vld [vmem:[#allocation2 + $0x2b] sm:$0xff]
      %v502 = vld [vmem:[#allocation2 + $0x33] sm:$0xff]
      %v503 = vld [vmem:[#allocation2 + $0x3b] sm:$0xff]
      %v504 = vld [vmem:[#allocation2 + $0x43] sm:$0xff]
      %v505 = vld [vmem:[#allocation2 + $0x4b] sm:$0xff]
      %v506 = vld [vmem:[#allocation2 + $0x53] sm:$0xff]
      %v507 = vld [vmem:[#allocation2 + $0x5b] sm:$0xff]
      %v508 = vld [vmem:[#allocation2 + $0x63] sm:$0xff]
      %v509 = vld [vmem:[#allocation2 + $0x6b] sm:$0xff]
      %v510 = vld [vmem:[#allocation2 + $0x73] sm:$0xff]
      %v511 = vld [vmem:[#allocation2 + $0x7b] sm:$0xff]
      %v512 = vld [vmem:[#allocation2 + $0x83] sm:$0xff]
      %v513 = vld [vmem:[#allocation2 + $0x8b] sm:$0xff]
      %v514 = vld [vmem:[#allocation2 + $0x93] sm:$0xff]
      %v515 = vld [vmem:[#allocation2 + $0x9b] sm:$0xff]
      %v516 = vld [vmem:[#allocation2 + $0xa3] sm:$0xff]
      %v517 = vld [vmem:[#allocation2 + $0xab] sm:$0xff]
      %v518 = vld [vmem:[#allocation2 + $0xb3] sm:$0xff]
      %v519 = vld [vmem:[#allocation2 + $0xbb] sm:$0xff]
      %v520 = vld [vmem:[#allocation2 + $0xc3] sm:$0xff]
      %v521 = vld [vmem:[#allocation2 + $0xcb] sm:$0xff]
      %v522 = vld [vmem:[#allocation2 + $0xd3] sm:$0xff]
      %v523 = vld [vmem:[#allocation2 + $0xdb] sm:$0xff]
      %v524 = vld [vmem:[#allocation2 + $0xe3] sm:$0xff]
      %v525 = vld [vmem:[#allocation2 + $0xeb] sm:$0xff]
      %v526 = vld [vmem:[#allocation2 + $0xf3] sm:$0xff]
      %v527 = vld [vmem:[#allocation2 + $0xfb] sm:$0xff]
      %v528 = vld [vmem:[#allocation2 + $0x103] sm:$0xff]
      %v529 = vld [vmem:[#allocation2 + $0x10b] sm:$0xff]
      %v530 = vld [vmem:[#allocation2 + $0x113] sm:$0xff]
      %v531 = vld [vmem:[#allocation2 + $0x11b] sm:$0xff]
      %v532 = vld [vmem:[#allocation2 + $0x123] sm:$0xff]
      %v533 = vld [vmem:[#allocation2 + $0x12b] sm:$0x3f]
      %v534 = vld [vmem:[#allocation2 + $0x14] sm:$0xff]
      %v535 = vld [vmem:[#allocation2 + $0x1c] sm:$0xff]
      %v536 = vld [vmem:[#allocation2 + $0x24] sm:$0xff]
      %v537 = vld [vmem:[#allocation2 + $0x2c] sm:$0xff]
      %v538 = vld [vmem:[#allocation2 + $0x34] sm:$0xff]
      %v539 = vld [vmem:[#allocation2 + $0x3c] sm:$0xff]
      %v540 = vld [vmem:[#allocation2 + $0x44] sm:$0xff]
      %v541 = vld [vmem:[#allocation2 + $0x4c] sm:$0xff]
      %v542 = vld [vmem:[#allocation2 + $0x54] sm:$0xff]
      %v543 = vld [vmem:[#allocation2 + $0x5c] sm:$0xff]
      %v544 = vld [vmem:[#allocation2 + $0x64] sm:$0xff]
      %v545 = vld [vmem:[#allocation2 + $0x6c] sm:$0xff]
      %v546 = vld [vmem:[#allocation2 + $0x74] sm:$0xff]
      %v547 = vld [vmem:[#allocation2 + $0x7c] sm:$0xff]
      %v548 = vld [vmem:[#allocation2 + $0x84] sm:$0xff]
      %v549 = vld [vmem:[#allocation2 + $0x8c] sm:$0xff]
      %v550 = vld [vmem:[#allocation2 + $0x94] sm:$0xff]
      %v551 = vld [vmem:[#allocation2 + $0x9c] sm:$0xff]
      %v552 = vld [vmem:[#allocation2 + $0xa4] sm:$0xff]
      %v553 = vld [vmem:[#allocation2 + $0xac] sm:$0xff]
      %v554 = vld [vmem:[#allocation2 + $0xb4] sm:$0xff]
      %v555 = vld [vmem:[#allocation2 + $0xbc] sm:$0xff]
      %v556 = vld [vmem:[#allocation2 + $0xc4] sm:$0xff]
      %v557 = vld [vmem:[#allocation2 + $0xcc] sm:$0xff]
      %v558 = vld [vmem:[#allocation2 + $0xd4] sm:$0xff]
      %v559 = vld [vmem:[#allocation2 + $0xdc] sm:$0xff]
      %v560 = vld [vmem:[#allocation2 + $0xe4] sm:$0xff]
      %v561 = vld [vmem:[#allocation2 + $0xec] sm:$0xff]
      %v562 = vld [vmem:[#allocation2 + $0xf4] sm:$0xff]
      %v563 = vld [vmem:[#allocation2 + $0xfc] sm:$0xff]
      %v564 = vld [vmem:[#allocation2 + $0x104] sm:$0xff]
      %v565 = vld [vmem:[#allocation2 + $0x10c] sm:$0xff]
      %v566 = vld [vmem:[#allocation2 + $0x114] sm:$0xff]
      %v567 = vld [vmem:[#allocation2 + $0x11c] sm:$0xff]
      %v568 = vld [vmem:[#allocation2 + $0x124] sm:$0xff]
      %v569 = vld [vmem:[#allocation2 + $0x12c] sm:$0x3f]
      %v570 = vld [vmem:[#allocation2 + $0x12c] sm:$0xff]
      %v571 = vld [vmem:[#allocation2 + $0x134] sm:$0xff]
      %v572 = vld [vmem:[#allocation2 + $0x13c] sm:$0x3f]
      %v573 = vld [vmem:[#allocation2 + $0x25] sm:$0xff]
      %v574 = vld [vmem:[#allocation2 + $0x2d] sm:$0xff]
      %v575 = vld [vmem:[#allocation2 + $0x35] sm:$0xff]
      %v576 = vld [vmem:[#allocation2 + $0x3d] sm:$0xff]
      %v577 = vld [vmem:[#allocation2 + $0x45] sm:$0xff]
      %v578 = vld [vmem:[#allocation2 + $0x4d] sm:$0xff]
      %v579 = vld [vmem:[#allocation2 + $0x55] sm:$0xff]
      %v580 = vld [vmem:[#allocation2 + $0x5d] sm:$0xff]
      %v581 = vld [vmem:[#allocation2 + $0x65] sm:$0xff]
      %v582 = vld [vmem:[#allocation2 + $0x6d] sm:$0xff]
      %v583 = vld [vmem:[#allocation2 + $0x75] sm:$0xff]
      %v584 = vld [vmem:[#allocation2 + $0x7d] sm:$0xff]
      %v585 = vld [vmem:[#allocation2 + $0x85] sm:$0xff]
      %v586 = vld [vmem:[#allocation2 + $0x8d] sm:$0xff]
      %v587 = vld [vmem:[#allocation2 + $0x95] sm:$0xff]
      %v588 = vld [vmem:[#allocation2 + $0x9d] sm:$0xff]
      %v589 = vld [vmem:[#allocation2 + $0xa5] sm:$0xff]
      %v590 = vld [vmem:[#allocation2 + $0xad] sm:$0xff]
      %v591 = vld [vmem:[#allocation2 + $0xb5] sm:$0xff]
      %v592 = vld [vmem:[#allocation2 + $0xbd] sm:$0xff]
      %v593 = vld [vmem:[#allocation2 + $0xc5] sm:$0xff]
      %v594 = vld [vmem:[#allocation2 + $0xcd] sm:$0xff]
      %v595 = vld [vmem:[#allocation2 + $0xd5] sm:$0xff]
      %v596 = vld [vmem:[#allocation2 + $0xdd] sm:$0xff]
      %v597 = vld [vmem:[#allocation2 + $0xe5] sm:$0xff]
      %v598 = vld [vmem:[#allocation2 + $0xed] sm:$0xff]
      %v599 = vld [vmem:[#allocation2 + $0xf5] sm:$0xff]
      %v600 = vld [vmem:[#allocation2 + $0xfd] sm:$0xff]
      %v601 = vld [vmem:[#allocation2 + $0x105] sm:$0xff]
      %v602 = vld [vmem:[#allocation2 + $0x10d] sm:$0xff]
      %v603 = vld [vmem:[#allocation2 + $0x115] sm:$0xff]
      %v604 = vld [vmem:[#allocation2 + $0x11d] sm:$0xff]
      %v605 = vld [vmem:[#allocation2 + $0x125] sm:$0xff]
      %v606 = vld [vmem:[#allocation2 + $0x12d] sm:$0xff]
      %v607 = vld [vmem:[#allocation2 + $0x135] sm:$0xff]
      %v608 = vld [vmem:[#allocation2 + $0x13d] sm:$0x3f]
      %v609 = vld [vmem:[#allocation2 + $0x26] sm:$0xff]
      %v610 = vld [vmem:[#allocation2 + $0x2e] sm:$0xff]
      %v611 = vld [vmem:[#allocation2 + $0x36] sm:$0xff]
      %v612 = vld [vmem:[#allocation2 + $0x3e] sm:$0xff]
      %v613 = vld [vmem:[#allocation2 + $0x46] sm:$0xff]
      %v614 = vld [vmem:[#allocation2 + $0x4e] sm:$0xff]
      %v615 = vld [vmem:[#allocation2 + $0x56] sm:$0xff]
      %v616 = vld [vmem:[#allocation2 + $0x5e] sm:$0xff]
      %v617 = vld [vmem:[#allocation2 + $0x66] sm:$0xff]
      %v618 = vld [vmem:[#allocation2 + $0x6e] sm:$0xff]
      %v619 = vld [vmem:[#allocation2 + $0x76] sm:$0xff]
      %v620 = vld [vmem:[#allocation2 + $0x7e] sm:$0xff]
      %v621 = vld [vmem:[#allocation2 + $0x86] sm:$0xff]
      %v622 = vld [vmem:[#allocation2 + $0x8e] sm:$0xff]
      %v623 = vld [vmem:[#allocation2 + $0x96] sm:$0xff]
      %v624 = vld [vmem:[#allocation2 + $0x9e] sm:$0xff]
      %v625 = vld [vmem:[#allocation2 + $0xa6] sm:$0xff]
      %v626 = vld [vmem:[#allocation2 + $0xae] sm:$0xff]
      %v627 = vld [vmem:[#allocation2 + $0xb6] sm:$0xff]
      %v628 = vld [vmem:[#allocation2 + $0xbe] sm:$0xff]
      %v629 = vld [vmem:[#allocation2 + $0xc6] sm:$0xff]
      %v630 = vld [vmem:[#allocation2 + $0xce] sm:$0xff]
      %v631 = vld [vmem:[#allocation2 + $0xd6] sm:$0xff]
      %v632 = vld [vmem:[#allocation2 + $0xde] sm:$0xff]
      %v633 = vld [vmem:[#allocation2 + $0xe6] sm:$0xff]
      %v634 = vld [vmem:[#allocation2 + $0xee] sm:$0xff]
      %v635 = vld [vmem:[#allocation2 + $0xf6] sm:$0xff]
      %v636 = vld [vmem:[#allocation2 + $0xfe] sm:$0xff]
      %v637 = vld [vmem:[#allocation2 + $0x106] sm:$0xff]
      %v638 = vld [vmem:[#allocation2 + $0x10e] sm:$0xff]
      %v639 = vld [vmem:[#allocation2 + $0x116] sm:$0xff]
      %v640 = vld [vmem:[#allocation2 + $0x11e] sm:$0xff]
      %v641 = vld [vmem:[#allocation2 + $0x126] sm:$0xff]
      %v642 = vld [vmem:[#allocation2 + $0x12e] sm:$0xff]
      %v643 = vld [vmem:[#allocation2 + $0x136] sm:$0xff]
      %v644 = vld [vmem:[#allocation2 + $0x13e] sm:$0x3f]
      %681 = vrot.lane.b32.xlu0 %v423, 64
      %v682 = vpop.permute.xlu0 %681
      %683 = vrot.lane.b32.xlu0 %v424, 64
      %v684 = vpop.permute.xlu0 %683
      %685 = vrot.lane.b32.xlu0 %v425, 64
      %v686 = vpop.permute.xlu0 %685
      %687 = vrot.lane.b32.xlu0 %v426, 64
      %v688 = vpop.permute.xlu0 %687
      %689 = vrot.lane.b32.xlu0 %v427, 64
      %v690 = vpop.permute.xlu0 %689
      %691 = vrot.lane.b32.xlu0 %v428, 64
      %v692 = vpop.permute.xlu0 %691
      %693 = vrot.lane.b32.xlu0 %v429, 64
      %v694 = vpop.permute.xlu0 %693
      %695 = vrot.lane.b32.xlu0 %v430, 64
      %v696 = vpop.permute.xlu0 %695
      %697 = vrot.lane.b32.xlu0 %v431, 64
      %v698 = vpop.permute.xlu0 %697
      %699 = vrot.lane.b32.xlu0 %v432, 64
      %v700 = vpop.permute.xlu0 %699
      %701 = vrot.lane.b32.xlu0 %v433, 64
      %v702 = vpop.permute.xlu0 %701
      %703 = vrot.lane.b32.xlu0 %v434, 64
      %v704 = vpop.permute.xlu0 %703
      %705 = vrot.lane.b32.xlu0 %v435, 64
      %v706 = vpop.permute.xlu0 %705
      %707 = vrot.lane.b32.xlu0 %v436, 64
      %v708 = vpop.permute.xlu0 %707
      %709 = vrot.lane.b32.xlu0 %v437, 64
      %v710 = vpop.permute.xlu0 %709
      %711 = vrot.lane.b32.xlu0 %v438, 64
      %v712 = vpop.permute.xlu0 %711
      %713 = vrot.lane.b32.xlu0 %v439, 64
      %v714 = vpop.permute.xlu0 %713
      %715 = vrot.lane.b32.xlu0 %v440, 64
      %v716 = vpop.permute.xlu0 %715
      %717 = vrot.lane.b32.xlu0 %v441, 64
      %v718 = vpop.permute.xlu0 %717
      %719 = vrot.lane.b32.xlu0 %v442, 64
      %v720 = vpop.permute.xlu0 %719
      %721 = vrot.lane.b32.xlu0 %v443, 64
      %v722 = vpop.permute.xlu0 %721
      %723 = vrot.lane.b32.xlu0 %v444, 64
      %v724 = vpop.permute.xlu0 %723
      %725 = vrot.lane.b32.xlu0 %v445, 64
      %v726 = vpop.permute.xlu0 %725
      %727 = vrot.lane.b32.xlu0 %v446, 64
      %v728 = vpop.permute.xlu0 %727
      %729 = vrot.lane.b32.xlu0 %v447, 64
      %v730 = vpop.permute.xlu0 %729
      %731 = vrot.lane.b32.xlu0 %v448, 64
      %v732 = vpop.permute.xlu0 %731
      %733 = vrot.lane.b32.xlu0 %v449, 64
      %v734 = vpop.permute.xlu0 %733
      %735 = vrot.lane.b32.xlu0 %v450, 64
      %v736 = vpop.permute.xlu0 %735
      %737 = vrot.lane.b32.xlu0 %v451, 64
      %v738 = vpop.permute.xlu0 %737
      %739 = vrot.lane.b32.xlu0 %v452, 64
      %v740 = vpop.permute.xlu0 %739
      %741 = vrot.lane.b32.xlu0 %v453, 64
      %v742 = vpop.permute.xlu0 %741
      %743 = vrot.lane.b32.xlu0 %v454, 64
      %v744 = vpop.permute.xlu0 %743
      %745 = vrot.lane.b32.xlu0 %v455, 64
      %v746 = vpop.permute.xlu0 %745
      %747 = vrot.lane.b32.xlu0 %v456, 64
      %v748 = vpop.permute.xlu0 %747
      %749 = vrot.lane.b32.xlu0 %v457, 64
      %v750 = vpop.permute.xlu0 %749
      %751 = vrot.lane.b32.xlu0 %v458, 64
      %v752 = vpop.permute.xlu0 %751
      %825 = vrot.lane.b32.xlu0 %v461, 64
      %v826 = vpop.permute.xlu0 %825
      %827 = vrot.lane.b32.xlu0 %v462, 64
      %v828 = vpop.permute.xlu0 %827
      %829 = vrot.lane.b32.xlu0 %v463, 64
      %v830 = vpop.permute.xlu0 %829
      %831 = vrot.lane.b32.xlu0 %v464, 64
      %v832 = vpop.permute.xlu0 %831
      %833 = vrot.lane.b32.xlu0 %v465, 64
      %v834 = vpop.permute.xlu0 %833
      %835 = vrot.lane.b32.xlu0 %v466, 64
      %v836 = vpop.permute.xlu0 %835
      %837 = vrot.lane.b32.xlu0 %v467, 64
      %v838 = vpop.permute.xlu0 %837
      %839 = vrot.lane.b32.xlu0 %v468, 64
      %v840 = vpop.permute.xlu0 %839
      %841 = vrot.lane.b32.xlu0 %v469, 64
      %v842 = vpop.permute.xlu0 %841
      %843 = vrot.lane.b32.xlu0 %v470, 64
      %v844 = vpop.permute.xlu0 %843
      %845 = vrot.lane.b32.xlu0 %v471, 64
      %v846 = vpop.permute.xlu0 %845
      %847 = vrot.lane.b32.xlu0 %v472, 64
      %v848 = vpop.permute.xlu0 %847
      %849 = vrot.lane.b32.xlu0 %v473, 64
      %v850 = vpop.permute.xlu0 %849
      %851 = vrot.lane.b32.xlu0 %v474, 64
      %v852 = vpop.permute.xlu0 %851
      %853 = vrot.lane.b32.xlu0 %v475, 64
      %v854 = vpop.permute.xlu0 %853
      %855 = vrot.lane.b32.xlu0 %v476, 64
      %v856 = vpop.permute.xlu0 %855
      %857 = vrot.lane.b32.xlu0 %v477, 64
      %v858 = vpop.permute.xlu0 %857
      %859 = vrot.lane.b32.xlu0 %v478, 64
      %v860 = vpop.permute.xlu0 %859
      %861 = vrot.lane.b32.xlu0 %v479, 64
      %v862 = vpop.permute.xlu0 %861
      %863 = vrot.lane.b32.xlu0 %v480, 64
      %v864 = vpop.permute.xlu0 %863
      %865 = vrot.lane.b32.xlu0 %v481, 64
      %v866 = vpop.permute.xlu0 %865
      %867 = vrot.lane.b32.xlu0 %v482, 64
      %v868 = vpop.permute.xlu0 %867
      %869 = vrot.lane.b32.xlu0 %v483, 64
      %v870 = vpop.permute.xlu0 %869
      %871 = vrot.lane.b32.xlu0 %v484, 64
      %v872 = vpop.permute.xlu0 %871
      %873 = vrot.lane.b32.xlu0 %v485, 64
      %v874 = vpop.permute.xlu0 %873
      %875 = vrot.lane.b32.xlu0 %v486, 64
      %v876 = vpop.permute.xlu0 %875
      %877 = vrot.lane.b32.xlu0 %v487, 64
      %v878 = vpop.permute.xlu0 %877
      %879 = vrot.lane.b32.xlu0 %v488, 64
      %v880 = vpop.permute.xlu0 %879
      %881 = vrot.lane.b32.xlu0 %v489, 64
      %v882 = vpop.permute.xlu0 %881
      %883 = vrot.lane.b32.xlu0 %v490, 64
      %v884 = vpop.permute.xlu0 %883
      %885 = vrot.lane.b32.xlu0 %v491, 64
      %v886 = vpop.permute.xlu0 %885
      %887 = vrot.lane.b32.xlu0 %v492, 64
      %v888 = vpop.permute.xlu0 %887
      %889 = vrot.lane.b32.xlu0 %v493, 64
      %v890 = vpop.permute.xlu0 %889
      %891 = vrot.lane.b32.xlu0 %v495, 64
      %v892 = vpop.permute.xlu0 %891
      %893 = vrot.lane.b32.xlu0 %v496, 64
      %v894 = vpop.permute.xlu0 %893
      %895 = vrot.lane.b32.xlu0 %v497, 64
      %v896 = vpop.permute.xlu0 %895
      %969 = vrot.lane.b32.xlu0 %v534, 64
      %v970 = vpop.permute.xlu0 %969
      %971 = vrot.lane.b32.xlu0 %v535, 64
      %v972 = vpop.permute.xlu0 %971
      %973 = vrot.lane.b32.xlu0 %v536, 64
      %v974 = vpop.permute.xlu0 %973
      %975 = vrot.lane.b32.xlu0 %v537, 64
      %v976 = vpop.permute.xlu0 %975
      %977 = vrot.lane.b32.xlu0 %v538, 64
      %v978 = vpop.permute.xlu0 %977
      %979 = vrot.lane.b32.xlu0 %v539, 64
      %v980 = vpop.permute.xlu0 %979
      %981 = vrot.lane.b32.xlu0 %v540, 64
      %v982 = vpop.permute.xlu0 %981
      %983 = vrot.lane.b32.xlu0 %v541, 64
      %v984 = vpop.permute.xlu0 %983
      %985 = vrot.lane.b32.xlu0 %v542, 64
      %v986 = vpop.permute.xlu0 %985
      %987 = vrot.lane.b32.xlu0 %v543, 64
      %v988 = vpop.permute.xlu0 %987
      %989 = vrot.lane.b32.xlu0 %v544, 64
      %v990 = vpop.permute.xlu0 %989
      %991 = vrot.lane.b32.xlu0 %v545, 64
      %v992 = vpop.permute.xlu0 %991
      %993 = vrot.lane.b32.xlu0 %v546, 64
      %v994 = vpop.permute.xlu0 %993
      %995 = vrot.lane.b32.xlu0 %v547, 64
      %v996 = vpop.permute.xlu0 %995
      %997 = vrot.lane.b32.xlu0 %v548, 64
      %v998 = vpop.permute.xlu0 %997
      %999 = vrot.lane.b32.xlu0 %v549, 64
      %v1000 = vpop.permute.xlu0 %999
      %1001 = vrot.lane.b32.xlu0 %v550, 64
      %v1002 = vpop.permute.xlu0 %1001
      %1003 = vrot.lane.b32.xlu0 %v551, 64
      %v1004 = vpop.permute.xlu0 %1003
      %1005 = vrot.lane.b32.xlu0 %v552, 64
      %v1006 = vpop.permute.xlu0 %1005
      %1007 = vrot.lane.b32.xlu0 %v553, 64
      %v1008 = vpop.permute.xlu0 %1007
      %1009 = vrot.lane.b32.xlu0 %v554, 64
      %v1010 = vpop.permute.xlu0 %1009
      %1011 = vrot.lane.b32.xlu0 %v555, 64
      %v1012 = vpop.permute.xlu0 %1011
      %1013 = vrot.lane.b32.xlu0 %v556, 64
      %v1014 = vpop.permute.xlu0 %1013
      %1015 = vrot.lane.b32.xlu0 %v557, 64
      %v1016 = vpop.permute.xlu0 %1015
      %1017 = vrot.lane.b32.xlu0 %v558, 64
      %v1018 = vpop.permute.xlu0 %1017
      %1019 = vrot.lane.b32.xlu0 %v559, 64
      %v1020 = vpop.permute.xlu0 %1019
      %1021 = vrot.lane.b32.xlu0 %v560, 64
      %v1022 = vpop.permute.xlu0 %1021
      %1023 = vrot.lane.b32.xlu0 %v561, 64
      %v1024 = vpop.permute.xlu0 %1023
      %1025 = vrot.lane.b32.xlu0 %v562, 64
      %v1026 = vpop.permute.xlu0 %1025
      %1027 = vrot.lane.b32.xlu0 %v563, 64
      %v1028 = vpop.permute.xlu0 %1027
      %1029 = vrot.lane.b32.xlu0 %v564, 64
      %v1030 = vpop.permute.xlu0 %1029
      %1031 = vrot.lane.b32.xlu0 %v565, 64
      %v1032 = vpop.permute.xlu0 %1031
      %1033 = vrot.lane.b32.xlu0 %v566, 64
      %v1034 = vpop.permute.xlu0 %1033
      %1035 = vrot.lane.b32.xlu0 %v567, 64
      %v1036 = vpop.permute.xlu0 %1035
      %1037 = vrot.lane.b32.xlu0 %v568, 64
      %v1038 = vpop.permute.xlu0 %1037
      %1039 = vrot.lane.b32.xlu0 %v569, 64
      %v1040 = vpop.permute.xlu0 %1039
      %1113 = vrot.lane.b32.xlu0 %v573, 64
      %v1114 = vpop.permute.xlu0 %1113
      %1115 = vrot.lane.b32.xlu0 %v574, 64
      %v1116 = vpop.permute.xlu0 %1115
      %1117 = vrot.lane.b32.xlu0 %v575, 64
      %v1118 = vpop.permute.xlu0 %1117
      %1119 = vrot.lane.b32.xlu0 %v576, 64
      %v1120 = vpop.permute.xlu0 %1119
      %1121 = vrot.lane.b32.xlu0 %v577, 64
      %v1122 = vpop.permute.xlu0 %1121
      %1123 = vrot.lane.b32.xlu0 %v578, 64
      %v1124 = vpop.permute.xlu0 %1123
      %1125 = vrot.lane.b32.xlu0 %v579, 64
      %v1126 = vpop.permute.xlu0 %1125
      %1127 = vrot.lane.b32.xlu0 %v580, 64
      %v1128 = vpop.permute.xlu0 %1127
      %1129 = vrot.lane.b32.xlu0 %v581, 64
      %v1130 = vpop.permute.xlu0 %1129
      %1131 = vrot.lane.b32.xlu0 %v582, 64
      %v1132 = vpop.permute.xlu0 %1131
      %1133 = vrot.lane.b32.xlu0 %v583, 64
      %v1134 = vpop.permute.xlu0 %1133
      %1135 = vrot.lane.b32.xlu0 %v584, 64
      %v1136 = vpop.permute.xlu0 %1135
      %1137 = vrot.lane.b32.xlu0 %v585, 64
      %v1138 = vpop.permute.xlu0 %1137
      %1139 = vrot.lane.b32.xlu0 %v586, 64
      %v1140 = vpop.permute.xlu0 %1139
      %1141 = vrot.lane.b32.xlu0 %v587, 64
      %v1142 = vpop.permute.xlu0 %1141
      %1143 = vrot.lane.b32.xlu0 %v588, 64
      %v1144 = vpop.permute.xlu0 %1143
      %1145 = vrot.lane.b32.xlu0 %v589, 64
      %v1146 = vpop.permute.xlu0 %1145
      %1147 = vrot.lane.b32.xlu0 %v590, 64
      %v1148 = vpop.permute.xlu0 %1147
      %1149 = vrot.lane.b32.xlu0 %v591, 64
      %v1150 = vpop.permute.xlu0 %1149
      %1151 = vrot.lane.b32.xlu0 %v592, 64
      %v1152 = vpop.permute.xlu0 %1151
      %1153 = vrot.lane.b32.xlu0 %v593, 64
      %v1154 = vpop.permute.xlu0 %1153
      %1155 = vrot.lane.b32.xlu0 %v594, 64
      %v1156 = vpop.permute.xlu0 %1155
      %1157 = vrot.lane.b32.xlu0 %v595, 64
      %v1158 = vpop.permute.xlu0 %1157
      %1159 = vrot.lane.b32.xlu0 %v596, 64
      %v1160 = vpop.permute.xlu0 %1159
      %1161 = vrot.lane.b32.xlu0 %v597, 64
      %v1162 = vpop.permute.xlu0 %1161
      %1163 = vrot.lane.b32.xlu0 %v598, 64
      %v1164 = vpop.permute.xlu0 %1163
      %1165 = vrot.lane.b32.xlu0 %v599, 64
      %v1166 = vpop.permute.xlu0 %1165
      %1167 = vrot.lane.b32.xlu0 %v600, 64
      %v1168 = vpop.permute.xlu0 %1167
      %1169 = vrot.lane.b32.xlu0 %v601, 64
      %v1170 = vpop.permute.xlu0 %1169
      %1171 = vrot.lane.b32.xlu0 %v602, 64
      %v1172 = vpop.permute.xlu0 %1171
      %1173 = vrot.lane.b32.xlu0 %v603, 64
      %v1174 = vpop.permute.xlu0 %1173
      %1175 = vrot.lane.b32.xlu0 %v604, 64
      %v1176 = vpop.permute.xlu0 %1175
      %1177 = vrot.lane.b32.xlu0 %v605, 64
      %v1178 = vpop.permute.xlu0 %1177
      %1179 = vrot.lane.b32.xlu0 %v606, 64
      %v1180 = vpop.permute.xlu0 %1179
      %1181 = vrot.lane.b32.xlu0 %v607, 64
      %v1182 = vpop.permute.xlu0 %1181
      %1183 = vrot.lane.b32.xlu0 %v608, 64
      %v1184 = vpop.permute.xlu0 %1183
      %v1221 = vsel %vm308, %v387, %v682
      %v1222 = vsel %vm308, %v388, %v684
      %v1223 = vsel %vm308, %v389, %v686
      %v1224 = vsel %vm308, %v390, %v688
      %v1225 = vsel %vm308, %v391, %v690
      %v1226 = vsel %vm308, %v392, %v692
      %v1227 = vsel %vm308, %v393, %v694
      %v1228 = vsel %vm308, %v394, %v696
      %v1229 = vsel %vm308, %v395, %v698
      %v1230 = vsel %vm308, %v396, %v700
      %v1231 = vsel %vm308, %v397, %v702
      %v1232 = vsel %vm308, %v398, %v704
      %v1233 = vsel %vm308, %v399, %v706
      %v1234 = vsel %vm308, %v400, %v708
      %v1235 = vsel %vm308, %v401, %v710
      %v1236 = vsel %vm308, %v402, %v712
      %v1237 = vsel %vm308, %v403, %v714
      %v1238 = vsel %vm308, %v404, %v716
      %v1239 = vsel %vm308, %v405, %v718
      %v1240 = vsel %vm308, %v406, %v720
      %v1241 = vsel %vm308, %v407, %v722
      %v1242 = vsel %vm308, %v408, %v724
      %v1243 = vsel %vm308, %v409, %v726
      %v1244 = vsel %vm308, %v410, %v728
      %v1245 = vsel %vm308, %v411, %v730
      %v1246 = vsel %vm308, %v412, %v732
      %v1247 = vsel %vm308, %v413, %v734
      %v1248 = vsel %vm308, %v414, %v736
      %v1249 = vsel %vm308, %v415, %v738
      %v1250 = vsel %vm308, %v416, %v740
      %v1251 = vsel %vm308, %v417, %v742
      %v1252 = vsel %vm308, %v418, %v744
      %v1253 = vsel %vm308, %v419, %v746
      %v1254 = vsel %vm308, %v420, %v748
      %v1255 = vsel %vm308, %v421, %v750
      %v1256 = vsel %vm308, %v422, %v752
      %v1257 = vsel %vm308, %v459, %v826
      %v1258 = vsel %vm308, %v460, %v828
      %v1259 = vsel %vm308, %v461, %v830
      %v1260 = vsel %vm308, %v462, %v832
      %v1261 = vsel %vm308, %v463, %v834
      %v1262 = vsel %vm308, %v464, %v836
      %v1263 = vsel %vm308, %v465, %v838
      %v1264 = vsel %vm308, %v466, %v840
      %v1265 = vsel %vm308, %v467, %v842
      %v1266 = vsel %vm308, %v468, %v844
      %v1267 = vsel %vm308, %v469, %v846
      %v1268 = vsel %vm308, %v470, %v848
      %v1269 = vsel %vm308, %v471, %v850
      %v1270 = vsel %vm308, %v472, %v852
      %v1271 = vsel %vm308, %v473, %v854
      %v1272 = vsel %vm308, %v474, %v856
      %v1273 = vsel %vm308, %v475, %v858
      %v1274 = vsel %vm308, %v476, %v860
      %v1275 = vsel %vm308, %v477, %v862
      %v1276 = vsel %vm308, %v478, %v864
      %v1277 = vsel %vm308, %v479, %v866
      %v1278 = vsel %vm308, %v480, %v868
      %v1279 = vsel %vm308, %v481, %v870
      %v1280 = vsel %vm308, %v482, %v872
      %v1281 = vsel %vm308, %v483, %v874
      %v1282 = vsel %vm308, %v484, %v876
      %v1283 = vsel %vm308, %v485, %v878
      %v1284 = vsel %vm308, %v486, %v880
      %v1285 = vsel %vm308, %v487, %v882
      %v1286 = vsel %vm308, %v488, %v884
      %v1287 = vsel %vm308, %v489, %v886
      %v1288 = vsel %vm308, %v490, %v888
      %v1289 = vsel %vm308, %v491, %v890
      %v1290 = vsel %vm308, %v492, %v892
      %v1291 = vsel %vm308, %v493, %v894
      %v1292 = vsel %vm308, %v494, %v896
      %v1293 = vsel %vm308, %v498, %v970
      %v1294 = vsel %vm308, %v499, %v972
      %v1295 = vsel %vm308, %v500, %v974
      %v1296 = vsel %vm308, %v501, %v976
      %v1297 = vsel %vm308, %v502, %v978
      %v1298 = vsel %vm308, %v503, %v980
      %v1299 = vsel %vm308, %v504, %v982
      %v1300 = vsel %vm308, %v505, %v984
      %v1301 = vsel %vm308, %v506, %v986
      %v1302 = vsel %vm308, %v507, %v988
      %v1303 = vsel %vm308, %v508, %v990
      %v1304 = vsel %vm308, %v509, %v992
      %v1305 = vsel %vm308, %v510, %v994
      %v1306 = vsel %vm308, %v511, %v996
      %v1307 = vsel %vm308, %v512, %v998
      %v1308 = vsel %vm308, %v513, %v1000
      %v1309 = vsel %vm308, %v514, %v1002
      %v1310 = vsel %vm308, %v515, %v1004
      %v1311 = vsel %vm308, %v516, %v1006
      %v1312 = vsel %vm308, %v517, %v1008
      %v1313 = vsel %vm308, %v518, %v1010
      %v1314 = vsel %vm308, %v519, %v1012
      %v1315 = vsel %vm308, %v520, %v1014
      %v1316 = vsel %vm308, %v521, %v1016
      %v1317 = vsel %vm308, %v522, %v1018
      %v1318 = vsel %vm308, %v523, %v1020
      %v1319 = vsel %vm308, %v524, %v1022
      %v1320 = vsel %vm308, %v525, %v1024
      %v1321 = vsel %vm308, %v526, %v1026
      %v1322 = vsel %vm308, %v527, %v1028
      %v1323 = vsel %vm308, %v528, %v1030
      %v1324 = vsel %vm308, %v529, %v1032
      %v1325 = vsel %vm308, %v530, %v1034
      %v1326 = vsel %vm308, %v531, %v1036
      %v1327 = vsel %vm308, %v532, %v1038
      %v1328 = vsel %vm308, %v533, %v1040
      %v1329 = vsel %vm308, %v536, %v1114
      %v1330 = vsel %vm308, %v537, %v1116
      %v1331 = vsel %vm308, %v538, %v1118
      %v1332 = vsel %vm308, %v539, %v1120
      %v1333 = vsel %vm308, %v540, %v1122
      %v1334 = vsel %vm308, %v541, %v1124
      %v1335 = vsel %vm308, %v542, %v1126
      %v1336 = vsel %vm308, %v543, %v1128
      %v1337 = vsel %vm308, %v544, %v1130
      %v1338 = vsel %vm308, %v545, %v1132
      %v1339 = vsel %vm308, %v546, %v1134
      %v1340 = vsel %vm308, %v547, %v1136
      %v1341 = vsel %vm308, %v548, %v1138
      %v1342 = vsel %vm308, %v549, %v1140
      %v1343 = vsel %vm308, %v550, %v1142
      %v1344 = vsel %vm308, %v551, %v1144
      %v1345 = vsel %vm308, %v552, %v1146
      %v1346 = vsel %vm308, %v553, %v1148
      %v1347 = vsel %vm308, %v554, %v1150
      %v1348 = vsel %vm308, %v555, %v1152
      %v1349 = vsel %vm308, %v556, %v1154
      %v1350 = vsel %vm308, %v557, %v1156
      %v1351 = vsel %vm308, %v558, %v1158
      %v1352 = vsel %vm308, %v559, %v1160
      %v1353 = vsel %vm308, %v560, %v1162
      %v1354 = vsel %vm308, %v561, %v1164
      %v1355 = vsel %vm308, %v562, %v1166
      %v1356 = vsel %vm308, %v563, %v1168
      %v1357 = vsel %vm308, %v564, %v1170
      %v1358 = vsel %vm308, %v565, %v1172
      %v1359 = vsel %vm308, %v566, %v1174
      %v1360 = vsel %vm308, %v567, %v1176
      %v1361 = vsel %vm308, %v568, %v1178
      %v1362 = vsel %vm308, %v570, %v1180
      %v1363 = vsel %vm308, %v571, %v1182
      %v1364 = vsel %vm308, %v572, %v1184
      %v1365 = vpack.c.bf16 %v1222, %v1221
      %v1366 = vpack.c.bf16 %v1258, %v1257
      %v1367 = vpack.c.bf16 %v1294, %v1293
      %v1368 = vpack.c.bf16 %v1330, %v1329
      %v1369 = vpack.c.bf16 %v610, %v609
      %v1370 = vpack.c.bf16 %v1224, %v1223
      %v1371 = vpack.c.bf16 %v1260, %v1259
      %v1372 = vpack.c.bf16 %v1296, %v1295
      %v1373 = vpack.c.bf16 %v1332, %v1331
      %v1374 = vpack.c.bf16 %v612, %v611
      %v1375 = vpack.c.bf16 %v1226, %v1225
      %v1376 = vpack.c.bf16 %v1262, %v1261
      %v1377 = vpack.c.bf16 %v1298, %v1297
      %v1378 = vpack.c.bf16 %v1334, %v1333
      %v1379 = vpack.c.bf16 %v614, %v613
      %v1380 = vpack.c.bf16 %v1228, %v1227
      %v1381 = vpack.c.bf16 %v1264, %v1263
      %v1382 = vpack.c.bf16 %v1300, %v1299
      %v1383 = vpack.c.bf16 %v1336, %v1335
      %v1384 = vpack.c.bf16 %v616, %v615
      %v1385 = vpack.c.bf16 %v1230, %v1229
      %v1386 = vpack.c.bf16 %v1266, %v1265
      %v1387 = vpack.c.bf16 %v1302, %v1301
      %v1388 = vpack.c.bf16 %v1338, %v1337
      %v1389 = vpack.c.bf16 %v618, %v617
      %v1390 = vpack.c.bf16 %v1232, %v1231
      %v1391 = vpack.c.bf16 %v1268, %v1267
      %v1392 = vpack.c.bf16 %v1304, %v1303
      %v1393 = vpack.c.bf16 %v1340, %v1339
      %v1394 = vpack.c.bf16 %v620, %v619
      %v1395 = vpack.c.bf16 %v1234, %v1233
      %v1396 = vpack.c.bf16 %v1270, %v1269
      %v1397 = vpack.c.bf16 %v1306, %v1305
      %v1398 = vpack.c.bf16 %v1342, %v1341
      %v1399 = vpack.c.bf16 %v622, %v621
      %v1400 = vpack.c.bf16 %v1236, %v1235
      %v1401 = vpack.c.bf16 %v1272, %v1271
      %v1402 = vpack.c.bf16 %v1308, %v1307
      %v1403 = vpack.c.bf16 %v1344, %v1343
      %v1404 = vpack.c.bf16 %v624, %v623
      %v1405 = vpack.c.bf16 %v1238, %v1237
      %v1406 = vpack.c.bf16 %v1274, %v1273
      %v1407 = vpack.c.bf16 %v1310, %v1309
      %v1408 = vpack.c.bf16 %v1346, %v1345
      %v1409 = vpack.c.bf16 %v626, %v625
      %v1410 = vpack.c.bf16 %v1240, %v1239
      %v1411 = vpack.c.bf16 %v1276, %v1275
      %v1412 = vpack.c.bf16 %v1312, %v1311
      %v1413 = vpack.c.bf16 %v1348, %v1347
      %v1414 = vpack.c.bf16 %v628, %v627
      %v1415 = vpack.c.bf16 %v1242, %v1241
      %v1416 = vpack.c.bf16 %v1278, %v1277
      %v1417 = vpack.c.bf16 %v1314, %v1313
      %v1418 = vpack.c.bf16 %v1350, %v1349
      %v1419 = vpack.c.bf16 %v630, %v629
      %v1420 = vpack.c.bf16 %v1244, %v1243
      %v1421 = vpack.c.bf16 %v1280, %v1279
      %v1422 = vpack.c.bf16 %v1316, %v1315
      %v1423 = vpack.c.bf16 %v1352, %v1351
      %v1424 = vpack.c.bf16 %v632, %v631
      %v1425 = vpack.c.bf16 %v1246, %v1245
      %v1426 = vpack.c.bf16 %v1282, %v1281
      %v1427 = vpack.c.bf16 %v1318, %v1317
      %v1428 = vpack.c.bf16 %v1354, %v1353
      %v1429 = vpack.c.bf16 %v634, %v633
      %v1430 = vpack.c.bf16 %v1248, %v1247
      %v1431 = vpack.c.bf16 %v1284, %v1283
      %v1432 = vpack.c.bf16 %v1320, %v1319
      %v1433 = vpack.c.bf16 %v1356, %v1355
      %v1434 = vpack.c.bf16 %v636, %v635
      %v1435 = vpack.c.bf16 %v1250, %v1249
      %v1436 = vpack.c.bf16 %v1286, %v1285
      %v1437 = vpack.c.bf16 %v1322, %v1321
      %v1438 = vpack.c.bf16 %v1358, %v1357
      %v1439 = vpack.c.bf16 %v638, %v637
      %v1440 = vpack.c.bf16 %v1252, %v1251
      %v1441 = vpack.c.bf16 %v1288, %v1287
      %v1442 = vpack.c.bf16 %v1324, %v1323
      %v1443 = vpack.c.bf16 %v1360, %v1359
      %v1444 = vpack.c.bf16 %v640, %v639
      %v1445 = vpack.c.bf16 %v1254, %v1253
      %v1446 = vpack.c.bf16 %v1290, %v1289
      %v1447 = vpack.c.bf16 %v1326, %v1325
      %v1448 = vpack.c.bf16 %v1362, %v1361
      %v1449 = vpack.c.bf16 %v642, %v641
      %v1450 = vpack.c.bf16 %v1256, %v1255
      %v1451 = vpack.c.bf16 %v1292, %v1291
      %v1452 = vpack.c.bf16 %v1328, %v1327
      %v1453 = vpack.c.bf16 %v1364, %v1363
      %v1454 = vpack.c.bf16 %v644, %v643
      %v1455 = vld [vmem:[%s2] sm:$0xf]
      %v1456 = vld [vmem:[%s2 + $0x4] sm:$0xf]
      %v1457 = vld [vmem:[%s2 + $0x8] sm:$0xf]
      %v1458 = vld [vmem:[%s2 + $0xc] sm:$0xf]
      %v1459 = vld [vmem:[%s2 + $0x10] sm:$0xf]
      %v1460 = vld [vmem:[%s2 + $0x14] sm:$0xf]
      %v1461 = vld [vmem:[%s2 + $0x18] sm:$0xf]
      %v1462 = vld [vmem:[%s2 + $0x1c] sm:$0xf]
      %v1463 = vld [vmem:[%s2 + $0x20] sm:$0xf]
      %v1464 = vld [vmem:[%s2 + $0x24] sm:$0xf]
      %v1465 = vld [vmem:[%s2 + $0x28] sm:$0xf]
      %v1466 = vld [vmem:[%s2 + $0x2c] sm:$0xf]
      %v1467 = vld [vmem:[%s2 + $0x30] sm:$0xf]
      %v1468 = vld [vmem:[%s2 + $0x34] sm:$0xf]
      %v1469 = vld [vmem:[%s2 + $0x38] sm:$0xf]
      %v1470 = vld [vmem:[%s2 + $0x3c] sm:$0xf]
      %v1471 = vld [vmem:[%s2 + $0x40] sm:$0xf]
      %v1472 = vld [vmem:[%s2 + $0x44] sm:$0xf]
      %v1473 = vld [vmem:[%s2 + $0x48] sm:$0xf]
      %v1474 = vld [vmem:[%s2 + $0x4c] sm:$0xf]
      %v1475 = vld [vmem:[%s2 + $0x50] sm:$0xf]
      %v1476 = vld [vmem:[%s2 + $0x54] sm:$0xf]
      %v1477 = vld [vmem:[%s2 + $0x58] sm:$0xf]
      %v1478 = vld [vmem:[%s2 + $0x5c] sm:$0xf]
      %v1479 = vld [vmem:[%s2 + $0x60] sm:$0xf]
      %v1480 = vld [vmem:[%s2 + $0x64] sm:$0xf]
      %v1481 = vld [vmem:[%s2 + $0x68] sm:$0xf]
      %v1482 = vld [vmem:[%s2 + $0x6c] sm:$0xf]
      %v1483 = vld [vmem:[%s2 + $0x70] sm:$0xf]
      %v1484 = vld [vmem:[%s2 + $0x74] sm:$0xf]
      %v1485 = vld [vmem:[%s2 + $0x78] sm:$0xf]
      %v1486 = vld [vmem:[%s2 + $0x7c] sm:$0xf]
      %v1487 = vld [vmem:[%s2 + $0x80] sm:$0xf]
      %v1488 = vld [vmem:[%s2 + $0x84] sm:$0xf]
      %v1489 = vld [vmem:[%s2 + $0x88] sm:$0xf]
      %v1490 = vld [vmem:[%s2 + $0x8c] sm:$0xf]
      %v1491 = vld [vmem:[%s2 + $0x90] sm:$0xf]
      %v1492 = vld [vmem:[%s2 + $0x94] sm:$0xf]
      %v1493 = vld [vmem:[%s2 + $0x98] sm:$0xf]
      %v1494 = vld [vmem:[%s2 + $0x9c] sm:$0xf]
      %v1495 = vld [vmem:[%s2 + $0xa0] sm:$0xf]
      %v1496 = vld [vmem:[%s2 + $0xa4] sm:$0xf]
      %v1497 = vld [vmem:[%s2 + $0xa8] sm:$0xf]
      %v1498 = vld [vmem:[%s2 + $0xac] sm:$0xf]
      %v1499 = vld [vmem:[%s2 + $0xb0] sm:$0xf]
      %v1500 = vld [vmem:[%s2 + $0xb4] sm:$0xf]
      %v1501 = vld [vmem:[%s2 + $0xb8] sm:$0xf]
      %v1502 = vld [vmem:[%s2 + $0xbc] sm:$0xf]
      %v1503 = vld [vmem:[%s2 + $0xc0] sm:$0xf]
      %v1504 = vld [vmem:[%s2 + $0xc4] sm:$0xf]
      %v1505 = vld [vmem:[%s2 + $0xc8] sm:$0xf]
      %v1506 = vld [vmem:[%s2 + $0xcc] sm:$0xf]
      %v1507 = vld [vmem:[%s2 + $0xd0] sm:$0xf]
      %v1508 = vld [vmem:[%s2 + $0xd4] sm:$0xf]
      %v1509 = vld [vmem:[%s2 + $0xd8] sm:$0xf]
      %v1510 = vld [vmem:[%s2 + $0xdc] sm:$0xf]
      %v1511 = vld [vmem:[%s2 + $0xe0] sm:$0xf]
      %v1512 = vld [vmem:[%s2 + $0xe4] sm:$0xf]
      %v1513 = vld [vmem:[%s2 + $0xe8] sm:$0xf]
      %v1514 = vld [vmem:[%s2 + $0xec] sm:$0xf]
      %v1515 = vld [vmem:[%s2 + $0xf0] sm:$0xf]
      %v1516 = vld [vmem:[%s2 + $0xf4] sm:$0xf]
      %v1517 = vld [vmem:[%s2 + $0xf8] sm:$0xf]
      %v1518 = vld [vmem:[%s2 + $0xfc] sm:$0xf]
      %v1519 = vld [vmem:[%s2 + $0x100] sm:$0xf]
      %v1520 = vld [vmem:[%s2 + $0x104] sm:$0xf]
      %v1521 = vld [vmem:[%s2 + $0x108] sm:$0xf]
      %v1522 = vld [vmem:[%s2 + $0x10c] sm:$0xf]
      %v1523 = vld [vmem:[%s2 + $0x110] sm:$0xf]
      %v1524 = vld [vmem:[%s2 + $0x114] sm:$0xf]
      %v1525 = vld [vmem:[%s2 + $0x118] sm:$0xf]
      %v1526 = vld [vmem:[%s2 + $0x11c] sm:$0xf]
      %v1599 = vunpack.c.l.b16 %v1455
      %v1600 = vunpack.c.l.b16 %v1456
      %v1601 = vunpack.c.l.b16 %v1457
      %v1602 = vunpack.c.l.b16 %v1458
      %v1603 = vunpack.c.l.b16 %v1459
      %v1604 = vunpack.c.l.b16 %v1460
      %v1605 = vunpack.c.l.b16 %v1461
      %v1606 = vunpack.c.l.b16 %v1462
      %v1607 = vunpack.c.l.b16 %v1463
      %v1608 = vunpack.c.l.b16 %v1464
      %v1609 = vunpack.c.l.b16 %v1465
      %v1610 = vunpack.c.l.b16 %v1466
      %v1611 = vunpack.c.l.b16 %v1467
      %v1612 = vunpack.c.l.b16 %v1468
      %v1613 = vunpack.c.l.b16 %v1469
      %v1614 = vunpack.c.l.b16 %v1470
      %v1615 = vunpack.c.l.b16 %v1471
      %v1616 = vunpack.c.l.b16 %v1472
      %v1617 = vunpack.c.l.b16 %v1473
      %v1618 = vunpack.c.l.b16 %v1474
      %v1619 = vunpack.c.l.b16 %v1475
      %v1620 = vunpack.c.l.b16 %v1476
      %v1621 = vunpack.c.l.b16 %v1477
      %v1622 = vunpack.c.l.b16 %v1478
      %v1623 = vunpack.c.l.b16 %v1479
      %v1624 = vunpack.c.l.b16 %v1480
      %v1625 = vunpack.c.l.b16 %v1481
      %v1626 = vunpack.c.l.b16 %v1482
      %v1627 = vunpack.c.l.b16 %v1483
      %v1628 = vunpack.c.l.b16 %v1484
      %v1629 = vunpack.c.l.b16 %v1485
      %v1630 = vunpack.c.l.b16 %v1486
      %v1631 = vunpack.c.l.b16 %v1487
      %v1632 = vunpack.c.l.b16 %v1488
      %v1633 = vunpack.c.l.b16 %v1489
      %v1634 = vunpack.c.l.b16 %v1490
      %v1635 = vunpack.c.l.b16 %v1491
      %v1636 = vunpack.c.l.b16 %v1492
      %v1637 = vunpack.c.l.b16 %v1493
      %v1638 = vunpack.c.l.b16 %v1494
      %v1639 = vunpack.c.l.b16 %v1495
      %v1640 = vunpack.c.l.b16 %v1496
      %v1641 = vunpack.c.l.b16 %v1497
      %v1642 = vunpack.c.l.b16 %v1498
      %v1643 = vunpack.c.l.b16 %v1499
      %v1644 = vunpack.c.l.b16 %v1500
      %v1645 = vunpack.c.l.b16 %v1501
      %v1646 = vunpack.c.l.b16 %v1502
      %v1647 = vunpack.c.l.b16 %v1503
      %v1648 = vunpack.c.l.b16 %v1504
      %v1649 = vunpack.c.l.b16 %v1505
      %v1650 = vunpack.c.l.b16 %v1506
      %v1651 = vunpack.c.l.b16 %v1507
      %v1652 = vunpack.c.l.b16 %v1508
      %v1653 = vunpack.c.l.b16 %v1509
      %v1654 = vunpack.c.l.b16 %v1510
      %v1655 = vunpack.c.l.b16 %v1511
      %v1656 = vunpack.c.l.b16 %v1512
      %v1657 = vunpack.c.l.b16 %v1513
      %v1658 = vunpack.c.l.b16 %v1514
      %v1659 = vunpack.c.l.b16 %v1515
      %v1660 = vunpack.c.l.b16 %v1516
      %v1661 = vunpack.c.l.b16 %v1517
      %v1662 = vunpack.c.l.b16 %v1518
      %v1663 = vunpack.c.l.b16 %v1519
      %v1664 = vunpack.c.l.b16 %v1520
      %v1665 = vunpack.c.l.b16 %v1521
      %v1666 = vunpack.c.l.b16 %v1522
      %v1667 = vunpack.c.l.b16 %v1523
      %v1668 = vunpack.c.l.b16 %v1524
      %v1669 = vunpack.c.l.b16 %v1525
      %v1670 = vunpack.c.l.b16 %v1526
      %v1671 = vpack.c.b16 %v1600, %v1599
      %v1672 = vpack.c.b16 %v1602, %v1601
      %v1673 = vpack.c.b16 %v1604, %v1603
      %v1674 = vpack.c.b16 %v1606, %v1605
      %v1675 = vpack.c.b16 %v1608, %v1607
      %v1676 = vpack.c.b16 %v1610, %v1609
      %v1677 = vpack.c.b16 %v1612, %v1611
      %v1678 = vpack.c.b16 %v1614, %v1613
      %v1679 = vpack.c.b16 %v1616, %v1615
      %v1680 = vpack.c.b16 %v1618, %v1617
      %v1681 = vpack.c.b16 %v1620, %v1619
      %v1682 = vpack.c.b16 %v1622, %v1621
      %v1683 = vpack.c.b16 %v1624, %v1623
      %v1684 = vpack.c.b16 %v1626, %v1625
      %v1685 = vpack.c.b16 %v1628, %v1627
      %v1686 = vpack.c.b16 %v1630, %v1629
      %v1687 = vpack.c.b16 %v1632, %v1631
      %v1688 = vpack.c.b16 %v1634, %v1633
      %v1689 = vpack.c.b16 %v1636, %v1635
      %v1690 = vpack.c.b16 %v1638, %v1637
      %v1691 = vpack.c.b16 %v1640, %v1639
      %v1692 = vpack.c.b16 %v1642, %v1641
      %v1693 = vpack.c.b16 %v1644, %v1643
      %v1694 = vpack.c.b16 %v1646, %v1645
      %v1695 = vpack.c.b16 %v1648, %v1647
      %v1696 = vpack.c.b16 %v1650, %v1649
      %v1697 = vpack.c.b16 %v1652, %v1651
      %v1698 = vpack.c.b16 %v1654, %v1653
      %v1699 = vpack.c.b16 %v1656, %v1655
      %v1700 = vpack.c.b16 %v1658, %v1657
      %v1701 = vpack.c.b16 %v1660, %v1659
      %v1702 = vpack.c.b16 %v1662, %v1661
      %v1703 = vpack.c.b16 %v1664, %v1663
      %v1704 = vpack.c.b16 %v1666, %v1665
      %v1705 = vpack.c.b16 %v1668, %v1667
      %v1706 = vpack.c.b16 %v1670, %v1669
      %v1744 = vsel %vm308, %v1369, 0
      %v1747 = vsel %vm308, %v1374, 0
      %v1750 = vsel %vm308, %v1379, 0
      %v1753 = vsel %vm308, %v1384, 0
      %v1756 = vsel %vm308, %v1389, 0
      %v1759 = vsel %vm308, %v1394, 0
      %v1762 = vsel %vm308, %v1399, 0
      %v1765 = vsel %vm308, %v1404, 0
      %v1768 = vsel %vm308, %v1409, 0
      %v1771 = vsel %vm308, %v1414, 0
      %v1774 = vsel %vm308, %v1419, 0
      %v1777 = vsel %vm308, %v1424, 0
      %v1780 = vsel %vm308, %v1429, 0
      %v1783 = vsel %vm308, %v1434, 0
      %v1786 = vsel %vm308, %v1439, 0
      %v1789 = vsel %vm308, %v1444, 0
      %v1792 = vsel %vm308, %v1449, 0
      %v1795 = vsel %vm308, %v1454, 0
      %1797 = vmatpush.bf16.msra.mxu0 %v1678
      %1798 = vmatpush.bf16.msra.mxu0 %v1677
      %1799 = vmatpush.bf16.msra.mxu0 %v1676
      %1800 = vmatpush.bf16.msra.mxu0 %v1675
      %1801 = vmatpush.bf16.msra.mxu0 %v1674
      %1802 = vmatpush.bf16.msra.mxu0 %v1673
      %1803 = vmatpush.bf16.msra.mxu0 %v1672
      %1804 = vmatpush.bf16.msra.mxu0 %v1671
      %1805 = vmatmul.bf16.gmra.mxu0 %v1365
      %v1806 = vpop.f32.mrf.mxu0
      %v1807 = vadd.f32 0.0, %v1806
      %v1808 = vpop.f32.mrf.mxu0
      %v1809 = vadd.f32 0.0, %v1808
      %1810 = vmatmul.bf16.gmra.mxu0 %v1370
      %v1811 = vpop.f32.mrf.mxu0
      %v1812 = vadd.f32 0.0, %v1811
      %v1813 = vpop.f32.mrf.mxu0
      %v1814 = vadd.f32 0.0, %v1813
      %1815 = vmatmul.bf16.gmra.mxu0 %v1375
      %v1816 = vpop.f32.mrf.mxu0
      %v1817 = vadd.f32 0.0, %v1816
      %v1818 = vpop.f32.mrf.mxu0
      %v1819 = vadd.f32 0.0, %v1818
      %1820 = vmatmul.bf16.gmra.mxu0 %v1380
      %v1821 = vpop.f32.mrf.mxu0
      %v1822 = vadd.f32 0.0, %v1821
      %v1823 = vpop.f32.mrf.mxu0
      %v1824 = vadd.f32 0.0, %v1823
      %1825 = vmatmul.bf16.gmra.mxu0 %v1385
      %v1826 = vpop.f32.mrf.mxu0
      %v1827 = vadd.f32 0.0, %v1826
      %v1828 = vpop.f32.mrf.mxu0
      %v1829 = vadd.f32 0.0, %v1828
      %1830 = vmatmul.bf16.gmra.mxu0 %v1390
      %v1831 = vpop.f32.mrf.mxu0
      %v1832 = vadd.f32 0.0, %v1831
      %v1833 = vpop.f32.mrf.mxu0
      %v1834 = vadd.f32 0.0, %v1833
      %1835 = vmatmul.bf16.gmra.mxu0 %v1395
      %v1836 = vpop.f32.mrf.mxu0
      %v1837 = vadd.f32 0.0, %v1836
      %v1838 = vpop.f32.mrf.mxu0
      %v1839 = vadd.f32 0.0, %v1838
      %1840 = vmatmul.bf16.gmra.mxu0 %v1400
      %v1841 = vpop.f32.mrf.mxu0
      %v1842 = vadd.f32 0.0, %v1841
      %v1843 = vpop.f32.mrf.mxu0
      %v1844 = vadd.f32 0.0, %v1843
      %1845 = vmatmul.bf16.gmra.mxu0 %v1405
      %v1846 = vpop.f32.mrf.mxu0
      %v1847 = vadd.f32 0.0, %v1846
      %v1848 = vpop.f32.mrf.mxu0
      %v1849 = vadd.f32 0.0, %v1848
      %1850 = vmatmul.bf16.gmra.mxu0 %v1410
      %v1851 = vpop.f32.mrf.mxu0
      %v1852 = vadd.f32 0.0, %v1851
      %v1853 = vpop.f32.mrf.mxu0
      %v1854 = vadd.f32 0.0, %v1853
      %1855 = vmatmul.bf16.gmra.mxu0 %v1415
      %v1856 = vpop.f32.mrf.mxu0
      %v1857 = vadd.f32 0.0, %v1856
      %v1858 = vpop.f32.mrf.mxu0
      %v1859 = vadd.f32 0.0, %v1858
      %1860 = vmatmul.bf16.gmra.mxu0 %v1420
      %v1861 = vpop.f32.mrf.mxu0
      %v1862 = vadd.f32 0.0, %v1861
      %v1863 = vpop.f32.mrf.mxu0
      %v1864 = vadd.f32 0.0, %v1863
      %1865 = vmatmul.bf16.gmra.mxu0 %v1425
      %v1866 = vpop.f32.mrf.mxu0
      %v1867 = vadd.f32 0.0, %v1866
      %v1868 = vpop.f32.mrf.mxu0
      %v1869 = vadd.f32 0.0, %v1868
      %1870 = vmatmul.bf16.gmra.mxu0 %v1430
      %v1871 = vpop.f32.mrf.mxu0
      %v1872 = vadd.f32 0.0, %v1871
      %v1873 = vpop.f32.mrf.mxu0
      %v1874 = vadd.f32 0.0, %v1873
      %1875 = vmatmul.bf16.gmra.mxu0 %v1435
      %v1876 = vpop.f32.mrf.mxu0
      %v1877 = vadd.f32 0.0, %v1876
      %v1878 = vpop.f32.mrf.mxu0
      %v1879 = vadd.f32 0.0, %v1878
      %1880 = vmatmul.bf16.gmra.mxu0 %v1440
      %v1881 = vpop.f32.mrf.mxu0
      %v1882 = vadd.f32 0.0, %v1881
      %v1883 = vpop.f32.mrf.mxu0
      %v1884 = vadd.f32 0.0, %v1883
      %1885 = vmatmul.bf16.gmra.mxu0 %v1445
      %v1886 = vpop.f32.mrf.mxu0
      %v1887 = vadd.f32 0.0, %v1886
      %v1888 = vpop.f32.mrf.mxu0
      %v1889 = vadd.f32 0.0, %v1888
      %1890 = vmatmul.bf16.gmra.mxu0 %v1450
      %v1891 = vpop.f32.mrf.mxu0
      %v1892 = vadd.f32 0.0, %v1891
      %v1893 = vpop.f32.mrf.mxu0
      %v1894 = vadd.f32 0.0, %v1893
      %1895 = vdwg.mxu0
      %1896 = vmatpush.bf16.msra.mxu0 %v1686
      %1897 = vmatpush.bf16.msra.mxu0 %v1685
      %1898 = vmatpush.bf16.msra.mxu0 %v1684
      %1899 = vmatpush.bf16.msra.mxu0 %v1683
      %1900 = vmatpush.bf16.msra.mxu0 %v1682
      %1901 = vmatpush.bf16.msra.mxu0 %v1681
      %1902 = vmatpush.bf16.msra.mxu0 %v1680
      %1903 = vmatpush.bf16.msra.mxu0 %v1679
      %1904 = vmatmul.bf16.gmra.mxu0 %v1366
      %v1905 = vpop.f32.mrf.mxu0
      %v1906 = vadd.f32 %v1807, %v1905
      %v1907 = vpop.f32.mrf.mxu0
      %v1908 = vadd.f32 %v1809, %v1907
      %1909 = vmatmul.bf16.gmra.mxu0 %v1371
      %v1910 = vpop.f32.mrf.mxu0
      %v1911 = vadd.f32 %v1812, %v1910
      %v1912 = vpop.f32.mrf.mxu0
      %v1913 = vadd.f32 %v1814, %v1912
      %1914 = vmatmul.bf16.gmra.mxu0 %v1376
      %v1915 = vpop.f32.mrf.mxu0
      %v1916 = vadd.f32 %v1817, %v1915
      %v1917 = vpop.f32.mrf.mxu0
      %v1918 = vadd.f32 %v1819, %v1917
      %1919 = vmatmul.bf16.gmra.mxu0 %v1381
      %v1920 = vpop.f32.mrf.mxu0
      %v1921 = vadd.f32 %v1822, %v1920
      %v1922 = vpop.f32.mrf.mxu0
      %v1923 = vadd.f32 %v1824, %v1922
      %1924 = vmatmul.bf16.gmra.mxu0 %v1386
      %v1925 = vpop.f32.mrf.mxu0
      %v1926 = vadd.f32 %v1827, %v1925
      %v1927 = vpop.f32.mrf.mxu0
      %v1928 = vadd.f32 %v1829, %v1927
      %1929 = vmatmul.bf16.gmra.mxu0 %v1391
      %v1930 = vpop.f32.mrf.mxu0
      %v1931 = vadd.f32 %v1832, %v1930
      %v1932 = vpop.f32.mrf.mxu0
      %v1933 = vadd.f32 %v1834, %v1932
      %1934 = vmatmul.bf16.gmra.mxu0 %v1396
      %v1935 = vpop.f32.mrf.mxu0
      %v1936 = vadd.f32 %v1837, %v1935
      %v1937 = vpop.f32.mrf.mxu0
      %v1938 = vadd.f32 %v1839, %v1937
      %1939 = vmatmul.bf16.gmra.mxu0 %v1401
      %v1940 = vpop.f32.mrf.mxu0
      %v1941 = vadd.f32 %v1842, %v1940
      %v1942 = vpop.f32.mrf.mxu0
      %v1943 = vadd.f32 %v1844, %v1942
      %1944 = vmatmul.bf16.gmra.mxu0 %v1406
      %v1945 = vpop.f32.mrf.mxu0
      %v1946 = vadd.f32 %v1847, %v1945
      %v1947 = vpop.f32.mrf.mxu0
      %v1948 = vadd.f32 %v1849, %v1947
      %1949 = vmatmul.bf16.gmra.mxu0 %v1411
      %v1950 = vpop.f32.mrf.mxu0
      %v1951 = vadd.f32 %v1852, %v1950
      %v1952 = vpop.f32.mrf.mxu0
      %v1953 = vadd.f32 %v1854, %v1952
      %1954 = vmatmul.bf16.gmra.mxu0 %v1416
      %v1955 = vpop.f32.mrf.mxu0
      %v1956 = vadd.f32 %v1857, %v1955
      %v1957 = vpop.f32.mrf.mxu0
      %v1958 = vadd.f32 %v1859, %v1957
      %1959 = vmatmul.bf16.gmra.mxu0 %v1421
      %v1960 = vpop.f32.mrf.mxu0
      %v1961 = vadd.f32 %v1862, %v1960
      %v1962 = vpop.f32.mrf.mxu0
      %v1963 = vadd.f32 %v1864, %v1962
      %1964 = vmatmul.bf16.gmra.mxu0 %v1426
      %v1965 = vpop.f32.mrf.mxu0
      %v1966 = vadd.f32 %v1867, %v1965
      %v1967 = vpop.f32.mrf.mxu0
      %v1968 = vadd.f32 %v1869, %v1967
      %1969 = vmatmul.bf16.gmra.mxu0 %v1431
      %v1970 = vpop.f32.mrf.mxu0
      %v1971 = vadd.f32 %v1872, %v1970
      %v1972 = vpop.f32.mrf.mxu0
      %v1973 = vadd.f32 %v1874, %v1972
      %1974 = vmatmul.bf16.gmra.mxu0 %v1436
      %v1975 = vpop.f32.mrf.mxu0
      %v1976 = vadd.f32 %v1877, %v1975
      %v1977 = vpop.f32.mrf.mxu0
      %v1978 = vadd.f32 %v1879, %v1977
      %1979 = vmatmul.bf16.gmra.mxu0 %v1441
      %v1980 = vpop.f32.mrf.mxu0
      %v1981 = vadd.f32 %v1882, %v1980
      %v1982 = vpop.f32.mrf.mxu0
      %v1983 = vadd.f32 %v1884, %v1982
      %1984 = vmatmul.bf16.gmra.mxu0 %v1446
      %v1985 = vpop.f32.mrf.mxu0
      %v1986 = vadd.f32 %v1887, %v1985
      %v1987 = vpop.f32.mrf.mxu0
      %v1988 = vadd.f32 %v1889, %v1987
      %1989 = vmatmul.bf16.gmra.mxu0 %v1451
      %v1990 = vpop.f32.mrf.mxu0
      %v1991 = vadd.f32 %v1892, %v1990
      %v1992 = vpop.f32.mrf.mxu0
      %v1993 = vadd.f32 %v1894, %v1992
      %1994 = vdwg.mxu0
      %1995 = vmatpush.bf16.msra.mxu0 %v1694
      %1996 = vmatpush.bf16.msra.mxu0 %v1693
      %1997 = vmatpush.bf16.msra.mxu0 %v1692
      %1998 = vmatpush.bf16.msra.mxu0 %v1691
      %1999 = vmatpush.bf16.msra.mxu0 %v1690
      %2000 = vmatpush.bf16.msra.mxu0 %v1689
      %2001 = vmatpush.bf16.msra.mxu0 %v1688
      %2002 = vmatpush.bf16.msra.mxu0 %v1687
      %2003 = vmatmul.bf16.gmra.mxu0 %v1367
      %v2004 = vpop.f32.mrf.mxu0
      %v2005 = vadd.f32 %v1906, %v2004
      %v2006 = vpop.f32.mrf.mxu0
      %v2007 = vadd.f32 %v1908, %v2006
      %2008 = vmatmul.bf16.gmra.mxu0 %v1372
      %v2009 = vpop.f32.mrf.mxu0
      %v2010 = vadd.f32 %v1911, %v2009
      %v2011 = vpop.f32.mrf.mxu0
      %v2012 = vadd.f32 %v1913, %v2011
      %2013 = vmatmul.bf16.gmra.mxu0 %v1377
      %v2014 = vpop.f32.mrf.mxu0
      %v2015 = vadd.f32 %v1916, %v2014
      %v2016 = vpop.f32.mrf.mxu0
      %v2017 = vadd.f32 %v1918, %v2016
      %2018 = vmatmul.bf16.gmra.mxu0 %v1382
      %v2019 = vpop.f32.mrf.mxu0
      %v2020 = vadd.f32 %v1921, %v2019
      %v2021 = vpop.f32.mrf.mxu0
      %v2022 = vadd.f32 %v1923, %v2021
      %2023 = vmatmul.bf16.gmra.mxu0 %v1387
      %v2024 = vpop.f32.mrf.mxu0
      %v2025 = vadd.f32 %v1926, %v2024
      %v2026 = vpop.f32.mrf.mxu0
      %v2027 = vadd.f32 %v1928, %v2026
      %2028 = vmatmul.bf16.gmra.mxu0 %v1392
      %v2029 = vpop.f32.mrf.mxu0
      %v2030 = vadd.f32 %v1931, %v2029
      %v2031 = vpop.f32.mrf.mxu0
      %v2032 = vadd.f32 %v1933, %v2031
      %2033 = vmatmul.bf16.gmra.mxu0 %v1397
      %v2034 = vpop.f32.mrf.mxu0
      %v2035 = vadd.f32 %v1936, %v2034
      %v2036 = vpop.f32.mrf.mxu0
      %v2037 = vadd.f32 %v1938, %v2036
      %2038 = vmatmul.bf16.gmra.mxu0 %v1402
      %v2039 = vpop.f32.mrf.mxu0
      %v2040 = vadd.f32 %v1941, %v2039
      %v2041 = vpop.f32.mrf.mxu0
      %v2042 = vadd.f32 %v1943, %v2041
      %2043 = vmatmul.bf16.gmra.mxu0 %v1407
      %v2044 = vpop.f32.mrf.mxu0
      %v2045 = vadd.f32 %v1946, %v2044
      %v2046 = vpop.f32.mrf.mxu0
      %v2047 = vadd.f32 %v1948, %v2046
      %2048 = vmatmul.bf16.gmra.mxu0 %v1412
      %v2049 = vpop.f32.mrf.mxu0
      %v2050 = vadd.f32 %v1951, %v2049
      %v2051 = vpop.f32.mrf.mxu0
      %v2052 = vadd.f32 %v1953, %v2051
      %2053 = vmatmul.bf16.gmra.mxu0 %v1417
      %v2054 = vpop.f32.mrf.mxu0
      %v2055 = vadd.f32 %v1956, %v2054
      %v2056 = vpop.f32.mrf.mxu0
      %v2057 = vadd.f32 %v1958, %v2056
      %2058 = vmatmul.bf16.gmra.mxu0 %v1422
      %v2059 = vpop.f32.mrf.mxu0
      %v2060 = vadd.f32 %v1961, %v2059
      %v2061 = vpop.f32.mrf.mxu0
      %v2062 = vadd.f32 %v1963, %v2061
      %2063 = vmatmul.bf16.gmra.mxu0 %v1427
      %v2064 = vpop.f32.mrf.mxu0
      %v2065 = vadd.f32 %v1966, %v2064
      %v2066 = vpop.f32.mrf.mxu0
      %v2067 = vadd.f32 %v1968, %v2066
      %2068 = vmatmul.bf16.gmra.mxu0 %v1432
      %v2069 = vpop.f32.mrf.mxu0
      %v2070 = vadd.f32 %v1971, %v2069
      %v2071 = vpop.f32.mrf.mxu0
      %v2072 = vadd.f32 %v1973, %v2071
      %2073 = vmatmul.bf16.gmra.mxu0 %v1437
      %v2074 = vpop.f32.mrf.mxu0
      %v2075 = vadd.f32 %v1976, %v2074
      %v2076 = vpop.f32.mrf.mxu0
      %v2077 = vadd.f32 %v1978, %v2076
      %2078 = vmatmul.bf16.gmra.mxu0 %v1442
      %v2079 = vpop.f32.mrf.mxu0
      %v2080 = vadd.f32 %v1981, %v2079
      %v2081 = vpop.f32.mrf.mxu0
      %v2082 = vadd.f32 %v1983, %v2081
      %2083 = vmatmul.bf16.gmra.mxu0 %v1447
      %v2084 = vpop.f32.mrf.mxu0
      %v2085 = vadd.f32 %v1986, %v2084
      %v2086 = vpop.f32.mrf.mxu0
      %v2087 = vadd.f32 %v1988, %v2086
      %2088 = vmatmul.bf16.gmra.mxu0 %v1452
      %v2089 = vpop.f32.mrf.mxu0
      %v2090 = vadd.f32 %v1991, %v2089
      %v2091 = vpop.f32.mrf.mxu0
      %v2092 = vadd.f32 %v1993, %v2091
      %2093 = vdwg.mxu0
      %2094 = vmatpush.bf16.msra.mxu0 %v1702
      %2095 = vmatpush.bf16.msra.mxu0 %v1701
      %2096 = vmatpush.bf16.msra.mxu0 %v1700
      %2097 = vmatpush.bf16.msra.mxu0 %v1699
      %2098 = vmatpush.bf16.msra.mxu0 %v1698
      %2099 = vmatpush.bf16.msra.mxu0 %v1697
      %2100 = vmatpush.bf16.msra.mxu0 %v1696
      %2101 = vmatpush.bf16.msra.mxu0 %v1695
      %2102 = vmatmul.bf16.gmra.mxu0 %v1368
      %v2103 = vpop.f32.mrf.mxu0
      %v2104 = vadd.f32 %v2005, %v2103
      %v2105 = vpop.f32.mrf.mxu0
      %v2106 = vadd.f32 %v2007, %v2105
      %2107 = vmatmul.bf16.gmra.mxu0 %v1373
      %v2108 = vpop.f32.mrf.mxu0
      %v2109 = vadd.f32 %v2010, %v2108
      %v2110 = vpop.f32.mrf.mxu0
      %v2111 = vadd.f32 %v2012, %v2110
      %2112 = vmatmul.bf16.gmra.mxu0 %v1378
      %v2113 = vpop.f32.mrf.mxu0
      %v2114 = vadd.f32 %v2015, %v2113
      %v2115 = vpop.f32.mrf.mxu0
      %v2116 = vadd.f32 %v2017, %v2115
      %2117 = vmatmul.bf16.gmra.mxu0 %v1383
      %v2118 = vpop.f32.mrf.mxu0
      %v2119 = vadd.f32 %v2020, %v2118
      %v2120 = vpop.f32.mrf.mxu0
      %v2121 = vadd.f32 %v2022, %v2120
      %2122 = vmatmul.bf16.gmra.mxu0 %v1388
      %v2123 = vpop.f32.mrf.mxu0
      %v2124 = vadd.f32 %v2025, %v2123
      %v2125 = vpop.f32.mrf.mxu0
      %v2126 = vadd.f32 %v2027, %v2125
      %2127 = vmatmul.bf16.gmra.mxu0 %v1393
      %v2128 = vpop.f32.mrf.mxu0
      %v2129 = vadd.f32 %v2030, %v2128
      %v2130 = vpop.f32.mrf.mxu0
      %v2131 = vadd.f32 %v2032, %v2130
      %2132 = vmatmul.bf16.gmra.mxu0 %v1398
      %v2133 = vpop.f32.mrf.mxu0
      %v2134 = vadd.f32 %v2035, %v2133
      %v2135 = vpop.f32.mrf.mxu0
      %v2136 = vadd.f32 %v2037, %v2135
      %2137 = vmatmul.bf16.gmra.mxu0 %v1403
      %v2138 = vpop.f32.mrf.mxu0
      %v2139 = vadd.f32 %v2040, %v2138
      %v2140 = vpop.f32.mrf.mxu0
      %v2141 = vadd.f32 %v2042, %v2140
      %2142 = vmatmul.bf16.gmra.mxu0 %v1408
      %v2143 = vpop.f32.mrf.mxu0
      %v2144 = vadd.f32 %v2045, %v2143
      %v2145 = vpop.f32.mrf.mxu0
      %v2146 = vadd.f32 %v2047, %v2145
      %2147 = vmatmul.bf16.gmra.mxu0 %v1413
      %v2148 = vpop.f32.mrf.mxu0
      %v2149 = vadd.f32 %v2050, %v2148
      %v2150 = vpop.f32.mrf.mxu0
      %v2151 = vadd.f32 %v2052, %v2150
      %2152 = vmatmul.bf16.gmra.mxu0 %v1418
      %v2153 = vpop.f32.mrf.mxu0
      %v2154 = vadd.f32 %v2055, %v2153
      %v2155 = vpop.f32.mrf.mxu0
      %v2156 = vadd.f32 %v2057, %v2155
      %2157 = vmatmul.bf16.gmra.mxu0 %v1423
      %v2158 = vpop.f32.mrf.mxu0
      %v2159 = vadd.f32 %v2060, %v2158
      %v2160 = vpop.f32.mrf.mxu0
      %v2161 = vadd.f32 %v2062, %v2160
      %2162 = vmatmul.bf16.gmra.mxu0 %v1428
      %v2163 = vpop.f32.mrf.mxu0
      %v2164 = vadd.f32 %v2065, %v2163
      %v2165 = vpop.f32.mrf.mxu0
      %v2166 = vadd.f32 %v2067, %v2165
      %2167 = vmatmul.bf16.gmra.mxu0 %v1433
      %v2168 = vpop.f32.mrf.mxu0
      %v2169 = vadd.f32 %v2070, %v2168
      %v2170 = vpop.f32.mrf.mxu0
      %v2171 = vadd.f32 %v2072, %v2170
      %2172 = vmatmul.bf16.gmra.mxu0 %v1438
      %v2173 = vpop.f32.mrf.mxu0
      %v2174 = vadd.f32 %v2075, %v2173
      %v2175 = vpop.f32.mrf.mxu0
      %v2176 = vadd.f32 %v2077, %v2175
      %2177 = vmatmul.bf16.gmra.mxu0 %v1443
      %v2178 = vpop.f32.mrf.mxu0
      %v2179 = vadd.f32 %v2080, %v2178
      %v2180 = vpop.f32.mrf.mxu0
      %v2181 = vadd.f32 %v2082, %v2180
      %2182 = vmatmul.bf16.gmra.mxu0 %v1448
      %v2183 = vpop.f32.mrf.mxu0
      %v2184 = vadd.f32 %v2085, %v2183
      %v2185 = vpop.f32.mrf.mxu0
      %v2186 = vadd.f32 %v2087, %v2185
      %2187 = vmatmul.bf16.gmra.mxu0 %v1453
      %v2188 = vpop.f32.mrf.mxu0
      %v2189 = vadd.f32 %v2090, %v2188
      %v2190 = vpop.f32.mrf.mxu0
      %v2191 = vadd.f32 %v2092, %v2190
      %2192 = vdwg.mxu0
      %2193 = vmatpush.bf16.msra.mxu0 0
      %2194 = vmatpush.bf16.msra.mxu0 0
      %2195 = vmatpush.bf16.msra.mxu0 0
      %2196 = vmatpush.bf16.msra.mxu0 0
      %2197 = vmatpush.bf16.msra.mxu0 %v1706
      %2198 = vmatpush.bf16.msra.mxu0 %v1705
      %2199 = vmatpush.bf16.msra.mxu0 %v1704
      %2200 = vmatpush.bf16.msra.mxu0 %v1703
      %2201 = vmatmul.bf16.gmra.mxu0 %v1744
      %v2202 = vpop.f32.mrf.mxu0
      %v2203 = vadd.f32 %v2104, %v2202
      %v2204 = vpop.f32.mrf.mxu0
      %v2205 = vadd.f32 %v2106, %v2204
      %2206 = vmatmul.bf16.gmra.mxu0 %v1747
      %v2207 = vpop.f32.mrf.mxu0
      %v2208 = vadd.f32 %v2109, %v2207
      %v2209 = vpop.f32.mrf.mxu0
      %v2210 = vadd.f32 %v2111, %v2209
      %2211 = vmatmul.bf16.gmra.mxu0 %v1750
      %v2212 = vpop.f32.mrf.mxu0
      %v2213 = vadd.f32 %v2114, %v2212
      %v2214 = vpop.f32.mrf.mxu0
      %v2215 = vadd.f32 %v2116, %v2214
      %2216 = vmatmul.bf16.gmra.mxu0 %v1753
      %v2217 = vpop.f32.mrf.mxu0
      %v2218 = vadd.f32 %v2119, %v2217
      %v2219 = vpop.f32.mrf.mxu0
      %v2220 = vadd.f32 %v2121, %v2219
      %2221 = vmatmul.bf16.gmra.mxu0 %v1756
      %v2222 = vpop.f32.mrf.mxu0
      %v2223 = vadd.f32 %v2124, %v2222
      %v2224 = vpop.f32.mrf.mxu0
      %v2225 = vadd.f32 %v2126, %v2224
      %2226 = vmatmul.bf16.gmra.mxu0 %v1759
      %v2227 = vpop.f32.mrf.mxu0
      %v2228 = vadd.f32 %v2129, %v2227
      %v2229 = vpop.f32.mrf.mxu0
      %v2230 = vadd.f32 %v2131, %v2229
      %2231 = vmatmul.bf16.gmra.mxu0 %v1762
      %v2232 = vpop.f32.mrf.mxu0
      %v2233 = vadd.f32 %v2134, %v2232
      %v2234 = vpop.f32.mrf.mxu0
      %v2235 = vadd.f32 %v2136, %v2234
      %2236 = vmatmul.bf16.gmra.mxu0 %v1765
      %v2237 = vpop.f32.mrf.mxu0
      %v2238 = vadd.f32 %v2139, %v2237
      %v2239 = vpop.f32.mrf.mxu0
      %v2240 = vadd.f32 %v2141, %v2239
      %2241 = vmatmul.bf16.gmra.mxu0 %v1768
      %v2242 = vpop.f32.mrf.mxu0
      %v2243 = vadd.f32 %v2144, %v2242
      %v2244 = vpop.f32.mrf.mxu0
      %v2245 = vadd.f32 %v2146, %v2244
      %2246 = vmatmul.bf16.gmra.mxu0 %v1771
      %v2247 = vpop.f32.mrf.mxu0
      %v2248 = vadd.f32 %v2149, %v2247
      %v2249 = vpop.f32.mrf.mxu0
      %v2250 = vadd.f32 %v2151, %v2249
      %2251 = vmatmul.bf16.gmra.mxu0 %v1774
      %v2252 = vpop.f32.mrf.mxu0
      %v2253 = vadd.f32 %v2154, %v2252
      %v2254 = vpop.f32.mrf.mxu0
      %v2255 = vadd.f32 %v2156, %v2254
      %2256 = vmatmul.bf16.gmra.mxu0 %v1777
      %v2257 = vpop.f32.mrf.mxu0
      %v2258 = vadd.f32 %v2159, %v2257
      %v2259 = vpop.f32.mrf.mxu0
      %v2260 = vadd.f32 %v2161, %v2259
      %2261 = vmatmul.bf16.gmra.mxu0 %v1780
      %v2262 = vpop.f32.mrf.mxu0
      %v2263 = vadd.f32 %v2164, %v2262
      %v2264 = vpop.f32.mrf.mxu0
      %v2265 = vadd.f32 %v2166, %v2264
      %2266 = vmatmul.bf16.gmra.mxu0 %v1783
      %v2267 = vpop.f32.mrf.mxu0
      %v2268 = vadd.f32 %v2169, %v2267
      %v2269 = vpop.f32.mrf.mxu0
      %v2270 = vadd.f32 %v2171, %v2269
      %2271 = vmatmul.bf16.gmra.mxu0 %v1786
      %v2272 = vpop.f32.mrf.mxu0
      %v2273 = vadd.f32 %v2174, %v2272
      %v2274 = vpop.f32.mrf.mxu0
      %v2275 = vadd.f32 %v2176, %v2274
      %2276 = vmatmul.bf16.gmra.mxu0 %v1789
      %v2277 = vpop.f32.mrf.mxu0
      %v2278 = vadd.f32 %v2179, %v2277
      %v2279 = vpop.f32.mrf.mxu0
      %v2280 = vadd.f32 %v2181, %v2279
      %2281 = vmatmul.bf16.gmra.mxu0 %v1792
      %v2282 = vpop.f32.mrf.mxu0
      %v2283 = vadd.f32 %v2184, %v2282
      %v2284 = vpop.f32.mrf.mxu0
      %v2285 = vadd.f32 %v2186, %v2284
      %2286 = vmatmul.bf16.gmra.mxu0 %v1795
      %v2287 = vpop.f32.mrf.mxu0
      %v2288 = vadd.f32 %v2189, %v2287
      %v2289 = vpop.f32.mrf.mxu0
      %v2290 = vadd.f32 %v2191, %v2289
      %2291 = vdwg.mxu0
      %v2292 = vld [vmem:[%s3] sm:$0x1]
      %v2294 = vperm.slane %v2292, 0
      %v2296 = vmul.f32 %v2203, %v2294
      %v2297 = vmul.f32 %v2205, %v2294
      %v2298 = vmul.f32 %v2208, %v2294
      %v2299 = vmul.f32 %v2210, %v2294
      %v2300 = vmul.f32 %v2213, %v2294
      %v2301 = vmul.f32 %v2215, %v2294
      %v2302 = vmul.f32 %v2218, %v2294
      %v2303 = vmul.f32 %v2220, %v2294
      %v2304 = vmul.f32 %v2223, %v2294
      %v2305 = vmul.f32 %v2225, %v2294
      %v2306 = vmul.f32 %v2228, %v2294
      %v2307 = vmul.f32 %v2230, %v2294
      %v2308 = vmul.f32 %v2233, %v2294
      %v2309 = vmul.f32 %v2235, %v2294
      %v2310 = vmul.f32 %v2238, %v2294
      %v2311 = vmul.f32 %v2240, %v2294
      %v2312 = vmul.f32 %v2243, %v2294
      %v2313 = vmul.f32 %v2245, %v2294
      %v2314 = vmul.f32 %v2248, %v2294
      %v2315 = vmul.f32 %v2250, %v2294
      %v2316 = vmul.f32 %v2253, %v2294
      %v2317 = vmul.f32 %v2255, %v2294
      %v2318 = vmul.f32 %v2258, %v2294
      %v2319 = vmul.f32 %v2260, %v2294
      %v2320 = vmul.f32 %v2263, %v2294
      %v2321 = vmul.f32 %v2265, %v2294
      %v2322 = vmul.f32 %v2268, %v2294
      %v2323 = vmul.f32 %v2270, %v2294
      %v2324 = vmul.f32 %v2273, %v2294
      %v2325 = vmul.f32 %v2275, %v2294
      %v2326 = vmul.f32 %v2278, %v2294
      %v2327 = vmul.f32 %v2280, %v2294
      %v2328 = vmul.f32 %v2283, %v2294
      %v2329 = vmul.f32 %v2285, %v2294
      %v2330 = vmul.f32 %v2288, %v2294
      %v2331 = vmul.f32 %v2290, %v2294
      %v2332 = vld [vmem:[%s4] sm:$0x1]
      %v2334 = vperm.slane %v2332, 0
      %v2336 = vadd.f32 %v2296, %v2334
      %v2337 = vadd.f32 %v2297, %v2334
      %v2338 = vadd.f32 %v2298, %v2334
      %v2339 = vadd.f32 %v2299, %v2334
      %v2340 = vadd.f32 %v2300, %v2334
      %v2341 = vadd.f32 %v2301, %v2334
      %v2342 = vadd.f32 %v2302, %v2334
      %v2343 = vadd.f32 %v2303, %v2334
      %v2344 = vadd.f32 %v2304, %v2334
      %v2345 = vadd.f32 %v2305, %v2334
      %v2346 = vadd.f32 %v2306, %v2334
      %v2347 = vadd.f32 %v2307, %v2334
      %v2348 = vadd.f32 %v2308, %v2334
      %v2349 = vadd.f32 %v2309, %v2334
      %v2350 = vadd.f32 %v2310, %v2334
      %v2351 = vadd.f32 %v2311, %v2334
      %v2352 = vadd.f32 %v2312, %v2334
      %v2353 = vadd.f32 %v2313, %v2334
      %v2354 = vadd.f32 %v2314, %v2334
      %v2355 = vadd.f32 %v2315, %v2334
      %v2356 = vadd.f32 %v2316, %v2334
      %v2357 = vadd.f32 %v2317, %v2334
      %v2358 = vadd.f32 %v2318, %v2334
      %v2359 = vadd.f32 %v2319, %v2334
      %v2360 = vadd.f32 %v2320, %v2334
      %v2361 = vadd.f32 %v2321, %v2334
      %v2362 = vadd.f32 %v2322, %v2334
      %v2363 = vadd.f32 %v2323, %v2334
      %v2364 = vadd.f32 %v2324, %v2334
      %v2365 = vadd.f32 %v2325, %v2334
      %v2366 = vadd.f32 %v2326, %v2334
      %v2367 = vadd.f32 %v2327, %v2334
      %v2368 = vadd.f32 %v2328, %v2334
      %v2369 = vadd.f32 %v2329, %v2334
      %v2370 = vadd.f32 %v2330, %v2334
      %v2371 = vadd.f32 %v2331, %v2334
      %v2372 = vmax.f32 %v2336, 0.0
      %v2373 = vmax.f32 %v2337, 0.0
      %v2374 = vmax.f32 %v2338, 0.0
      %v2375 = vmax.f32 %v2339, 0.0
      %v2376 = vmax.f32 %v2340, 0.0
      %v2377 = vmax.f32 %v2341, 0.0
      %v2378 = vmax.f32 %v2342, 0.0
      %v2379 = vmax.f32 %v2343, 0.0
      %v2380 = vmax.f32 %v2344, 0.0
      %v2381 = vmax.f32 %v2345, 0.0
      %v2382 = vmax.f32 %v2346, 0.0
      %v2383 = vmax.f32 %v2347, 0.0
      %v2384 = vmax.f32 %v2348, 0.0
      %v2385 = vmax.f32 %v2349, 0.0
      %v2386 = vmax.f32 %v2350, 0.0
      %v2387 = vmax.f32 %v2351, 0.0
      %v2388 = vmax.f32 %v2352, 0.0
      %v2389 = vmax.f32 %v2353, 0.0
      %v2390 = vmax.f32 %v2354, 0.0
      %v2391 = vmax.f32 %v2355, 0.0
      %v2392 = vmax.f32 %v2356, 0.0
      %v2393 = vmax.f32 %v2357, 0.0
      %v2394 = vmax.f32 %v2358, 0.0
      %v2395 = vmax.f32 %v2359, 0.0
      %v2396 = vmax.f32 %v2360, 0.0
      %v2397 = vmax.f32 %v2361, 0.0
      %v2398 = vmax.f32 %v2362, 0.0
      %v2399 = vmax.f32 %v2363, 0.0
      %v2400 = vmax.f32 %v2364, 0.0
      %v2401 = vmax.f32 %v2365, 0.0
      %v2402 = vmax.f32 %v2366, 0.0
      %v2403 = vmax.f32 %v2367, 0.0
      %v2404 = vmax.f32 %v2368, 0.0
      %v2405 = vmax.f32 %v2369, 0.0
      %v2406 = vmax.f32 %v2370, 0.0
      %v2407 = vmax.f32 %v2371, 0.0
      %2409 = vset.pattern.permute.xlu0 0
      %2410 = vperm.xlu0 %2409, %v351
      %v2411 = vpop.permute.xlu0 %2410
      %2414 = vset.pattern.permute.xlu0 0
      %2415 = vperm.xlu0 %2414, %v352
      %v2416 = vpop.permute.xlu0 %2415
      %2419 = vset.pattern.permute.xlu0 0
      %2420 = vperm.xlu0 %2419, %v353
      %v2421 = vpop.permute.xlu0 %2420
      %2424 = vset.pattern.permute.xlu0 0
      %2425 = vperm.xlu0 %2424, %v354
      %v2426 = vpop.permute.xlu0 %2425
      %2429 = vset.pattern.permute.xlu0 0
      %2430 = vperm.xlu0 %2429, %v355
      %v2431 = vpop.permute.xlu0 %2430
      %2434 = vset.pattern.permute.xlu0 0
      %2435 = vperm.xlu0 %2434, %v356
      %v2436 = vpop.permute.xlu0 %2435
      %2439 = vset.pattern.permute.xlu0 0
      %2440 = vperm.xlu0 %2439, %v357
      %v2441 = vpop.permute.xlu0 %2440
      %2444 = vset.pattern.permute.xlu0 0
      %2445 = vperm.xlu0 %2444, %v358
      %v2446 = vpop.permute.xlu0 %2445
      %2449 = vset.pattern.permute.xlu0 0
      %2450 = vperm.xlu0 %2449, %v359
      %v2451 = vpop.permute.xlu0 %2450
      %2454 = vset.pattern.permute.xlu0 0
      %2455 = vperm.xlu0 %2454, %v360
      %v2456 = vpop.permute.xlu0 %2455
      %2459 = vset.pattern.permute.xlu0 0
      %2460 = vperm.xlu0 %2459, %v361
      %v2461 = vpop.permute.xlu0 %2460
      %2464 = vset.pattern.permute.xlu0 0
      %2465 = vperm.xlu0 %2464, %v362
      %v2466 = vpop.permute.xlu0 %2465
      %2469 = vset.pattern.permute.xlu0 0
      %2470 = vperm.xlu0 %2469, %v363
      %v2471 = vpop.permute.xlu0 %2470
      %2474 = vset.pattern.permute.xlu0 0
      %2475 = vperm.xlu0 %2474, %v364
      %v2476 = vpop.permute.xlu0 %2475
      %2479 = vset.pattern.permute.xlu0 0
      %2480 = vperm.xlu0 %2479, %v365
      %v2481 = vpop.permute.xlu0 %2480
      %2484 = vset.pattern.permute.xlu0 0
      %2485 = vperm.xlu0 %2484, %v366
      %v2486 = vpop.permute.xlu0 %2485
      %2489 = vset.pattern.permute.xlu0 0
      %2490 = vperm.xlu0 %2489, %v367
      %v2491 = vpop.permute.xlu0 %2490
      %2494 = vset.pattern.permute.xlu0 0
      %2495 = vperm.xlu0 %2494, %v368
      %v2496 = vpop.permute.xlu0 %2495
      %2499 = vset.pattern.permute.xlu0 0
      %2500 = vperm.xlu0 %2499, %v369
      %v2501 = vpop.permute.xlu0 %2500
      %2504 = vset.pattern.permute.xlu0 0
      %2505 = vperm.xlu0 %2504, %v370
      %v2506 = vpop.permute.xlu0 %2505
      %2509 = vset.pattern.permute.xlu0 0
      %2510 = vperm.xlu0 %2509, %v371
      %v2511 = vpop.permute.xlu0 %2510
      %2514 = vset.pattern.permute.xlu0 0
      %2515 = vperm.xlu0 %2514, %v372
      %v2516 = vpop.permute.xlu0 %2515
      %2519 = vset.pattern.permute.xlu0 0
      %2520 = vperm.xlu0 %2519, %v373
      %v2521 = vpop.permute.xlu0 %2520
      %2524 = vset.pattern.permute.xlu0 0
      %2525 = vperm.xlu0 %2524, %v374
      %v2526 = vpop.permute.xlu0 %2525
      %2529 = vset.pattern.permute.xlu0 0
      %2530 = vperm.xlu0 %2529, %v375
      %v2531 = vpop.permute.xlu0 %2530
      %2534 = vset.pattern.permute.xlu0 0
      %2535 = vperm.xlu0 %2534, %v376
      %v2536 = vpop.permute.xlu0 %2535
      %2539 = vset.pattern.permute.xlu0 0
      %2540 = vperm.xlu0 %2539, %v377
      %v2541 = vpop.permute.xlu0 %2540
      %2544 = vset.pattern.permute.xlu0 0
      %2545 = vperm.xlu0 %2544, %v378
      %v2546 = vpop.permute.xlu0 %2545
      %2549 = vset.pattern.permute.xlu0 0
      %2550 = vperm.xlu0 %2549, %v379
      %v2551 = vpop.permute.xlu0 %2550
      %2554 = vset.pattern.permute.xlu0 0
      %2555 = vperm.xlu0 %2554, %v380
      %v2556 = vpop.permute.xlu0 %2555
      %2559 = vset.pattern.permute.xlu0 0
      %2560 = vperm.xlu0 %2559, %v381
      %v2561 = vpop.permute.xlu0 %2560
      %2564 = vset.pattern.permute.xlu0 0
      %2565 = vperm.xlu0 %2564, %v382
      %v2566 = vpop.permute.xlu0 %2565
      %2569 = vset.pattern.permute.xlu0 0
      %2570 = vperm.xlu0 %2569, %v383
      %v2571 = vpop.permute.xlu0 %2570
      %2574 = vset.pattern.permute.xlu0 0
      %2575 = vperm.xlu0 %2574, %v384
      %v2576 = vpop.permute.xlu0 %2575
      %2579 = vset.pattern.permute.xlu0 0
      %2580 = vperm.xlu0 %2579, %v385
      %v2581 = vpop.permute.xlu0 %2580
      %2584 = vset.pattern.permute.xlu0 0
      %2585 = vperm.xlu0 %2584, %v386
      %v2586 = vpop.permute.xlu0 %2585
      %v2588 = vmul.f32 %v2372, %v2411
      %v2589 = vmul.f32 %v2373, %v2416
      %v2590 = vmul.f32 %v2374, %v2421
      %v2591 = vmul.f32 %v2375, %v2426
      %v2592 = vmul.f32 %v2376, %v2431
      %v2593 = vmul.f32 %v2377, %v2436
      %v2594 = vmul.f32 %v2378, %v2441
      %v2595 = vmul.f32 %v2379, %v2446
      %v2596 = vmul.f32 %v2380, %v2451
      %v2597 = vmul.f32 %v2381, %v2456
      %v2598 = vmul.f32 %v2382, %v2461
      %v2599 = vmul.f32 %v2383, %v2466
      %v2600 = vmul.f32 %v2384, %v2471
      %v2601 = vmul.f32 %v2385, %v2476
      %v2602 = vmul.f32 %v2386, %v2481
      %v2603 = vmul.f32 %v2387, %v2486
      %v2604 = vmul.f32 %v2388, %v2491
      %v2605 = vmul.f32 %v2389, %v2496
      %v2606 = vmul.f32 %v2390, %v2501
      %v2607 = vmul.f32 %v2391, %v2506
      %v2608 = vmul.f32 %v2392, %v2511
      %v2609 = vmul.f32 %v2393, %v2516
      %v2610 = vmul.f32 %v2394, %v2521
      %v2611 = vmul.f32 %v2395, %v2526
      %v2612 = vmul.f32 %v2396, %v2531
      %v2613 = vmul.f32 %v2397, %v2536
      %v2614 = vmul.f32 %v2398, %v2541
      %v2615 = vmul.f32 %v2399, %v2546
      %v2616 = vmul.f32 %v2400, %v2551
      %v2617 = vmul.f32 %v2401, %v2556
      %v2618 = vmul.f32 %v2402, %v2561
      %v2619 = vmul.f32 %v2403, %v2566
      %v2620 = vmul.f32 %v2404, %v2571
      %v2621 = vmul.f32 %v2405, %v2576
      %v2622 = vmul.f32 %v2406, %v2581
      %v2623 = vmul.f32 %v2407, %v2586
      %2624 = vst.msk [vmem:[#allocation2 + $0x13] sm:$0xff] %vm308, %v2588
      %2625 = vst.msk [vmem:[#allocation2 + $0x1b] sm:$0xff] %vm308, %v2589
      %2626 = vst.msk [vmem:[#allocation2 + $0x23] sm:$0xff] %vm308, %v2590
      %2627 = vst.msk [vmem:[#allocation2 + $0x2b] sm:$0xff] %vm308, %v2591
      %2628 = vst.msk [vmem:[#allocation2 + $0x33] sm:$0xff] %vm308, %v2592
      %2629 = vst.msk [vmem:[#allocation2 + $0x3b] sm:$0xff] %vm308, %v2593
      %2630 = vst.msk [vmem:[#allocation2 + $0x43] sm:$0xff] %vm308, %v2594
      %2631 = vst.msk [vmem:[#allocation2 + $0x4b] sm:$0xff] %vm308, %v2595
      %2632 = vst.msk [vmem:[#allocation2 + $0x53] sm:$0xff] %vm308, %v2596
      %2633 = vst.msk [vmem:[#allocation2 + $0x5b] sm:$0xff] %vm308, %v2597
      %2634 = vst.msk [vmem:[#allocation2 + $0x63] sm:$0xff] %vm308, %v2598
      %2635 = vst.msk [vmem:[#allocation2 + $0x6b] sm:$0xff] %vm308, %v2599
      %2636 = vst.msk [vmem:[#allocation2 + $0x73] sm:$0xff] %vm308, %v2600
      %2637 = vst.msk [vmem:[#allocation2 + $0x7b] sm:$0xff] %vm308, %v2601
      %2638 = vst.msk [vmem:[#allocation2 + $0x83] sm:$0xff] %vm308, %v2602
      %2639 = vst.msk [vmem:[#allocation2 + $0x8b] sm:$0xff] %vm308, %v2603
      %2640 = vst.msk [vmem:[#allocation2 + $0x93] sm:$0xff] %vm308, %v2604
      %2641 = vst.msk [vmem:[#allocation2 + $0x9b] sm:$0xff] %vm308, %v2605
      %2642 = vst.msk [vmem:[#allocation2 + $0xa3] sm:$0xff] %vm308, %v2606
      %2643 = vst.msk [vmem:[#allocation2 + $0xab] sm:$0xff] %vm308, %v2607
      %2644 = vst.msk [vmem:[#allocation2 + $0xb3] sm:$0xff] %vm308, %v2608
      %2645 = vst.msk [vmem:[#allocation2 + $0xbb] sm:$0xff] %vm308, %v2609
      %2646 = vst.msk [vmem:[#allocation2 + $0xc3] sm:$0xff] %vm308, %v2610
      %2647 = vst.msk [vmem:[#allocation2 + $0xcb] sm:$0xff] %vm308, %v2611
      %2648 = vst.msk [vmem:[#allocation2 + $0xd3] sm:$0xff] %vm308, %v2612
      %2649 = vst.msk [vmem:[#allocation2 + $0xdb] sm:$0xff] %vm308, %v2613
      %2650 = vst.msk [vmem:[#allocation2 + $0xe3] sm:$0xff] %vm308, %v2614
      %2651 = vst.msk [vmem:[#allocation2 + $0xeb] sm:$0xff] %vm308, %v2615
      %2652 = vst.msk [vmem:[#allocation2 + $0xf3] sm:$0xff] %vm308, %v2616
      %2653 = vst.msk [vmem:[#allocation2 + $0xfb] sm:$0xff] %vm308, %v2617
      %2654 = vst.msk [vmem:[#allocation2 + $0x103] sm:$0xff] %vm308, %v2618
      %2655 = vst.msk [vmem:[#allocation2 + $0x10b] sm:$0xff] %vm308, %v2619
      %2656 = vst.msk [vmem:[#allocation2 + $0x113] sm:$0xff] %vm308, %v2620
      %2657 = vst.msk [vmem:[#allocation2 + $0x11b] sm:$0xff] %vm308, %v2621
      %2658 = vst.msk [vmem:[#allocation2 + $0x123] sm:$0xff] %vm308, %v2622
      %vm2659 = vcmask 521216
      %2660 = vst.msk [vmem:[#allocation2 + $0x12b] sm:$0x3f] %vm2659, %v2623
      %v2661 = vld [vmem:[#allocation2] sm:$0xff]
      %v2662 = vld [vmem:[#allocation2 + $0x8] sm:$0xff]
      %v2663 = vld [vmem:[#allocation2 + $0x10] sm:$0xff]
      %v2664 = vld [vmem:[#allocation2 + $0x18] sm:$0xff]
      %v2665 = vld [vmem:[#allocation2 + $0x20] sm:$0xff]
      %v2666 = vld [vmem:[#allocation2 + $0x28] sm:$0xff]
      %v2667 = vld [vmem:[#allocation2 + $0x30] sm:$0xff]
      %v2668 = vld [vmem:[#allocation2 + $0x38] sm:$0xff]
      %v2669 = vld [vmem:[#allocation2 + $0x40] sm:$0xff]
      %v2670 = vld [vmem:[#allocation2 + $0x48] sm:$0xff]
      %v2671 = vld [vmem:[#allocation2 + $0x50] sm:$0xff]
      %v2672 = vld [vmem:[#allocation2 + $0x58] sm:$0xff]
      %v2673 = vld [vmem:[#allocation2 + $0x60] sm:$0xff]
      %v2674 = vld [vmem:[#allocation2 + $0x68] sm:$0xff]
      %v2675 = vld [vmem:[#allocation2 + $0x70] sm:$0xff]
      %v2676 = vld [vmem:[#allocation2 + $0x78] sm:$0xff]
      %v2677 = vld [vmem:[#allocation2 + $0x80] sm:$0xff]
      %v2678 = vld [vmem:[#allocation2 + $0x88] sm:$0xff]
      %v2679 = vld [vmem:[#allocation2 + $0x90] sm:$0xff]
      %v2680 = vld [vmem:[#allocation2 + $0x98] sm:$0xff]
      %v2681 = vld [vmem:[#allocation2 + $0xa0] sm:$0xff]
      %v2682 = vld [vmem:[#allocation2 + $0xa8] sm:$0xff]
      %v2683 = vld [vmem:[#allocation2 + $0xb0] sm:$0xff]
      %v2684 = vld [vmem:[#allocation2 + $0xb8] sm:$0xff]
      %v2685 = vld [vmem:[#allocation2 + $0xc0] sm:$0xff]
      %v2686 = vld [vmem:[#allocation2 + $0xc8] sm:$0xff]
      %v2687 = vld [vmem:[#allocation2 + $0xd0] sm:$0xff]
      %v2688 = vld [vmem:[#allocation2 + $0xd8] sm:$0xff]
      %v2689 = vld [vmem:[#allocation2 + $0xe0] sm:$0xff]
      %v2690 = vld [vmem:[#allocation2 + $0xe8] sm:$0xff]
      %v2691 = vld [vmem:[#allocation2 + $0xf0] sm:$0xff]
      %v2692 = vld [vmem:[#allocation2 + $0xf8] sm:$0xff]
      %v2693 = vld [vmem:[#allocation2 + $0x100] sm:$0xff]
      %v2694 = vld [vmem:[#allocation2 + $0x108] sm:$0xff]
      %v2695 = vld [vmem:[#allocation2 + $0x110] sm:$0xff]
      %v2696 = vld [vmem:[#allocation2 + $0x118] sm:$0x3f]
      %v2697 = vld [vmem:[#allocation2 + $0x1] sm:$0xff]
      %v2698 = vld [vmem:[#allocation2 + $0x9] sm:$0xff]
      %v2699 = vld [vmem:[#allocation2 + $0x11] sm:$0xff]
      %v2700 = vld [vmem:[#allocation2 + $0x19] sm:$0xff]
      %v2701 = vld [vmem:[#allocation2 + $0x21] sm:$0xff]
      %v2702 = vld [vmem:[#allocation2 + $0x29] sm:$0xff]
      %v2703 = vld [vmem:[#allocation2 + $0x31] sm:$0xff]
      %v2704 = vld [vmem:[#allocation2 + $0x39] sm:$0xff]
      %v2705 = vld [vmem:[#allocation2 + $0x41] sm:$0xff]
      %v2706 = vld [vmem:[#allocation2 + $0x49] sm:$0xff]
      %v2707 = vld [vmem:[#allocation2 + $0x51] sm:$0xff]
      %v2708 = vld [vmem:[#allocation2 + $0x59] sm:$0xff]
      %v2709 = vld [vmem:[#allocation2 + $0x61] sm:$0xff]
      %v2710 = vld [vmem:[#allocation2 + $0x69] sm:$0xff]
      %v2711 = vld [vmem:[#allocation2 + $0x71] sm:$0xff]
      %v2712 = vld [vmem:[#allocation2 + $0x79] sm:$0xff]
      %v2713 = vld [vmem:[#allocation2 + $0x81] sm:$0xff]
      %v2714 = vld [vmem:[#allocation2 + $0x89] sm:$0xff]
      %v2715 = vld [vmem:[#allocation2 + $0x91] sm:$0xff]
      %v2716 = vld [vmem:[#allocation2 + $0x99] sm:$0xff]
      %v2717 = vld [vmem:[#allocation2 + $0xa1] sm:$0xff]
      %v2718 = vld [vmem:[#allocation2 + $0xa9] sm:$0xff]
      %v2719 = vld [vmem:[#allocation2 + $0xb1] sm:$0xff]
      %v2720 = vld [vmem:[#allocation2 + $0xb9] sm:$0xff]
      %v2721 = vld [vmem:[#allocation2 + $0xc1] sm:$0xff]
      %v2722 = vld [vmem:[#allocation2 + $0xc9] sm:$0xff]
      %v2723 = vld [vmem:[#allocation2 + $0xd1] sm:$0xff]
      %v2724 = vld [vmem:[#allocation2 + $0xd9] sm:$0xff]
      %v2725 = vld [vmem:[#allocation2 + $0xe1] sm:$0xff]
      %v2726 = vld [vmem:[#allocation2 + $0xe9] sm:$0xff]
      %v2727 = vld [vmem:[#allocation2 + $0xf1] sm:$0xff]
      %v2728 = vld [vmem:[#allocation2 + $0xf9] sm:$0xff]
      %v2729 = vld [vmem:[#allocation2 + $0x101] sm:$0xff]
      %v2730 = vld [vmem:[#allocation2 + $0x109] sm:$0xff]
      %v2731 = vld [vmem:[#allocation2 + $0x111] sm:$0xff]
      %v2732 = vld [vmem:[#allocation2 + $0x119] sm:$0x3f]
      %v2733 = vld [vmem:[#allocation2 + $0x2] sm:$0xff]
      %v2734 = vld [vmem:[#allocation2 + $0xa] sm:$0xff]
      %v2735 = vld [vmem:[#allocation2 + $0x12] sm:$0xff]
      %v2736 = vld [vmem:[#allocation2 + $0x1a] sm:$0xff]
      %v2737 = vld [vmem:[#allocation2 + $0x22] sm:$0xff]
      %v2738 = vld [vmem:[#allocation2 + $0x2a] sm:$0xff]
      %v2739 = vld [vmem:[#allocation2 + $0x32] sm:$0xff]
      %v2740 = vld [vmem:[#allocation2 + $0x3a] sm:$0xff]
      %v2741 = vld [vmem:[#allocation2 + $0x42] sm:$0xff]
      %v2742 = vld [vmem:[#allocation2 + $0x4a] sm:$0xff]
      %v2743 = vld [vmem:[#allocation2 + $0x52] sm:$0xff]
      %v2744 = vld [vmem:[#allocation2 + $0x5a] sm:$0xff]
      %v2745 = vld [vmem:[#allocation2 + $0x62] sm:$0xff]
      %v2746 = vld [vmem:[#allocation2 + $0x6a] sm:$0xff]
      %v2747 = vld [vmem:[#allocation2 + $0x72] sm:$0xff]
      %v2748 = vld [vmem:[#allocation2 + $0x7a] sm:$0xff]
      %v2749 = vld [vmem:[#allocation2 + $0x82] sm:$0xff]
      %v2750 = vld [vmem:[#allocation2 + $0x8a] sm:$0xff]
      %v2751 = vld [vmem:[#allocation2 + $0x92] sm:$0xff]
      %v2752 = vld [vmem:[#allocation2 + $0x9a] sm:$0xff]
      %v2753 = vld [vmem:[#allocation2 + $0xa2] sm:$0xff]
      %v2754 = vld [vmem:[#allocation2 + $0xaa] sm:$0xff]
      %v2755 = vld [vmem:[#allocation2 + $0xb2] sm:$0xff]
      %v2756 = vld [vmem:[#allocation2 + $0xba] sm:$0xff]
      %v2757 = vld [vmem:[#allocation2 + $0xc2] sm:$0xff]
      %v2758 = vld [vmem:[#allocation2 + $0xca] sm:$0xff]
      %v2759 = vld [vmem:[#allocation2 + $0xd2] sm:$0xff]
      %v2760 = vld [vmem:[#allocation2 + $0xda] sm:$0xff]
      %v2761 = vld [vmem:[#allocation2 + $0xe2] sm:$0xff]
      %v2762 = vld [vmem:[#allocation2 + $0xea] sm:$0xff]
      %v2763 = vld [vmem:[#allocation2 + $0xf2] sm:$0xff]
      %v2764 = vld [vmem:[#allocation2 + $0xfa] sm:$0xff]
      %v2765 = vld [vmem:[#allocation2 + $0x102] sm:$0xff]
      %v2766 = vld [vmem:[#allocation2 + $0x10a] sm:$0xff]
      %v2767 = vld [vmem:[#allocation2 + $0x112] sm:$0xff]
      %v2768 = vld [vmem:[#allocation2 + $0x11a] sm:$0x3f]
      %v2769 = vld [vmem:[#allocation2 + $0x11a] sm:$0xff]
      %v2770 = vld [vmem:[#allocation2 + $0x122] sm:$0xff]
      %v2771 = vld [vmem:[#allocation2 + $0x12a] sm:$0x3f]
      %v2772 = vld [vmem:[#allocation2 + $0x13] sm:$0xff]
      %v2773 = vld [vmem:[#allocation2 + $0x1b] sm:$0xff]
      %v2774 = vld [vmem:[#allocation2 + $0x23] sm:$0xff]
      %v2775 = vld [vmem:[#allocation2 + $0x2b] sm:$0xff]
      %v2776 = vld [vmem:[#allocation2 + $0x33] sm:$0xff]
      %v2777 = vld [vmem:[#allocation2 + $0x3b] sm:$0xff]
      %v2778 = vld [vmem:[#allocation2 + $0x43] sm:$0xff]
      %v2779 = vld [vmem:[#allocation2 + $0x4b] sm:$0xff]
      %v2780 = vld [vmem:[#allocation2 + $0x53] sm:$0xff]
      %v2781 = vld [vmem:[#allocation2 + $0x5b] sm:$0xff]
      %v2782 = vld [vmem:[#allocation2 + $0x63] sm:$0xff]
      %v2783 = vld [vmem:[#allocation2 + $0x6b] sm:$0xff]
      %v2784 = vld [vmem:[#allocation2 + $0x73] sm:$0xff]
      %v2785 = vld [vmem:[#allocation2 + $0x7b] sm:$0xff]
      %v2786 = vld [vmem:[#allocation2 + $0x83] sm:$0xff]
      %v2787 = vld [vmem:[#allocation2 + $0x8b] sm:$0xff]
      %v2788 = vld [vmem:[#allocation2 + $0x93] sm:$0xff]
      %v2789 = vld [vmem:[#allocation2 + $0x9b] sm:$0xff]
      %v2790 = vld [vmem:[#allocation2 + $0xa3] sm:$0xff]
      %v2791 = vld [vmem:[#allocation2 + $0xab] sm:$0xff]
      %v2792 = vld [vmem:[#allocation2 + $0xb3] sm:$0xff]
      %v2793 = vld [vmem:[#allocation2 + $0xbb] sm:$0xff]
      %v2794 = vld [vmem:[#allocation2 + $0xc3] sm:$0xff]
      %v2795 = vld [vmem:[#allocation2 + $0xcb] sm:$0xff]
      %v2796 = vld [vmem:[#allocation2 + $0xd3] sm:$0xff]
      %v2797 = vld [vmem:[#allocation2 + $0xdb] sm:$0xff]
      %v2798 = vld [vmem:[#allocation2 + $0xe3] sm:$0xff]
      %v2799 = vld [vmem:[#allocation2 + $0xeb] sm:$0xff]
      %v2800 = vld [vmem:[#allocation2 + $0xf3] sm:$0xff]
      %v2801 = vld [vmem:[#allocation2 + $0xfb] sm:$0xff]
      %v2802 = vld [vmem:[#allocation2 + $0x103] sm:$0xff]
      %v2803 = vld [vmem:[#allocation2 + $0x10b] sm:$0xff]
      %v2804 = vld [vmem:[#allocation2 + $0x113] sm:$0xff]
      %v2805 = vld [vmem:[#allocation2 + $0x11b] sm:$0xff]
      %v2806 = vld [vmem:[#allocation2 + $0x123] sm:$0xff]
      %v2807 = vld [vmem:[#allocation2 + $0x12b] sm:$0x3f]
      %v2808 = vld [vmem:[#allocation2 + $0x14] sm:$0xff]
      %v2809 = vld [vmem:[#allocation2 + $0x1c] sm:$0xff]
      %v2810 = vld [vmem:[#allocation2 + $0x24] sm:$0xff]
      %v2811 = vld [vmem:[#allocation2 + $0x2c] sm:$0xff]
      %v2812 = vld [vmem:[#allocation2 + $0x34] sm:$0xff]
      %v2813 = vld [vmem:[#allocation2 + $0x3c] sm:$0xff]
      %v2814 = vld [vmem:[#allocation2 + $0x44] sm:$0xff]
      %v2815 = vld [vmem:[#allocation2 + $0x4c] sm:$0xff]
      %v2816 = vld [vmem:[#allocation2 + $0x54] sm:$0xff]
      %v2817 = vld [vmem:[#allocation2 + $0x5c] sm:$0xff]
      %v2818 = vld [vmem:[#allocation2 + $0x64] sm:$0xff]
      %v2819 = vld [vmem:[#allocation2 + $0x6c] sm:$0xff]
      %v2820 = vld [vmem:[#allocation2 + $0x74] sm:$0xff]
      %v2821 = vld [vmem:[#allocation2 + $0x7c] sm:$0xff]
      %v2822 = vld [vmem:[#allocation2 + $0x84] sm:$0xff]
      %v2823 = vld [vmem:[#allocation2 + $0x8c] sm:$0xff]
      %v2824 = vld [vmem:[#allocation2 + $0x94] sm:$0xff]
      %v2825 = vld [vmem:[#allocation2 + $0x9c] sm:$0xff]
      %v2826 = vld [vmem:[#allocation2 + $0xa4] sm:$0xff]
      %v2827 = vld [vmem:[#allocation2 + $0xac] sm:$0xff]
      %v2828 = vld [vmem:[#allocation2 + $0xb4] sm:$0xff]
      %v2829 = vld [vmem:[#allocation2 + $0xbc] sm:$0xff]
      %v2830 = vld [vmem:[#allocation2 + $0xc4] sm:$0xff]
      %v2831 = vld [vmem:[#allocation2 + $0xcc] sm:$0xff]
      %v2832 = vld [vmem:[#allocation2 + $0xd4] sm:$0xff]
      %v2833 = vld [vmem:[#allocation2 + $0xdc] sm:$0xff]
      %v2834 = vld [vmem:[#allocation2 + $0xe4] sm:$0xff]
      %v2835 = vld [vmem:[#allocation2 + $0xec] sm:$0xff]
      %v2836 = vld [vmem:[#allocation2 + $0xf4] sm:$0xff]
      %v2837 = vld [vmem:[#allocation2 + $0xfc] sm:$0xff]
      %v2838 = vld [vmem:[#allocation2 + $0x104] sm:$0xff]
      %v2839 = vld [vmem:[#allocation2 + $0x10c] sm:$0xff]
      %v2840 = vld [vmem:[#allocation2 + $0x114] sm:$0xff]
      %v2841 = vld [vmem:[#allocation2 + $0x11c] sm:$0xff]
      %v2842 = vld [vmem:[#allocation2 + $0x124] sm:$0xff]
      %v2843 = vld [vmem:[#allocation2 + $0x12c] sm:$0x3f]
      %v2844 = vld [vmem:[#allocation2 + $0x12c] sm:$0xff]
      %v2845 = vld [vmem:[#allocation2 + $0x134] sm:$0xff]
      %v2846 = vld [vmem:[#allocation2 + $0x13c] sm:$0x3f]
      %v2847 = vld [vmem:[#allocation2 + $0x25] sm:$0xff]
      %v2848 = vld [vmem:[#allocation2 + $0x2d] sm:$0xff]
      %v2849 = vld [vmem:[#allocation2 + $0x35] sm:$0xff]
      %v2850 = vld [vmem:[#allocation2 + $0x3d] sm:$0xff]
      %v2851 = vld [vmem:[#allocation2 + $0x45] sm:$0xff]
      %v2852 = vld [vmem:[#allocation2 + $0x4d] sm:$0xff]
      %v2853 = vld [vmem:[#allocation2 + $0x55] sm:$0xff]
      %v2854 = vld [vmem:[#allocation2 + $0x5d] sm:$0xff]
      %v2855 = vld [vmem:[#allocation2 + $0x65] sm:$0xff]
      %v2856 = vld [vmem:[#allocation2 + $0x6d] sm:$0xff]
      %v2857 = vld [vmem:[#allocation2 + $0x75] sm:$0xff]
      %v2858 = vld [vmem:[#allocation2 + $0x7d] sm:$0xff]
      %v2859 = vld [vmem:[#allocation2 + $0x85] sm:$0xff]
      %v2860 = vld [vmem:[#allocation2 + $0x8d] sm:$0xff]
      %v2861 = vld [vmem:[#allocation2 + $0x95] sm:$0xff]
      %v2862 = vld [vmem:[#allocation2 + $0x9d] sm:$0xff]
      %v2863 = vld [vmem:[#allocation2 + $0xa5] sm:$0xff]
      %v2864 = vld [vmem:[#allocation2 + $0xad] sm:$0xff]
      %v2865 = vld [vmem:[#allocation2 + $0xb5] sm:$0xff]
      %v2866 = vld [vmem:[#allocation2 + $0xbd] sm:$0xff]
      %v2867 = vld [vmem:[#allocation2 + $0xc5] sm:$0xff]
      %v2868 = vld [vmem:[#allocation2 + $0xcd] sm:$0xff]
      %v2869 = vld [vmem:[#allocation2 + $0xd5] sm:$0xff]
      %v2870 = vld [vmem:[#allocation2 + $0xdd] sm:$0xff]
      %v2871 = vld [vmem:[#allocation2 + $0xe5] sm:$0xff]
      %v2872 = vld [vmem:[#allocation2 + $0xed] sm:$0xff]
      %v2873 = vld [vmem:[#allocation2 + $0xf5] sm:$0xff]
      %v2874 = vld [vmem:[#allocation2 + $0xfd] sm:$0xff]
      %v2875 = vld [vmem:[#allocation2 + $0x105] sm:$0xff]
      %v2876 = vld [vmem:[#allocation2 + $0x10d] sm:$0xff]
      %v2877 = vld [vmem:[#allocation2 + $0x115] sm:$0xff]
      %v2878 = vld [vmem:[#allocation2 + $0x11d] sm:$0xff]
      %v2879 = vld [vmem:[#allocation2 + $0x125] sm:$0xff]
      %v2880 = vld [vmem:[#allocation2 + $0x12d] sm:$0xff]
      %v2881 = vld [vmem:[#allocation2 + $0x135] sm:$0xff]
      %v2882 = vld [vmem:[#allocation2 + $0x13d] sm:$0x3f]
      %v2883 = vld [vmem:[#allocation2 + $0x26] sm:$0xff]
      %v2884 = vld [vmem:[#allocation2 + $0x2e] sm:$0xff]
      %v2885 = vld [vmem:[#allocation2 + $0x36] sm:$0xff]
      %v2886 = vld [vmem:[#allocation2 + $0x3e] sm:$0xff]
      %v2887 = vld [vmem:[#allocation2 + $0x46] sm:$0xff]
      %v2888 = vld [vmem:[#allocation2 + $0x4e] sm:$0xff]
      %v2889 = vld [vmem:[#allocation2 + $0x56] sm:$0xff]
      %v2890 = vld [vmem:[#allocation2 + $0x5e] sm:$0xff]
      %v2891 = vld [vmem:[#allocation2 + $0x66] sm:$0xff]
      %v2892 = vld [vmem:[#allocation2 + $0x6e] sm:$0xff]
      %v2893 = vld [vmem:[#allocation2 + $0x76] sm:$0xff]
      %v2894 = vld [vmem:[#allocation2 + $0x7e] sm:$0xff]
      %v2895 = vld [vmem:[#allocation2 + $0x86] sm:$0xff]
      %v2896 = vld [vmem:[#allocation2 + $0x8e] sm:$0xff]
      %v2897 = vld [vmem:[#allocation2 + $0x96] sm:$0xff]
      %v2898 = vld [vmem:[#allocation2 + $0x9e] sm:$0xff]
      %v2899 = vld [vmem:[#allocation2 + $0xa6] sm:$0xff]
      %v2900 = vld [vmem:[#allocation2 + $0xae] sm:$0xff]
      %v2901 = vld [vmem:[#allocation2 + $0xb6] sm:$0xff]
      %v2902 = vld [vmem:[#allocation2 + $0xbe] sm:$0xff]
      %v2903 = vld [vmem:[#allocation2 + $0xc6] sm:$0xff]
      %v2904 = vld [vmem:[#allocation2 + $0xce] sm:$0xff]
      %v2905 = vld [vmem:[#allocation2 + $0xd6] sm:$0xff]
      %v2906 = vld [vmem:[#allocation2 + $0xde] sm:$0xff]
      %v2907 = vld [vmem:[#allocation2 + $0xe6] sm:$0xff]
      %v2908 = vld [vmem:[#allocation2 + $0xee] sm:$0xff]
      %v2909 = vld [vmem:[#allocation2 + $0xf6] sm:$0xff]
      %v2910 = vld [vmem:[#allocation2 + $0xfe] sm:$0xff]
      %v2911 = vld [vmem:[#allocation2 + $0x106] sm:$0xff]
      %v2912 = vld [vmem:[#allocation2 + $0x10e] sm:$0xff]
      %v2913 = vld [vmem:[#allocation2 + $0x116] sm:$0xff]
      %v2914 = vld [vmem:[#allocation2 + $0x11e] sm:$0xff]
      %v2915 = vld [vmem:[#allocation2 + $0x126] sm:$0xff]
      %v2916 = vld [vmem:[#allocation2 + $0x12e] sm:$0xff]
      %v2917 = vld [vmem:[#allocation2 + $0x136] sm:$0xff]
      %v2918 = vld [vmem:[#allocation2 + $0x13e] sm:$0x3f]
      %2955 = vrot.lane.b32.xlu0 %v2697, 64
      %v2956 = vpop.permute.xlu0 %2955
      %2957 = vrot.lane.b32.xlu0 %v2698, 64
      %v2958 = vpop.permute.xlu0 %2957
      %2959 = vrot.lane.b32.xlu0 %v2699, 64
      %v2960 = vpop.permute.xlu0 %2959
      %2961 = vrot.lane.b32.xlu0 %v2700, 64
      %v2962 = vpop.permute.xlu0 %2961
      %2963 = vrot.lane.b32.xlu0 %v2701, 64
      %v2964 = vpop.permute.xlu0 %2963
      %2965 = vrot.lane.b32.xlu0 %v2702, 64
      %v2966 = vpop.permute.xlu0 %2965
      %2967 = vrot.lane.b32.xlu0 %v2703, 64
      %v2968 = vpop.permute.xlu0 %2967
      %2969 = vrot.lane.b32.xlu0 %v2704, 64
      %v2970 = vpop.permute.xlu0 %2969
      %2971 = vrot.lane.b32.xlu0 %v2705, 64
      %v2972 = vpop.permute.xlu0 %2971
      %2973 = vrot.lane.b32.xlu0 %v2706, 64
      %v2974 = vpop.permute.xlu0 %2973
      %2975 = vrot.lane.b32.xlu0 %v2707, 64
      %v2976 = vpop.permute.xlu0 %2975
      %2977 = vrot.lane.b32.xlu0 %v2708, 64
      %v2978 = vpop.permute.xlu0 %2977
      %2979 = vrot.lane.b32.xlu0 %v2709, 64
      %v2980 = vpop.permute.xlu0 %2979
      %2981 = vrot.lane.b32.xlu0 %v2710, 64
      %v2982 = vpop.permute.xlu0 %2981
      %2983 = vrot.lane.b32.xlu0 %v2711, 64
      %v2984 = vpop.permute.xlu0 %2983
      %2985 = vrot.lane.b32.xlu0 %v2712, 64
      %v2986 = vpop.permute.xlu0 %2985
      %2987 = vrot.lane.b32.xlu0 %v2713, 64
      %v2988 = vpop.permute.xlu0 %2987
      %2989 = vrot.lane.b32.xlu0 %v2714, 64
      %v2990 = vpop.permute.xlu0 %2989
      %2991 = vrot.lane.b32.xlu0 %v2715, 64
      %v2992 = vpop.permute.xlu0 %2991
      %2993 = vrot.lane.b32.xlu0 %v2716, 64
      %v2994 = vpop.permute.xlu0 %2993
      %2995 = vrot.lane.b32.xlu0 %v2717, 64
      %v2996 = vpop.permute.xlu0 %2995
      %2997 = vrot.lane.b32.xlu0 %v2718, 64
      %v2998 = vpop.permute.xlu0 %2997
      %2999 = vrot.lane.b32.xlu0 %v2719, 64
      %v3000 = vpop.permute.xlu0 %2999
      %3001 = vrot.lane.b32.xlu0 %v2720, 64
      %v3002 = vpop.permute.xlu0 %3001
      %3003 = vrot.lane.b32.xlu0 %v2721, 64
      %v3004 = vpop.permute.xlu0 %3003
      %3005 = vrot.lane.b32.xlu0 %v2722, 64
      %v3006 = vpop.permute.xlu0 %3005
      %3007 = vrot.lane.b32.xlu0 %v2723, 64
      %v3008 = vpop.permute.xlu0 %3007
      %3009 = vrot.lane.b32.xlu0 %v2724, 64
      %v3010 = vpop.permute.xlu0 %3009
      %3011 = vrot.lane.b32.xlu0 %v2725, 64
      %v3012 = vpop.permute.xlu0 %3011
      %3013 = vrot.lane.b32.xlu0 %v2726, 64
      %v3014 = vpop.permute.xlu0 %3013
      %3015 = vrot.lane.b32.xlu0 %v2727, 64
      %v3016 = vpop.permute.xlu0 %3015
      %3017 = vrot.lane.b32.xlu0 %v2728, 64
      %v3018 = vpop.permute.xlu0 %3017
      %3019 = vrot.lane.b32.xlu0 %v2729, 64
      %v3020 = vpop.permute.xlu0 %3019
      %3021 = vrot.lane.b32.xlu0 %v2730, 64
      %v3022 = vpop.permute.xlu0 %3021
      %3023 = vrot.lane.b32.xlu0 %v2731, 64
      %v3024 = vpop.permute.xlu0 %3023
      %3025 = vrot.lane.b32.xlu0 %v2732, 64
      %v3026 = vpop.permute.xlu0 %3025
      %3099 = vrot.lane.b32.xlu0 %v2735, 64
      %v3100 = vpop.permute.xlu0 %3099
      %3101 = vrot.lane.b32.xlu0 %v2736, 64
      %v3102 = vpop.permute.xlu0 %3101
      %3103 = vrot.lane.b32.xlu0 %v2737, 64
      %v3104 = vpop.permute.xlu0 %3103
      %3105 = vrot.lane.b32.xlu0 %v2738, 64
      %v3106 = vpop.permute.xlu0 %3105
      %3107 = vrot.lane.b32.xlu0 %v2739, 64
      %v3108 = vpop.permute.xlu0 %3107
      %3109 = vrot.lane.b32.xlu0 %v2740, 64
      %v3110 = vpop.permute.xlu0 %3109
      %3111 = vrot.lane.b32.xlu0 %v2741, 64
      %v3112 = vpop.permute.xlu0 %3111
      %3113 = vrot.lane.b32.xlu0 %v2742, 64
      %v3114 = vpop.permute.xlu0 %3113
      %3115 = vrot.lane.b32.xlu0 %v2743, 64
      %v3116 = vpop.permute.xlu0 %3115
      %3117 = vrot.lane.b32.xlu0 %v2744, 64
      %v3118 = vpop.permute.xlu0 %3117
      %3119 = vrot.lane.b32.xlu0 %v2745, 64
      %v3120 = vpop.permute.xlu0 %3119
      %3121 = vrot.lane.b32.xlu0 %v2746, 64
      %v3122 = vpop.permute.xlu0 %3121
      %3123 = vrot.lane.b32.xlu0 %v2747, 64
      %v3124 = vpop.permute.xlu0 %3123
      %3125 = vrot.lane.b32.xlu0 %v2748, 64
      %v3126 = vpop.permute.xlu0 %3125
      %3127 = vrot.lane.b32.xlu0 %v2749, 64
      %v3128 = vpop.permute.xlu0 %3127
      %3129 = vrot.lane.b32.xlu0 %v2750, 64
      %v3130 = vpop.permute.xlu0 %3129
      %3131 = vrot.lane.b32.xlu0 %v2751, 64
      %v3132 = vpop.permute.xlu0 %3131
      %3133 = vrot.lane.b32.xlu0 %v2752, 64
      %v3134 = vpop.permute.xlu0 %3133
      %3135 = vrot.lane.b32.xlu0 %v2753, 64
      %v3136 = vpop.permute.xlu0 %3135
      %3137 = vrot.lane.b32.xlu0 %v2754, 64
      %v3138 = vpop.permute.xlu0 %3137
      %3139 = vrot.lane.b32.xlu0 %v2755, 64
      %v3140 = vpop.permute.xlu0 %3139
      %3141 = vrot.lane.b32.xlu0 %v2756, 64
      %v3142 = vpop.permute.xlu0 %3141
      %3143 = vrot.lane.b32.xlu0 %v2757, 64
      %v3144 = vpop.permute.xlu0 %3143
      %3145 = vrot.lane.b32.xlu0 %v2758, 64
      %v3146 = vpop.permute.xlu0 %3145
      %3147 = vrot.lane.b32.xlu0 %v2759, 64
      %v3148 = vpop.permute.xlu0 %3147
      %3149 = vrot.lane.b32.xlu0 %v2760, 64
      %v3150 = vpop.permute.xlu0 %3149
      %3151 = vrot.lane.b32.xlu0 %v2761, 64
      %v3152 = vpop.permute.xlu0 %3151
      %3153 = vrot.lane.b32.xlu0 %v2762, 64
      %v3154 = vpop.permute.xlu0 %3153
      %3155 = vrot.lane.b32.xlu0 %v2763, 64
      %v3156 = vpop.permute.xlu0 %3155
      %3157 = vrot.lane.b32.xlu0 %v2764, 64
      %v3158 = vpop.permute.xlu0 %3157
      %3159 = vrot.lane.b32.xlu0 %v2765, 64
      %v3160 = vpop.permute.xlu0 %3159
      %3161 = vrot.lane.b32.xlu0 %v2766, 64
      %v3162 = vpop.permute.xlu0 %3161
      %3163 = vrot.lane.b32.xlu0 %v2767, 64
      %v3164 = vpop.permute.xlu0 %3163
      %3165 = vrot.lane.b32.xlu0 %v2769, 64
      %v3166 = vpop.permute.xlu0 %3165
      %3167 = vrot.lane.b32.xlu0 %v2770, 64
      %v3168 = vpop.permute.xlu0 %3167
      %3169 = vrot.lane.b32.xlu0 %v2771, 64
      %v3170 = vpop.permute.xlu0 %3169
      %3243 = vrot.lane.b32.xlu0 %v2808, 64
      %v3244 = vpop.permute.xlu0 %3243
      %3245 = vrot.lane.b32.xlu0 %v2809, 64
      %v3246 = vpop.permute.xlu0 %3245
      %3247 = vrot.lane.b32.xlu0 %v2810, 64
      %v3248 = vpop.permute.xlu0 %3247
      %3249 = vrot.lane.b32.xlu0 %v2811, 64
      %v3250 = vpop.permute.xlu0 %3249
      %3251 = vrot.lane.b32.xlu0 %v2812, 64
      %v3252 = vpop.permute.xlu0 %3251
      %3253 = vrot.lane.b32.xlu0 %v2813, 64
      %v3254 = vpop.permute.xlu0 %3253
      %3255 = vrot.lane.b32.xlu0 %v2814, 64
      %v3256 = vpop.permute.xlu0 %3255
      %3257 = vrot.lane.b32.xlu0 %v2815, 64
      %v3258 = vpop.permute.xlu0 %3257
      %3259 = vrot.lane.b32.xlu0 %v2816, 64
      %v3260 = vpop.permute.xlu0 %3259
      %3261 = vrot.lane.b32.xlu0 %v2817, 64
      %v3262 = vpop.permute.xlu0 %3261
      %3263 = vrot.lane.b32.xlu0 %v2818, 64
      %v3264 = vpop.permute.xlu0 %3263
      %3265 = vrot.lane.b32.xlu0 %v2819, 64
      %v3266 = vpop.permute.xlu0 %3265
      %3267 = vrot.lane.b32.xlu0 %v2820, 64
      %v3268 = vpop.permute.xlu0 %3267
      %3269 = vrot.lane.b32.xlu0 %v2821, 64
      %v3270 = vpop.permute.xlu0 %3269
      %3271 = vrot.lane.b32.xlu0 %v2822, 64
      %v3272 = vpop.permute.xlu0 %3271
      %3273 = vrot.lane.b32.xlu0 %v2823, 64
      %v3274 = vpop.permute.xlu0 %3273
      %3275 = vrot.lane.b32.xlu0 %v2824, 64
      %v3276 = vpop.permute.xlu0 %3275
      %3277 = vrot.lane.b32.xlu0 %v2825, 64
      %v3278 = vpop.permute.xlu0 %3277
      %3279 = vrot.lane.b32.xlu0 %v2826, 64
      %v3280 = vpop.permute.xlu0 %3279
      %3281 = vrot.lane.b32.xlu0 %v2827, 64
      %v3282 = vpop.permute.xlu0 %3281
      %3283 = vrot.lane.b32.xlu0 %v2828, 64
      %v3284 = vpop.permute.xlu0 %3283
      %3285 = vrot.lane.b32.xlu0 %v2829, 64
      %v3286 = vpop.permute.xlu0 %3285
      %3287 = vrot.lane.b32.xlu0 %v2830, 64
      %v3288 = vpop.permute.xlu0 %3287
      %3289 = vrot.lane.b32.xlu0 %v2831, 64
      %v3290 = vpop.permute.xlu0 %3289
      %3291 = vrot.lane.b32.xlu0 %v2832, 64
      %v3292 = vpop.permute.xlu0 %3291
      %3293 = vrot.lane.b32.xlu0 %v2833, 64
      %v3294 = vpop.permute.xlu0 %3293
      %3295 = vrot.lane.b32.xlu0 %v2834, 64
      %v3296 = vpop.permute.xlu0 %3295
      %3297 = vrot.lane.b32.xlu0 %v2835, 64
      %v3298 = vpop.permute.xlu0 %3297
      %3299 = vrot.lane.b32.xlu0 %v2836, 64
      %v3300 = vpop.permute.xlu0 %3299
      %3301 = vrot.lane.b32.xlu0 %v2837, 64
      %v3302 = vpop.permute.xlu0 %3301
      %3303 = vrot.lane.b32.xlu0 %v2838, 64
      %v3304 = vpop.permute.xlu0 %3303
      %3305 = vrot.lane.b32.xlu0 %v2839, 64
      %v3306 = vpop.permute.xlu0 %3305
      %3307 = vrot.lane.b32.xlu0 %v2840, 64
      %v3308 = vpop.permute.xlu0 %3307
      %3309 = vrot.lane.b32.xlu0 %v2841, 64
      %v3310 = vpop.permute.xlu0 %3309
      %3311 = vrot.lane.b32.xlu0 %v2842, 64
      %v3312 = vpop.permute.xlu0 %3311
      %3313 = vrot.lane.b32.xlu0 %v2843, 64
      %v3314 = vpop.permute.xlu0 %3313
      %3387 = vrot.lane.b32.xlu0 %v2847, 64
      %v3388 = vpop.permute.xlu0 %3387
      %3389 = vrot.lane.b32.xlu0 %v2848, 64
      %v3390 = vpop.permute.xlu0 %3389
      %3391 = vrot.lane.b32.xlu0 %v2849, 64
      %v3392 = vpop.permute.xlu0 %3391
      %3393 = vrot.lane.b32.xlu0 %v2850, 64
      %v3394 = vpop.permute.xlu0 %3393
      %3395 = vrot.lane.b32.xlu0 %v2851, 64
      %v3396 = vpop.permute.xlu0 %3395
      %3397 = vrot.lane.b32.xlu0 %v2852, 64
      %v3398 = vpop.permute.xlu0 %3397
      %3399 = vrot.lane.b32.xlu0 %v2853, 64
      %v3400 = vpop.permute.xlu0 %3399
      %3401 = vrot.lane.b32.xlu0 %v2854, 64
      %v3402 = vpop.permute.xlu0 %3401
      %3403 = vrot.lane.b32.xlu0 %v2855, 64
      %v3404 = vpop.permute.xlu0 %3403
      %3405 = vrot.lane.b32.xlu0 %v2856, 64
      %v3406 = vpop.permute.xlu0 %3405
      %3407 = vrot.lane.b32.xlu0 %v2857, 64
      %v3408 = vpop.permute.xlu0 %3407
      %3409 = vrot.lane.b32.xlu0 %v2858, 64
      %v3410 = vpop.permute.xlu0 %3409
      %3411 = vrot.lane.b32.xlu0 %v2859, 64
      %v3412 = vpop.permute.xlu0 %3411
      %3413 = vrot.lane.b32.xlu0 %v2860, 64
      %v3414 = vpop.permute.xlu0 %3413
      %3415 = vrot.lane.b32.xlu0 %v2861, 64
      %v3416 = vpop.permute.xlu0 %3415
      %3417 = vrot.lane.b32.xlu0 %v2862, 64
      %v3418 = vpop.permute.xlu0 %3417
      %3419 = vrot.lane.b32.xlu0 %v2863, 64
      %v3420 = vpop.permute.xlu0 %3419
      %3421 = vrot.lane.b32.xlu0 %v2864, 64
      %v3422 = vpop.permute.xlu0 %3421
      %3423 = vrot.lane.b32.xlu0 %v2865, 64
      %v3424 = vpop.permute.xlu0 %3423
      %3425 = vrot.lane.b32.xlu0 %v2866, 64
      %v3426 = vpop.permute.xlu0 %3425
      %3427 = vrot.lane.b32.xlu0 %v2867, 64
      %v3428 = vpop.permute.xlu0 %3427
      %3429 = vrot.lane.b32.xlu0 %v2868, 64
      %v3430 = vpop.permute.xlu0 %3429
      %3431 = vrot.lane.b32.xlu0 %v2869, 64
      %v3432 = vpop.permute.xlu0 %3431
      %3433 = vrot.lane.b32.xlu0 %v2870, 64
      %v3434 = vpop.permute.xlu0 %3433
      %3435 = vrot.lane.b32.xlu0 %v2871, 64
      %v3436 = vpop.permute.xlu0 %3435
      %3437 = vrot.lane.b32.xlu0 %v2872, 64
      %v3438 = vpop.permute.xlu0 %3437
      %3439 = vrot.lane.b32.xlu0 %v2873, 64
      %v3440 = vpop.permute.xlu0 %3439
      %3441 = vrot.lane.b32.xlu0 %v2874, 64
      %v3442 = vpop.permute.xlu0 %3441
      %3443 = vrot.lane.b32.xlu0 %v2875, 64
      %v3444 = vpop.permute.xlu0 %3443
      %3445 = vrot.lane.b32.xlu0 %v2876, 64
      %v3446 = vpop.permute.xlu0 %3445
      %3447 = vrot.lane.b32.xlu0 %v2877, 64
      %v3448 = vpop.permute.xlu0 %3447
      %3449 = vrot.lane.b32.xlu0 %v2878, 64
      %v3450 = vpop.permute.xlu0 %3449
      %3451 = vrot.lane.b32.xlu0 %v2879, 64
      %v3452 = vpop.permute.xlu0 %3451
      %3453 = vrot.lane.b32.xlu0 %v2880, 64
      %v3454 = vpop.permute.xlu0 %3453
      %3455 = vrot.lane.b32.xlu0 %v2881, 64
      %v3456 = vpop.permute.xlu0 %3455
      %3457 = vrot.lane.b32.xlu0 %v2882, 64
      %v3458 = vpop.permute.xlu0 %3457
      %v3495 = vsel %vm308, %v2661, %v2956
      %v3496 = vsel %vm308, %v2662, %v2958
      %v3497 = vsel %vm308, %v2663, %v2960
      %v3498 = vsel %vm308, %v2664, %v2962
      %v3499 = vsel %vm308, %v2665, %v2964
      %v3500 = vsel %vm308, %v2666, %v2966
      %v3501 = vsel %vm308, %v2667, %v2968
      %v3502 = vsel %vm308, %v2668, %v2970
      %v3503 = vsel %vm308, %v2669, %v2972
      %v3504 = vsel %vm308, %v2670, %v2974
      %v3505 = vsel %vm308, %v2671, %v2976
      %v3506 = vsel %vm308, %v2672, %v2978
      %v3507 = vsel %vm308, %v2673, %v2980
      %v3508 = vsel %vm308, %v2674, %v2982
      %v3509 = vsel %vm308, %v2675, %v2984
      %v3510 = vsel %vm308, %v2676, %v2986
      %v3511 = vsel %vm308, %v2677, %v2988
      %v3512 = vsel %vm308, %v2678, %v2990
      %v3513 = vsel %vm308, %v2679, %v2992
      %v3514 = vsel %vm308, %v2680, %v2994
      %v3515 = vsel %vm308, %v2681, %v2996
      %v3516 = vsel %vm308, %v2682, %v2998
      %v3517 = vsel %vm308, %v2683, %v3000
      %v3518 = vsel %vm308, %v2684, %v3002
      %v3519 = vsel %vm308, %v2685, %v3004
      %v3520 = vsel %vm308, %v2686, %v3006
      %v3521 = vsel %vm308, %v2687, %v3008
      %v3522 = vsel %vm308, %v2688, %v3010
      %v3523 = vsel %vm308, %v2689, %v3012
      %v3524 = vsel %vm308, %v2690, %v3014
      %v3525 = vsel %vm308, %v2691, %v3016
      %v3526 = vsel %vm308, %v2692, %v3018
      %v3527 = vsel %vm308, %v2693, %v3020
      %v3528 = vsel %vm308, %v2694, %v3022
      %v3529 = vsel %vm308, %v2695, %v3024
      %v3530 = vsel %vm308, %v2696, %v3026
      %v3531 = vsel %vm308, %v2733, %v3100
      %v3532 = vsel %vm308, %v2734, %v3102
      %v3533 = vsel %vm308, %v2735, %v3104
      %v3534 = vsel %vm308, %v2736, %v3106
      %v3535 = vsel %vm308, %v2737, %v3108
      %v3536 = vsel %vm308, %v2738, %v3110
      %v3537 = vsel %vm308, %v2739, %v3112
      %v3538 = vsel %vm308, %v2740, %v3114
      %v3539 = vsel %vm308, %v2741, %v3116
      %v3540 = vsel %vm308, %v2742, %v3118
      %v3541 = vsel %vm308, %v2743, %v3120
      %v3542 = vsel %vm308, %v2744, %v3122
      %v3543 = vsel %vm308, %v2745, %v3124
      %v3544 = vsel %vm308, %v2746, %v3126
      %v3545 = vsel %vm308, %v2747, %v3128
      %v3546 = vsel %vm308, %v2748, %v3130
      %v3547 = vsel %vm308, %v2749, %v3132
      %v3548 = vsel %vm308, %v2750, %v3134
      %v3549 = vsel %vm308, %v2751, %v3136
      %v3550 = vsel %vm308, %v2752, %v3138
      %v3551 = vsel %vm308, %v2753, %v3140
      %v3552 = vsel %vm308, %v2754, %v3142
      %v3553 = vsel %vm308, %v2755, %v3144
      %v3554 = vsel %vm308, %v2756, %v3146
      %v3555 = vsel %vm308, %v2757, %v3148
      %v3556 = vsel %vm308, %v2758, %v3150
      %v3557 = vsel %vm308, %v2759, %v3152
      %v3558 = vsel %vm308, %v2760, %v3154
      %v3559 = vsel %vm308, %v2761, %v3156
      %v3560 = vsel %vm308, %v2762, %v3158
      %v3561 = vsel %vm308, %v2763, %v3160
      %v3562 = vsel %vm308, %v2764, %v3162
      %v3563 = vsel %vm308, %v2765, %v3164
      %v3564 = vsel %vm308, %v2766, %v3166
      %v3565 = vsel %vm308, %v2767, %v3168
      %v3566 = vsel %vm308, %v2768, %v3170
      %v3567 = vsel %vm308, %v2772, %v3244
      %v3568 = vsel %vm308, %v2773, %v3246
      %v3569 = vsel %vm308, %v2774, %v3248
      %v3570 = vsel %vm308, %v2775, %v3250
      %v3571 = vsel %vm308, %v2776, %v3252
      %v3572 = vsel %vm308, %v2777, %v3254
      %v3573 = vsel %vm308, %v2778, %v3256
      %v3574 = vsel %vm308, %v2779, %v3258
      %v3575 = vsel %vm308, %v2780, %v3260
      %v3576 = vsel %vm308, %v2781, %v3262
      %v3577 = vsel %vm308, %v2782, %v3264
      %v3578 = vsel %vm308, %v2783, %v3266
      %v3579 = vsel %vm308, %v2784, %v3268
      %v3580 = vsel %vm308, %v2785, %v3270
      %v3581 = vsel %vm308, %v2786, %v3272
      %v3582 = vsel %vm308, %v2787, %v3274
      %v3583 = vsel %vm308, %v2788, %v3276
      %v3584 = vsel %vm308, %v2789, %v3278
      %v3585 = vsel %vm308, %v2790, %v3280
      %v3586 = vsel %vm308, %v2791, %v3282
      %v3587 = vsel %vm308, %v2792, %v3284
      %v3588 = vsel %vm308, %v2793, %v3286
      %v3589 = vsel %vm308, %v2794, %v3288
      %v3590 = vsel %vm308, %v2795, %v3290
      %v3591 = vsel %vm308, %v2796, %v3292
      %v3592 = vsel %vm308, %v2797, %v3294
      %v3593 = vsel %vm308, %v2798, %v3296
      %v3594 = vsel %vm308, %v2799, %v3298
      %v3595 = vsel %vm308, %v2800, %v3300
      %v3596 = vsel %vm308, %v2801, %v3302
      %v3597 = vsel %vm308, %v2802, %v3304
      %v3598 = vsel %vm308, %v2803, %v3306
      %v3599 = vsel %vm308, %v2804, %v3308
      %v3600 = vsel %vm308, %v2805, %v3310
      %v3601 = vsel %vm308, %v2806, %v3312
      %v3602 = vsel %vm308, %v2807, %v3314
      %v3603 = vsel %vm308, %v2810, %v3388
      %v3604 = vsel %vm308, %v2811, %v3390
      %v3605 = vsel %vm308, %v2812, %v3392
      %v3606 = vsel %vm308, %v2813, %v3394
      %v3607 = vsel %vm308, %v2814, %v3396
      %v3608 = vsel %vm308, %v2815, %v3398
      %v3609 = vsel %vm308, %v2816, %v3400
      %v3610 = vsel %vm308, %v2817, %v3402
      %v3611 = vsel %vm308, %v2818, %v3404
      %v3612 = vsel %vm308, %v2819, %v3406
      %v3613 = vsel %vm308, %v2820, %v3408
      %v3614 = vsel %vm308, %v2821, %v3410
      %v3615 = vsel %vm308, %v2822, %v3412
      %v3616 = vsel %vm308, %v2823, %v3414
      %v3617 = vsel %vm308, %v2824, %v3416
      %v3618 = vsel %vm308, %v2825, %v3418
      %v3619 = vsel %vm308, %v2826, %v3420
      %v3620 = vsel %vm308, %v2827, %v3422
      %v3621 = vsel %vm308, %v2828, %v3424
      %v3622 = vsel %vm308, %v2829, %v3426
      %v3623 = vsel %vm308, %v2830, %v3428
      %v3624 = vsel %vm308, %v2831, %v3430
      %v3625 = vsel %vm308, %v2832, %v3432
      %v3626 = vsel %vm308, %v2833, %v3434
      %v3627 = vsel %vm308, %v2834, %v3436
      %v3628 = vsel %vm308, %v2835, %v3438
      %v3629 = vsel %vm308, %v2836, %v3440
      %v3630 = vsel %vm308, %v2837, %v3442
      %v3631 = vsel %vm308, %v2838, %v3444
      %v3632 = vsel %vm308, %v2839, %v3446
      %v3633 = vsel %vm308, %v2840, %v3448
      %v3634 = vsel %vm308, %v2841, %v3450
      %v3635 = vsel %vm308, %v2842, %v3452
      %v3636 = vsel %vm308, %v2844, %v3454
      %v3637 = vsel %vm308, %v2845, %v3456
      %v3638 = vsel %vm308, %v2846, %v3458
      %v3639 = vpack.c.bf16 %v3496, %v3495
      %v3640 = vpack.c.bf16 %v3532, %v3531
      %v3641 = vpack.c.bf16 %v3568, %v3567
      %v3642 = vpack.c.bf16 %v3604, %v3603
      %v3643 = vpack.c.bf16 %v2884, %v2883
      %v3644 = vpack.c.bf16 %v3498, %v3497
      %v3645 = vpack.c.bf16 %v3534, %v3533
      %v3646 = vpack.c.bf16 %v3570, %v3569
      %v3647 = vpack.c.bf16 %v3606, %v3605
      %v3648 = vpack.c.bf16 %v2886, %v2885
      %v3649 = vpack.c.bf16 %v3500, %v3499
      %v3650 = vpack.c.bf16 %v3536, %v3535
      %v3651 = vpack.c.bf16 %v3572, %v3571
      %v3652 = vpack.c.bf16 %v3608, %v3607
      %v3653 = vpack.c.bf16 %v2888, %v2887
      %v3654 = vpack.c.bf16 %v3502, %v3501
      %v3655 = vpack.c.bf16 %v3538, %v3537
      %v3656 = vpack.c.bf16 %v3574, %v3573
      %v3657 = vpack.c.bf16 %v3610, %v3609
      %v3658 = vpack.c.bf16 %v2890, %v2889
      %v3659 = vpack.c.bf16 %v3504, %v3503
      %v3660 = vpack.c.bf16 %v3540, %v3539
      %v3661 = vpack.c.bf16 %v3576, %v3575
      %v3662 = vpack.c.bf16 %v3612, %v3611
      %v3663 = vpack.c.bf16 %v2892, %v2891
      %v3664 = vpack.c.bf16 %v3506, %v3505
      %v3665 = vpack.c.bf16 %v3542, %v3541
      %v3666 = vpack.c.bf16 %v3578, %v3577
      %v3667 = vpack.c.bf16 %v3614, %v3613
      %v3668 = vpack.c.bf16 %v2894, %v2893
      %v3669 = vpack.c.bf16 %v3508, %v3507
      %v3670 = vpack.c.bf16 %v3544, %v3543
      %v3671 = vpack.c.bf16 %v3580, %v3579
      %v3672 = vpack.c.bf16 %v3616, %v3615
      %v3673 = vpack.c.bf16 %v2896, %v2895
      %v3674 = vpack.c.bf16 %v3510, %v3509
      %v3675 = vpack.c.bf16 %v3546, %v3545
      %v3676 = vpack.c.bf16 %v3582, %v3581
      %v3677 = vpack.c.bf16 %v3618, %v3617
      %v3678 = vpack.c.bf16 %v2898, %v2897
      %v3679 = vpack.c.bf16 %v3512, %v3511
      %v3680 = vpack.c.bf16 %v3548, %v3547
      %v3681 = vpack.c.bf16 %v3584, %v3583
      %v3682 = vpack.c.bf16 %v3620, %v3619
      %v3683 = vpack.c.bf16 %v2900, %v2899
      %v3684 = vpack.c.bf16 %v3514, %v3513
      %v3685 = vpack.c.bf16 %v3550, %v3549
      %v3686 = vpack.c.bf16 %v3586, %v3585
      %v3687 = vpack.c.bf16 %v3622, %v3621
      %v3688 = vpack.c.bf16 %v2902, %v2901
      %v3689 = vpack.c.bf16 %v3516, %v3515
      %v3690 = vpack.c.bf16 %v3552, %v3551
      %v3691 = vpack.c.bf16 %v3588, %v3587
      %v3692 = vpack.c.bf16 %v3624, %v3623
      %v3693 = vpack.c.bf16 %v2904, %v2903
      %v3694 = vpack.c.bf16 %v3518, %v3517
      %v3695 = vpack.c.bf16 %v3554, %v3553
      %v3696 = vpack.c.bf16 %v3590, %v3589
      %v3697 = vpack.c.bf16 %v3626, %v3625
      %v3698 = vpack.c.bf16 %v2906, %v2905
      %v3699 = vpack.c.bf16 %v3520, %v3519
      %v3700 = vpack.c.bf16 %v3556, %v3555
      %v3701 = vpack.c.bf16 %v3592, %v3591
      %v3702 = vpack.c.bf16 %v3628, %v3627
      %v3703 = vpack.c.bf16 %v2908, %v2907
      %v3704 = vpack.c.bf16 %v3522, %v3521
      %v3705 = vpack.c.bf16 %v3558, %v3557
      %v3706 = vpack.c.bf16 %v3594, %v3593
      %v3707 = vpack.c.bf16 %v3630, %v3629
      %v3708 = vpack.c.bf16 %v2910, %v2909
      %v3709 = vpack.c.bf16 %v3524, %v3523
      %v3710 = vpack.c.bf16 %v3560, %v3559
      %v3711 = vpack.c.bf16 %v3596, %v3595
      %v3712 = vpack.c.bf16 %v3632, %v3631
      %v3713 = vpack.c.bf16 %v2912, %v2911
      %v3714 = vpack.c.bf16 %v3526, %v3525
      %v3715 = vpack.c.bf16 %v3562, %v3561
      %v3716 = vpack.c.bf16 %v3598, %v3597
      %v3717 = vpack.c.bf16 %v3634, %v3633
      %v3718 = vpack.c.bf16 %v2914, %v2913
      %v3719 = vpack.c.bf16 %v3528, %v3527
      %v3720 = vpack.c.bf16 %v3564, %v3563
      %v3721 = vpack.c.bf16 %v3600, %v3599
      %v3722 = vpack.c.bf16 %v3636, %v3635
      %v3723 = vpack.c.bf16 %v2916, %v2915
      %v3724 = vpack.c.bf16 %v3530, %v3529
      %v3725 = vpack.c.bf16 %v3566, %v3565
      %v3726 = vpack.c.bf16 %v3602, %v3601
      %v3727 = vpack.c.bf16 %v3638, %v3637
      %v3728 = vpack.c.bf16 %v2918, %v2917
      %s3729 = scalar_lea.vmem %s2, 288
      %v3730 = vld [vmem:[%s3729] sm:$0xf]
      %v3731 = vld [vmem:[%s3729 + $0x4] sm:$0xf]
      %v3732 = vld [vmem:[%s3729 + $0x8] sm:$0xf]
      %v3733 = vld [vmem:[%s3729 + $0xc] sm:$0xf]
      %v3734 = vld [vmem:[%s3729 + $0x10] sm:$0xf]
      %v3735 = vld [vmem:[%s3729 + $0x14] sm:$0xf]
      %v3736 = vld [vmem:[%s3729 + $0x18] sm:$0xf]
      %v3737 = vld [vmem:[%s3729 + $0x1c] sm:$0xf]
      %v3738 = vld [vmem:[%s3729 + $0x20] sm:$0xf]
      %v3739 = vld [vmem:[%s3729 + $0x24] sm:$0xf]
      %v3740 = vld [vmem:[%s3729 + $0x28] sm:$0xf]
      %v3741 = vld [vmem:[%s3729 + $0x2c] sm:$0xf]
      %v3742 = vld [vmem:[%s3729 + $0x30] sm:$0xf]
      %v3743 = vld [vmem:[%s3729 + $0x34] sm:$0xf]
      %v3744 = vld [vmem:[%s3729 + $0x38] sm:$0xf]
      %v3745 = vld [vmem:[%s3729 + $0x3c] sm:$0xf]
      %v3746 = vld [vmem:[%s3729 + $0x40] sm:$0xf]
      %v3747 = vld [vmem:[%s3729 + $0x44] sm:$0xf]
      %v3748 = vld [vmem:[%s3729 + $0x48] sm:$0xf]
      %v3749 = vld [vmem:[%s3729 + $0x4c] sm:$0xf]
      %v3750 = vld [vmem:[%s3729 + $0x50] sm:$0xf]
      %v3751 = vld [vmem:[%s3729 + $0x54] sm:$0xf]
      %v3752 = vld [vmem:[%s3729 + $0x58] sm:$0xf]
      %v3753 = vld [vmem:[%s3729 + $0x5c] sm:$0xf]
      %v3754 = vld [vmem:[%s3729 + $0x60] sm:$0xf]
      %v3755 = vld [vmem:[%s3729 + $0x64] sm:$0xf]
      %v3756 = vld [vmem:[%s3729 + $0x68] sm:$0xf]
      %v3757 = vld [vmem:[%s3729 + $0x6c] sm:$0xf]
      %v3758 = vld [vmem:[%s3729 + $0x70] sm:$0xf]
      %v3759 = vld [vmem:[%s3729 + $0x74] sm:$0xf]
      %v3760 = vld [vmem:[%s3729 + $0x78] sm:$0xf]
      %v3761 = vld [vmem:[%s3729 + $0x7c] sm:$0xf]
      %v3762 = vld [vmem:[%s3729 + $0x80] sm:$0xf]
      %v3763 = vld [vmem:[%s3729 + $0x84] sm:$0xf]
      %v3764 = vld [vmem:[%s3729 + $0x88] sm:$0xf]
      %v3765 = vld [vmem:[%s3729 + $0x8c] sm:$0xf]
      %v3766 = vld [vmem:[%s3729 + $0x90] sm:$0xf]
      %v3767 = vld [vmem:[%s3729 + $0x94] sm:$0xf]
      %v3768 = vld [vmem:[%s3729 + $0x98] sm:$0xf]
      %v3769 = vld [vmem:[%s3729 + $0x9c] sm:$0xf]
      %v3770 = vld [vmem:[%s3729 + $0xa0] sm:$0xf]
      %v3771 = vld [vmem:[%s3729 + $0xa4] sm:$0xf]
      %v3772 = vld [vmem:[%s3729 + $0xa8] sm:$0xf]
      %v3773 = vld [vmem:[%s3729 + $0xac] sm:$0xf]
      %v3774 = vld [vmem:[%s3729 + $0xb0] sm:$0xf]
      %v3775 = vld [vmem:[%s3729 + $0xb4] sm:$0xf]
      %v3776 = vld [vmem:[%s3729 + $0xb8] sm:$0xf]
      %v3777 = vld [vmem:[%s3729 + $0xbc] sm:$0xf]
      %v3778 = vld [vmem:[%s3729 + $0xc0] sm:$0xf]
      %v3779 = vld [vmem:[%s3729 + $0xc4] sm:$0xf]
      %v3780 = vld [vmem:[%s3729 + $0xc8] sm:$0xf]
      %v3781 = vld [vmem:[%s3729 + $0xcc] sm:$0xf]
      %v3782 = vld [vmem:[%s3729 + $0xd0] sm:$0xf]
      %v3783 = vld [vmem:[%s3729 + $0xd4] sm:$0xf]
      %v3784 = vld [vmem:[%s3729 + $0xd8] sm:$0xf]
      %v3785 = vld [vmem:[%s3729 + $0xdc] sm:$0xf]
      %v3786 = vld [vmem:[%s3729 + $0xe0] sm:$0xf]
      %v3787 = vld [vmem:[%s3729 + $0xe4] sm:$0xf]
      %v3788 = vld [vmem:[%s3729 + $0xe8] sm:$0xf]
      %v3789 = vld [vmem:[%s3729 + $0xec] sm:$0xf]
      %v3790 = vld [vmem:[%s3729 + $0xf0] sm:$0xf]
      %v3791 = vld [vmem:[%s3729 + $0xf4] sm:$0xf]
      %v3792 = vld [vmem:[%s3729 + $0xf8] sm:$0xf]
      %v3793 = vld [vmem:[%s3729 + $0xfc] sm:$0xf]
      %v3794 = vld [vmem:[%s3729 + $0x100] sm:$0xf]
      %v3795 = vld [vmem:[%s3729 + $0x104] sm:$0xf]
      %v3796 = vld [vmem:[%s3729 + $0x108] sm:$0xf]
      %v3797 = vld [vmem:[%s3729 + $0x10c] sm:$0xf]
      %v3798 = vld [vmem:[%s3729 + $0x110] sm:$0xf]
      %v3799 = vld [vmem:[%s3729 + $0x114] sm:$0xf]
      %v3800 = vld [vmem:[%s3729 + $0x118] sm:$0xf]
      %v3801 = vld [vmem:[%s3729 + $0x11c] sm:$0xf]
      %v3874 = vunpack.c.l.b16 %v3730
      %v3875 = vunpack.c.l.b16 %v3731
      %v3876 = vunpack.c.l.b16 %v3732
      %v3877 = vunpack.c.l.b16 %v3733
      %v3878 = vunpack.c.l.b16 %v3734
      %v3879 = vunpack.c.l.b16 %v3735
      %v3880 = vunpack.c.l.b16 %v3736
      %v3881 = vunpack.c.l.b16 %v3737
      %v3882 = vunpack.c.l.b16 %v3738
      %v3883 = vunpack.c.l.b16 %v3739
      %v3884 = vunpack.c.l.b16 %v3740
      %v3885 = vunpack.c.l.b16 %v3741
      %v3886 = vunpack.c.l.b16 %v3742
      %v3887 = vunpack.c.l.b16 %v3743
      %v3888 = vunpack.c.l.b16 %v3744
      %v3889 = vunpack.c.l.b16 %v3745
      %v3890 = vunpack.c.l.b16 %v3746
      %v3891 = vunpack.c.l.b16 %v3747
      %v3892 = vunpack.c.l.b16 %v3748
      %v3893 = vunpack.c.l.b16 %v3749
      %v3894 = vunpack.c.l.b16 %v3750
      %v3895 = vunpack.c.l.b16 %v3751
      %v3896 = vunpack.c.l.b16 %v3752
      %v3897 = vunpack.c.l.b16 %v3753
      %v3898 = vunpack.c.l.b16 %v3754
      %v3899 = vunpack.c.l.b16 %v3755
      %v3900 = vunpack.c.l.b16 %v3756
      %v3901 = vunpack.c.l.b16 %v3757
      %v3902 = vunpack.c.l.b16 %v3758
      %v3903 = vunpack.c.l.b16 %v3759
      %v3904 = vunpack.c.l.b16 %v3760
      %v3905 = vunpack.c.l.b16 %v3761
      %v3906 = vunpack.c.l.b16 %v3762
      %v3907 = vunpack.c.l.b16 %v3763
      %v3908 = vunpack.c.l.b16 %v3764
      %v3909 = vunpack.c.l.b16 %v3765
      %v3910 = vunpack.c.l.b16 %v3766
      %v3911 = vunpack.c.l.b16 %v3767
      %v3912 = vunpack.c.l.b16 %v3768
      %v3913 = vunpack.c.l.b16 %v3769
      %v3914 = vunpack.c.l.b16 %v3770
      %v3915 = vunpack.c.l.b16 %v3771
      %v3916 = vunpack.c.l.b16 %v3772
      %v3917 = vunpack.c.l.b16 %v3773
      %v3918 = vunpack.c.l.b16 %v3774
      %v3919 = vunpack.c.l.b16 %v3775
      %v3920 = vunpack.c.l.b16 %v3776
      %v3921 = vunpack.c.l.b16 %v3777
      %v3922 = vunpack.c.l.b16 %v3778
      %v3923 = vunpack.c.l.b16 %v3779
      %v3924 = vunpack.c.l.b16 %v3780
      %v3925 = vunpack.c.l.b16 %v3781
      %v3926 = vunpack.c.l.b16 %v3782
      %v3927 = vunpack.c.l.b16 %v3783
      %v3928 = vunpack.c.l.b16 %v3784
      %v3929 = vunpack.c.l.b16 %v3785
      %v3930 = vunpack.c.l.b16 %v3786
      %v3931 = vunpack.c.l.b16 %v3787
      %v3932 = vunpack.c.l.b16 %v3788
      %v3933 = vunpack.c.l.b16 %v3789
      %v3934 = vunpack.c.l.b16 %v3790
      %v3935 = vunpack.c.l.b16 %v3791
      %v3936 = vunpack.c.l.b16 %v3792
      %v3937 = vunpack.c.l.b16 %v3793
      %v3938 = vunpack.c.l.b16 %v3794
      %v3939 = vunpack.c.l.b16 %v3795
      %v3940 = vunpack.c.l.b16 %v3796
      %v3941 = vunpack.c.l.b16 %v3797
      %v3942 = vunpack.c.l.b16 %v3798
      %v3943 = vunpack.c.l.b16 %v3799
      %v3944 = vunpack.c.l.b16 %v3800
      %v3945 = vunpack.c.l.b16 %v3801
      %v3946 = vpack.c.b16 %v3875, %v3874
      %v3947 = vpack.c.b16 %v3877, %v3876
      %v3948 = vpack.c.b16 %v3879, %v3878
      %v3949 = vpack.c.b16 %v3881, %v3880
      %v3950 = vpack.c.b16 %v3883, %v3882
      %v3951 = vpack.c.b16 %v3885, %v3884
      %v3952 = vpack.c.b16 %v3887, %v3886
      %v3953 = vpack.c.b16 %v3889, %v3888
      %v3954 = vpack.c.b16 %v3891, %v3890
      %v3955 = vpack.c.b16 %v3893, %v3892
      %v3956 = vpack.c.b16 %v3895, %v3894
      %v3957 = vpack.c.b16 %v3897, %v3896
      %v3958 = vpack.c.b16 %v3899, %v3898
      %v3959 = vpack.c.b16 %v3901, %v3900
      %v3960 = vpack.c.b16 %v3903, %v3902
      %v3961 = vpack.c.b16 %v3905, %v3904
      %v3962 = vpack.c.b16 %v3907, %v3906
      %v3963 = vpack.c.b16 %v3909, %v3908
      %v3964 = vpack.c.b16 %v3911, %v3910
      %v3965 = vpack.c.b16 %v3913, %v3912
      %v3966 = vpack.c.b16 %v3915, %v3914
      %v3967 = vpack.c.b16 %v3917, %v3916
      %v3968 = vpack.c.b16 %v3919, %v3918
      %v3969 = vpack.c.b16 %v3921, %v3920
      %v3970 = vpack.c.b16 %v3923, %v3922
      %v3971 = vpack.c.b16 %v3925, %v3924
      %v3972 = vpack.c.b16 %v3927, %v3926
      %v3973 = vpack.c.b16 %v3929, %v3928
      %v3974 = vpack.c.b16 %v3931, %v3930
      %v3975 = vpack.c.b16 %v3933, %v3932
      %v3976 = vpack.c.b16 %v3935, %v3934
      %v3977 = vpack.c.b16 %v3937, %v3936
      %v3978 = vpack.c.b16 %v3939, %v3938
      %v3979 = vpack.c.b16 %v3941, %v3940
      %v3980 = vpack.c.b16 %v3943, %v3942
      %v3981 = vpack.c.b16 %v3945, %v3944
      %v4019 = vsel %vm308, %v3643, 0
      %v4022 = vsel %vm308, %v3648, 0
      %v4025 = vsel %vm308, %v3653, 0
      %v4028 = vsel %vm308, %v3658, 0
      %v4031 = vsel %vm308, %v3663, 0
      %v4034 = vsel %vm308, %v3668, 0
      %v4037 = vsel %vm308, %v3673, 0
      %v4040 = vsel %vm308, %v3678, 0
      %v4043 = vsel %vm308, %v3683, 0
      %v4046 = vsel %vm308, %v3688, 0
      %v4049 = vsel %vm308, %v3693, 0
      %v4052 = vsel %vm308, %v3698, 0
      %v4055 = vsel %vm308, %v3703, 0
      %v4058 = vsel %vm308, %v3708, 0
      %v4061 = vsel %vm308, %v3713, 0
      %v4064 = vsel %vm308, %v3718, 0
      %v4067 = vsel %vm308, %v3723, 0
      %v4070 = vsel %vm308, %v3728, 0
      %4072 = vmatpush.bf16.msra.mxu0 %v3953
      %4073 = vmatpush.bf16.msra.mxu0 %v3952
      %4074 = vmatpush.bf16.msra.mxu0 %v3951
      %4075 = vmatpush.bf16.msra.mxu0 %v3950
      %4076 = vmatpush.bf16.msra.mxu0 %v3949
      %4077 = vmatpush.bf16.msra.mxu0 %v3948
      %4078 = vmatpush.bf16.msra.mxu0 %v3947
      %4079 = vmatpush.bf16.msra.mxu0 %v3946
      %4080 = vmatmul.bf16.gmra.mxu0 %v3639
      %v4081 = vpop.f32.mrf.mxu0
      %v4082 = vadd.f32 0.0, %v4081
      %v4083 = vpop.f32.mrf.mxu0
      %v4084 = vadd.f32 0.0, %v4083
      %4085 = vmatmul.bf16.gmra.mxu0 %v3644
      %v4086 = vpop.f32.mrf.mxu0
      %v4087 = vadd.f32 0.0, %v4086
      %v4088 = vpop.f32.mrf.mxu0
      %v4089 = vadd.f32 0.0, %v4088
      %4090 = vmatmul.bf16.gmra.mxu0 %v3649
      %v4091 = vpop.f32.mrf.mxu0
      %v4092 = vadd.f32 0.0, %v4091
      %v4093 = vpop.f32.mrf.mxu0
      %v4094 = vadd.f32 0.0, %v4093
      %4095 = vmatmul.bf16.gmra.mxu0 %v3654
      %v4096 = vpop.f32.mrf.mxu0
      %v4097 = vadd.f32 0.0, %v4096
      %v4098 = vpop.f32.mrf.mxu0
      %v4099 = vadd.f32 0.0, %v4098
      %4100 = vmatmul.bf16.gmra.mxu0 %v3659
      %v4101 = vpop.f32.mrf.mxu0
      %v4102 = vadd.f32 0.0, %v4101
      %v4103 = vpop.f32.mrf.mxu0
      %v4104 = vadd.f32 0.0, %v4103
      %4105 = vmatmul.bf16.gmra.mxu0 %v3664
      %v4106 = vpop.f32.mrf.mxu0
      %v4107 = vadd.f32 0.0, %v4106
      %v4108 = vpop.f32.mrf.mxu0
      %v4109 = vadd.f32 0.0, %v4108
      %4110 = vmatmul.bf16.gmra.mxu0 %v3669
      %v4111 = vpop.f32.mrf.mxu0
      %v4112 = vadd.f32 0.0, %v4111
      %v4113 = vpop.f32.mrf.mxu0
      %v4114 = vadd.f32 0.0, %v4113
      %4115 = vmatmul.bf16.gmra.mxu0 %v3674
      %v4116 = vpop.f32.mrf.mxu0
      %v4117 = vadd.f32 0.0, %v4116
      %v4118 = vpop.f32.mrf.mxu0
      %v4119 = vadd.f32 0.0, %v4118
      %4120 = vmatmul.bf16.gmra.mxu0 %v3679
      %v4121 = vpop.f32.mrf.mxu0
      %v4122 = vadd.f32 0.0, %v4121
      %v4123 = vpop.f32.mrf.mxu0
      %v4124 = vadd.f32 0.0, %v4123
      %4125 = vmatmul.bf16.gmra.mxu0 %v3684
      %v4126 = vpop.f32.mrf.mxu0
      %v4127 = vadd.f32 0.0, %v4126
      %v4128 = vpop.f32.mrf.mxu0
      %v4129 = vadd.f32 0.0, %v4128
      %4130 = vmatmul.bf16.gmra.mxu0 %v3689
      %v4131 = vpop.f32.mrf.mxu0
      %v4132 = vadd.f32 0.0, %v4131
      %v4133 = vpop.f32.mrf.mxu0
      %v4134 = vadd.f32 0.0, %v4133
      %4135 = vmatmul.bf16.gmra.mxu0 %v3694
      %v4136 = vpop.f32.mrf.mxu0
      %v4137 = vadd.f32 0.0, %v4136
      %v4138 = vpop.f32.mrf.mxu0
      %v4139 = vadd.f32 0.0, %v4138
      %4140 = vmatmul.bf16.gmra.mxu0 %v3699
      %v4141 = vpop.f32.mrf.mxu0
      %v4142 = vadd.f32 0.0, %v4141
      %v4143 = vpop.f32.mrf.mxu0
      %v4144 = vadd.f32 0.0, %v4143
      %4145 = vmatmul.bf16.gmra.mxu0 %v3704
      %v4146 = vpop.f32.mrf.mxu0
      %v4147 = vadd.f32 0.0, %v4146
      %v4148 = vpop.f32.mrf.mxu0
      %v4149 = vadd.f32 0.0, %v4148
      %4150 = vmatmul.bf16.gmra.mxu0 %v3709
      %v4151 = vpop.f32.mrf.mxu0
      %v4152 = vadd.f32 0.0, %v4151
      %v4153 = vpop.f32.mrf.mxu0
      %v4154 = vadd.f32 0.0, %v4153
      %4155 = vmatmul.bf16.gmra.mxu0 %v3714
      %v4156 = vpop.f32.mrf.mxu0
      %v4157 = vadd.f32 0.0, %v4156
      %v4158 = vpop.f32.mrf.mxu0
      %v4159 = vadd.f32 0.0, %v4158
      %4160 = vmatmul.bf16.gmra.mxu0 %v3719
      %v4161 = vpop.f32.mrf.mxu0
      %v4162 = vadd.f32 0.0, %v4161
      %v4163 = vpop.f32.mrf.mxu0
      %v4164 = vadd.f32 0.0, %v4163
      %4165 = vmatmul.bf16.gmra.mxu0 %v3724
      %v4166 = vpop.f32.mrf.mxu0
      %v4167 = vadd.f32 0.0, %v4166
      %v4168 = vpop.f32.mrf.mxu0
      %v4169 = vadd.f32 0.0, %v4168
      %4170 = vdwg.mxu0
      %4171 = vmatpush.bf16.msra.mxu0 %v3961
      %4172 = vmatpush.bf16.msra.mxu0 %v3960
      %4173 = vmatpush.bf16.msra.mxu0 %v3959
      %4174 = vmatpush.bf16.msra.mxu0 %v3958
      %4175 = vmatpush.bf16.msra.mxu0 %v3957
      %4176 = vmatpush.bf16.msra.mxu0 %v3956
      %4177 = vmatpush.bf16.msra.mxu0 %v3955
      %4178 = vmatpush.bf16.msra.mxu0 %v3954
      %4179 = vmatmul.bf16.gmra.mxu0 %v3640
      %v4180 = vpop.f32.mrf.mxu0
      %v4181 = vadd.f32 %v4082, %v4180
      %v4182 = vpop.f32.mrf.mxu0
      %v4183 = vadd.f32 %v4084, %v4182
      %4184 = vmatmul.bf16.gmra.mxu0 %v3645
      %v4185 = vpop.f32.mrf.mxu0
      %v4186 = vadd.f32 %v4087, %v4185
      %v4187 = vpop.f32.mrf.mxu0
      %v4188 = vadd.f32 %v4089, %v4187
      %4189 = vmatmul.bf16.gmra.mxu0 %v3650
      %v4190 = vpop.f32.mrf.mxu0
      %v4191 = vadd.f32 %v4092, %v4190
      %v4192 = vpop.f32.mrf.mxu0
      %v4193 = vadd.f32 %v4094, %v4192
      %4194 = vmatmul.bf16.gmra.mxu0 %v3655
      %v4195 = vpop.f32.mrf.mxu0
      %v4196 = vadd.f32 %v4097, %v4195
      %v4197 = vpop.f32.mrf.mxu0
      %v4198 = vadd.f32 %v4099, %v4197
      %4199 = vmatmul.bf16.gmra.mxu0 %v3660
      %v4200 = vpop.f32.mrf.mxu0
      %v4201 = vadd.f32 %v4102, %v4200
      %v4202 = vpop.f32.mrf.mxu0
      %v4203 = vadd.f32 %v4104, %v4202
      %4204 = vmatmul.bf16.gmra.mxu0 %v3665
      %v4205 = vpop.f32.mrf.mxu0
      %v4206 = vadd.f32 %v4107, %v4205
      %v4207 = vpop.f32.mrf.mxu0
      %v4208 = vadd.f32 %v4109, %v4207
      %4209 = vmatmul.bf16.gmra.mxu0 %v3670
      %v4210 = vpop.f32.mrf.mxu0
      %v4211 = vadd.f32 %v4112, %v4210
      %v4212 = vpop.f32.mrf.mxu0
      %v4213 = vadd.f32 %v4114, %v4212
      %4214 = vmatmul.bf16.gmra.mxu0 %v3675
      %v4215 = vpop.f32.mrf.mxu0
      %v4216 = vadd.f32 %v4117, %v4215
      %v4217 = vpop.f32.mrf.mxu0
      %v4218 = vadd.f32 %v4119, %v4217
      %4219 = vmatmul.bf16.gmra.mxu0 %v3680
      %v4220 = vpop.f32.mrf.mxu0
      %v4221 = vadd.f32 %v4122, %v4220
      %v4222 = vpop.f32.mrf.mxu0
      %v4223 = vadd.f32 %v4124, %v4222
      %4224 = vmatmul.bf16.gmra.mxu0 %v3685
      %v4225 = vpop.f32.mrf.mxu0
      %v4226 = vadd.f32 %v4127, %v4225
      %v4227 = vpop.f32.mrf.mxu0
      %v4228 = vadd.f32 %v4129, %v4227
      %4229 = vmatmul.bf16.gmra.mxu0 %v3690
      %v4230 = vpop.f32.mrf.mxu0
      %v4231 = vadd.f32 %v4132, %v4230
      %v4232 = vpop.f32.mrf.mxu0
      %v4233 = vadd.f32 %v4134, %v4232
      %4234 = vmatmul.bf16.gmra.mxu0 %v3695
      %v4235 = vpop.f32.mrf.mxu0
      %v4236 = vadd.f32 %v4137, %v4235
      %v4237 = vpop.f32.mrf.mxu0
      %v4238 = vadd.f32 %v4139, %v4237
      %4239 = vmatmul.bf16.gmra.mxu0 %v3700
      %v4240 = vpop.f32.mrf.mxu0
      %v4241 = vadd.f32 %v4142, %v4240
      %v4242 = vpop.f32.mrf.mxu0
      %v4243 = vadd.f32 %v4144, %v4242
      %4244 = vmatmul.bf16.gmra.mxu0 %v3705
      %v4245 = vpop.f32.mrf.mxu0
      %v4246 = vadd.f32 %v4147, %v4245
      %v4247 = vpop.f32.mrf.mxu0
      %v4248 = vadd.f32 %v4149, %v4247
      %4249 = vmatmul.bf16.gmra.mxu0 %v3710
      %v4250 = vpop.f32.mrf.mxu0
      %v4251 = vadd.f32 %v4152, %v4250
      %v4252 = vpop.f32.mrf.mxu0
      %v4253 = vadd.f32 %v4154, %v4252
      %4254 = vmatmul.bf16.gmra.mxu0 %v3715
      %v4255 = vpop.f32.mrf.mxu0
      %v4256 = vadd.f32 %v4157, %v4255
      %v4257 = vpop.f32.mrf.mxu0
      %v4258 = vadd.f32 %v4159, %v4257
      %4259 = vmatmul.bf16.gmra.mxu0 %v3720
      %v4260 = vpop.f32.mrf.mxu0
      %v4261 = vadd.f32 %v4162, %v4260
      %v4262 = vpop.f32.mrf.mxu0
      %v4263 = vadd.f32 %v4164, %v4262
      %4264 = vmatmul.bf16.gmra.mxu0 %v3725
      %v4265 = vpop.f32.mrf.mxu0
      %v4266 = vadd.f32 %v4167, %v4265
      %v4267 = vpop.f32.mrf.mxu0
      %v4268 = vadd.f32 %v4169, %v4267
      %4269 = vdwg.mxu0
      %4270 = vmatpush.bf16.msra.mxu0 %v3969
      %4271 = vmatpush.bf16.msra.mxu0 %v3968
      %4272 = vmatpush.bf16.msra.mxu0 %v3967
      %4273 = vmatpush.bf16.msra.mxu0 %v3966
      %4274 = vmatpush.bf16.msra.mxu0 %v3965
      %4275 = vmatpush.bf16.msra.mxu0 %v3964
      %4276 = vmatpush.bf16.msra.mxu0 %v3963
      %4277 = vmatpush.bf16.msra.mxu0 %v3962
      %4278 = vmatmul.bf16.gmra.mxu0 %v3641
      %v4279 = vpop.f32.mrf.mxu0
      %v4280 = vadd.f32 %v4181, %v4279
      %v4281 = vpop.f32.mrf.mxu0
      %v4282 = vadd.f32 %v4183, %v4281
      %4283 = vmatmul.bf16.gmra.mxu0 %v3646
      %v4284 = vpop.f32.mrf.mxu0
      %v4285 = vadd.f32 %v4186, %v4284
      %v4286 = vpop.f32.mrf.mxu0
      %v4287 = vadd.f32 %v4188, %v4286
      %4288 = vmatmul.bf16.gmra.mxu0 %v3651
      %v4289 = vpop.f32.mrf.mxu0
      %v4290 = vadd.f32 %v4191, %v4289
      %v4291 = vpop.f32.mrf.mxu0
      %v4292 = vadd.f32 %v4193, %v4291
      %4293 = vmatmul.bf16.gmra.mxu0 %v3656
      %v4294 = vpop.f32.mrf.mxu0
      %v4295 = vadd.f32 %v4196, %v4294
      %v4296 = vpop.f32.mrf.mxu0
      %v4297 = vadd.f32 %v4198, %v4296
      %4298 = vmatmul.bf16.gmra.mxu0 %v3661
      %v4299 = vpop.f32.mrf.mxu0
      %v4300 = vadd.f32 %v4201, %v4299
      %v4301 = vpop.f32.mrf.mxu0
      %v4302 = vadd.f32 %v4203, %v4301
      %4303 = vmatmul.bf16.gmra.mxu0 %v3666
      %v4304 = vpop.f32.mrf.mxu0
      %v4305 = vadd.f32 %v4206, %v4304
      %v4306 = vpop.f32.mrf.mxu0
      %v4307 = vadd.f32 %v4208, %v4306
      %4308 = vmatmul.bf16.gmra.mxu0 %v3671
      %v4309 = vpop.f32.mrf.mxu0
      %v4310 = vadd.f32 %v4211, %v4309
      %v4311 = vpop.f32.mrf.mxu0
      %v4312 = vadd.f32 %v4213, %v4311
      %4313 = vmatmul.bf16.gmra.mxu0 %v3676
      %v4314 = vpop.f32.mrf.mxu0
      %v4315 = vadd.f32 %v4216, %v4314
      %v4316 = vpop.f32.mrf.mxu0
      %v4317 = vadd.f32 %v4218, %v4316
      %4318 = vmatmul.bf16.gmra.mxu0 %v3681
      %v4319 = vpop.f32.mrf.mxu0
      %v4320 = vadd.f32 %v4221, %v4319
      %v4321 = vpop.f32.mrf.mxu0
      %v4322 = vadd.f32 %v4223, %v4321
      %4323 = vmatmul.bf16.gmra.mxu0 %v3686
      %v4324 = vpop.f32.mrf.mxu0
      %v4325 = vadd.f32 %v4226, %v4324
      %v4326 = vpop.f32.mrf.mxu0
      %v4327 = vadd.f32 %v4228, %v4326
      %4328 = vmatmul.bf16.gmra.mxu0 %v3691
      %v4329 = vpop.f32.mrf.mxu0
      %v4330 = vadd.f32 %v4231, %v4329
      %v4331 = vpop.f32.mrf.mxu0
      %v4332 = vadd.f32 %v4233, %v4331
      %4333 = vmatmul.bf16.gmra.mxu0 %v3696
      %v4334 = vpop.f32.mrf.mxu0
      %v4335 = vadd.f32 %v4236, %v4334
      %v4336 = vpop.f32.mrf.mxu0
      %v4337 = vadd.f32 %v4238, %v4336
      %4338 = vmatmul.bf16.gmra.mxu0 %v3701
      %v4339 = vpop.f32.mrf.mxu0
      %v4340 = vadd.f32 %v4241, %v4339
      %v4341 = vpop.f32.mrf.mxu0
      %v4342 = vadd.f32 %v4243, %v4341
      %4343 = vmatmul.bf16.gmra.mxu0 %v3706
      %v4344 = vpop.f32.mrf.mxu0
      %v4345 = vadd.f32 %v4246, %v4344
      %v4346 = vpop.f32.mrf.mxu0
      %v4347 = vadd.f32 %v4248, %v4346
      %4348 = vmatmul.bf16.gmra.mxu0 %v3711
      %v4349 = vpop.f32.mrf.mxu0
      %v4350 = vadd.f32 %v4251, %v4349
      %v4351 = vpop.f32.mrf.mxu0
      %v4352 = vadd.f32 %v4253, %v4351
      %4353 = vmatmul.bf16.gmra.mxu0 %v3716
      %v4354 = vpop.f32.mrf.mxu0
      %v4355 = vadd.f32 %v4256, %v4354
      %v4356 = vpop.f32.mrf.mxu0
      %v4357 = vadd.f32 %v4258, %v4356
      %4358 = vmatmul.bf16.gmra.mxu0 %v3721
      %v4359 = vpop.f32.mrf.mxu0
      %v4360 = vadd.f32 %v4261, %v4359
      %v4361 = vpop.f32.mrf.mxu0
      %v4362 = vadd.f32 %v4263, %v4361
      %4363 = vmatmul.bf16.gmra.mxu0 %v3726
      %v4364 = vpop.f32.mrf.mxu0
      %v4365 = vadd.f32 %v4266, %v4364
      %v4366 = vpop.f32.mrf.mxu0
      %v4367 = vadd.f32 %v4268, %v4366
      %4368 = vdwg.mxu0
      %4369 = vmatpush.bf16.msra.mxu0 %v3977
      %4370 = vmatpush.bf16.msra.mxu0 %v3976
      %4371 = vmatpush.bf16.msra.mxu0 %v3975
      %4372 = vmatpush.bf16.msra.mxu0 %v3974
      %4373 = vmatpush.bf16.msra.mxu0 %v3973
      %4374 = vmatpush.bf16.msra.mxu0 %v3972
      %4375 = vmatpush.bf16.msra.mxu0 %v3971
      %4376 = vmatpush.bf16.msra.mxu0 %v3970
      %4377 = vmatmul.bf16.gmra.mxu0 %v3642
      %v4378 = vpop.f32.mrf.mxu0
      %v4379 = vadd.f32 %v4280, %v4378
      %v4380 = vpop.f32.mrf.mxu0
      %v4381 = vadd.f32 %v4282, %v4380
      %4382 = vmatmul.bf16.gmra.mxu0 %v3647
      %v4383 = vpop.f32.mrf.mxu0
      %v4384 = vadd.f32 %v4285, %v4383
      %v4385 = vpop.f32.mrf.mxu0
      %v4386 = vadd.f32 %v4287, %v4385
      %4387 = vmatmul.bf16.gmra.mxu0 %v3652
      %v4388 = vpop.f32.mrf.mxu0
      %v4389 = vadd.f32 %v4290, %v4388
      %v4390 = vpop.f32.mrf.mxu0
      %v4391 = vadd.f32 %v4292, %v4390
      %4392 = vmatmul.bf16.gmra.mxu0 %v3657
      %v4393 = vpop.f32.mrf.mxu0
      %v4394 = vadd.f32 %v4295, %v4393
      %v4395 = vpop.f32.mrf.mxu0
      %v4396 = vadd.f32 %v4297, %v4395
      %4397 = vmatmul.bf16.gmra.mxu0 %v3662
      %v4398 = vpop.f32.mrf.mxu0
      %v4399 = vadd.f32 %v4300, %v4398
      %v4400 = vpop.f32.mrf.mxu0
      %v4401 = vadd.f32 %v4302, %v4400
      %4402 = vmatmul.bf16.gmra.mxu0 %v3667
      %v4403 = vpop.f32.mrf.mxu0
      %v4404 = vadd.f32 %v4305, %v4403
      %v4405 = vpop.f32.mrf.mxu0
      %v4406 = vadd.f32 %v4307, %v4405
      %4407 = vmatmul.bf16.gmra.mxu0 %v3672
      %v4408 = vpop.f32.mrf.mxu0
      %v4409 = vadd.f32 %v4310, %v4408
      %v4410 = vpop.f32.mrf.mxu0
      %v4411 = vadd.f32 %v4312, %v4410
      %4412 = vmatmul.bf16.gmra.mxu0 %v3677
      %v4413 = vpop.f32.mrf.mxu0
      %v4414 = vadd.f32 %v4315, %v4413
      %v4415 = vpop.f32.mrf.mxu0
      %v4416 = vadd.f32 %v4317, %v4415
      %4417 = vmatmul.bf16.gmra.mxu0 %v3682
      %v4418 = vpop.f32.mrf.mxu0
      %v4419 = vadd.f32 %v4320, %v4418
      %v4420 = vpop.f32.mrf.mxu0
      %v4421 = vadd.f32 %v4322, %v4420
      %4422 = vmatmul.bf16.gmra.mxu0 %v3687
      %v4423 = vpop.f32.mrf.mxu0
      %v4424 = vadd.f32 %v4325, %v4423
      %v4425 = vpop.f32.mrf.mxu0
      %v4426 = vadd.f32 %v4327, %v4425
      %4427 = vmatmul.bf16.gmra.mxu0 %v3692
      %v4428 = vpop.f32.mrf.mxu0
      %v4429 = vadd.f32 %v4330, %v4428
      %v4430 = vpop.f32.mrf.mxu0
      %v4431 = vadd.f32 %v4332, %v4430
      %4432 = vmatmul.bf16.gmra.mxu0 %v3697
      %v4433 = vpop.f32.mrf.mxu0
      %v4434 = vadd.f32 %v4335, %v4433
      %v4435 = vpop.f32.mrf.mxu0
      %v4436 = vadd.f32 %v4337, %v4435
      %4437 = vmatmul.bf16.gmra.mxu0 %v3702
      %v4438 = vpop.f32.mrf.mxu0
      %v4439 = vadd.f32 %v4340, %v4438
      %v4440 = vpop.f32.mrf.mxu0
      %v4441 = vadd.f32 %v4342, %v4440
      %4442 = vmatmul.bf16.gmra.mxu0 %v3707
      %v4443 = vpop.f32.mrf.mxu0
      %v4444 = vadd.f32 %v4345, %v4443
      %v4445 = vpop.f32.mrf.mxu0
      %v4446 = vadd.f32 %v4347, %v4445
      %4447 = vmatmul.bf16.gmra.mxu0 %v3712
      %v4448 = vpop.f32.mrf.mxu0
      %v4449 = vadd.f32 %v4350, %v4448
      %v4450 = vpop.f32.mrf.mxu0
      %v4451 = vadd.f32 %v4352, %v4450
      %4452 = vmatmul.bf16.gmra.mxu0 %v3717
      %v4453 = vpop.f32.mrf.mxu0
      %v4454 = vadd.f32 %v4355, %v4453
      %v4455 = vpop.f32.mrf.mxu0
      %v4456 = vadd.f32 %v4357, %v4455
      %4457 = vmatmul.bf16.gmra.mxu0 %v3722
      %v4458 = vpop.f32.mrf.mxu0
      %v4459 = vadd.f32 %v4360, %v4458
      %v4460 = vpop.f32.mrf.mxu0
      %v4461 = vadd.f32 %v4362, %v4460
      %4462 = vmatmul.bf16.gmra.mxu0 %v3727
      %v4463 = vpop.f32.mrf.mxu0
      %v4464 = vadd.f32 %v4365, %v4463
      %v4465 = vpop.f32.mrf.mxu0
      %v4466 = vadd.f32 %v4367, %v4465
      %4467 = vdwg.mxu0
      %4468 = vmatpush.bf16.msra.mxu0 0
      %4469 = vmatpush.bf16.msra.mxu0 0
      %4470 = vmatpush.bf16.msra.mxu0 0
      %4471 = vmatpush.bf16.msra.mxu0 0
      %4472 = vmatpush.bf16.msra.mxu0 %v3981
      %4473 = vmatpush.bf16.msra.mxu0 %v3980
      %4474 = vmatpush.bf16.msra.mxu0 %v3979
      %4475 = vmatpush.bf16.msra.mxu0 %v3978
      %4476 = vmatmul.bf16.gmra.mxu0 %v4019
      %v4477 = vpop.f32.mrf.mxu0
      %v4478 = vadd.f32 %v4379, %v4477
      %v4479 = vpop.f32.mrf.mxu0
      %v4480 = vadd.f32 %v4381, %v4479
      %4481 = vmatmul.bf16.gmra.mxu0 %v4022
      %v4482 = vpop.f32.mrf.mxu0
      %v4483 = vadd.f32 %v4384, %v4482
      %v4484 = vpop.f32.mrf.mxu0
      %v4485 = vadd.f32 %v4386, %v4484
      %4486 = vmatmul.bf16.gmra.mxu0 %v4025
      %v4487 = vpop.f32.mrf.mxu0
      %v4488 = vadd.f32 %v4389, %v4487
      %v4489 = vpop.f32.mrf.mxu0
      %v4490 = vadd.f32 %v4391, %v4489
      %4491 = vmatmul.bf16.gmra.mxu0 %v4028
      %v4492 = vpop.f32.mrf.mxu0
      %v4493 = vadd.f32 %v4394, %v4492
      %v4494 = vpop.f32.mrf.mxu0
      %v4495 = vadd.f32 %v4396, %v4494
      %4496 = vmatmul.bf16.gmra.mxu0 %v4031
      %v4497 = vpop.f32.mrf.mxu0
      %v4498 = vadd.f32 %v4399, %v4497
      %v4499 = vpop.f32.mrf.mxu0
      %v4500 = vadd.f32 %v4401, %v4499
      %4501 = vmatmul.bf16.gmra.mxu0 %v4034
      %v4502 = vpop.f32.mrf.mxu0
      %v4503 = vadd.f32 %v4404, %v4502
      %v4504 = vpop.f32.mrf.mxu0
      %v4505 = vadd.f32 %v4406, %v4504
      %4506 = vmatmul.bf16.gmra.mxu0 %v4037
      %v4507 = vpop.f32.mrf.mxu0
      %v4508 = vadd.f32 %v4409, %v4507
      %v4509 = vpop.f32.mrf.mxu0
      %v4510 = vadd.f32 %v4411, %v4509
      %4511 = vmatmul.bf16.gmra.mxu0 %v4040
      %v4512 = vpop.f32.mrf.mxu0
      %v4513 = vadd.f32 %v4414, %v4512
      %v4514 = vpop.f32.mrf.mxu0
      %v4515 = vadd.f32 %v4416, %v4514
      %4516 = vmatmul.bf16.gmra.mxu0 %v4043
      %v4517 = vpop.f32.mrf.mxu0
      %v4518 = vadd.f32 %v4419, %v4517
      %v4519 = vpop.f32.mrf.mxu0
      %v4520 = vadd.f32 %v4421, %v4519
      %4521 = vmatmul.bf16.gmra.mxu0 %v4046
      %v4522 = vpop.f32.mrf.mxu0
      %v4523 = vadd.f32 %v4424, %v4522
      %v4524 = vpop.f32.mrf.mxu0
      %v4525 = vadd.f32 %v4426, %v4524
      %4526 = vmatmul.bf16.gmra.mxu0 %v4049
      %v4527 = vpop.f32.mrf.mxu0
      %v4528 = vadd.f32 %v4429, %v4527
      %v4529 = vpop.f32.mrf.mxu0
      %v4530 = vadd.f32 %v4431, %v4529
      %4531 = vmatmul.bf16.gmra.mxu0 %v4052
      %v4532 = vpop.f32.mrf.mxu0
      %v4533 = vadd.f32 %v4434, %v4532
      %v4534 = vpop.f32.mrf.mxu0
      %v4535 = vadd.f32 %v4436, %v4534
      %4536 = vmatmul.bf16.gmra.mxu0 %v4055
      %v4537 = vpop.f32.mrf.mxu0
      %v4538 = vadd.f32 %v4439, %v4537
      %v4539 = vpop.f32.mrf.mxu0
      %v4540 = vadd.f32 %v4441, %v4539
      %4541 = vmatmul.bf16.gmra.mxu0 %v4058
      %v4542 = vpop.f32.mrf.mxu0
      %v4543 = vadd.f32 %v4444, %v4542
      %v4544 = vpop.f32.mrf.mxu0
      %v4545 = vadd.f32 %v4446, %v4544
      %4546 = vmatmul.bf16.gmra.mxu0 %v4061
      %v4547 = vpop.f32.mrf.mxu0
      %v4548 = vadd.f32 %v4449, %v4547
      %v4549 = vpop.f32.mrf.mxu0
      %v4550 = vadd.f32 %v4451, %v4549
      %4551 = vmatmul.bf16.gmra.mxu0 %v4064
      %v4552 = vpop.f32.mrf.mxu0
      %v4553 = vadd.f32 %v4454, %v4552
      %v4554 = vpop.f32.mrf.mxu0
      %v4555 = vadd.f32 %v4456, %v4554
      %4556 = vmatmul.bf16.gmra.mxu0 %v4067
      %v4557 = vpop.f32.mrf.mxu0
      %v4558 = vadd.f32 %v4459, %v4557
      %v4559 = vpop.f32.mrf.mxu0
      %v4560 = vadd.f32 %v4461, %v4559
      %4561 = vmatmul.bf16.gmra.mxu0 %v4070
      %v4562 = vpop.f32.mrf.mxu0
      %v4563 = vadd.f32 %v4464, %v4562
      %v4564 = vpop.f32.mrf.mxu0
      %v4565 = vadd.f32 %v4466, %v4564
      %4566 = vdwg.mxu0
      %s4567 = scalar_lea.vmem %s3, 1
      %v4568 = vld [vmem:[%s4567] sm:$0x1]
      %v4570 = vperm.slane %v4568, 0
      %v4572 = vmul.f32 %v4478, %v4570
      %v4573 = vmul.f32 %v4480, %v4570
      %v4574 = vmul.f32 %v4483, %v4570
      %v4575 = vmul.f32 %v4485, %v4570
      %v4576 = vmul.f32 %v4488, %v4570
      %v4577 = vmul.f32 %v4490, %v4570
      %v4578 = vmul.f32 %v4493, %v4570
      %v4579 = vmul.f32 %v4495, %v4570
      %v4580 = vmul.f32 %v4498, %v4570
      %v4581 = vmul.f32 %v4500, %v4570
      %v4582 = vmul.f32 %v4503, %v4570
      %v4583 = vmul.f32 %v4505, %v4570
      %v4584 = vmul.f32 %v4508, %v4570
      %v4585 = vmul.f32 %v4510, %v4570
      %v4586 = vmul.f32 %v4513, %v4570
      %v4587 = vmul.f32 %v4515, %v4570
      %v4588 = vmul.f32 %v4518, %v4570
      %v4589 = vmul.f32 %v4520, %v4570
      %v4590 = vmul.f32 %v4523, %v4570
      %v4591 = vmul.f32 %v4525, %v4570
      %v4592 = vmul.f32 %v4528, %v4570
      %v4593 = vmul.f32 %v4530, %v4570
      %v4594 = vmul.f32 %v4533, %v4570
      %v4595 = vmul.f32 %v4535, %v4570
      %v4596 = vmul.f32 %v4538, %v4570
      %v4597 = vmul.f32 %v4540, %v4570
      %v4598 = vmul.f32 %v4543, %v4570
      %v4599 = vmul.f32 %v4545, %v4570
      %v4600 = vmul.f32 %v4548, %v4570
      %v4601 = vmul.f32 %v4550, %v4570
      %v4602 = vmul.f32 %v4553, %v4570
      %v4603 = vmul.f32 %v4555, %v4570
      %v4604 = vmul.f32 %v4558, %v4570
      %v4605 = vmul.f32 %v4560, %v4570
      %v4606 = vmul.f32 %v4563, %v4570
      %v4607 = vmul.f32 %v4565, %v4570
      %s4608 = scalar_lea.vmem %s4, 1
      %v4609 = vld [vmem:[%s4608] sm:$0x1]
      %v4611 = vperm.slane %v4609, 0
      %v4613 = vadd.f32 %v4572, %v4611
      %v4614 = vadd.f32 %v4573, %v4611
      %v4615 = vadd.f32 %v4574, %v4611
      %v4616 = vadd.f32 %v4575, %v4611
      %v4617 = vadd.f32 %v4576, %v4611
      %v4618 = vadd.f32 %v4577, %v4611
      %v4619 = vadd.f32 %v4578, %v4611
      %v4620 = vadd.f32 %v4579, %v4611
      %v4621 = vadd.f32 %v4580, %v4611
      %v4622 = vadd.f32 %v4581, %v4611
      %v4623 = vadd.f32 %v4582, %v4611
      %v4624 = vadd.f32 %v4583, %v4611
      %v4625 = vadd.f32 %v4584, %v4611
      %v4626 = vadd.f32 %v4585, %v4611
      %v4627 = vadd.f32 %v4586, %v4611
      %v4628 = vadd.f32 %v4587, %v4611
      %v4629 = vadd.f32 %v4588, %v4611
      %v4630 = vadd.f32 %v4589, %v4611
      %v4631 = vadd.f32 %v4590, %v4611
      %v4632 = vadd.f32 %v4591, %v4611
      %v4633 = vadd.f32 %v4592, %v4611
      %v4634 = vadd.f32 %v4593, %v4611
      %v4635 = vadd.f32 %v4594, %v4611
      %v4636 = vadd.f32 %v4595, %v4611
      %v4637 = vadd.f32 %v4596, %v4611
      %v4638 = vadd.f32 %v4597, %v4611
      %v4639 = vadd.f32 %v4598, %v4611
      %v4640 = vadd.f32 %v4599, %v4611
      %v4641 = vadd.f32 %v4600, %v4611
      %v4642 = vadd.f32 %v4601, %v4611
      %v4643 = vadd.f32 %v4602, %v4611
      %v4644 = vadd.f32 %v4603, %v4611
      %v4645 = vadd.f32 %v4604, %v4611
      %v4646 = vadd.f32 %v4605, %v4611
      %v4647 = vadd.f32 %v4606, %v4611
      %v4648 = vadd.f32 %v4607, %v4611
      %v4649 = vmax.f32 %v4613, 0.0
      %v4650 = vmax.f32 %v4614, 0.0
      %v4651 = vmax.f32 %v4615, 0.0
      %v4652 = vmax.f32 %v4616, 0.0
      %v4653 = vmax.f32 %v4617, 0.0
      %v4654 = vmax.f32 %v4618, 0.0
      %v4655 = vmax.f32 %v4619, 0.0
      %v4656 = vmax.f32 %v4620, 0.0
      %v4657 = vmax.f32 %v4621, 0.0
      %v4658 = vmax.f32 %v4622, 0.0
      %v4659 = vmax.f32 %v4623, 0.0
      %v4660 = vmax.f32 %v4624, 0.0
      %v4661 = vmax.f32 %v4625, 0.0
      %v4662 = vmax.f32 %v4626, 0.0
      %v4663 = vmax.f32 %v4627, 0.0
      %v4664 = vmax.f32 %v4628, 0.0
      %v4665 = vmax.f32 %v4629, 0.0
      %v4666 = vmax.f32 %v4630, 0.0
      %v4667 = vmax.f32 %v4631, 0.0
      %v4668 = vmax.f32 %v4632, 0.0
      %v4669 = vmax.f32 %v4633, 0.0
      %v4670 = vmax.f32 %v4634, 0.0
      %v4671 = vmax.f32 %v4635, 0.0
      %v4672 = vmax.f32 %v4636, 0.0
      %v4673 = vmax.f32 %v4637, 0.0
      %v4674 = vmax.f32 %v4638, 0.0
      %v4675 = vmax.f32 %v4639, 0.0
      %v4676 = vmax.f32 %v4640, 0.0
      %v4677 = vmax.f32 %v4641, 0.0
      %v4678 = vmax.f32 %v4642, 0.0
      %v4679 = vmax.f32 %v4643, 0.0
      %v4680 = vmax.f32 %v4644, 0.0
      %v4681 = vmax.f32 %v4645, 0.0
      %v4682 = vmax.f32 %v4646, 0.0
      %v4683 = vmax.f32 %v4647, 0.0
      %v4684 = vmax.f32 %v4648, 0.0
      %v4685 = vmul.f32 %v4649, %v2411
      %v4686 = vmul.f32 %v4650, %v2416
      %v4687 = vmul.f32 %v4651, %v2421
      %v4688 = vmul.f32 %v4652, %v2426
      %v4689 = vmul.f32 %v4653, %v2431
      %v4690 = vmul.f32 %v4654, %v2436
      %v4691 = vmul.f32 %v4655, %v2441
      %v4692 = vmul.f32 %v4656, %v2446
      %v4693 = vmul.f32 %v4657, %v2451
      %v4694 = vmul.f32 %v4658, %v2456
      %v4695 = vmul.f32 %v4659, %v2461
      %v4696 = vmul.f32 %v4660, %v2466
      %v4697 = vmul.f32 %v4661, %v2471
      %v4698 = vmul.f32 %v4662, %v2476
      %v4699 = vmul.f32 %v4663, %v2481
      %v4700 = vmul.f32 %v4664, %v2486
      %v4701 = vmul.f32 %v4665, %v2491
      %v4702 = vmul.f32 %v4666, %v2496
      %v4703 = vmul.f32 %v4667, %v2501
      %v4704 = vmul.f32 %v4668, %v2506
      %v4705 = vmul.f32 %v4669, %v2511
      %v4706 = vmul.f32 %v4670, %v2516
      %v4707 = vmul.f32 %v4671, %v2521
      %v4708 = vmul.f32 %v4672, %v2526
      %v4709 = vmul.f32 %v4673, %v2531
      %v4710 = vmul.f32 %v4674, %v2536
      %v4711 = vmul.f32 %v4675, %v2541
      %v4712 = vmul.f32 %v4676, %v2546
      %v4713 = vmul.f32 %v4677, %v2551
      %v4714 = vmul.f32 %v4678, %v2556
      %v4715 = vmul.f32 %v4679, %v2561
      %v4716 = vmul.f32 %v4680, %v2566
      %v4717 = vmul.f32 %v4681, %v2571
      %v4718 = vmul.f32 %v4682, %v2576
      %v4719 = vmul.f32 %v4683, %v2581
      %v4720 = vmul.f32 %v4684, %v2586
      %4721 = vst.msk [vmem:[#allocation2 + $0x13] sm:$0xff] %vm308, %v4685
      %4722 = vst.msk [vmem:[#allocation2 + $0x1b] sm:$0xff] %vm308, %v4686
      %4723 = vst.msk [vmem:[#allocation2 + $0x23] sm:$0xff] %vm308, %v4687
      %4724 = vst.msk [vmem:[#allocation2 + $0x2b] sm:$0xff] %vm308, %v4688
      %4725 = vst.msk [vmem:[#allocation2 + $0x33] sm:$0xff] %vm308, %v4689
      %4726 = vst.msk [vmem:[#allocation2 + $0x3b] sm:$0xff] %vm308, %v4690
      %4727 = vst.msk [vmem:[#allocation2 + $0x43] sm:$0xff] %vm308, %v4691
      %4728 = vst.msk [vmem:[#allocation2 + $0x4b] sm:$0xff] %vm308, %v4692
      %4729 = vst.msk [vmem:[#allocation2 + $0x53] sm:$0xff] %vm308, %v4693
      %4730 = vst.msk [vmem:[#allocation2 + $0x5b] sm:$0xff] %vm308, %v4694
      %4731 = vst.msk [vmem:[#allocation2 + $0x63] sm:$0xff] %vm308, %v4695
      %4732 = vst.msk [vmem:[#allocation2 + $0x6b] sm:$0xff] %vm308, %v4696
      %4733 = vst.msk [vmem:[#allocation2 + $0x73] sm:$0xff] %vm308, %v4697
      %4734 = vst.msk [vmem:[#allocation2 + $0x7b] sm:$0xff] %vm308, %v4698
      %4735 = vst.msk [vmem:[#allocation2 + $0x83] sm:$0xff] %vm308, %v4699
      %4736 = vst.msk [vmem:[#allocation2 + $0x8b] sm:$0xff] %vm308, %v4700
      %4737 = vst.msk [vmem:[#allocation2 + $0x93] sm:$0xff] %vm308, %v4701
      %4738 = vst.msk [vmem:[#allocation2 + $0x9b] sm:$0xff] %vm308, %v4702
      %4739 = vst.msk [vmem:[#allocation2 + $0xa3] sm:$0xff] %vm308, %v4703
      %4740 = vst.msk [vmem:[#allocation2 + $0xab] sm:$0xff] %vm308, %v4704
      %4741 = vst.msk [vmem:[#allocation2 + $0xb3] sm:$0xff] %vm308, %v4705
      %4742 = vst.msk [vmem:[#allocation2 + $0xbb] sm:$0xff] %vm308, %v4706
      %4743 = vst.msk [vmem:[#allocation2 + $0xc3] sm:$0xff] %vm308, %v4707
      %4744 = vst.msk [vmem:[#allocation2 + $0xcb] sm:$0xff] %vm308, %v4708
      %4745 = vst.msk [vmem:[#allocation2 + $0xd3] sm:$0xff] %vm308, %v4709
      %4746 = vst.msk [vmem:[#allocation2 + $0xdb] sm:$0xff] %vm308, %v4710
      %4747 = vst.msk [vmem:[#allocation2 + $0xe3] sm:$0xff] %vm308, %v4711
      %4748 = vst.msk [vmem:[#allocation2 + $0xeb] sm:$0xff] %vm308, %v4712
      %4749 = vst.msk [vmem:[#allocation2 + $0xf3] sm:$0xff] %vm308, %v4713
      %4750 = vst.msk [vmem:[#allocation2 + $0xfb] sm:$0xff] %vm308, %v4714
      %4751 = vst.msk [vmem:[#allocation2 + $0x103] sm:$0xff] %vm308, %v4715
      %4752 = vst.msk [vmem:[#allocation2 + $0x10b] sm:$0xff] %vm308, %v4716
      %4753 = vst.msk [vmem:[#allocation2 + $0x113] sm:$0xff] %vm308, %v4717
      %4754 = vst.msk [vmem:[#allocation2 + $0x11b] sm:$0xff] %vm308, %v4718
      %4755 = vst.msk [vmem:[#allocation2 + $0x123] sm:$0xff] %vm308, %v4719
      %4756 = vst.msk [vmem:[#allocation2 + $0x12b] sm:$0x3f] %vm2659, %v4720
      %v4757 = vld [vmem:[#allocation2] sm:$0xff]
      %v4758 = vld [vmem:[#allocation2 + $0x8] sm:$0xff]
      %v4759 = vld [vmem:[#allocation2 + $0x10] sm:$0xff]
      %v4760 = vld [vmem:[#allocation2 + $0x18] sm:$0xff]
      %v4761 = vld [vmem:[#allocation2 + $0x20] sm:$0xff]
      %v4762 = vld [vmem:[#allocation2 + $0x28] sm:$0xff]
      %v4763 = vld [vmem:[#allocation2 + $0x30] sm:$0xff]
      %v4764 = vld [vmem:[#allocation2 + $0x38] sm:$0xff]
      %v4765 = vld [vmem:[#allocation2 + $0x40] sm:$0xff]
      %v4766 = vld [vmem:[#allocation2 + $0x48] sm:$0xff]
      %v4767 = vld [vmem:[#allocation2 + $0x50] sm:$0xff]
      %v4768 = vld [vmem:[#allocation2 + $0x58] sm:$0xff]
      %v4769 = vld [vmem:[#allocation2 + $0x60] sm:$0xff]
      %v4770 = vld [vmem:[#allocation2 + $0x68] sm:$0xff]
      %v4771 = vld [vmem:[#allocation2 + $0x70] sm:$0xff]
      %v4772 = vld [vmem:[#allocation2 + $0x78] sm:$0xff]
      %v4773 = vld [vmem:[#allocation2 + $0x80] sm:$0xff]
      %v4774 = vld [vmem:[#allocation2 + $0x88] sm:$0xff]
      %v4775 = vld [vmem:[#allocation2 + $0x90] sm:$0xff]
      %v4776 = vld [vmem:[#allocation2 + $0x98] sm:$0xff]
      %v4777 = vld [vmem:[#allocation2 + $0xa0] sm:$0xff]
      %v4778 = vld [vmem:[#allocation2 + $0xa8] sm:$0xff]
      %v4779 = vld [vmem:[#allocation2 + $0xb0] sm:$0xff]
      %v4780 = vld [vmem:[#allocation2 + $0xb8] sm:$0xff]
      %v4781 = vld [vmem:[#allocation2 + $0xc0] sm:$0xff]
      %v4782 = vld [vmem:[#allocation2 + $0xc8] sm:$0xff]
      %v4783 = vld [vmem:[#allocation2 + $0xd0] sm:$0xff]
      %v4784 = vld [vmem:[#allocation2 + $0xd8] sm:$0xff]
      %v4785 = vld [vmem:[#allocation2 + $0xe0] sm:$0xff]
      %v4786 = vld [vmem:[#allocation2 + $0xe8] sm:$0xff]
      %v4787 = vld [vmem:[#allocation2 + $0xf0] sm:$0xff]
      %v4788 = vld [vmem:[#allocation2 + $0xf8] sm:$0xff]
      %v4789 = vld [vmem:[#allocation2 + $0x100] sm:$0xff]
      %v4790 = vld [vmem:[#allocation2 + $0x108] sm:$0xff]
      %v4791 = vld [vmem:[#allocation2 + $0x110] sm:$0xff]
      %v4792 = vld [vmem:[#allocation2 + $0x118] sm:$0x3f]
      %v4793 = vld [vmem:[#allocation2 + $0x1] sm:$0xff]
      %v4794 = vld [vmem:[#allocation2 + $0x9] sm:$0xff]
      %v4795 = vld [vmem:[#allocation2 + $0x11] sm:$0xff]
      %v4796 = vld [vmem:[#allocation2 + $0x19] sm:$0xff]
      %v4797 = vld [vmem:[#allocation2 + $0x21] sm:$0xff]
      %v4798 = vld [vmem:[#allocation2 + $0x29] sm:$0xff]
      %v4799 = vld [vmem:[#allocation2 + $0x31] sm:$0xff]
      %v4800 = vld [vmem:[#allocation2 + $0x39] sm:$0xff]
      %v4801 = vld [vmem:[#allocation2 + $0x41] sm:$0xff]
      %v4802 = vld [vmem:[#allocation2 + $0x49] sm:$0xff]
      %v4803 = vld [vmem:[#allocation2 + $0x51] sm:$0xff]
      %v4804 = vld [vmem:[#allocation2 + $0x59] sm:$0xff]
      %v4805 = vld [vmem:[#allocation2 + $0x61] sm:$0xff]
      %v4806 = vld [vmem:[#allocation2 + $0x69] sm:$0xff]
      %v4807 = vld [vmem:[#allocation2 + $0x71] sm:$0xff]
      %v4808 = vld [vmem:[#allocation2 + $0x79] sm:$0xff]
      %v4809 = vld [vmem:[#allocation2 + $0x81] sm:$0xff]
      %v4810 = vld [vmem:[#allocation2 + $0x89] sm:$0xff]
      %v4811 = vld [vmem:[#allocation2 + $0x91] sm:$0xff]
      %v4812 = vld [vmem:[#allocation2 + $0x99] sm:$0xff]
      %v4813 = vld [vmem:[#allocation2 + $0xa1] sm:$0xff]
      %v4814 = vld [vmem:[#allocation2 + $0xa9] sm:$0xff]
      %v4815 = vld [vmem:[#allocation2 + $0xb1] sm:$0xff]
      %v4816 = vld [vmem:[#allocation2 + $0xb9] sm:$0xff]
      %v4817 = vld [vmem:[#allocation2 + $0xc1] sm:$0xff]
      %v4818 = vld [vmem:[#allocation2 + $0xc9] sm:$0xff]
      %v4819 = vld [vmem:[#allocation2 + $0xd1] sm:$0xff]
      %v4820 = vld [vmem:[#allocation2 + $0xd9] sm:$0xff]
      %v4821 = vld [vmem:[#allocation2 + $0xe1] sm:$0xff]
      %v4822 = vld [vmem:[#allocation2 + $0xe9] sm:$0xff]
      %v4823 = vld [vmem:[#allocation2 + $0xf1] sm:$0xff]
      %v4824 = vld [vmem:[#allocation2 + $0xf9] sm:$0xff]
      %v4825 = vld [vmem:[#allocation2 + $0x101] sm:$0xff]
      %v4826 = vld [vmem:[#allocation2 + $0x109] sm:$0xff]
      %v4827 = vld [vmem:[#allocation2 + $0x111] sm:$0xff]
      %v4828 = vld [vmem:[#allocation2 + $0x119] sm:$0x3f]
      %v4829 = vld [vmem:[#allocation2 + $0x2] sm:$0xff]
      %v4830 = vld [vmem:[#allocation2 + $0xa] sm:$0xff]
      %v4831 = vld [vmem:[#allocation2 + $0x12] sm:$0xff]
      %v4832 = vld [vmem:[#allocation2 + $0x1a] sm:$0xff]
      %v4833 = vld [vmem:[#allocation2 + $0x22] sm:$0xff]
      %v4834 = vld [vmem:[#allocation2 + $0x2a] sm:$0xff]
      %v4835 = vld [vmem:[#allocation2 + $0x32] sm:$0xff]
      %v4836 = vld [vmem:[#allocation2 + $0x3a] sm:$0xff]
      %v4837 = vld [vmem:[#allocation2 + $0x42] sm:$0xff]
      %v4838 = vld [vmem:[#allocation2 + $0x4a] sm:$0xff]
      %v4839 = vld [vmem:[#allocation2 + $0x52] sm:$0xff]
      %v4840 = vld [vmem:[#allocation2 + $0x5a] sm:$0xff]
      %v4841 = vld [vmem:[#allocation2 + $0x62] sm:$0xff]
      %v4842 = vld [vmem:[#allocation2 + $0x6a] sm:$0xff]
      %v4843 = vld [vmem:[#allocation2 + $0x72] sm:$0xff]
      %v4844 = vld [vmem:[#allocation2 + $0x7a] sm:$0xff]
      %v4845 = vld [vmem:[#allocation2 + $0x82] sm:$0xff]
      %v4846 = vld [vmem:[#allocation2 + $0x8a] sm:$0xff]
      %v4847 = vld [vmem:[#allocation2 + $0x92] sm:$0xff]
      %v4848 = vld [vmem:[#allocation2 + $0x9a] sm:$0xff]
      %v4849 = vld [vmem:[#allocation2 + $0xa2] sm:$0xff]
      %v4850 = vld [vmem:[#allocation2 + $0xaa] sm:$0xff]
      %v4851 = vld [vmem:[#allocation2 + $0xb2] sm:$0xff]
      %v4852 = vld [vmem:[#allocation2 + $0xba] sm:$0xff]
      %v4853 = vld [vmem:[#allocation2 + $0xc2] sm:$0xff]
      %v4854 = vld [vmem:[#allocation2 + $0xca] sm:$0xff]
      %v4855 = vld [vmem:[#allocation2 + $0xd2] sm:$0xff]
      %v4856 = vld [vmem:[#allocation2 + $0xda] sm:$0xff]
      %v4857 = vld [vmem:[#allocation2 + $0xe2] sm:$0xff]
      %v4858 = vld [vmem:[#allocation2 + $0xea] sm:$0xff]
      %v4859 = vld [vmem:[#allocation2 + $0xf2] sm:$0xff]
      %v4860 = vld [vmem:[#allocation2 + $0xfa] sm:$0xff]
      %v4861 = vld [vmem:[#allocation2 + $0x102] sm:$0xff]
      %v4862 = vld [vmem:[#allocation2 + $0x10a] sm:$0xff]
      %v4863 = vld [vmem:[#allocation2 + $0x112] sm:$0xff]
      %v4864 = vld [vmem:[#allocation2 + $0x11a] sm:$0x3f]
      %v4865 = vld [vmem:[#allocation2 + $0x11a] sm:$0xff]
      %v4866 = vld [vmem:[#allocation2 + $0x122] sm:$0xff]
      %v4867 = vld [vmem:[#allocation2 + $0x12a] sm:$0x3f]
      %v4868 = vld [vmem:[#allocation2 + $0x13] sm:$0xff]
      %v4869 = vld [vmem:[#allocation2 + $0x1b] sm:$0xff]
      %v4870 = vld [vmem:[#allocation2 + $0x23] sm:$0xff]
      %v4871 = vld [vmem:[#allocation2 + $0x2b] sm:$0xff]
      %v4872 = vld [vmem:[#allocation2 + $0x33] sm:$0xff]
      %v4873 = vld [vmem:[#allocation2 + $0x3b] sm:$0xff]
      %v4874 = vld [vmem:[#allocation2 + $0x43] sm:$0xff]
      %v4875 = vld [vmem:[#allocation2 + $0x4b] sm:$0xff]
      %v4876 = vld [vmem:[#allocation2 + $0x53] sm:$0xff]
      %v4877 = vld [vmem:[#allocation2 + $0x5b] sm:$0xff]
      %v4878 = vld [vmem:[#allocation2 + $0x63] sm:$0xff]
      %v4879 = vld [vmem:[#allocation2 + $0x6b] sm:$0xff]
      %v4880 = vld [vmem:[#allocation2 + $0x73] sm:$0xff]
      %v4881 = vld [vmem:[#allocation2 + $0x7b] sm:$0xff]
      %v4882 = vld [vmem:[#allocation2 + $0x83] sm:$0xff]
      %v4883 = vld [vmem:[#allocation2 + $0x8b] sm:$0xff]
      %v4884 = vld [vmem:[#allocation2 + $0x93] sm:$0xff]
      %v4885 = vld [vmem:[#allocation2 + $0x9b] sm:$0xff]
      %v4886 = vld [vmem:[#allocation2 + $0xa3] sm:$0xff]
      %v4887 = vld [vmem:[#allocation2 + $0xab] sm:$0xff]
      %v4888 = vld [vmem:[#allocation2 + $0xb3] sm:$0xff]
      %v4889 = vld [vmem:[#allocation2 + $0xbb] sm:$0xff]
      %v4890 = vld [vmem:[#allocation2 + $0xc3] sm:$0xff]
      %v4891 = vld [vmem:[#allocation2 + $0xcb] sm:$0xff]
      %v4892 = vld [vmem:[#allocation2 + $0xd3] sm:$0xff]
      %v4893 = vld [vmem:[#allocation2 + $0xdb] sm:$0xff]
      %v4894 = vld [vmem:[#allocation2 + $0xe3] sm:$0xff]
      %v4895 = vld [vmem:[#allocation2 + $0xeb] sm:$0xff]
      %v4896 = vld [vmem:[#allocation2 + $0xf3] sm:$0xff]
      %v4897 = vld [vmem:[#allocation2 + $0xfb] sm:$0xff]
      %v4898 = vld [vmem:[#allocation2 + $0x103] sm:$0xff]
      %v4899 = vld [vmem:[#allocation2 + $0x10b] sm:$0xff]
      %v4900 = vld [vmem:[#allocation2 + $0x113] sm:$0xff]
      %v4901 = vld [vmem:[#allocation2 + $0x11b] sm:$0xff]
      %v4902 = vld [vmem:[#allocation2 + $0x123] sm:$0xff]
      %v4903 = vld [vmem:[#allocation2 + $0x12b] sm:$0x3f]
      %v4904 = vld [vmem:[#allocation2 + $0x14] sm:$0xff]
      %v4905 = vld [vmem:[#allocation2 + $0x1c] sm:$0xff]
      %v4906 = vld [vmem:[#allocation2 + $0x24] sm:$0xff]
      %v4907 = vld [vmem:[#allocation2 + $0x2c] sm:$0xff]
      %v4908 = vld [vmem:[#allocation2 + $0x34] sm:$0xff]
      %v4909 = vld [vmem:[#allocation2 + $0x3c] sm:$0xff]
      %v4910 = vld [vmem:[#allocation2 + $0x44] sm:$0xff]
      %v4911 = vld [vmem:[#allocation2 + $0x4c] sm:$0xff]
      %v4912 = vld [vmem:[#allocation2 + $0x54] sm:$0xff]
      %v4913 = vld [vmem:[#allocation2 + $0x5c] sm:$0xff]
      %v4914 = vld [vmem:[#allocation2 + $0x64] sm:$0xff]
      %v4915 = vld [vmem:[#allocation2 + $0x6c] sm:$0xff]
      %v4916 = vld [vmem:[#allocation2 + $0x74] sm:$0xff]
      %v4917 = vld [vmem:[#allocation2 + $0x7c] sm:$0xff]
      %v4918 = vld [vmem:[#allocation2 + $0x84] sm:$0xff]
      %v4919 = vld [vmem:[#allocation2 + $0x8c] sm:$0xff]
      %v4920 = vld [vmem:[#allocation2 + $0x94] sm:$0xff]
      %v4921 = vld [vmem:[#allocation2 + $0x9c] sm:$0xff]
      %v4922 = vld [vmem:[#allocation2 + $0xa4] sm:$0xff]
      %v4923 = vld [vmem:[#allocation2 + $0xac] sm:$0xff]
      %v4924 = vld [vmem:[#allocation2 + $0xb4] sm:$0xff]
      %v4925 = vld [vmem:[#allocation2 + $0xbc] sm:$0xff]
      %v4926 = vld [vmem:[#allocation2 + $0xc4] sm:$0xff]
      %v4927 = vld [vmem:[#allocation2 + $0xcc] sm:$0xff]
      %v4928 = vld [vmem:[#allocation2 + $0xd4] sm:$0xff]
      %v4929 = vld [vmem:[#allocation2 + $0xdc] sm:$0xff]
      %v4930 = vld [vmem:[#allocation2 + $0xe4] sm:$0xff]
      %v4931 = vld [vmem:[#allocation2 + $0xec] sm:$0xff]
      %v4932 = vld [vmem:[#allocation2 + $0xf4] sm:$0xff]
      %v4933 = vld [vmem:[#allocation2 + $0xfc] sm:$0xff]
      %v4934 = vld [vmem:[#allocation2 + $0x104] sm:$0xff]
      %v4935 = vld [vmem:[#allocation2 + $0x10c] sm:$0xff]
      %v4936 = vld [vmem:[#allocation2 + $0x114] sm:$0xff]
      %v4937 = vld [vmem:[#allocation2 + $0x11c] sm:$0xff]
      %v4938 = vld [vmem:[#allocation2 + $0x124] sm:$0xff]
      %v4939 = vld [vmem:[#allocation2 + $0x12c] sm:$0x3f]
      %v4940 = vld [vmem:[#allocation2 + $0x12c] sm:$0xff]
      %v4941 = vld [vmem:[#allocation2 + $0x134] sm:$0xff]
      %v4942 = vld [vmem:[#allocation2 + $0x13c] sm:$0x3f]
      %v4943 = vld [vmem:[#allocation2 + $0x25] sm:$0xff]
      %v4944 = vld [vmem:[#allocation2 + $0x2d] sm:$0xff]
      %v4945 = vld [vmem:[#allocation2 + $0x35] sm:$0xff]
      %v4946 = vld [vmem:[#allocation2 + $0x3d] sm:$0xff]
      %v4947 = vld [vmem:[#allocation2 + $0x45] sm:$0xff]
      %v4948 = vld [vmem:[#allocation2 + $0x4d] sm:$0xff]
      %v4949 = vld [vmem:[#allocation2 + $0x55] sm:$0xff]
      %v4950 = vld [vmem:[#allocation2 + $0x5d] sm:$0xff]
      %v4951 = vld [vmem:[#allocation2 + $0x65] sm:$0xff]
      %v4952 = vld [vmem:[#allocation2 + $0x6d] sm:$0xff]
      %v4953 = vld [vmem:[#allocation2 + $0x75] sm:$0xff]
      %v4954 = vld [vmem:[#allocation2 + $0x7d] sm:$0xff]
      %v4955 = vld [vmem:[#allocation2 + $0x85] sm:$0xff]
      %v4956 = vld [vmem:[#allocation2 + $0x8d] sm:$0xff]
      %v4957 = vld [vmem:[#allocation2 + $0x95] sm:$0xff]
      %v4958 = vld [vmem:[#allocation2 + $0x9d] sm:$0xff]
      %v4959 = vld [vmem:[#allocation2 + $0xa5] sm:$0xff]
      %v4960 = vld [vmem:[#allocation2 + $0xad] sm:$0xff]
      %v4961 = vld [vmem:[#allocation2 + $0xb5] sm:$0xff]
      %v4962 = vld [vmem:[#allocation2 + $0xbd] sm:$0xff]
      %v4963 = vld [vmem:[#allocation2 + $0xc5] sm:$0xff]
      %v4964 = vld [vmem:[#allocation2 + $0xcd] sm:$0xff]
      %v4965 = vld [vmem:[#allocation2 + $0xd5] sm:$0xff]
      %v4966 = vld [vmem:[#allocation2 + $0xdd] sm:$0xff]
      %v4967 = vld [vmem:[#allocation2 + $0xe5] sm:$0xff]
      %v4968 = vld [vmem:[#allocation2 + $0xed] sm:$0xff]
      %v4969 = vld [vmem:[#allocation2 + $0xf5] sm:$0xff]
      %v4970 = vld [vmem:[#allocation2 + $0xfd] sm:$0xff]
      %v4971 = vld [vmem:[#allocation2 + $0x105] sm:$0xff]
      %v4972 = vld [vmem:[#allocation2 + $0x10d] sm:$0xff]
      %v4973 = vld [vmem:[#allocation2 + $0x115] sm:$0xff]
      %v4974 = vld [vmem:[#allocation2 + $0x11d] sm:$0xff]
      %v4975 = vld [vmem:[#allocation2 + $0x125] sm:$0xff]
      %v4976 = vld [vmem:[#allocation2 + $0x12d] sm:$0xff]
      %v4977 = vld [vmem:[#allocation2 + $0x135] sm:$0xff]
      %v4978 = vld [vmem:[#allocation2 + $0x13d] sm:$0x3f]
      %v4979 = vld [vmem:[#allocation2 + $0x26] sm:$0xff]
      %v4980 = vld [vmem:[#allocation2 + $0x2e] sm:$0xff]
      %v4981 = vld [vmem:[#allocation2 + $0x36] sm:$0xff]
      %v4982 = vld [vmem:[#allocation2 + $0x3e] sm:$0xff]
      %v4983 = vld [vmem:[#allocation2 + $0x46] sm:$0xff]
      %v4984 = vld [vmem:[#allocation2 + $0x4e] sm:$0xff]
      %v4985 = vld [vmem:[#allocation2 + $0x56] sm:$0xff]
      %v4986 = vld [vmem:[#allocation2 + $0x5e] sm:$0xff]
      %v4987 = vld [vmem:[#allocation2 + $0x66] sm:$0xff]
      %v4988 = vld [vmem:[#allocation2 + $0x6e] sm:$0xff]
      %v4989 = vld [vmem:[#allocation2 + $0x76] sm:$0xff]
      %v4990 = vld [vmem:[#allocation2 + $0x7e] sm:$0xff]
      %v4991 = vld [vmem:[#allocation2 + $0x86] sm:$0xff]
      %v4992 = vld [vmem:[#allocation2 + $0x8e] sm:$0xff]
      %v4993 = vld [vmem:[#allocation2 + $0x96] sm:$0xff]
      %v4994 = vld [vmem:[#allocation2 + $0x9e] sm:$0xff]
      %v4995 = vld [vmem:[#allocation2 + $0xa6] sm:$0xff]
      %v4996 = vld [vmem:[#allocation2 + $0xae] sm:$0xff]
      %v4997 = vld [vmem:[#allocation2 + $0xb6] sm:$0xff]
      %v4998 = vld [vmem:[#allocation2 + $0xbe] sm:$0xff]
      %v4999 = vld [vmem:[#allocation2 + $0xc6] sm:$0xff]
      %v5000 = vld [vmem:[#allocation2 + $0xce] sm:$0xff]
      %v5001 = vld [vmem:[#allocation2 + $0xd6] sm:$0xff]
      %v5002 = vld [vmem:[#allocation2 + $0xde] sm:$0xff]
      %v5003 = vld [vmem:[#allocation2 + $0xe6] sm:$0xff]
      %v5004 = vld [vmem:[#allocation2 + $0xee] sm:$0xff]
      %v5005 = vld [vmem:[#allocation2 + $0xf6] sm:$0xff]
      %v5006 = vld [vmem:[#allocation2 + $0xfe] sm:$0xff]
      %v5007 = vld [vmem:[#allocation2 + $0x106] sm:$0xff]
      %v5008 = vld [vmem:[#allocation2 + $0x10e] sm:$0xff]
      %v5009 = vld [vmem:[#allocation2 + $0x116] sm:$0xff]
      %v5010 = vld [vmem:[#allocation2 + $0x11e] sm:$0xff]
      %v5011 = vld [vmem:[#allocation2 + $0x126] sm:$0xff]
      %v5012 = vld [vmem:[#allocation2 + $0x12e] sm:$0xff]
      %v5013 = vld [vmem:[#allocation2 + $0x136] sm:$0xff]
      %v5014 = vld [vmem:[#allocation2 + $0x13e] sm:$0x3f]
      %5051 = vrot.lane.b32.xlu0 %v4793, 64
      %v5052 = vpop.permute.xlu0 %5051
      %5053 = vrot.lane.b32.xlu0 %v4794, 64
      %v5054 = vpop.permute.xlu0 %5053
      %5055 = vrot.lane.b32.xlu0 %v4795, 64
      %v5056 = vpop.permute.xlu0 %5055
      %5057 = vrot.lane.b32.xlu0 %v4796, 64
      %v5058 = vpop.permute.xlu0 %5057
      %5059 = vrot.lane.b32.xlu0 %v4797, 64
      %v5060 = vpop.permute.xlu0 %5059
      %5061 = vrot.lane.b32.xlu0 %v4798, 64
      %v5062 = vpop.permute.xlu0 %5061
      %5063 = vrot.lane.b32.xlu0 %v4799, 64
      %v5064 = vpop.permute.xlu0 %5063
      %5065 = vrot.lane.b32.xlu0 %v4800, 64
      %v5066 = vpop.permute.xlu0 %5065
      %5067 = vrot.lane.b32.xlu0 %v4801, 64
      %v5068 = vpop.permute.xlu0 %5067
      %5069 = vrot.lane.b32.xlu0 %v4802, 64
      %v5070 = vpop.permute.xlu0 %5069
      %5071 = vrot.lane.b32.xlu0 %v4803, 64
      %v5072 = vpop.permute.xlu0 %5071
      %5073 = vrot.lane.b32.xlu0 %v4804, 64
      %v5074 = vpop.permute.xlu0 %5073
      %5075 = vrot.lane.b32.xlu0 %v4805, 64
      %v5076 = vpop.permute.xlu0 %5075
      %5077 = vrot.lane.b32.xlu0 %v4806, 64
      %v5078 = vpop.permute.xlu0 %5077
      %5079 = vrot.lane.b32.xlu0 %v4807, 64
      %v5080 = vpop.permute.xlu0 %5079
      %5081 = vrot.lane.b32.xlu0 %v4808, 64
      %v5082 = vpop.permute.xlu0 %5081
      %5083 = vrot.lane.b32.xlu0 %v4809, 64
      %v5084 = vpop.permute.xlu0 %5083
      %5085 = vrot.lane.b32.xlu0 %v4810, 64
      %v5086 = vpop.permute.xlu0 %5085
      %5087 = vrot.lane.b32.xlu0 %v4811, 64
      %v5088 = vpop.permute.xlu0 %5087
      %5089 = vrot.lane.b32.xlu0 %v4812, 64
      %v5090 = vpop.permute.xlu0 %5089
      %5091 = vrot.lane.b32.xlu0 %v4813, 64
      %v5092 = vpop.permute.xlu0 %5091
      %5093 = vrot.lane.b32.xlu0 %v4814, 64
      %v5094 = vpop.permute.xlu0 %5093
      %5095 = vrot.lane.b32.xlu0 %v4815, 64
      %v5096 = vpop.permute.xlu0 %5095
      %5097 = vrot.lane.b32.xlu0 %v4816, 64
      %v5098 = vpop.permute.xlu0 %5097
      %5099 = vrot.lane.b32.xlu0 %v4817, 64
      %v5100 = vpop.permute.xlu0 %5099
      %5101 = vrot.lane.b32.xlu0 %v4818, 64
      %v5102 = vpop.permute.xlu0 %5101
      %5103 = vrot.lane.b32.xlu0 %v4819, 64
      %v5104 = vpop.permute.xlu0 %5103
      %5105 = vrot.lane.b32.xlu0 %v4820, 64
      %v5106 = vpop.permute.xlu0 %5105
      %5107 = vrot.lane.b32.xlu0 %v4821, 64
      %v5108 = vpop.permute.xlu0 %5107
      %5109 = vrot.lane.b32.xlu0 %v4822, 64
      %v5110 = vpop.permute.xlu0 %5109
      %5111 = vrot.lane.b32.xlu0 %v4823, 64
      %v5112 = vpop.permute.xlu0 %5111
      %5113 = vrot.lane.b32.xlu0 %v4824, 64
      %v5114 = vpop.permute.xlu0 %5113
      %5115 = vrot.lane.b32.xlu0 %v4825, 64
      %v5116 = vpop.permute.xlu0 %5115
      %5117 = vrot.lane.b32.xlu0 %v4826, 64
      %v5118 = vpop.permute.xlu0 %5117
      %5119 = vrot.lane.b32.xlu0 %v4827, 64
      %v5120 = vpop.permute.xlu0 %5119
      %5121 = vrot.lane.b32.xlu0 %v4828, 64
      %v5122 = vpop.permute.xlu0 %5121
      %5195 = vrot.lane.b32.xlu0 %v4831, 64
      %v5196 = vpop.permute.xlu0 %5195
      %5197 = vrot.lane.b32.xlu0 %v4832, 64
      %v5198 = vpop.permute.xlu0 %5197
      %5199 = vrot.lane.b32.xlu0 %v4833, 64
      %v5200 = vpop.permute.xlu0 %5199
      %5201 = vrot.lane.b32.xlu0 %v4834, 64
      %v5202 = vpop.permute.xlu0 %5201
      %5203 = vrot.lane.b32.xlu0 %v4835, 64
      %v5204 = vpop.permute.xlu0 %5203
      %5205 = vrot.lane.b32.xlu0 %v4836, 64
      %v5206 = vpop.permute.xlu0 %5205
      %5207 = vrot.lane.b32.xlu0 %v4837, 64
      %v5208 = vpop.permute.xlu0 %5207
      %5209 = vrot.lane.b32.xlu0 %v4838, 64
      %v5210 = vpop.permute.xlu0 %5209
      %5211 = vrot.lane.b32.xlu0 %v4839, 64
      %v5212 = vpop.permute.xlu0 %5211
      %5213 = vrot.lane.b32.xlu0 %v4840, 64
      %v5214 = vpop.permute.xlu0 %5213
      %5215 = vrot.lane.b32.xlu0 %v4841, 64
      %v5216 = vpop.permute.xlu0 %5215
      %5217 = vrot.lane.b32.xlu0 %v4842, 64
      %v5218 = vpop.permute.xlu0 %5217
      %5219 = vrot.lane.b32.xlu0 %v4843, 64
      %v5220 = vpop.permute.xlu0 %5219
      %5221 = vrot.lane.b32.xlu0 %v4844, 64
      %v5222 = vpop.permute.xlu0 %5221
      %5223 = vrot.lane.b32.xlu0 %v4845, 64
      %v5224 = vpop.permute.xlu0 %5223
      %5225 = vrot.lane.b32.xlu0 %v4846, 64
      %v5226 = vpop.permute.xlu0 %5225
      %5227 = vrot.lane.b32.xlu0 %v4847, 64
      %v5228 = vpop.permute.xlu0 %5227
      %5229 = vrot.lane.b32.xlu0 %v4848, 64
      %v5230 = vpop.permute.xlu0 %5229
      %5231 = vrot.lane.b32.xlu0 %v4849, 64
      %v5232 = vpop.permute.xlu0 %5231
      %5233 = vrot.lane.b32.xlu0 %v4850, 64
      %v5234 = vpop.permute.xlu0 %5233
      %5235 = vrot.lane.b32.xlu0 %v4851, 64
      %v5236 = vpop.permute.xlu0 %5235
      %5237 = vrot.lane.b32.xlu0 %v4852, 64
      %v5238 = vpop.permute.xlu0 %5237
      %5239 = vrot.lane.b32.xlu0 %v4853, 64
      %v5240 = vpop.permute.xlu0 %5239
      %5241 = vrot.lane.b32.xlu0 %v4854, 64
      %v5242 = vpop.permute.xlu0 %5241
      %5243 = vrot.lane.b32.xlu0 %v4855, 64
      %v5244 = vpop.permute.xlu0 %5243
      %5245 = vrot.lane.b32.xlu0 %v4856, 64
      %v5246 = vpop.permute.xlu0 %5245
      %5247 = vrot.lane.b32.xlu0 %v4857, 64
      %v5248 = vpop.permute.xlu0 %5247
      %5249 = vrot.lane.b32.xlu0 %v4858, 64
      %v5250 = vpop.permute.xlu0 %5249
      %5251 = vrot.lane.b32.xlu0 %v4859, 64
      %v5252 = vpop.permute.xlu0 %5251
      %5253 = vrot.lane.b32.xlu0 %v4860, 64
      %v5254 = vpop.permute.xlu0 %5253
      %5255 = vrot.lane.b32.xlu0 %v4861, 64
      %v5256 = vpop.permute.xlu0 %5255
      %5257 = vrot.lane.b32.xlu0 %v4862, 64
      %v5258 = vpop.permute.xlu0 %5257
      %5259 = vrot.lane.b32.xlu0 %v4863, 64
      %v5260 = vpop.permute.xlu0 %5259
      %5261 = vrot.lane.b32.xlu0 %v4865, 64
      %v5262 = vpop.permute.xlu0 %5261
      %5263 = vrot.lane.b32.xlu0 %v4866, 64
      %v5264 = vpop.permute.xlu0 %5263
      %5265 = vrot.lane.b32.xlu0 %v4867, 64
      %v5266 = vpop.permute.xlu0 %5265
      %5339 = vrot.lane.b32.xlu0 %v4904, 64
      %v5340 = vpop.permute.xlu0 %5339
      %5341 = vrot.lane.b32.xlu0 %v4905, 64
      %v5342 = vpop.permute.xlu0 %5341
      %5343 = vrot.lane.b32.xlu0 %v4906, 64
      %v5344 = vpop.permute.xlu0 %5343
      %5345 = vrot.lane.b32.xlu0 %v4907, 64
      %v5346 = vpop.permute.xlu0 %5345
      %5347 = vrot.lane.b32.xlu0 %v4908, 64
      %v5348 = vpop.permute.xlu0 %5347
      %5349 = vrot.lane.b32.xlu0 %v4909, 64
      %v5350 = vpop.permute.xlu0 %5349
      %5351 = vrot.lane.b32.xlu0 %v4910, 64
      %v5352 = vpop.permute.xlu0 %5351
      %5353 = vrot.lane.b32.xlu0 %v4911, 64
      %v5354 = vpop.permute.xlu0 %5353
      %5355 = vrot.lane.b32.xlu0 %v4912, 64
      %v5356 = vpop.permute.xlu0 %5355
      %5357 = vrot.lane.b32.xlu0 %v4913, 64
      %v5358 = vpop.permute.xlu0 %5357
      %5359 = vrot.lane.b32.xlu0 %v4914, 64
      %v5360 = vpop.permute.xlu0 %5359
      %5361 = vrot.lane.b32.xlu0 %v4915, 64
      %v5362 = vpop.permute.xlu0 %5361
      %5363 = vrot.lane.b32.xlu0 %v4916, 64
      %v5364 = vpop.permute.xlu0 %5363
      %5365 = vrot.lane.b32.xlu0 %v4917, 64
      %v5366 = vpop.permute.xlu0 %5365
      %5367 = vrot.lane.b32.xlu0 %v4918, 64
      %v5368 = vpop.permute.xlu0 %5367
      %5369 = vrot.lane.b32.xlu0 %v4919, 64
      %v5370 = vpop.permute.xlu0 %5369
      %5371 = vrot.lane.b32.xlu0 %v4920, 64
      %v5372 = vpop.permute.xlu0 %5371
      %5373 = vrot.lane.b32.xlu0 %v4921, 64
      %v5374 = vpop.permute.xlu0 %5373
      %5375 = vrot.lane.b32.xlu0 %v4922, 64
      %v5376 = vpop.permute.xlu0 %5375
      %5377 = vrot.lane.b32.xlu0 %v4923, 64
      %v5378 = vpop.permute.xlu0 %5377
      %5379 = vrot.lane.b32.xlu0 %v4924, 64
      %v5380 = vpop.permute.xlu0 %5379
      %5381 = vrot.lane.b32.xlu0 %v4925, 64
      %v5382 = vpop.permute.xlu0 %5381
      %5383 = vrot.lane.b32.xlu0 %v4926, 64
      %v5384 = vpop.permute.xlu0 %5383
      %5385 = vrot.lane.b32.xlu0 %v4927, 64
      %v5386 = vpop.permute.xlu0 %5385
      %5387 = vrot.lane.b32.xlu0 %v4928, 64
      %v5388 = vpop.permute.xlu0 %5387
      %5389 = vrot.lane.b32.xlu0 %v4929, 64
      %v5390 = vpop.permute.xlu0 %5389
      %5391 = vrot.lane.b32.xlu0 %v4930, 64
      %v5392 = vpop.permute.xlu0 %5391
      %5393 = vrot.lane.b32.xlu0 %v4931, 64
      %v5394 = vpop.permute.xlu0 %5393
      %5395 = vrot.lane.b32.xlu0 %v4932, 64
      %v5396 = vpop.permute.xlu0 %5395
      %5397 = vrot.lane.b32.xlu0 %v4933, 64
      %v5398 = vpop.permute.xlu0 %5397
      %5399 = vrot.lane.b32.xlu0 %v4934, 64
      %v5400 = vpop.permute.xlu0 %5399
      %5401 = vrot.lane.b32.xlu0 %v4935, 64
      %v5402 = vpop.permute.xlu0 %5401
      %5403 = vrot.lane.b32.xlu0 %v4936, 64
      %v5404 = vpop.permute.xlu0 %5403
      %5405 = vrot.lane.b32.xlu0 %v4937, 64
      %v5406 = vpop.permute.xlu0 %5405
      %5407 = vrot.lane.b32.xlu0 %v4938, 64
      %v5408 = vpop.permute.xlu0 %5407
      %5409 = vrot.lane.b32.xlu0 %v4939, 64
      %v5410 = vpop.permute.xlu0 %5409
      %5483 = vrot.lane.b32.xlu0 %v4943, 64
      %v5484 = vpop.permute.xlu0 %5483
      %5485 = vrot.lane.b32.xlu0 %v4944, 64
      %v5486 = vpop.permute.xlu0 %5485
      %5487 = vrot.lane.b32.xlu0 %v4945, 64
      %v5488 = vpop.permute.xlu0 %5487
      %5489 = vrot.lane.b32.xlu0 %v4946, 64
      %v5490 = vpop.permute.xlu0 %5489
      %5491 = vrot.lane.b32.xlu0 %v4947, 64
      %v5492 = vpop.permute.xlu0 %5491
      %5493 = vrot.lane.b32.xlu0 %v4948, 64
      %v5494 = vpop.permute.xlu0 %5493
      %5495 = vrot.lane.b32.xlu0 %v4949, 64
      %v5496 = vpop.permute.xlu0 %5495
      %5497 = vrot.lane.b32.xlu0 %v4950, 64
      %v5498 = vpop.permute.xlu0 %5497
      %5499 = vrot.lane.b32.xlu0 %v4951, 64
      %v5500 = vpop.permute.xlu0 %5499
      %5501 = vrot.lane.b32.xlu0 %v4952, 64
      %v5502 = vpop.permute.xlu0 %5501
      %5503 = vrot.lane.b32.xlu0 %v4953, 64
      %v5504 = vpop.permute.xlu0 %5503
      %5505 = vrot.lane.b32.xlu0 %v4954, 64
      %v5506 = vpop.permute.xlu0 %5505
      %5507 = vrot.lane.b32.xlu0 %v4955, 64
      %v5508 = vpop.permute.xlu0 %5507
      %5509 = vrot.lane.b32.xlu0 %v4956, 64
      %v5510 = vpop.permute.xlu0 %5509
      %5511 = vrot.lane.b32.xlu0 %v4957, 64
      %v5512 = vpop.permute.xlu0 %5511
      %5513 = vrot.lane.b32.xlu0 %v4958, 64
      %v5514 = vpop.permute.xlu0 %5513
      %5515 = vrot.lane.b32.xlu0 %v4959, 64
      %v5516 = vpop.permute.xlu0 %5515
      %5517 = vrot.lane.b32.xlu0 %v4960, 64
      %v5518 = vpop.permute.xlu0 %5517
      %5519 = vrot.lane.b32.xlu0 %v4961, 64
      %v5520 = vpop.permute.xlu0 %5519
      %5521 = vrot.lane.b32.xlu0 %v4962, 64
      %v5522 = vpop.permute.xlu0 %5521
      %5523 = vrot.lane.b32.xlu0 %v4963, 64
      %v5524 = vpop.permute.xlu0 %5523
      %5525 = vrot.lane.b32.xlu0 %v4964, 64
      %v5526 = vpop.permute.xlu0 %5525
      %5527 = vrot.lane.b32.xlu0 %v4965, 64
      %v5528 = vpop.permute.xlu0 %5527
      %5529 = vrot.lane.b32.xlu0 %v4966, 64
      %v5530 = vpop.permute.xlu0 %5529
      %5531 = vrot.lane.b32.xlu0 %v4967, 64
      %v5532 = vpop.permute.xlu0 %5531
      %5533 = vrot.lane.b32.xlu0 %v4968, 64
      %v5534 = vpop.permute.xlu0 %5533
      %5535 = vrot.lane.b32.xlu0 %v4969, 64
      %v5536 = vpop.permute.xlu0 %5535
      %5537 = vrot.lane.b32.xlu0 %v4970, 64
      %v5538 = vpop.permute.xlu0 %5537
      %5539 = vrot.lane.b32.xlu0 %v4971, 64
      %v5540 = vpop.permute.xlu0 %5539
      %5541 = vrot.lane.b32.xlu0 %v4972, 64
      %v5542 = vpop.permute.xlu0 %5541
      %5543 = vrot.lane.b32.xlu0 %v4973, 64
      %v5544 = vpop.permute.xlu0 %5543
      %5545 = vrot.lane.b32.xlu0 %v4974, 64
      %v5546 = vpop.permute.xlu0 %5545
      %5547 = vrot.lane.b32.xlu0 %v4975, 64
      %v5548 = vpop.permute.xlu0 %5547
      %5549 = vrot.lane.b32.xlu0 %v4976, 64
      %v5550 = vpop.permute.xlu0 %5549
      %5551 = vrot.lane.b32.xlu0 %v4977, 64
      %v5552 = vpop.permute.xlu0 %5551
      %5553 = vrot.lane.b32.xlu0 %v4978, 64
      %v5554 = vpop.permute.xlu0 %5553
      %v5591 = vsel %vm308, %v4757, %v5052
      %v5592 = vsel %vm308, %v4758, %v5054
      %v5593 = vsel %vm308, %v4759, %v5056
      %v5594 = vsel %vm308, %v4760, %v5058
      %v5595 = vsel %vm308, %v4761, %v5060
      %v5596 = vsel %vm308, %v4762, %v5062
      %v5597 = vsel %vm308, %v4763, %v5064
      %v5598 = vsel %vm308, %v4764, %v5066
      %v5599 = vsel %vm308, %v4765, %v5068
      %v5600 = vsel %vm308, %v4766, %v5070
      %v5601 = vsel %vm308, %v4767, %v5072
      %v5602 = vsel %vm308, %v4768, %v5074
      %v5603 = vsel %vm308, %v4769, %v5076
      %v5604 = vsel %vm308, %v4770, %v5078
      %v5605 = vsel %vm308, %v4771, %v5080
      %v5606 = vsel %vm308, %v4772, %v5082
      %v5607 = vsel %vm308, %v4773, %v5084
      %v5608 = vsel %vm308, %v4774, %v5086
      %v5609 = vsel %vm308, %v4775, %v5088
      %v5610 = vsel %vm308, %v4776, %v5090
      %v5611 = vsel %vm308, %v4777, %v5092
      %v5612 = vsel %vm308, %v4778, %v5094
      %v5613 = vsel %vm308, %v4779, %v5096
      %v5614 = vsel %vm308, %v4780, %v5098
      %v5615 = vsel %vm308, %v4781, %v5100
      %v5616 = vsel %vm308, %v4782, %v5102
      %v5617 = vsel %vm308, %v4783, %v5104
      %v5618 = vsel %vm308, %v4784, %v5106
      %v5619 = vsel %vm308, %v4785, %v5108
      %v5620 = vsel %vm308, %v4786, %v5110
      %v5621 = vsel %vm308, %v4787, %v5112
      %v5622 = vsel %vm308, %v4788, %v5114
      %v5623 = vsel %vm308, %v4789, %v5116
      %v5624 = vsel %vm308, %v4790, %v5118
      %v5625 = vsel %vm308, %v4791, %v5120
      %v5626 = vsel %vm308, %v4792, %v5122
      %v5627 = vsel %vm308, %v4829, %v5196
      %v5628 = vsel %vm308, %v4830, %v5198
      %v5629 = vsel %vm308, %v4831, %v5200
      %v5630 = vsel %vm308, %v4832, %v5202
      %v5631 = vsel %vm308, %v4833, %v5204
      %v5632 = vsel %vm308, %v4834, %v5206
      %v5633 = vsel %vm308, %v4835, %v5208
      %v5634 = vsel %vm308, %v4836, %v5210
      %v5635 = vsel %vm308, %v4837, %v5212
      %v5636 = vsel %vm308, %v4838, %v5214
      %v5637 = vsel %vm308, %v4839, %v5216
      %v5638 = vsel %vm308, %v4840, %v5218
      %v5639 = vsel %vm308, %v4841, %v5220
      %v5640 = vsel %vm308, %v4842, %v5222
      %v5641 = vsel %vm308, %v4843, %v5224
      %v5642 = vsel %vm308, %v4844, %v5226
      %v5643 = vsel %vm308, %v4845, %v5228
      %v5644 = vsel %vm308, %v4846, %v5230
      %v5645 = vsel %vm308, %v4847, %v5232
      %v5646 = vsel %vm308, %v4848, %v5234
      %v5647 = vsel %vm308, %v4849, %v5236
      %v5648 = vsel %vm308, %v4850, %v5238
      %v5649 = vsel %vm308, %v4851, %v5240
      %v5650 = vsel %vm308, %v4852, %v5242
      %v5651 = vsel %vm308, %v4853, %v5244
      %v5652 = vsel %vm308, %v4854, %v5246
      %v5653 = vsel %vm308, %v4855, %v5248
      %v5654 = vsel %vm308, %v4856, %v5250
      %v5655 = vsel %vm308, %v4857, %v5252
      %v5656 = vsel %vm308, %v4858, %v5254
      %v5657 = vsel %vm308, %v4859, %v5256
      %v5658 = vsel %vm308, %v4860, %v5258
      %v5659 = vsel %vm308, %v4861, %v5260
      %v5660 = vsel %vm308, %v4862, %v5262
      %v5661 = vsel %vm308, %v4863, %v5264
      %v5662 = vsel %vm308, %v4864, %v5266
      %v5663 = vsel %vm308, %v4868, %v5340
      %v5664 = vsel %vm308, %v4869, %v5342
      %v5665 = vsel %vm308, %v4870, %v5344
      %v5666 = vsel %vm308, %v4871, %v5346
      %v5667 = vsel %vm308, %v4872, %v5348
      %v5668 = vsel %vm308, %v4873, %v5350
      %v5669 = vsel %vm308, %v4874, %v5352
      %v5670 = vsel %vm308, %v4875, %v5354
      %v5671 = vsel %vm308, %v4876, %v5356
      %v5672 = vsel %vm308, %v4877, %v5358
      %v5673 = vsel %vm308, %v4878, %v5360
      %v5674 = vsel %vm308, %v4879, %v5362
      %v5675 = vsel %vm308, %v4880, %v5364
      %v5676 = vsel %vm308, %v4881, %v5366
      %v5677 = vsel %vm308, %v4882, %v5368
      %v5678 = vsel %vm308, %v4883, %v5370
      %v5679 = vsel %vm308, %v4884, %v5372
      %v5680 = vsel %vm308, %v4885, %v5374
      %v5681 = vsel %vm308, %v4886, %v5376
      %v5682 = vsel %vm308, %v4887, %v5378
      %v5683 = vsel %vm308, %v4888, %v5380
      %v5684 = vsel %vm308, %v4889, %v5382
      %v5685 = vsel %vm308, %v4890, %v5384
      %v5686 = vsel %vm308, %v4891, %v5386
      %v5687 = vsel %vm308, %v4892, %v5388
      %v5688 = vsel %vm308, %v4893, %v5390
      %v5689 = vsel %vm308, %v4894, %v5392
      %v5690 = vsel %vm308, %v4895, %v5394
      %v5691 = vsel %vm308, %v4896, %v5396
      %v5692 = vsel %vm308, %v4897, %v5398
      %v5693 = vsel %vm308, %v4898, %v5400
      %v5694 = vsel %vm308, %v4899, %v5402
      %v5695 = vsel %vm308, %v4900, %v5404
      %v5696 = vsel %vm308, %v4901, %v5406
      %v5697 = vsel %vm308, %v4902, %v5408
      %v5698 = vsel %vm308, %v4903, %v5410
      %v5699 = vsel %vm308, %v4906, %v5484
      %v5700 = vsel %vm308, %v4907, %v5486
      %v5701 = vsel %vm308, %v4908, %v5488
      %v5702 = vsel %vm308, %v4909, %v5490
      %v5703 = vsel %vm308, %v4910, %v5492
      %v5704 = vsel %vm308, %v4911, %v5494
      %v5705 = vsel %vm308, %v4912, %v5496
      %v5706 = vsel %vm308, %v4913, %v5498
      %v5707 = vsel %vm308, %v4914, %v5500
      %v5708 = vsel %vm308, %v4915, %v5502
      %v5709 = vsel %vm308, %v4916, %v5504
      %v5710 = vsel %vm308, %v4917, %v5506
      %v5711 = vsel %vm308, %v4918, %v5508
      %v5712 = vsel %vm308, %v4919, %v5510
      %v5713 = vsel %vm308, %v4920, %v5512
      %v5714 = vsel %vm308, %v4921, %v5514
      %v5715 = vsel %vm308, %v4922, %v5516
      %v5716 = vsel %vm308, %v4923, %v5518
      %v5717 = vsel %vm308, %v4924, %v5520
      %v5718 = vsel %vm308, %v4925, %v5522
      %v5719 = vsel %vm308, %v4926, %v5524
      %v5720 = vsel %vm308, %v4927, %v5526
      %v5721 = vsel %vm308, %v4928, %v5528
      %v5722 = vsel %vm308, %v4929, %v5530
      %v5723 = vsel %vm308, %v4930, %v5532
      %v5724 = vsel %vm308, %v4931, %v5534
      %v5725 = vsel %vm308, %v4932, %v5536
      %v5726 = vsel %vm308, %v4933, %v5538
      %v5727 = vsel %vm308, %v4934, %v5540
      %v5728 = vsel %vm308, %v4935, %v5542
      %v5729 = vsel %vm308, %v4936, %v5544
      %v5730 = vsel %vm308, %v4937, %v5546
      %v5731 = vsel %vm308, %v4938, %v5548
      %v5732 = vsel %vm308, %v4940, %v5550
      %v5733 = vsel %vm308, %v4941, %v5552
      %v5734 = vsel %vm308, %v4942, %v5554
      %v5735 = vpack.c.bf16 %v5592, %v5591
      %v5736 = vpack.c.bf16 %v5628, %v5627
      %v5737 = vpack.c.bf16 %v5664, %v5663
      %v5738 = vpack.c.bf16 %v5700, %v5699
      %v5739 = vpack.c.bf16 %v4980, %v4979
      %v5740 = vpack.c.bf16 %v5594, %v5593
      %v5741 = vpack.c.bf16 %v5630, %v5629
      %v5742 = vpack.c.bf16 %v5666, %v5665
      %v5743 = vpack.c.bf16 %v5702, %v5701
      %v5744 = vpack.c.bf16 %v4982, %v4981
      %v5745 = vpack.c.bf16 %v5596, %v5595
      %v5746 = vpack.c.bf16 %v5632, %v5631
      %v5747 = vpack.c.bf16 %v5668, %v5667
      %v5748 = vpack.c.bf16 %v5704, %v5703
      %v5749 = vpack.c.bf16 %v4984, %v4983
      %v5750 = vpack.c.bf16 %v5598, %v5597
      %v5751 = vpack.c.bf16 %v5634, %v5633
      %v5752 = vpack.c.bf16 %v5670, %v5669
      %v5753 = vpack.c.bf16 %v5706, %v5705
      %v5754 = vpack.c.bf16 %v4986, %v4985
      %v5755 = vpack.c.bf16 %v5600, %v5599
      %v5756 = vpack.c.bf16 %v5636, %v5635
      %v5757 = vpack.c.bf16 %v5672, %v5671
      %v5758 = vpack.c.bf16 %v5708, %v5707
      %v5759 = vpack.c.bf16 %v4988, %v4987
      %v5760 = vpack.c.bf16 %v5602, %v5601
      %v5761 = vpack.c.bf16 %v5638, %v5637
      %v5762 = vpack.c.bf16 %v5674, %v5673
      %v5763 = vpack.c.bf16 %v5710, %v5709
      %v5764 = vpack.c.bf16 %v4990, %v4989
      %v5765 = vpack.c.bf16 %v5604, %v5603
      %v5766 = vpack.c.bf16 %v5640, %v5639
      %v5767 = vpack.c.bf16 %v5676, %v5675
      %v5768 = vpack.c.bf16 %v5712, %v5711
      %v5769 = vpack.c.bf16 %v4992, %v4991
      %v5770 = vpack.c.bf16 %v5606, %v5605
      %v5771 = vpack.c.bf16 %v5642, %v5641
      %v5772 = vpack.c.bf16 %v5678, %v5677
      %v5773 = vpack.c.bf16 %v5714, %v5713
      %v5774 = vpack.c.bf16 %v4994, %v4993
      %v5775 = vpack.c.bf16 %v5608, %v5607
      %v5776 = vpack.c.bf16 %v5644, %v5643
      %v5777 = vpack.c.bf16 %v5680, %v5679
      %v5778 = vpack.c.bf16 %v5716, %v5715
      %v5779 = vpack.c.bf16 %v4996, %v4995
      %v5780 = vpack.c.bf16 %v5610, %v5609
      %v5781 = vpack.c.bf16 %v5646, %v5645
      %v5782 = vpack.c.bf16 %v5682, %v5681
      %v5783 = vpack.c.bf16 %v5718, %v5717
      %v5784 = vpack.c.bf16 %v4998, %v4997
      %v5785 = vpack.c.bf16 %v5612, %v5611
      %v5786 = vpack.c.bf16 %v5648, %v5647
      %v5787 = vpack.c.bf16 %v5684, %v5683
      %v5788 = vpack.c.bf16 %v5720, %v5719
      %v5789 = vpack.c.bf16 %v5000, %v4999
      %v5790 = vpack.c.bf16 %v5614, %v5613
      %v5791 = vpack.c.bf16 %v5650, %v5649
      %v5792 = vpack.c.bf16 %v5686, %v5685
      %v5793 = vpack.c.bf16 %v5722, %v5721
      %v5794 = vpack.c.bf16 %v5002, %v5001
      %v5795 = vpack.c.bf16 %v5616, %v5615
      %v5796 = vpack.c.bf16 %v5652, %v5651
      %v5797 = vpack.c.bf16 %v5688, %v5687
      %v5798 = vpack.c.bf16 %v5724, %v5723
      %v5799 = vpack.c.bf16 %v5004, %v5003
      %v5800 = vpack.c.bf16 %v5618, %v5617
      %v5801 = vpack.c.bf16 %v5654, %v5653
      %v5802 = vpack.c.bf16 %v5690, %v5689
      %v5803 = vpack.c.bf16 %v5726, %v5725
      %v5804 = vpack.c.bf16 %v5006, %v5005
      %v5805 = vpack.c.bf16 %v5620, %v5619
      %v5806 = vpack.c.bf16 %v5656, %v5655
      %v5807 = vpack.c.bf16 %v5692, %v5691
      %v5808 = vpack.c.bf16 %v5728, %v5727
      %v5809 = vpack.c.bf16 %v5008, %v5007
      %v5810 = vpack.c.bf16 %v5622, %v5621
      %v5811 = vpack.c.bf16 %v5658, %v5657
      %v5812 = vpack.c.bf16 %v5694, %v5693
      %v5813 = vpack.c.bf16 %v5730, %v5729
      %v5814 = vpack.c.bf16 %v5010, %v5009
      %v5815 = vpack.c.bf16 %v5624, %v5623
      %v5816 = vpack.c.bf16 %v5660, %v5659
      %v5817 = vpack.c.bf16 %v5696, %v5695
      %v5818 = vpack.c.bf16 %v5732, %v5731
      %v5819 = vpack.c.bf16 %v5012, %v5011
      %v5820 = vpack.c.bf16 %v5626, %v5625
      %v5821 = vpack.c.bf16 %v5662, %v5661
      %v5822 = vpack.c.bf16 %v5698, %v5697
      %v5823 = vpack.c.bf16 %v5734, %v5733
      %v5824 = vpack.c.bf16 %v5014, %v5013
      %s5825 = scalar_lea.vmem %s2, 576
      %v5826 = vld [vmem:[%s5825] sm:$0xf]
      %v5827 = vld [vmem:[%s5825 + $0x4] sm:$0xf]
      %v5828 = vld [vmem:[%s5825 + $0x8] sm:$0xf]
      %v5829 = vld [vmem:[%s5825 + $0xc] sm:$0xf]
      %v5830 = vld [vmem:[%s5825 + $0x10] sm:$0xf]
      %v5831 = vld [vmem:[%s5825 + $0x14] sm:$0xf]
      %v5832 = vld [vmem:[%s5825 + $0x18] sm:$0xf]
      %v5833 = vld [vmem:[%s5825 + $0x1c] sm:$0xf]
      %v5834 = vld [vmem:[%s5825 + $0x20] sm:$0xf]
      %v5835 = vld [vmem:[%s5825 + $0x24] sm:$0xf]
      %v5836 = vld [vmem:[%s5825 + $0x28] sm:$0xf]
      %v5837 = vld [vmem:[%s5825 + $0x2c] sm:$0xf]
      %v5838 = vld [vmem:[%s5825 + $0x30] sm:$0xf]
      %v5839 = vld [vmem:[%s5825 + $0x34] sm:$0xf]
      %v5840 = vld [vmem:[%s5825 + $0x38] sm:$0xf]
      %v5841 = vld [vmem:[%s5825 + $0x3c] sm:$0xf]
      %v5842 = vld [vmem:[%s5825 + $0x40] sm:$0xf]
      %v5843 = vld [vmem:[%s5825 + $0x44] sm:$0xf]
      %v5844 = vld [vmem:[%s5825 + $0x48] sm:$0xf]
      %v5845 = vld [vmem:[%s5825 + $0x4c] sm:$0xf]
      %v5846 = vld [vmem:[%s5825 + $0x50] sm:$0xf]
      %v5847 = vld [vmem:[%s5825 + $0x54] sm:$0xf]
      %v5848 = vld [vmem:[%s5825 + $0x58] sm:$0xf]
      %v5849 = vld [vmem:[%s5825 + $0x5c] sm:$0xf]
      %v5850 = vld [vmem:[%s5825 + $0x60] sm:$0xf]
      %v5851 = vld [vmem:[%s5825 + $0x64] sm:$0xf]
      %v5852 = vld [vmem:[%s5825 + $0x68] sm:$0xf]
      %v5853 = vld [vmem:[%s5825 + $0x6c] sm:$0xf]
      %v5854 = vld [vmem:[%s5825 + $0x70] sm:$0xf]
      %v5855 = vld [vmem:[%s5825 + $0x74] sm:$0xf]
      %v5856 = vld [vmem:[%s5825 + $0x78] sm:$0xf]
      %v5857 = vld [vmem:[%s5825 + $0x7c] sm:$0xf]
      %v5858 = vld [vmem:[%s5825 + $0x80] sm:$0xf]
      %v5859 = vld [vmem:[%s5825 + $0x84] sm:$0xf]
      %v5860 = vld [vmem:[%s5825 + $0x88] sm:$0xf]
      %v5861 = vld [vmem:[%s5825 + $0x8c] sm:$0xf]
      %v5862 = vld [vmem:[%s5825 + $0x90] sm:$0xf]
      %v5863 = vld [vmem:[%s5825 + $0x94] sm:$0xf]
      %v5864 = vld [vmem:[%s5825 + $0x98] sm:$0xf]
      %v5865 = vld [vmem:[%s5825 + $0x9c] sm:$0xf]
      %v5866 = vld [vmem:[%s5825 + $0xa0] sm:$0xf]
      %v5867 = vld [vmem:[%s5825 + $0xa4] sm:$0xf]
      %v5868 = vld [vmem:[%s5825 + $0xa8] sm:$0xf]
      %v5869 = vld [vmem:[%s5825 + $0xac] sm:$0xf]
      %v5870 = vld [vmem:[%s5825 + $0xb0] sm:$0xf]
      %v5871 = vld [vmem:[%s5825 + $0xb4] sm:$0xf]
      %v5872 = vld [vmem:[%s5825 + $0xb8] sm:$0xf]
      %v5873 = vld [vmem:[%s5825 + $0xbc] sm:$0xf]
      %v5874 = vld [vmem:[%s5825 + $0xc0] sm:$0xf]
      %v5875 = vld [vmem:[%s5825 + $0xc4] sm:$0xf]
      %v5876 = vld [vmem:[%s5825 + $0xc8] sm:$0xf]
      %v5877 = vld [vmem:[%s5825 + $0xcc] sm:$0xf]
      %v5878 = vld [vmem:[%s5825 + $0xd0] sm:$0xf]
      %v5879 = vld [vmem:[%s5825 + $0xd4] sm:$0xf]
      %v5880 = vld [vmem:[%s5825 + $0xd8] sm:$0xf]
      %v5881 = vld [vmem:[%s5825 + $0xdc] sm:$0xf]
      %v5882 = vld [vmem:[%s5825 + $0xe0] sm:$0xf]
      %v5883 = vld [vmem:[%s5825 + $0xe4] sm:$0xf]
      %v5884 = vld [vmem:[%s5825 + $0xe8] sm:$0xf]
      %v5885 = vld [vmem:[%s5825 + $0xec] sm:$0xf]
      %v5886 = vld [vmem:[%s5825 + $0xf0] sm:$0xf]
      %v5887 = vld [vmem:[%s5825 + $0xf4] sm:$0xf]
      %v5888 = vld [vmem:[%s5825 + $0xf8] sm:$0xf]
      %v5889 = vld [vmem:[%s5825 + $0xfc] sm:$0xf]
      %v5890 = vld [vmem:[%s5825 + $0x100] sm:$0xf]
      %v5891 = vld [vmem:[%s5825 + $0x104] sm:$0xf]
      %v5892 = vld [vmem:[%s5825 + $0x108] sm:$0xf]
      %v5893 = vld [vmem:[%s5825 + $0x10c] sm:$0xf]
      %v5894 = vld [vmem:[%s5825 + $0x110] sm:$0xf]
      %v5895 = vld [vmem:[%s5825 + $0x114] sm:$0xf]
      %v5896 = vld [vmem:[%s5825 + $0x118] sm:$0xf]
      %v5897 = vld [vmem:[%s5825 + $0x11c] sm:$0xf]
      %v5970 = vunpack.c.l.b16 %v5826
      %v5971 = vunpack.c.l.b16 %v5827
      %v5972 = vunpack.c.l.b16 %v5828
      %v5973 = vunpack.c.l.b16 %v5829
      %v5974 = vunpack.c.l.b16 %v5830
      %v5975 = vunpack.c.l.b16 %v5831
      %v5976 = vunpack.c.l.b16 %v5832
      %v5977 = vunpack.c.l.b16 %v5833
      %v5978 = vunpack.c.l.b16 %v5834
      %v5979 = vunpack.c.l.b16 %v5835
      %v5980 = vunpack.c.l.b16 %v5836
      %v5981 = vunpack.c.l.b16 %v5837
      %v5982 = vunpack.c.l.b16 %v5838
      %v5983 = vunpack.c.l.b16 %v5839
      %v5984 = vunpack.c.l.b16 %v5840
      %v5985 = vunpack.c.l.b16 %v5841
      %v5986 = vunpack.c.l.b16 %v5842
      %v5987 = vunpack.c.l.b16 %v5843
      %v5988 = vunpack.c.l.b16 %v5844
      %v5989 = vunpack.c.l.b16 %v5845
      %v5990 = vunpack.c.l.b16 %v5846
      %v5991 = vunpack.c.l.b16 %v5847
      %v5992 = vunpack.c.l.b16 %v5848
      %v5993 = vunpack.c.l.b16 %v5849
      %v5994 = vunpack.c.l.b16 %v5850
      %v5995 = vunpack.c.l.b16 %v5851
      %v5996 = vunpack.c.l.b16 %v5852
      %v5997 = vunpack.c.l.b16 %v5853
      %v5998 = vunpack.c.l.b16 %v5854
      %v5999 = vunpack.c.l.b16 %v5855
      %v6000 = vunpack.c.l.b16 %v5856
      %v6001 = vunpack.c.l.b16 %v5857
      %v6002 = vunpack.c.l.b16 %v5858
      %v6003 = vunpack.c.l.b16 %v5859
      %v6004 = vunpack.c.l.b16 %v5860
      %v6005 = vunpack.c.l.b16 %v5861
      %v6006 = vunpack.c.l.b16 %v5862
      %v6007 = vunpack.c.l.b16 %v5863
      %v6008 = vunpack.c.l.b16 %v5864
      %v6009 = vunpack.c.l.b16 %v5865
      %v6010 = vunpack.c.l.b16 %v5866
      %v6011 = vunpack.c.l.b16 %v5867
      %v6012 = vunpack.c.l.b16 %v5868
      %v6013 = vunpack.c.l.b16 %v5869
      %v6014 = vunpack.c.l.b16 %v5870
      %v6015 = vunpack.c.l.b16 %v5871
      %v6016 = vunpack.c.l.b16 %v5872
      %v6017 = vunpack.c.l.b16 %v5873
      %v6018 = vunpack.c.l.b16 %v5874
      %v6019 = vunpack.c.l.b16 %v5875
      %v6020 = vunpack.c.l.b16 %v5876
      %v6021 = vunpack.c.l.b16 %v5877
      %v6022 = vunpack.c.l.b16 %v5878
      %v6023 = vunpack.c.l.b16 %v5879
      %v6024 = vunpack.c.l.b16 %v5880
      %v6025 = vunpack.c.l.b16 %v5881
      %v6026 = vunpack.c.l.b16 %v5882
      %v6027 = vunpack.c.l.b16 %v5883
      %v6028 = vunpack.c.l.b16 %v5884
      %v6029 = vunpack.c.l.b16 %v5885
      %v6030 = vunpack.c.l.b16 %v5886
      %v6031 = vunpack.c.l.b16 %v5887
      %v6032 = vunpack.c.l.b16 %v5888
      %v6033 = vunpack.c.l.b16 %v5889
      %v6034 = vunpack.c.l.b16 %v5890
      %v6035 = vunpack.c.l.b16 %v5891
      %v6036 = vunpack.c.l.b16 %v5892
      %v6037 = vunpack.c.l.b16 %v5893
      %v6038 = vunpack.c.l.b16 %v5894
      %v6039 = vunpack.c.l.b16 %v5895
      %v6040 = vunpack.c.l.b16 %v5896
      %v6041 = vunpack.c.l.b16 %v5897
      %v6042 = vpack.c.b16 %v5971, %v5970
      %v6043 = vpack.c.b16 %v5973, %v5972
      %v6044 = vpack.c.b16 %v5975, %v5974
      %v6045 = vpack.c.b16 %v5977, %v5976
      %v6046 = vpack.c.b16 %v5979, %v5978
      %v6047 = vpack.c.b16 %v5981, %v5980
      %v6048 = vpack.c.b16 %v5983, %v5982
      %v6049 = vpack.c.b16 %v5985, %v5984
      %v6050 = vpack.c.b16 %v5987, %v5986
      %v6051 = vpack.c.b16 %v5989, %v5988
      %v6052 = vpack.c.b16 %v5991, %v5990
      %v6053 = vpack.c.b16 %v5993, %v5992
      %v6054 = vpack.c.b16 %v5995, %v5994
      %v6055 = vpack.c.b16 %v5997, %v5996
      %v6056 = vpack.c.b16 %v5999, %v5998
      %v6057 = vpack.c.b16 %v6001, %v6000
      %v6058 = vpack.c.b16 %v6003, %v6002
      %v6059 = vpack.c.b16 %v6005, %v6004
      %v6060 = vpack.c.b16 %v6007, %v6006
      %v6061 = vpack.c.b16 %v6009, %v6008
      %v6062 = vpack.c.b16 %v6011, %v6010
      %v6063 = vpack.c.b16 %v6013, %v6012
      %v6064 = vpack.c.b16 %v6015, %v6014
      %v6065 = vpack.c.b16 %v6017, %v6016
      %v6066 = vpack.c.b16 %v6019, %v6018
      %v6067 = vpack.c.b16 %v6021, %v6020
      %v6068 = vpack.c.b16 %v6023, %v6022
      %v6069 = vpack.c.b16 %v6025, %v6024
      %v6070 = vpack.c.b16 %v6027, %v6026
      %v6071 = vpack.c.b16 %v6029, %v6028
      %v6072 = vpack.c.b16 %v6031, %v6030
      %v6073 = vpack.c.b16 %v6033, %v6032
      %v6074 = vpack.c.b16 %v6035, %v6034
      %v6075 = vpack.c.b16 %v6037, %v6036
      %v6076 = vpack.c.b16 %v6039, %v6038
      %v6077 = vpack.c.b16 %v6041, %v6040
      %v6115 = vsel %vm308, %v5739, 0
      %v6118 = vsel %vm308, %v5744, 0
      %v6121 = vsel %vm308, %v5749, 0
      %v6124 = vsel %vm308, %v5754, 0
      %v6127 = vsel %vm308, %v5759, 0
      %v6130 = vsel %vm308, %v5764, 0
      %v6133 = vsel %vm308, %v5769, 0
      %v6136 = vsel %vm308, %v5774, 0
      %v6139 = vsel %vm308, %v5779, 0
      %v6142 = vsel %vm308, %v5784, 0
      %v6145 = vsel %vm308, %v5789, 0
      %v6148 = vsel %vm308, %v5794, 0
      %v6151 = vsel %vm308, %v5799, 0
      %v6154 = vsel %vm308, %v5804, 0
      %v6157 = vsel %vm308, %v5809, 0
      %v6160 = vsel %vm308, %v5814, 0
      %v6163 = vsel %vm308, %v5819, 0
      %v6166 = vsel %vm308, %v5824, 0
      %6168 = vmatpush.bf16.msra.mxu0 %v6049
      %6169 = vmatpush.bf16.msra.mxu0 %v6048
      %6170 = vmatpush.bf16.msra.mxu0 %v6047
      %6171 = vmatpush.bf16.msra.mxu0 %v6046
      %6172 = vmatpush.bf16.msra.mxu0 %v6045
      %6173 = vmatpush.bf16.msra.mxu0 %v6044
      %6174 = vmatpush.bf16.msra.mxu0 %v6043
      %6175 = vmatpush.bf16.msra.mxu0 %v6042
      %6176 = vmatmul.bf16.gmra.mxu0 %v5735
      %v6177 = vpop.f32.mrf.mxu0
      %v6178 = vadd.f32 0.0, %v6177
      %v6179 = vpop.f32.mrf.mxu0
      %v6180 = vadd.f32 0.0, %v6179
      %6181 = vmatmul.bf16.gmra.mxu0 %v5740
      %v6182 = vpop.f32.mrf.mxu0
      %v6183 = vadd.f32 0.0, %v6182
      %v6184 = vpop.f32.mrf.mxu0
      %v6185 = vadd.f32 0.0, %v6184
      %6186 = vmatmul.bf16.gmra.mxu0 %v5745
      %v6187 = vpop.f32.mrf.mxu0
      %v6188 = vadd.f32 0.0, %v6187
      %v6189 = vpop.f32.mrf.mxu0
      %v6190 = vadd.f32 0.0, %v6189
      %6191 = vmatmul.bf16.gmra.mxu0 %v5750
      %v6192 = vpop.f32.mrf.mxu0
      %v6193 = vadd.f32 0.0, %v6192
      %v6194 = vpop.f32.mrf.mxu0
      %v6195 = vadd.f32 0.0, %v6194
      %6196 = vmatmul.bf16.gmra.mxu0 %v5755
      %v6197 = vpop.f32.mrf.mxu0
      %v6198 = vadd.f32 0.0, %v6197
      %v6199 = vpop.f32.mrf.mxu0
      %v6200 = vadd.f32 0.0, %v6199
      %6201 = vmatmul.bf16.gmra.mxu0 %v5760
      %v6202 = vpop.f32.mrf.mxu0
      %v6203 = vadd.f32 0.0, %v6202
      %v6204 = vpop.f32.mrf.mxu0
      %v6205 = vadd.f32 0.0, %v6204
      %6206 = vmatmul.bf16.gmra.mxu0 %v5765
      %v6207 = vpop.f32.mrf.mxu0
      %v6208 = vadd.f32 0.0, %v6207
      %v6209 = vpop.f32.mrf.mxu0
      %v6210 = vadd.f32 0.0, %v6209
      %6211 = vmatmul.bf16.gmra.mxu0 %v5770
      %v6212 = vpop.f32.mrf.mxu0
      %v6213 = vadd.f32 0.0, %v6212
      %v6214 = vpop.f32.mrf.mxu0
      %v6215 = vadd.f32 0.0, %v6214
      %6216 = vmatmul.bf16.gmra.mxu0 %v5775
      %v6217 = vpop.f32.mrf.mxu0
      %v6218 = vadd.f32 0.0, %v6217
      %v6219 = vpop.f32.mrf.mxu0
      %v6220 = vadd.f32 0.0, %v6219
      %6221 = vmatmul.bf16.gmra.mxu0 %v5780
      %v6222 = vpop.f32.mrf.mxu0
      %v6223 = vadd.f32 0.0, %v6222
      %v6224 = vpop.f32.mrf.mxu0
      %v6225 = vadd.f32 0.0, %v6224
      %6226 = vmatmul.bf16.gmra.mxu0 %v5785
      %v6227 = vpop.f32.mrf.mxu0
      %v6228 = vadd.f32 0.0, %v6227
      %v6229 = vpop.f32.mrf.mxu0
      %v6230 = vadd.f32 0.0, %v6229
      %6231 = vmatmul.bf16.gmra.mxu0 %v5790
      %v6232 = vpop.f32.mrf.mxu0
      %v6233 = vadd.f32 0.0, %v6232
      %v6234 = vpop.f32.mrf.mxu0
      %v6235 = vadd.f32 0.0, %v6234
      %6236 = vmatmul.bf16.gmra.mxu0 %v5795
      %v6237 = vpop.f32.mrf.mxu0
      %v6238 = vadd.f32 0.0, %v6237
      %v6239 = vpop.f32.mrf.mxu0
      %v6240 = vadd.f32 0.0, %v6239
      %6241 = vmatmul.bf16.gmra.mxu0 %v5800
      %v6242 = vpop.f32.mrf.mxu0
      %v6243 = vadd.f32 0.0, %v6242
      %v6244 = vpop.f32.mrf.mxu0
      %v6245 = vadd.f32 0.0, %v6244
      %6246 = vmatmul.bf16.gmra.mxu0 %v5805
      %v6247 = vpop.f32.mrf.mxu0
      %v6248 = vadd.f32 0.0, %v6247
      %v6249 = vpop.f32.mrf.mxu0
      %v6250 = vadd.f32 0.0, %v6249
      %6251 = vmatmul.bf16.gmra.mxu0 %v5810
      %v6252 = vpop.f32.mrf.mxu0
      %v6253 = vadd.f32 0.0, %v6252
      %v6254 = vpop.f32.mrf.mxu0
      %v6255 = vadd.f32 0.0, %v6254
      %6256 = vmatmul.bf16.gmra.mxu0 %v5815
      %v6257 = vpop.f32.mrf.mxu0
      %v6258 = vadd.f32 0.0, %v6257
      %v6259 = vpop.f32.mrf.mxu0
      %v6260 = vadd.f32 0.0, %v6259
      %6261 = vmatmul.bf16.gmra.mxu0 %v5820
      %v6262 = vpop.f32.mrf.mxu0
      %v6263 = vadd.f32 0.0, %v6262
      %v6264 = vpop.f32.mrf.mxu0
      %v6265 = vadd.f32 0.0, %v6264
      %6266 = vdwg.mxu0
      %6267 = vmatpush.bf16.msra.mxu0 %v6057
      %6268 = vmatpush.bf16.msra.mxu0 %v6056
      %6269 = vmatpush.bf16.msra.mxu0 %v6055
      %6270 = vmatpush.bf16.msra.mxu0 %v6054
      %6271 = vmatpush.bf16.msra.mxu0 %v6053
      %6272 = vmatpush.bf16.msra.mxu0 %v6052
      %6273 = vmatpush.bf16.msra.mxu0 %v6051
      %6274 = vmatpush.bf16.msra.mxu0 %v6050
      %6275 = vmatmul.bf16.gmra.mxu0 %v5736
      %v6276 = vpop.f32.mrf.mxu0
      %v6277 = vadd.f32 %v6178, %v6276
      %v6278 = vpop.f32.mrf.mxu0
      %v6279 = vadd.f32 %v6180, %v6278
      %6280 = vmatmul.bf16.gmra.mxu0 %v5741
      %v6281 = vpop.f32.mrf.mxu0
      %v6282 = vadd.f32 %v6183, %v6281
      %v6283 = vpop.f32.mrf.mxu0
      %v6284 = vadd.f32 %v6185, %v6283
      %6285 = vmatmul.bf16.gmra.mxu0 %v5746
      %v6286 = vpop.f32.mrf.mxu0
      %v6287 = vadd.f32 %v6188, %v6286
      %v6288 = vpop.f32.mrf.mxu0
      %v6289 = vadd.f32 %v6190, %v6288
      %6290 = vmatmul.bf16.gmra.mxu0 %v5751
      %v6291 = vpop.f32.mrf.mxu0
      %v6292 = vadd.f32 %v6193, %v6291
      %v6293 = vpop.f32.mrf.mxu0
      %v6294 = vadd.f32 %v6195, %v6293
      %6295 = vmatmul.bf16.gmra.mxu0 %v5756
      %v6296 = vpop.f32.mrf.mxu0
      %v6297 = vadd.f32 %v6198, %v6296
      %v6298 = vpop.f32.mrf.mxu0
      %v6299 = vadd.f32 %v6200, %v6298
      %6300 = vmatmul.bf16.gmra.mxu0 %v5761
      %v6301 = vpop.f32.mrf.mxu0
      %v6302 = vadd.f32 %v6203, %v6301
      %v6303 = vpop.f32.mrf.mxu0
      %v6304 = vadd.f32 %v6205, %v6303
      %6305 = vmatmul.bf16.gmra.mxu0 %v5766
      %v6306 = vpop.f32.mrf.mxu0
      %v6307 = vadd.f32 %v6208, %v6306
      %v6308 = vpop.f32.mrf.mxu0
      %v6309 = vadd.f32 %v6210, %v6308
      %6310 = vmatmul.bf16.gmra.mxu0 %v5771
      %v6311 = vpop.f32.mrf.mxu0
      %v6312 = vadd.f32 %v6213, %v6311
      %v6313 = vpop.f32.mrf.mxu0
      %v6314 = vadd.f32 %v6215, %v6313
      %6315 = vmatmul.bf16.gmra.mxu0 %v5776
      %v6316 = vpop.f32.mrf.mxu0
      %v6317 = vadd.f32 %v6218, %v6316
      %v6318 = vpop.f32.mrf.mxu0
      %v6319 = vadd.f32 %v6220, %v6318
      %6320 = vmatmul.bf16.gmra.mxu0 %v5781
      %v6321 = vpop.f32.mrf.mxu0
      %v6322 = vadd.f32 %v6223, %v6321
      %v6323 = vpop.f32.mrf.mxu0
      %v6324 = vadd.f32 %v6225, %v6323
      %6325 = vmatmul.bf16.gmra.mxu0 %v5786
      %v6326 = vpop.f32.mrf.mxu0
      %v6327 = vadd.f32 %v6228, %v6326
      %v6328 = vpop.f32.mrf.mxu0
      %v6329 = vadd.f32 %v6230, %v6328
      %6330 = vmatmul.bf16.gmra.mxu0 %v5791
      %v6331 = vpop.f32.mrf.mxu0
      %v6332 = vadd.f32 %v6233, %v6331
      %v6333 = vpop.f32.mrf.mxu0
      %v6334 = vadd.f32 %v6235, %v6333
      %6335 = vmatmul.bf16.gmra.mxu0 %v5796
      %v6336 = vpop.f32.mrf.mxu0
      %v6337 = vadd.f32 %v6238, %v6336
      %v6338 = vpop.f32.mrf.mxu0
      %v6339 = vadd.f32 %v6240, %v6338
      %6340 = vmatmul.bf16.gmra.mxu0 %v5801
      %v6341 = vpop.f32.mrf.mxu0
      %v6342 = vadd.f32 %v6243, %v6341
      %v6343 = vpop.f32.mrf.mxu0
      %v6344 = vadd.f32 %v6245, %v6343
      %6345 = vmatmul.bf16.gmra.mxu0 %v5806
      %v6346 = vpop.f32.mrf.mxu0
      %v6347 = vadd.f32 %v6248, %v6346
      %v6348 = vpop.f32.mrf.mxu0
      %v6349 = vadd.f32 %v6250, %v6348
      %6350 = vmatmul.bf16.gmra.mxu0 %v5811
      %v6351 = vpop.f32.mrf.mxu0
      %v6352 = vadd.f32 %v6253, %v6351
      %v6353 = vpop.f32.mrf.mxu0
      %v6354 = vadd.f32 %v6255, %v6353
      %6355 = vmatmul.bf16.gmra.mxu0 %v5816
      %v6356 = vpop.f32.mrf.mxu0
      %v6357 = vadd.f32 %v6258, %v6356
      %v6358 = vpop.f32.mrf.mxu0
      %v6359 = vadd.f32 %v6260, %v6358
      %6360 = vmatmul.bf16.gmra.mxu0 %v5821
      %v6361 = vpop.f32.mrf.mxu0
      %v6362 = vadd.f32 %v6263, %v6361
      %v6363 = vpop.f32.mrf.mxu0
      %v6364 = vadd.f32 %v6265, %v6363
      %6365 = vdwg.mxu0
      %6366 = vmatpush.bf16.msra.mxu0 %v6065
      %6367 = vmatpush.bf16.msra.mxu0 %v6064
      %6368 = vmatpush.bf16.msra.mxu0 %v6063
      %6369 = vmatpush.bf16.msra.mxu0 %v6062
      %6370 = vmatpush.bf16.msra.mxu0 %v6061
      %6371 = vmatpush.bf16.msra.mxu0 %v6060
      %6372 = vmatpush.bf16.msra.mxu0 %v6059
      %6373 = vmatpush.bf16.msra.mxu0 %v6058
      %6374 = vmatmul.bf16.gmra.mxu0 %v5737
      %v6375 = vpop.f32.mrf.mxu0
      %v6376 = vadd.f32 %v6277, %v6375
      %v6377 = vpop.f32.mrf.mxu0
      %v6378 = vadd.f32 %v6279, %v6377
      %6379 = vmatmul.bf16.gmra.mxu0 %v5742
      %v6380 = vpop.f32.mrf.mxu0
      %v6381 = vadd.f32 %v6282, %v6380
      %v6382 = vpop.f32.mrf.mxu0
      %v6383 = vadd.f32 %v6284, %v6382
      %6384 = vmatmul.bf16.gmra.mxu0 %v5747
      %v6385 = vpop.f32.mrf.mxu0
      %v6386 = vadd.f32 %v6287, %v6385
      %v6387 = vpop.f32.mrf.mxu0
      %v6388 = vadd.f32 %v6289, %v6387
      %6389 = vmatmul.bf16.gmra.mxu0 %v5752
      %v6390 = vpop.f32.mrf.mxu0
      %v6391 = vadd.f32 %v6292, %v6390
      %v6392 = vpop.f32.mrf.mxu0
      %v6393 = vadd.f32 %v6294, %v6392
      %6394 = vmatmul.bf16.gmra.mxu0 %v5757
      %v6395 = vpop.f32.mrf.mxu0
      %v6396 = vadd.f32 %v6297, %v6395
      %v6397 = vpop.f32.mrf.mxu0
      %v6398 = vadd.f32 %v6299, %v6397
      %6399 = vmatmul.bf16.gmra.mxu0 %v5762
      %v6400 = vpop.f32.mrf.mxu0
      %v6401 = vadd.f32 %v6302, %v6400
      %v6402 = vpop.f32.mrf.mxu0
      %v6403 = vadd.f32 %v6304, %v6402
      %6404 = vmatmul.bf16.gmra.mxu0 %v5767
      %v6405 = vpop.f32.mrf.mxu0
      %v6406 = vadd.f32 %v6307, %v6405
      %v6407 = vpop.f32.mrf.mxu0
      %v6408 = vadd.f32 %v6309, %v6407
      %6409 = vmatmul.bf16.gmra.mxu0 %v5772
      %v6410 = vpop.f32.mrf.mxu0
      %v6411 = vadd.f32 %v6312, %v6410
      %v6412 = vpop.f32.mrf.mxu0
      %v6413 = vadd.f32 %v6314, %v6412
      %6414 = vmatmul.bf16.gmra.mxu0 %v5777
      %v6415 = vpop.f32.mrf.mxu0
      %v6416 = vadd.f32 %v6317, %v6415
      %v6417 = vpop.f32.mrf.mxu0
      %v6418 = vadd.f32 %v6319, %v6417
      %6419 = vmatmul.bf16.gmra.mxu0 %v5782
      %v6420 = vpop.f32.mrf.mxu0
      %v6421 = vadd.f32 %v6322, %v6420
      %v6422 = vpop.f32.mrf.mxu0
      %v6423 = vadd.f32 %v6324, %v6422
      %6424 = vmatmul.bf16.gmra.mxu0 %v5787
      %v6425 = vpop.f32.mrf.mxu0
      %v6426 = vadd.f32 %v6327, %v6425
      %v6427 = vpop.f32.mrf.mxu0
      %v6428 = vadd.f32 %v6329, %v6427
      %6429 = vmatmul.bf16.gmra.mxu0 %v5792
      %v6430 = vpop.f32.mrf.mxu0
      %v6431 = vadd.f32 %v6332, %v6430
      %v6432 = vpop.f32.mrf.mxu0
      %v6433 = vadd.f32 %v6334, %v6432
      %6434 = vmatmul.bf16.gmra.mxu0 %v5797
      %v6435 = vpop.f32.mrf.mxu0
      %v6436 = vadd.f32 %v6337, %v6435
      %v6437 = vpop.f32.mrf.mxu0
      %v6438 = vadd.f32 %v6339, %v6437
      %6439 = vmatmul.bf16.gmra.mxu0 %v5802
      %v6440 = vpop.f32.mrf.mxu0
      %v6441 = vadd.f32 %v6342, %v6440
      %v6442 = vpop.f32.mrf.mxu0
      %v6443 = vadd.f32 %v6344, %v6442
      %6444 = vmatmul.bf16.gmra.mxu0 %v5807
      %v6445 = vpop.f32.mrf.mxu0
      %v6446 = vadd.f32 %v6347, %v6445
      %v6447 = vpop.f32.mrf.mxu0
      %v6448 = vadd.f32 %v6349, %v6447
      %6449 = vmatmul.bf16.gmra.mxu0 %v5812
      %v6450 = vpop.f32.mrf.mxu0
      %v6451 = vadd.f32 %v6352, %v6450
      %v6452 = vpop.f32.mrf.mxu0
      %v6453 = vadd.f32 %v6354, %v6452
      %6454 = vmatmul.bf16.gmra.mxu0 %v5817
      %v6455 = vpop.f32.mrf.mxu0
      %v6456 = vadd.f32 %v6357, %v6455
      %v6457 = vpop.f32.mrf.mxu0
      %v6458 = vadd.f32 %v6359, %v6457
      %6459 = vmatmul.bf16.gmra.mxu0 %v5822
      %v6460 = vpop.f32.mrf.mxu0
      %v6461 = vadd.f32 %v6362, %v6460
      %v6462 = vpop.f32.mrf.mxu0
      %v6463 = vadd.f32 %v6364, %v6462
      %6464 = vdwg.mxu0
      %6465 = vmatpush.bf16.msra.mxu0 %v6073
      %6466 = vmatpush.bf16.msra.mxu0 %v6072
      %6467 = vmatpush.bf16.msra.mxu0 %v6071
      %6468 = vmatpush.bf16.msra.mxu0 %v6070
      %6469 = vmatpush.bf16.msra.mxu0 %v6069
      %6470 = vmatpush.bf16.msra.mxu0 %v6068
      %6471 = vmatpush.bf16.msra.mxu0 %v6067
      %6472 = vmatpush.bf16.msra.mxu0 %v6066
      %6473 = vmatmul.bf16.gmra.mxu0 %v5738
      %v6474 = vpop.f32.mrf.mxu0
      %v6475 = vadd.f32 %v6376, %v6474
      %v6476 = vpop.f32.mrf.mxu0
      %v6477 = vadd.f32 %v6378, %v6476
      %6478 = vmatmul.bf16.gmra.mxu0 %v5743
      %v6479 = vpop.f32.mrf.mxu0
      %v6480 = vadd.f32 %v6381, %v6479
      %v6481 = vpop.f32.mrf.mxu0
      %v6482 = vadd.f32 %v6383, %v6481
      %6483 = vmatmul.bf16.gmra.mxu0 %v5748
      %v6484 = vpop.f32.mrf.mxu0
      %v6485 = vadd.f32 %v6386, %v6484
      %v6486 = vpop.f32.mrf.mxu0
      %v6487 = vadd.f32 %v6388, %v6486
      %6488 = vmatmul.bf16.gmra.mxu0 %v5753
      %v6489 = vpop.f32.mrf.mxu0
      %v6490 = vadd.f32 %v6391, %v6489
      %v6491 = vpop.f32.mrf.mxu0
      %v6492 = vadd.f32 %v6393, %v6491
      %6493 = vmatmul.bf16.gmra.mxu0 %v5758
      %v6494 = vpop.f32.mrf.mxu0
      %v6495 = vadd.f32 %v6396, %v6494
      %v6496 = vpop.f32.mrf.mxu0
      %v6497 = vadd.f32 %v6398, %v6496
      %6498 = vmatmul.bf16.gmra.mxu0 %v5763
      %v6499 = vpop.f32.mrf.mxu0
      %v6500 = vadd.f32 %v6401, %v6499
      %v6501 = vpop.f32.mrf.mxu0
      %v6502 = vadd.f32 %v6403, %v6501
      %6503 = vmatmul.bf16.gmra.mxu0 %v5768
      %v6504 = vpop.f32.mrf.mxu0
      %v6505 = vadd.f32 %v6406, %v6504
      %v6506 = vpop.f32.mrf.mxu0
      %v6507 = vadd.f32 %v6408, %v6506
      %6508 = vmatmul.bf16.gmra.mxu0 %v5773
      %v6509 = vpop.f32.mrf.mxu0
      %v6510 = vadd.f32 %v6411, %v6509
      %v6511 = vpop.f32.mrf.mxu0
      %v6512 = vadd.f32 %v6413, %v6511
      %6513 = vmatmul.bf16.gmra.mxu0 %v5778
      %v6514 = vpop.f32.mrf.mxu0
      %v6515 = vadd.f32 %v6416, %v6514
      %v6516 = vpop.f32.mrf.mxu0
      %v6517 = vadd.f32 %v6418, %v6516
      %6518 = vmatmul.bf16.gmra.mxu0 %v5783
      %v6519 = vpop.f32.mrf.mxu0
      %v6520 = vadd.f32 %v6421, %v6519
      %v6521 = vpop.f32.mrf.mxu0
      %v6522 = vadd.f32 %v6423, %v6521
      %6523 = vmatmul.bf16.gmra.mxu0 %v5788
      %v6524 = vpop.f32.mrf.mxu0
      %v6525 = vadd.f32 %v6426, %v6524
      %v6526 = vpop.f32.mrf.mxu0
      %v6527 = vadd.f32 %v6428, %v6526
      %6528 = vmatmul.bf16.gmra.mxu0 %v5793
      %v6529 = vpop.f32.mrf.mxu0
      %v6530 = vadd.f32 %v6431, %v6529
      %v6531 = vpop.f32.mrf.mxu0
      %v6532 = vadd.f32 %v6433, %v6531
      %6533 = vmatmul.bf16.gmra.mxu0 %v5798
      %v6534 = vpop.f32.mrf.mxu0
      %v6535 = vadd.f32 %v6436, %v6534
      %v6536 = vpop.f32.mrf.mxu0
      %v6537 = vadd.f32 %v6438, %v6536
      %6538 = vmatmul.bf16.gmra.mxu0 %v5803
      %v6539 = vpop.f32.mrf.mxu0
      %v6540 = vadd.f32 %v6441, %v6539
      %v6541 = vpop.f32.mrf.mxu0
      %v6542 = vadd.f32 %v6443, %v6541
      %6543 = vmatmul.bf16.gmra.mxu0 %v5808
      %v6544 = vpop.f32.mrf.mxu0
      %v6545 = vadd.f32 %v6446, %v6544
      %v6546 = vpop.f32.mrf.mxu0
      %v6547 = vadd.f32 %v6448, %v6546
      %6548 = vmatmul.bf16.gmra.mxu0 %v5813
      %v6549 = vpop.f32.mrf.mxu0
      %v6550 = vadd.f32 %v6451, %v6549
      %v6551 = vpop.f32.mrf.mxu0
      %v6552 = vadd.f32 %v6453, %v6551
      %6553 = vmatmul.bf16.gmra.mxu0 %v5818
      %v6554 = vpop.f32.mrf.mxu0
      %v6555 = vadd.f32 %v6456, %v6554
      %v6556 = vpop.f32.mrf.mxu0
      %v6557 = vadd.f32 %v6458, %v6556
      %6558 = vmatmul.bf16.gmra.mxu0 %v5823
      %v6559 = vpop.f32.mrf.mxu0
      %v6560 = vadd.f32 %v6461, %v6559
      %v6561 = vpop.f32.mrf.mxu0
      %v6562 = vadd.f32 %v6463, %v6561
      %6563 = vdwg.mxu0
      %6564 = vmatpush.bf16.msra.mxu0 0
      %6565 = vmatpush.bf16.msra.mxu0 0
      %6566 = vmatpush.bf16.msra.mxu0 0
      %6567 = vmatpush.bf16.msra.mxu0 0
      %6568 = vmatpush.bf16.msra.mxu0 %v6077
      %6569 = vmatpush.bf16.msra.mxu0 %v6076
      %6570 = vmatpush.bf16.msra.mxu0 %v6075
      %6571 = vmatpush.bf16.msra.mxu0 %v6074
      %6572 = vmatmul.bf16.gmra.mxu0 %v6115
      %v6573 = vpop.f32.mrf.mxu0
      %v6574 = vadd.f32 %v6475, %v6573
      %v6575 = vpop.f32.mrf.mxu0
      %v6576 = vadd.f32 %v6477, %v6575
      %6577 = vmatmul.bf16.gmra.mxu0 %v6118
      %v6578 = vpop.f32.mrf.mxu0
      %v6579 = vadd.f32 %v6480, %v6578
      %v6580 = vpop.f32.mrf.mxu0
      %v6581 = vadd.f32 %v6482, %v6580
      %6582 = vmatmul.bf16.gmra.mxu0 %v6121
      %v6583 = vpop.f32.mrf.mxu0
      %v6584 = vadd.f32 %v6485, %v6583
      %v6585 = vpop.f32.mrf.mxu0
      %v6586 = vadd.f32 %v6487, %v6585
      %6587 = vmatmul.bf16.gmra.mxu0 %v6124
      %v6588 = vpop.f32.mrf.mxu0
      %v6589 = vadd.f32 %v6490, %v6588
      %v6590 = vpop.f32.mrf.mxu0
      %v6591 = vadd.f32 %v6492, %v6590
      %6592 = vmatmul.bf16.gmra.mxu0 %v6127
      %v6593 = vpop.f32.mrf.mxu0
      %v6594 = vadd.f32 %v6495, %v6593
      %v6595 = vpop.f32.mrf.mxu0
      %v6596 = vadd.f32 %v6497, %v6595
      %6597 = vmatmul.bf16.gmra.mxu0 %v6130
      %v6598 = vpop.f32.mrf.mxu0
      %v6599 = vadd.f32 %v6500, %v6598
      %v6600 = vpop.f32.mrf.mxu0
      %v6601 = vadd.f32 %v6502, %v6600
      %6602 = vmatmul.bf16.gmra.mxu0 %v6133
      %v6603 = vpop.f32.mrf.mxu0
      %v6604 = vadd.f32 %v6505, %v6603
      %v6605 = vpop.f32.mrf.mxu0
      %v6606 = vadd.f32 %v6507, %v6605
      %6607 = vmatmul.bf16.gmra.mxu0 %v6136
      %v6608 = vpop.f32.mrf.mxu0
      %v6609 = vadd.f32 %v6510, %v6608
      %v6610 = vpop.f32.mrf.mxu0
      %v6611 = vadd.f32 %v6512, %v6610
      %6612 = vmatmul.bf16.gmra.mxu0 %v6139
      %v6613 = vpop.f32.mrf.mxu0
      %v6614 = vadd.f32 %v6515, %v6613
      %v6615 = vpop.f32.mrf.mxu0
      %v6616 = vadd.f32 %v6517, %v6615
      %6617 = vmatmul.bf16.gmra.mxu0 %v6142
      %v6618 = vpop.f32.mrf.mxu0
      %v6619 = vadd.f32 %v6520, %v6618
      %v6620 = vpop.f32.mrf.mxu0
      %v6621 = vadd.f32 %v6522, %v6620
      %6622 = vmatmul.bf16.gmra.mxu0 %v6145
      %v6623 = vpop.f32.mrf.mxu0
      %v6624 = vadd.f32 %v6525, %v6623
      %v6625 = vpop.f32.mrf.mxu0
      %v6626 = vadd.f32 %v6527, %v6625
      %6627 = vmatmul.bf16.gmra.mxu0 %v6148
      %v6628 = vpop.f32.mrf.mxu0
      %v6629 = vadd.f32 %v6530, %v6628
      %v6630 = vpop.f32.mrf.mxu0
      %v6631 = vadd.f32 %v6532, %v6630
      %6632 = vmatmul.bf16.gmra.mxu0 %v6151
      %v6633 = vpop.f32.mrf.mxu0
      %v6634 = vadd.f32 %v6535, %v6633
      %v6635 = vpop.f32.mrf.mxu0
      %v6636 = vadd.f32 %v6537, %v6635
      %6637 = vmatmul.bf16.gmra.mxu0 %v6154
      %v6638 = vpop.f32.mrf.mxu0
      %v6639 = vadd.f32 %v6540, %v6638
      %v6640 = vpop.f32.mrf.mxu0
      %v6641 = vadd.f32 %v6542, %v6640
      %6642 = vmatmul.bf16.gmra.mxu0 %v6157
      %v6643 = vpop.f32.mrf.mxu0
      %v6644 = vadd.f32 %v6545, %v6643
      %v6645 = vpop.f32.mrf.mxu0
      %v6646 = vadd.f32 %v6547, %v6645
      %6647 = vmatmul.bf16.gmra.mxu0 %v6160
      %v6648 = vpop.f32.mrf.mxu0
      %v6649 = vadd.f32 %v6550, %v6648
      %v6650 = vpop.f32.mrf.mxu0
      %v6651 = vadd.f32 %v6552, %v6650
      %6652 = vmatmul.bf16.gmra.mxu0 %v6163
      %v6653 = vpop.f32.mrf.mxu0
      %v6654 = vadd.f32 %v6555, %v6653
      %v6655 = vpop.f32.mrf.mxu0
      %v6656 = vadd.f32 %v6557, %v6655
      %6657 = vmatmul.bf16.gmra.mxu0 %v6166
      %v6658 = vpop.f32.mrf.mxu0
      %v6659 = vadd.f32 %v6560, %v6658
      %v6660 = vpop.f32.mrf.mxu0
      %v6661 = vadd.f32 %v6562, %v6660
      %6662 = vdwg.mxu0
      %s6663 = scalar_lea.vmem %s3, 2
      %v6664 = vld [vmem:[%s6663] sm:$0x1]
      %v6666 = vperm.slane %v6664, 0
      %v6668 = vmul.f32 %v6574, %v6666
      %v6669 = vmul.f32 %v6576, %v6666
      %v6670 = vmul.f32 %v6579, %v6666
      %v6671 = vmul.f32 %v6581, %v6666
      %v6672 = vmul.f32 %v6584, %v6666
      %v6673 = vmul.f32 %v6586, %v6666
      %v6674 = vmul.f32 %v6589, %v6666
      %v6675 = vmul.f32 %v6591, %v6666
      %v6676 = vmul.f32 %v6594, %v6666
      %v6677 = vmul.f32 %v6596, %v6666
      %v6678 = vmul.f32 %v6599, %v6666
      %v6679 = vmul.f32 %v6601, %v6666
      %v6680 = vmul.f32 %v6604, %v6666
      %v6681 = vmul.f32 %v6606, %v6666
      %v6682 = vmul.f32 %v6609, %v6666
      %v6683 = vmul.f32 %v6611, %v6666
      %v6684 = vmul.f32 %v6614, %v6666
      %v6685 = vmul.f32 %v6616, %v6666
      %v6686 = vmul.f32 %v6619, %v6666
      %v6687 = vmul.f32 %v6621, %v6666
      %v6688 = vmul.f32 %v6624, %v6666
      %v6689 = vmul.f32 %v6626, %v6666
      %v6690 = vmul.f32 %v6629, %v6666
      %v6691 = vmul.f32 %v6631, %v6666
      %v6692 = vmul.f32 %v6634, %v6666
      %v6693 = vmul.f32 %v6636, %v6666
      %v6694 = vmul.f32 %v6639, %v6666
      %v6695 = vmul.f32 %v6641, %v6666
      %v6696 = vmul.f32 %v6644, %v6666
      %v6697 = vmul.f32 %v6646, %v6666
      %v6698 = vmul.f32 %v6649, %v6666
      %v6699 = vmul.f32 %v6651, %v6666
      %v6700 = vmul.f32 %v6654, %v6666
      %v6701 = vmul.f32 %v6656, %v6666
      %v6702 = vmul.f32 %v6659, %v6666
      %v6703 = vmul.f32 %v6661, %v6666
      %s6704 = scalar_lea.vmem %s4, 2
      %v6705 = vld [vmem:[%s6704] sm:$0x1]
      %v6707 = vperm.slane %v6705, 0
      %v6709 = vadd.f32 %v6668, %v6707
      %v6710 = vadd.f32 %v6669, %v6707
      %v6711 = vadd.f32 %v6670, %v6707
      %v6712 = vadd.f32 %v6671, %v6707
      %v6713 = vadd.f32 %v6672, %v6707
      %v6714 = vadd.f32 %v6673, %v6707
      %v6715 = vadd.f32 %v6674, %v6707
      %v6716 = vadd.f32 %v6675, %v6707
      %v6717 = vadd.f32 %v6676, %v6707
      %v6718 = vadd.f32 %v6677, %v6707
      %v6719 = vadd.f32 %v6678, %v6707
      %v6720 = vadd.f32 %v6679, %v6707
      %v6721 = vadd.f32 %v6680, %v6707
      %v6722 = vadd.f32 %v6681, %v6707
      %v6723 = vadd.f32 %v6682, %v6707
      %v6724 = vadd.f32 %v6683, %v6707
      %v6725 = vadd.f32 %v6684, %v6707
      %v6726 = vadd.f32 %v6685, %v6707
      %v6727 = vadd.f32 %v6686, %v6707
      %v6728 = vadd.f32 %v6687, %v6707
      %v6729 = vadd.f32 %v6688, %v6707
      %v6730 = vadd.f32 %v6689, %v6707
      %v6731 = vadd.f32 %v6690, %v6707
      %v6732 = vadd.f32 %v6691, %v6707
      %v6733 = vadd.f32 %v6692, %v6707
      %v6734 = vadd.f32 %v6693, %v6707
      %v6735 = vadd.f32 %v6694, %v6707
      %v6736 = vadd.f32 %v6695, %v6707
      %v6737 = vadd.f32 %v6696, %v6707
      %v6738 = vadd.f32 %v6697, %v6707
      %v6739 = vadd.f32 %v6698, %v6707
      %v6740 = vadd.f32 %v6699, %v6707
      %v6741 = vadd.f32 %v6700, %v6707
      %v6742 = vadd.f32 %v6701, %v6707
      %v6743 = vadd.f32 %v6702, %v6707
      %v6744 = vadd.f32 %v6703, %v6707
      %v6745 = vmax.f32 %v6709, 0.0
      %v6746 = vmax.f32 %v6710, 0.0
      %v6747 = vmax.f32 %v6711, 0.0
      %v6748 = vmax.f32 %v6712, 0.0
      %v6749 = vmax.f32 %v6713, 0.0
      %v6750 = vmax.f32 %v6714, 0.0
      %v6751 = vmax.f32 %v6715, 0.0
      %v6752 = vmax.f32 %v6716, 0.0
      %v6753 = vmax.f32 %v6717, 0.0
      %v6754 = vmax.f32 %v6718, 0.0
      %v6755 = vmax.f32 %v6719, 0.0
      %v6756 = vmax.f32 %v6720, 0.0
      %v6757 = vmax.f32 %v6721, 0.0
      %v6758 = vmax.f32 %v6722, 0.0
      %v6759 = vmax.f32 %v6723, 0.0
      %v6760 = vmax.f32 %v6724, 0.0
      %v6761 = vmax.f32 %v6725, 0.0
      %v6762 = vmax.f32 %v6726, 0.0
      %v6763 = vmax.f32 %v6727, 0.0
      %v6764 = vmax.f32 %v6728, 0.0
      %v6765 = vmax.f32 %v6729, 0.0
      %v6766 = vmax.f32 %v6730, 0.0
      %v6767 = vmax.f32 %v6731, 0.0
      %v6768 = vmax.f32 %v6732, 0.0
      %v6769 = vmax.f32 %v6733, 0.0
      %v6770 = vmax.f32 %v6734, 0.0
      %v6771 = vmax.f32 %v6735, 0.0
      %v6772 = vmax.f32 %v6736, 0.0
      %v6773 = vmax.f32 %v6737, 0.0
      %v6774 = vmax.f32 %v6738, 0.0
      %v6775 = vmax.f32 %v6739, 0.0
      %v6776 = vmax.f32 %v6740, 0.0
      %v6777 = vmax.f32 %v6741, 0.0
      %v6778 = vmax.f32 %v6742, 0.0
      %v6779 = vmax.f32 %v6743, 0.0
      %v6780 = vmax.f32 %v6744, 0.0
      %v6781 = vmul.f32 %v6745, %v2411
      %v6782 = vmul.f32 %v6746, %v2416
      %v6783 = vmul.f32 %v6747, %v2421
      %v6784 = vmul.f32 %v6748, %v2426
      %v6785 = vmul.f32 %v6749, %v2431
      %v6786 = vmul.f32 %v6750, %v2436
      %v6787 = vmul.f32 %v6751, %v2441
      %v6788 = vmul.f32 %v6752, %v2446
      %v6789 = vmul.f32 %v6753, %v2451
      %v6790 = vmul.f32 %v6754, %v2456
      %v6791 = vmul.f32 %v6755, %v2461
      %v6792 = vmul.f32 %v6756, %v2466
      %v6793 = vmul.f32 %v6757, %v2471
      %v6794 = vmul.f32 %v6758, %v2476
      %v6795 = vmul.f32 %v6759, %v2481
      %v6796 = vmul.f32 %v6760, %v2486
      %v6797 = vmul.f32 %v6761, %v2491
      %v6798 = vmul.f32 %v6762, %v2496
      %v6799 = vmul.f32 %v6763, %v2501
      %v6800 = vmul.f32 %v6764, %v2506
      %v6801 = vmul.f32 %v6765, %v2511
      %v6802 = vmul.f32 %v6766, %v2516
      %v6803 = vmul.f32 %v6767, %v2521
      %v6804 = vmul.f32 %v6768, %v2526
      %v6805 = vmul.f32 %v6769, %v2531
      %v6806 = vmul.f32 %v6770, %v2536
      %v6807 = vmul.f32 %v6771, %v2541
      %v6808 = vmul.f32 %v6772, %v2546
      %v6809 = vmul.f32 %v6773, %v2551
      %v6810 = vmul.f32 %v6774, %v2556
      %v6811 = vmul.f32 %v6775, %v2561
      %v6812 = vmul.f32 %v6776, %v2566
      %v6813 = vmul.f32 %v6777, %v2571
      %v6814 = vmul.f32 %v6778, %v2576
      %v6815 = vmul.f32 %v6779, %v2581
      %v6816 = vmul.f32 %v6780, %v2586
      %6817 = vst.msk [vmem:[#allocation2 + $0x13] sm:$0xff] %vm308, %v6781
      %6818 = vst.msk [vmem:[#allocation2 + $0x1b] sm:$0xff] %vm308, %v6782
      %6819 = vst.msk [vmem:[#allocation2 + $0x23] sm:$0xff] %vm308, %v6783
      %6820 = vst.msk [vmem:[#allocation2 + $0x2b] sm:$0xff] %vm308, %v6784
      %6821 = vst.msk [vmem:[#allocation2 + $0x33] sm:$0xff] %vm308, %v6785
      %6822 = vst.msk [vmem:[#allocation2 + $0x3b] sm:$0xff] %vm308, %v6786
      %6823 = vst.msk [vmem:[#allocation2 + $0x43] sm:$0xff] %vm308, %v6787
      %6824 = vst.msk [vmem:[#allocation2 + $0x4b] sm:$0xff] %vm308, %v6788
      %6825 = vst.msk [vmem:[#allocation2 + $0x53] sm:$0xff] %vm308, %v6789
      %6826 = vst.msk [vmem:[#allocation2 + $0x5b] sm:$0xff] %vm308, %v6790
      %6827 = vst.msk [vmem:[#allocation2 + $0x63] sm:$0xff] %vm308, %v6791
      %6828 = vst.msk [vmem:[#allocation2 + $0x6b] sm:$0xff] %vm308, %v6792
      %6829 = vst.msk [vmem:[#allocation2 + $0x73] sm:$0xff] %vm308, %v6793
      %6830 = vst.msk [vmem:[#allocation2 + $0x7b] sm:$0xff] %vm308, %v6794
      %6831 = vst.msk [vmem:[#allocation2 + $0x83] sm:$0xff] %vm308, %v6795
      %6832 = vst.msk [vmem:[#allocation2 + $0x8b] sm:$0xff] %vm308, %v6796
      %6833 = vst.msk [vmem:[#allocation2 + $0x93] sm:$0xff] %vm308, %v6797
      %6834 = vst.msk [vmem:[#allocation2 + $0x9b] sm:$0xff] %vm308, %v6798
      %6835 = vst.msk [vmem:[#allocation2 + $0xa3] sm:$0xff] %vm308, %v6799
      %6836 = vst.msk [vmem:[#allocation2 + $0xab] sm:$0xff] %vm308, %v6800
      %6837 = vst.msk [vmem:[#allocation2 + $0xb3] sm:$0xff] %vm308, %v6801
      %6838 = vst.msk [vmem:[#allocation2 + $0xbb] sm:$0xff] %vm308, %v6802
      %6839 = vst.msk [vmem:[#allocation2 + $0xc3] sm:$0xff] %vm308, %v6803
      %6840 = vst.msk [vmem:[#allocation2 + $0xcb] sm:$0xff] %vm308, %v6804
      %6841 = vst.msk [vmem:[#allocation2 + $0xd3] sm:$0xff] %vm308, %v6805
      %6842 = vst.msk [vmem:[#allocation2 + $0xdb] sm:$0xff] %vm308, %v6806
      %6843 = vst.msk [vmem:[#allocation2 + $0xe3] sm:$0xff] %vm308, %v6807
      %6844 = vst.msk [vmem:[#allocation2 + $0xeb] sm:$0xff] %vm308, %v6808
      %6845 = vst.msk [vmem:[#allocation2 + $0xf3] sm:$0xff] %vm308, %v6809
      %6846 = vst.msk [vmem:[#allocation2 + $0xfb] sm:$0xff] %vm308, %v6810
      %6847 = vst.msk [vmem:[#allocation2 + $0x103] sm:$0xff] %vm308, %v6811
      %6848 = vst.msk [vmem:[#allocation2 + $0x10b] sm:$0xff] %vm308, %v6812
      %6849 = vst.msk [vmem:[#allocation2 + $0x113] sm:$0xff] %vm308, %v6813
      %6850 = vst.msk [vmem:[#allocation2 + $0x11b] sm:$0xff] %vm308, %v6814
      %6851 = vst.msk [vmem:[#allocation2 + $0x123] sm:$0xff] %vm308, %v6815
      %6852 = vst.msk [vmem:[#allocation2 + $0x12b] sm:$0x3f] %vm2659, %v6816
      %v6853 = vld [vmem:[#allocation2] sm:$0xff]
      %v6854 = vld [vmem:[#allocation2 + $0x8] sm:$0xff]
      %v6855 = vld [vmem:[#allocation2 + $0x10] sm:$0xff]
      %v6856 = vld [vmem:[#allocation2 + $0x18] sm:$0xff]
      %v6857 = vld [vmem:[#allocation2 + $0x20] sm:$0xff]
      %v6858 = vld [vmem:[#allocation2 + $0x28] sm:$0xff]
      %v6859 = vld [vmem:[#allocation2 + $0x30] sm:$0xff]
      %v6860 = vld [vmem:[#allocation2 + $0x38] sm:$0xff]
      %v6861 = vld [vmem:[#allocation2 + $0x40] sm:$0xff]
      %v6862 = vld [vmem:[#allocation2 + $0x48] sm:$0xff]
      %v6863 = vld [vmem:[#allocation2 + $0x50] sm:$0xff]
      %v6864 = vld [vmem:[#allocation2 + $0x58] sm:$0xff]
      %v6865 = vld [vmem:[#allocation2 + $0x60] sm:$0xff]
      %v6866 = vld [vmem:[#allocation2 + $0x68] sm:$0xff]
      %v6867 = vld [vmem:[#allocation2 + $0x70] sm:$0xff]
      %v6868 = vld [vmem:[#allocation2 + $0x78] sm:$0xff]
      %v6869 = vld [vmem:[#allocation2 + $0x80] sm:$0xff]
      %v6870 = vld [vmem:[#allocation2 + $0x88] sm:$0xff]
      %v6871 = vld [vmem:[#allocation2 + $0x90] sm:$0xff]
      %v6872 = vld [vmem:[#allocation2 + $0x98] sm:$0xff]
      %v6873 = vld [vmem:[#allocation2 + $0xa0] sm:$0xff]
      %v6874 = vld [vmem:[#allocation2 + $0xa8] sm:$0xff]
      %v6875 = vld [vmem:[#allocation2 + $0xb0] sm:$0xff]
      %v6876 = vld [vmem:[#allocation2 + $0xb8] sm:$0xff]
      %v6877 = vld [vmem:[#allocation2 + $0xc0] sm:$0xff]
      %v6878 = vld [vmem:[#allocation2 + $0xc8] sm:$0xff]
      %v6879 = vld [vmem:[#allocation2 + $0xd0] sm:$0xff]
      %v6880 = vld [vmem:[#allocation2 + $0xd8] sm:$0xff]
      %v6881 = vld [vmem:[#allocation2 + $0xe0] sm:$0xff]
      %v6882 = vld [vmem:[#allocation2 + $0xe8] sm:$0xff]
      %v6883 = vld [vmem:[#allocation2 + $0xf0] sm:$0xff]
      %v6884 = vld [vmem:[#allocation2 + $0xf8] sm:$0xff]
      %v6885 = vld [vmem:[#allocation2 + $0x100] sm:$0xff]
      %v6886 = vld [vmem:[#allocation2 + $0x108] sm:$0xff]
      %v6887 = vld [vmem:[#allocation2 + $0x110] sm:$0xff]
      %v6888 = vld [vmem:[#allocation2 + $0x118] sm:$0x3f]
      %v6889 = vld [vmem:[#allocation2 + $0x1] sm:$0xff]
      %v6890 = vld [vmem:[#allocation2 + $0x9] sm:$0xff]
      %v6891 = vld [vmem:[#allocation2 + $0x11] sm:$0xff]
      %v6892 = vld [vmem:[#allocation2 + $0x19] sm:$0xff]
      %v6893 = vld [vmem:[#allocation2 + $0x21] sm:$0xff]
      %v6894 = vld [vmem:[#allocation2 + $0x29] sm:$0xff]
      %v6895 = vld [vmem:[#allocation2 + $0x31] sm:$0xff]
      %v6896 = vld [vmem:[#allocation2 + $0x39] sm:$0xff]
      %v6897 = vld [vmem:[#allocation2 + $0x41] sm:$0xff]
      %v6898 = vld [vmem:[#allocation2 + $0x49] sm:$0xff]
      %v6899 = vld [vmem:[#allocation2 + $0x51] sm:$0xff]
      %v6900 = vld [vmem:[#allocation2 + $0x59] sm:$0xff]
      %v6901 = vld [vmem:[#allocation2 + $0x61] sm:$0xff]
      %v6902 = vld [vmem:[#allocation2 + $0x69] sm:$0xff]
      %v6903 = vld [vmem:[#allocation2 + $0x71] sm:$0xff]
      %v6904 = vld [vmem:[#allocation2 + $0x79] sm:$0xff]
      %v6905 = vld [vmem:[#allocation2 + $0x81] sm:$0xff]
      %v6906 = vld [vmem:[#allocation2 + $0x89] sm:$0xff]
      %v6907 = vld [vmem:[#allocation2 + $0x91] sm:$0xff]
      %v6908 = vld [vmem:[#allocation2 + $0x99] sm:$0xff]
      %v6909 = vld [vmem:[#allocation2 + $0xa1] sm:$0xff]
      %v6910 = vld [vmem:[#allocation2 + $0xa9] sm:$0xff]
      %v6911 = vld [vmem:[#allocation2 + $0xb1] sm:$0xff]
      %v6912 = vld [vmem:[#allocation2 + $0xb9] sm:$0xff]
      %v6913 = vld [vmem:[#allocation2 + $0xc1] sm:$0xff]
      %v6914 = vld [vmem:[#allocation2 + $0xc9] sm:$0xff]
      %v6915 = vld [vmem:[#allocation2 + $0xd1] sm:$0xff]
      %v6916 = vld [vmem:[#allocation2 + $0xd9] sm:$0xff]
      %v6917 = vld [vmem:[#allocation2 + $0xe1] sm:$0xff]
      %v6918 = vld [vmem:[#allocation2 + $0xe9] sm:$0xff]
      %v6919 = vld [vmem:[#allocation2 + $0xf1] sm:$0xff]
      %v6920 = vld [vmem:[#allocation2 + $0xf9] sm:$0xff]
      %v6921 = vld [vmem:[#allocation2 + $0x101] sm:$0xff]
      %v6922 = vld [vmem:[#allocation2 + $0x109] sm:$0xff]
      %v6923 = vld [vmem:[#allocation2 + $0x111] sm:$0xff]
      %v6924 = vld [vmem:[#allocation2 + $0x119] sm:$0x3f]
      %v6925 = vld [vmem:[#allocation2 + $0x2] sm:$0xff]
      %v6926 = vld [vmem:[#allocation2 + $0xa] sm:$0xff]
      %v6927 = vld [vmem:[#allocation2 + $0x12] sm:$0xff]
      %v6928 = vld [vmem:[#allocation2 + $0x1a] sm:$0xff]
      %v6929 = vld [vmem:[#allocation2 + $0x22] sm:$0xff]
      %v6930 = vld [vmem:[#allocation2 + $0x2a] sm:$0xff]
      %v6931 = vld [vmem:[#allocation2 + $0x32] sm:$0xff]
      %v6932 = vld [vmem:[#allocation2 + $0x3a] sm:$0xff]
      %v6933 = vld [vmem:[#allocation2 + $0x42] sm:$0xff]
      %v6934 = vld [vmem:[#allocation2 + $0x4a] sm:$0xff]
      %v6935 = vld [vmem:[#allocation2 + $0x52] sm:$0xff]
      %v6936 = vld [vmem:[#allocation2 + $0x5a] sm:$0xff]
      %v6937 = vld [vmem:[#allocation2 + $0x62] sm:$0xff]
      %v6938 = vld [vmem:[#allocation2 + $0x6a] sm:$0xff]
      %v6939 = vld [vmem:[#allocation2 + $0x72] sm:$0xff]
      %v6940 = vld [vmem:[#allocation2 + $0x7a] sm:$0xff]
      %v6941 = vld [vmem:[#allocation2 + $0x82] sm:$0xff]
      %v6942 = vld [vmem:[#allocation2 + $0x8a] sm:$0xff]
      %v6943 = vld [vmem:[#allocation2 + $0x92] sm:$0xff]
      %v6944 = vld [vmem:[#allocation2 + $0x9a] sm:$0xff]
      %v6945 = vld [vmem:[#allocation2 + $0xa2] sm:$0xff]
      %v6946 = vld [vmem:[#allocation2 + $0xaa] sm:$0xff]
      %v6947 = vld [vmem:[#allocation2 + $0xb2] sm:$0xff]
      %v6948 = vld [vmem:[#allocation2 + $0xba] sm:$0xff]
      %v6949 = vld [vmem:[#allocation2 + $0xc2] sm:$0xff]
      %v6950 = vld [vmem:[#allocation2 + $0xca] sm:$0xff]
      %v6951 = vld [vmem:[#allocation2 + $0xd2] sm:$0xff]
      %v6952 = vld [vmem:[#allocation2 + $0xda] sm:$0xff]
      %v6953 = vld [vmem:[#allocation2 + $0xe2] sm:$0xff]
      %v6954 = vld [vmem:[#allocation2 + $0xea] sm:$0xff]
      %v6955 = vld [vmem:[#allocation2 + $0xf2] sm:$0xff]
      %v6956 = vld [vmem:[#allocation2 + $0xfa] sm:$0xff]
      %v6957 = vld [vmem:[#allocation2 + $0x102] sm:$0xff]
      %v6958 = vld [vmem:[#allocation2 + $0x10a] sm:$0xff]
      %v6959 = vld [vmem:[#allocation2 + $0x112] sm:$0xff]
      %v6960 = vld [vmem:[#allocation2 + $0x11a] sm:$0x3f]
      %v6961 = vld [vmem:[#allocation2 + $0x11a] sm:$0xff]
      %v6962 = vld [vmem:[#allocation2 + $0x122] sm:$0xff]
      %v6963 = vld [vmem:[#allocation2 + $0x12a] sm:$0x3f]
      %v6964 = vld [vmem:[#allocation2 + $0x13] sm:$0xff]
      %v6965 = vld [vmem:[#allocation2 + $0x1b] sm:$0xff]
      %v6966 = vld [vmem:[#allocation2 + $0x23] sm:$0xff]
      %v6967 = vld [vmem:[#allocation2 + $0x2b] sm:$0xff]
      %v6968 = vld [vmem:[#allocation2 + $0x33] sm:$0xff]
      %v6969 = vld [vmem:[#allocation2 + $0x3b] sm:$0xff]
      %v6970 = vld [vmem:[#allocation2 + $0x43] sm:$0xff]
      %v6971 = vld [vmem:[#allocation2 + $0x4b] sm:$0xff]
      %v6972 = vld [vmem:[#allocation2 + $0x53] sm:$0xff]
      %v6973 = vld [vmem:[#allocation2 + $0x5b] sm:$0xff]
      %v6974 = vld [vmem:[#allocation2 + $0x63] sm:$0xff]
      %v6975 = vld [vmem:[#allocation2 + $0x6b] sm:$0xff]
      %v6976 = vld [vmem:[#allocation2 + $0x73] sm:$0xff]
      %v6977 = vld [vmem:[#allocation2 + $0x7b] sm:$0xff]
      %v6978 = vld [vmem:[#allocation2 + $0x83] sm:$0xff]
      %v6979 = vld [vmem:[#allocation2 + $0x8b] sm:$0xff]
      %v6980 = vld [vmem:[#allocation2 + $0x93] sm:$0xff]
      %v6981 = vld [vmem:[#allocation2 + $0x9b] sm:$0xff]
      %v6982 = vld [vmem:[#allocation2 + $0xa3] sm:$0xff]
      %v6983 = vld [vmem:[#allocation2 + $0xab] sm:$0xff]
      %v6984 = vld [vmem:[#allocation2 + $0xb3] sm:$0xff]
      %v6985 = vld [vmem:[#allocation2 + $0xbb] sm:$0xff]
      %v6986 = vld [vmem:[#allocation2 + $0xc3] sm:$0xff]
      %v6987 = vld [vmem:[#allocation2 + $0xcb] sm:$0xff]
      %v6988 = vld [vmem:[#allocation2 + $0xd3] sm:$0xff]
      %v6989 = vld [vmem:[#allocation2 + $0xdb] sm:$0xff]
      %v6990 = vld [vmem:[#allocation2 + $0xe3] sm:$0xff]
      %v6991 = vld [vmem:[#allocation2 + $0xeb] sm:$0xff]
      %v6992 = vld [vmem:[#allocation2 + $0xf3] sm:$0xff]
      %v6993 = vld [vmem:[#allocation2 + $0xfb] sm:$0xff]
      %v6994 = vld [vmem:[#allocation2 + $0x103] sm:$0xff]
      %v6995 = vld [vmem:[#allocation2 + $0x10b] sm:$0xff]
      %v6996 = vld [vmem:[#allocation2 + $0x113] sm:$0xff]
      %v6997 = vld [vmem:[#allocation2 + $0x11b] sm:$0xff]
      %v6998 = vld [vmem:[#allocation2 + $0x123] sm:$0xff]
      %v6999 = vld [vmem:[#allocation2 + $0x12b] sm:$0x3f]
      %v7000 = vld [vmem:[#allocation2 + $0x14] sm:$0xff]
      %v7001 = vld [vmem:[#allocation2 + $0x1c] sm:$0xff]
      %v7002 = vld [vmem:[#allocation2 + $0x24] sm:$0xff]
      %v7003 = vld [vmem:[#allocation2 + $0x2c] sm:$0xff]
      %v7004 = vld [vmem:[#allocation2 + $0x34] sm:$0xff]
      %v7005 = vld [vmem:[#allocation2 + $0x3c] sm:$0xff]
      %v7006 = vld [vmem:[#allocation2 + $0x44] sm:$0xff]
      %v7007 = vld [vmem:[#allocation2 + $0x4c] sm:$0xff]
      %v7008 = vld [vmem:[#allocation2 + $0x54] sm:$0xff]
      %v7009 = vld [vmem:[#allocation2 + $0x5c] sm:$0xff]
      %v7010 = vld [vmem:[#allocation2 + $0x64] sm:$0xff]
      %v7011 = vld [vmem:[#allocation2 + $0x6c] sm:$0xff]
      %v7012 = vld [vmem:[#allocation2 + $0x74] sm:$0xff]
      %v7013 = vld [vmem:[#allocation2 + $0x7c] sm:$0xff]
      %v7014 = vld [vmem:[#allocation2 + $0x84] sm:$0xff]
      %v7015 = vld [vmem:[#allocation2 + $0x8c] sm:$0xff]
      %v7016 = vld [vmem:[#allocation2 + $0x94] sm:$0xff]
      %v7017 = vld [vmem:[#allocation2 + $0x9c] sm:$0xff]
      %v7018 = vld [vmem:[#allocation2 + $0xa4] sm:$0xff]
      %v7019 = vld [vmem:[#allocation2 + $0xac] sm:$0xff]
      %v7020 = vld [vmem:[#allocation2 + $0xb4] sm:$0xff]
      %v7021 = vld [vmem:[#allocation2 + $0xbc] sm:$0xff]
      %v7022 = vld [vmem:[#allocation2 + $0xc4] sm:$0xff]
      %v7023 = vld [vmem:[#allocation2 + $0xcc] sm:$0xff]
      %v7024 = vld [vmem:[#allocation2 + $0xd4] sm:$0xff]
      %v7025 = vld [vmem:[#allocation2 + $0xdc] sm:$0xff]
      %v7026 = vld [vmem:[#allocation2 + $0xe4] sm:$0xff]
      %v7027 = vld [vmem:[#allocation2 + $0xec] sm:$0xff]
      %v7028 = vld [vmem:[#allocation2 + $0xf4] sm:$0xff]
      %v7029 = vld [vmem:[#allocation2 + $0xfc] sm:$0xff]
      %v7030 = vld [vmem:[#allocation2 + $0x104] sm:$0xff]
      %v7031 = vld [vmem:[#allocation2 + $0x10c] sm:$0xff]
      %v7032 = vld [vmem:[#allocation2 + $0x114] sm:$0xff]
      %v7033 = vld [vmem:[#allocation2 + $0x11c] sm:$0xff]
      %v7034 = vld [vmem:[#allocation2 + $0x124] sm:$0xff]
      %v7035 = vld [vmem:[#allocation2 + $0x12c] sm:$0x3f]
      %v7036 = vld [vmem:[#allocation2 + $0x12c] sm:$0xff]
      %v7037 = vld [vmem:[#allocation2 + $0x134] sm:$0xff]
      %v7038 = vld [vmem:[#allocation2 + $0x13c] sm:$0x3f]
      %v7039 = vld [vmem:[#allocation2 + $0x25] sm:$0xff]
      %v7040 = vld [vmem:[#allocation2 + $0x2d] sm:$0xff]
      %v7041 = vld [vmem:[#allocation2 + $0x35] sm:$0xff]
      %v7042 = vld [vmem:[#allocation2 + $0x3d] sm:$0xff]
      %v7043 = vld [vmem:[#allocation2 + $0x45] sm:$0xff]
      %v7044 = vld [vmem:[#allocation2 + $0x4d] sm:$0xff]
      %v7045 = vld [vmem:[#allocation2 + $0x55] sm:$0xff]
      %v7046 = vld [vmem:[#allocation2 + $0x5d] sm:$0xff]
      %v7047 = vld [vmem:[#allocation2 + $0x65] sm:$0xff]
      %v7048 = vld [vmem:[#allocation2 + $0x6d] sm:$0xff]
      %v7049 = vld [vmem:[#allocation2 + $0x75] sm:$0xff]
      %v7050 = vld [vmem:[#allocation2 + $0x7d] sm:$0xff]
      %v7051 = vld [vmem:[#allocation2 + $0x85] sm:$0xff]
      %v7052 = vld [vmem:[#allocation2 + $0x8d] sm:$0xff]
      %v7053 = vld [vmem:[#allocation2 + $0x95] sm:$0xff]
      %v7054 = vld [vmem:[#allocation2 + $0x9d] sm:$0xff]
      %v7055 = vld [vmem:[#allocation2 + $0xa5] sm:$0xff]
      %v7056 = vld [vmem:[#allocation2 + $0xad] sm:$0xff]
      %v7057 = vld [vmem:[#allocation2 + $0xb5] sm:$0xff]
      %v7058 = vld [vmem:[#allocation2 + $0xbd] sm:$0xff]
      %v7059 = vld [vmem:[#allocation2 + $0xc5] sm:$0xff]
      %v7060 = vld [vmem:[#allocation2 + $0xcd] sm:$0xff]
      %v7061 = vld [vmem:[#allocation2 + $0xd5] sm:$0xff]
      %v7062 = vld [vmem:[#allocation2 + $0xdd] sm:$0xff]
      %v7063 = vld [vmem:[#allocation2 + $0xe5] sm:$0xff]
      %v7064 = vld [vmem:[#allocation2 + $0xed] sm:$0xff]
      %v7065 = vld [vmem:[#allocation2 + $0xf5] sm:$0xff]
      %v7066 = vld [vmem:[#allocation2 + $0xfd] sm:$0xff]
      %v7067 = vld [vmem:[#allocation2 + $0x105] sm:$0xff]
      %v7068 = vld [vmem:[#allocation2 + $0x10d] sm:$0xff]
      %v7069 = vld [vmem:[#allocation2 + $0x115] sm:$0xff]
      %v7070 = vld [vmem:[#allocation2 + $0x11d] sm:$0xff]
      %v7071 = vld [vmem:[#allocation2 + $0x125] sm:$0xff]
      %v7072 = vld [vmem:[#allocation2 + $0x12d] sm:$0xff]
      %v7073 = vld [vmem:[#allocation2 + $0x135] sm:$0xff]
      %v7074 = vld [vmem:[#allocation2 + $0x13d] sm:$0x3f]
      %v7075 = vld [vmem:[#allocation2 + $0x26] sm:$0xff]
      %v7076 = vld [vmem:[#allocation2 + $0x2e] sm:$0xff]
      %v7077 = vld [vmem:[#allocation2 + $0x36] sm:$0xff]
      %v7078 = vld [vmem:[#allocation2 + $0x3e] sm:$0xff]
      %v7079 = vld [vmem:[#allocation2 + $0x46] sm:$0xff]
      %v7080 = vld [vmem:[#allocation2 + $0x4e] sm:$0xff]
      %v7081 = vld [vmem:[#allocation2 + $0x56] sm:$0xff]
      %v7082 = vld [vmem:[#allocation2 + $0x5e] sm:$0xff]
      %v7083 = vld [vmem:[#allocation2 + $0x66] sm:$0xff]
      %v7084 = vld [vmem:[#allocation2 + $0x6e] sm:$0xff]
      %v7085 = vld [vmem:[#allocation2 + $0x76] sm:$0xff]
      %v7086 = vld [vmem:[#allocation2 + $0x7e] sm:$0xff]
      %v7087 = vld [vmem:[#allocation2 + $0x86] sm:$0xff]
      %v7088 = vld [vmem:[#allocation2 + $0x8e] sm:$0xff]
      %v7089 = vld [vmem:[#allocation2 + $0x96] sm:$0xff]
      %v7090 = vld [vmem:[#allocation2 + $0x9e] sm:$0xff]
      %v7091 = vld [vmem:[#allocation2 + $0xa6] sm:$0xff]
      %v7092 = vld [vmem:[#allocation2 + $0xae] sm:$0xff]
      %v7093 = vld [vmem:[#allocation2 + $0xb6] sm:$0xff]
      %v7094 = vld [vmem:[#allocation2 + $0xbe] sm:$0xff]
      %v7095 = vld [vmem:[#allocation2 + $0xc6] sm:$0xff]
      %v7096 = vld [vmem:[#allocation2 + $0xce] sm:$0xff]
      %v7097 = vld [vmem:[#allocation2 + $0xd6] sm:$0xff]
      %v7098 = vld [vmem:[#allocation2 + $0xde] sm:$0xff]
      %v7099 = vld [vmem:[#allocation2 + $0xe6] sm:$0xff]
      %v7100 = vld [vmem:[#allocation2 + $0xee] sm:$0xff]
      %v7101 = vld [vmem:[#allocation2 + $0xf6] sm:$0xff]
      %v7102 = vld [vmem:[#allocation2 + $0xfe] sm:$0xff]
      %v7103 = vld [vmem:[#allocation2 + $0x106] sm:$0xff]
      %v7104 = vld [vmem:[#allocation2 + $0x10e] sm:$0xff]
      %v7105 = vld [vmem:[#allocation2 + $0x116] sm:$0xff]
      %v7106 = vld [vmem:[#allocation2 + $0x11e] sm:$0xff]
      %v7107 = vld [vmem:[#allocation2 + $0x126] sm:$0xff]
      %v7108 = vld [vmem:[#allocation2 + $0x12e] sm:$0xff]
      %v7109 = vld [vmem:[#allocation2 + $0x136] sm:$0xff]
      %v7110 = vld [vmem:[#allocation2 + $0x13e] sm:$0x3f]
      %7147 = vrot.lane.b32.xlu0 %v6889, 64
      %v7148 = vpop.permute.xlu0 %7147
      %7149 = vrot.lane.b32.xlu0 %v6890, 64
      %v7150 = vpop.permute.xlu0 %7149
      %7151 = vrot.lane.b32.xlu0 %v6891, 64
      %v7152 = vpop.permute.xlu0 %7151
      %7153 = vrot.lane.b32.xlu0 %v6892, 64
      %v7154 = vpop.permute.xlu0 %7153
      %7155 = vrot.lane.b32.xlu0 %v6893, 64
      %v7156 = vpop.permute.xlu0 %7155
      %7157 = vrot.lane.b32.xlu0 %v6894, 64
      %v7158 = vpop.permute.xlu0 %7157
      %7159 = vrot.lane.b32.xlu0 %v6895, 64
      %v7160 = vpop.permute.xlu0 %7159
      %7161 = vrot.lane.b32.xlu0 %v6896, 64
      %v7162 = vpop.permute.xlu0 %7161
      %7163 = vrot.lane.b32.xlu0 %v6897, 64
      %v7164 = vpop.permute.xlu0 %7163
      %7165 = vrot.lane.b32.xlu0 %v6898, 64
      %v7166 = vpop.permute.xlu0 %7165
      %7167 = vrot.lane.b32.xlu0 %v6899, 64
      %v7168 = vpop.permute.xlu0 %7167
      %7169 = vrot.lane.b32.xlu0 %v6900, 64
      %v7170 = vpop.permute.xlu0 %7169
      %7171 = vrot.lane.b32.xlu0 %v6901, 64
      %v7172 = vpop.permute.xlu0 %7171
      %7173 = vrot.lane.b32.xlu0 %v6902, 64
      %v7174 = vpop.permute.xlu0 %7173
      %7175 = vrot.lane.b32.xlu0 %v6903, 64
      %v7176 = vpop.permute.xlu0 %7175
      %7177 = vrot.lane.b32.xlu0 %v6904, 64
      %v7178 = vpop.permute.xlu0 %7177
      %7179 = vrot.lane.b32.xlu0 %v6905, 64
      %v7180 = vpop.permute.xlu0 %7179
      %7181 = vrot.lane.b32.xlu0 %v6906, 64
      %v7182 = vpop.permute.xlu0 %7181
      %7183 = vrot.lane.b32.xlu0 %v6907, 64
      %v7184 = vpop.permute.xlu0 %7183
      %7185 = vrot.lane.b32.xlu0 %v6908, 64
      %v7186 = vpop.permute.xlu0 %7185
      %7187 = vrot.lane.b32.xlu0 %v6909, 64
      %v7188 = vpop.permute.xlu0 %7187
      %7189 = vrot.lane.b32.xlu0 %v6910, 64
      %v7190 = vpop.permute.xlu0 %7189
      %7191 = vrot.lane.b32.xlu0 %v6911, 64
      %v7192 = vpop.permute.xlu0 %7191
      %7193 = vrot.lane.b32.xlu0 %v6912, 64
      %v7194 = vpop.permute.xlu0 %7193
      %7195 = vrot.lane.b32.xlu0 %v6913, 64
      %v7196 = vpop.permute.xlu0 %7195
      %7197 = vrot.lane.b32.xlu0 %v6914, 64
      %v7198 = vpop.permute.xlu0 %7197
      %7199 = vrot.lane.b32.xlu0 %v6915, 64
      %v7200 = vpop.permute.xlu0 %7199
      %7201 = vrot.lane.b32.xlu0 %v6916, 64
      %v7202 = vpop.permute.xlu0 %7201
      %7203 = vrot.lane.b32.xlu0 %v6917, 64
      %v7204 = vpop.permute.xlu0 %7203
      %7205 = vrot.lane.b32.xlu0 %v6918, 64
      %v7206 = vpop.permute.xlu0 %7205
      %7207 = vrot.lane.b32.xlu0 %v6919, 64
      %v7208 = vpop.permute.xlu0 %7207
      %7209 = vrot.lane.b32.xlu0 %v6920, 64
      %v7210 = vpop.permute.xlu0 %7209
      %7211 = vrot.lane.b32.xlu0 %v6921, 64
      %v7212 = vpop.permute.xlu0 %7211
      %7213 = vrot.lane.b32.xlu0 %v6922, 64
      %v7214 = vpop.permute.xlu0 %7213
      %7215 = vrot.lane.b32.xlu0 %v6923, 64
      %v7216 = vpop.permute.xlu0 %7215
      %7217 = vrot.lane.b32.xlu0 %v6924, 64
      %v7218 = vpop.permute.xlu0 %7217
      %7291 = vrot.lane.b32.xlu0 %v6927, 64
      %v7292 = vpop.permute.xlu0 %7291
      %7293 = vrot.lane.b32.xlu0 %v6928, 64
      %v7294 = vpop.permute.xlu0 %7293
      %7295 = vrot.lane.b32.xlu0 %v6929, 64
      %v7296 = vpop.permute.xlu0 %7295
      %7297 = vrot.lane.b32.xlu0 %v6930, 64
      %v7298 = vpop.permute.xlu0 %7297
      %7299 = vrot.lane.b32.xlu0 %v6931, 64
      %v7300 = vpop.permute.xlu0 %7299
      %7301 = vrot.lane.b32.xlu0 %v6932, 64
      %v7302 = vpop.permute.xlu0 %7301
      %7303 = vrot.lane.b32.xlu0 %v6933, 64
      %v7304 = vpop.permute.xlu0 %7303
      %7305 = vrot.lane.b32.xlu0 %v6934, 64
      %v7306 = vpop.permute.xlu0 %7305
      %7307 = vrot.lane.b32.xlu0 %v6935, 64
      %v7308 = vpop.permute.xlu0 %7307
      %7309 = vrot.lane.b32.xlu0 %v6936, 64
      %v7310 = vpop.permute.xlu0 %7309
      %7311 = vrot.lane.b32.xlu0 %v6937, 64
      %v7312 = vpop.permute.xlu0 %7311
      %7313 = vrot.lane.b32.xlu0 %v6938, 64
      %v7314 = vpop.permute.xlu0 %7313
      %7315 = vrot.lane.b32.xlu0 %v6939, 64
      %v7316 = vpop.permute.xlu0 %7315
      %7317 = vrot.lane.b32.xlu0 %v6940, 64
      %v7318 = vpop.permute.xlu0 %7317
      %7319 = vrot.lane.b32.xlu0 %v6941, 64
      %v7320 = vpop.permute.xlu0 %7319
      %7321 = vrot.lane.b32.xlu0 %v6942, 64
      %v7322 = vpop.permute.xlu0 %7321
      %7323 = vrot.lane.b32.xlu0 %v6943, 64
      %v7324 = vpop.permute.xlu0 %7323
      %7325 = vrot.lane.b32.xlu0 %v6944, 64
      %v7326 = vpop.permute.xlu0 %7325
      %7327 = vrot.lane.b32.xlu0 %v6945, 64
      %v7328 = vpop.permute.xlu0 %7327
      %7329 = vrot.lane.b32.xlu0 %v6946, 64
      %v7330 = vpop.permute.xlu0 %7329
      %7331 = vrot.lane.b32.xlu0 %v6947, 64
      %v7332 = vpop.permute.xlu0 %7331
      %7333 = vrot.lane.b32.xlu0 %v6948, 64
      %v7334 = vpop.permute.xlu0 %7333
      %7335 = vrot.lane.b32.xlu0 %v6949, 64
      %v7336 = vpop.permute.xlu0 %7335
      %7337 = vrot.lane.b32.xlu0 %v6950, 64
      %v7338 = vpop.permute.xlu0 %7337
      %7339 = vrot.lane.b32.xlu0 %v6951, 64
      %v7340 = vpop.permute.xlu0 %7339
      %7341 = vrot.lane.b32.xlu0 %v6952, 64
      %v7342 = vpop.permute.xlu0 %7341
      %7343 = vrot.lane.b32.xlu0 %v6953, 64
      %v7344 = vpop.permute.xlu0 %7343
      %7345 = vrot.lane.b32.xlu0 %v6954, 64
      %v7346 = vpop.permute.xlu0 %7345
      %7347 = vrot.lane.b32.xlu0 %v6955, 64
      %v7348 = vpop.permute.xlu0 %7347
      %7349 = vrot.lane.b32.xlu0 %v6956, 64
      %v7350 = vpop.permute.xlu0 %7349
      %7351 = vrot.lane.b32.xlu0 %v6957, 64
      %v7352 = vpop.permute.xlu0 %7351
      %7353 = vrot.lane.b32.xlu0 %v6958, 64
      %v7354 = vpop.permute.xlu0 %7353
      %7355 = vrot.lane.b32.xlu0 %v6959, 64
      %v7356 = vpop.permute.xlu0 %7355
      %7357 = vrot.lane.b32.xlu0 %v6961, 64
      %v7358 = vpop.permute.xlu0 %7357
      %7359 = vrot.lane.b32.xlu0 %v6962, 64
      %v7360 = vpop.permute.xlu0 %7359
      %7361 = vrot.lane.b32.xlu0 %v6963, 64
      %v7362 = vpop.permute.xlu0 %7361
      %7435 = vrot.lane.b32.xlu0 %v7000, 64
      %v7436 = vpop.permute.xlu0 %7435
      %7437 = vrot.lane.b32.xlu0 %v7001, 64
      %v7438 = vpop.permute.xlu0 %7437
      %7439 = vrot.lane.b32.xlu0 %v7002, 64
      %v7440 = vpop.permute.xlu0 %7439
      %7441 = vrot.lane.b32.xlu0 %v7003, 64
      %v7442 = vpop.permute.xlu0 %7441
      %7443 = vrot.lane.b32.xlu0 %v7004, 64
      %v7444 = vpop.permute.xlu0 %7443
      %7445 = vrot.lane.b32.xlu0 %v7005, 64
      %v7446 = vpop.permute.xlu0 %7445
      %7447 = vrot.lane.b32.xlu0 %v7006, 64
      %v7448 = vpop.permute.xlu0 %7447
      %7449 = vrot.lane.b32.xlu0 %v7007, 64
      %v7450 = vpop.permute.xlu0 %7449
      %7451 = vrot.lane.b32.xlu0 %v7008, 64
      %v7452 = vpop.permute.xlu0 %7451
      %7453 = vrot.lane.b32.xlu0 %v7009, 64
      %v7454 = vpop.permute.xlu0 %7453
      %7455 = vrot.lane.b32.xlu0 %v7010, 64
      %v7456 = vpop.permute.xlu0 %7455
      %7457 = vrot.lane.b32.xlu0 %v7011, 64
      %v7458 = vpop.permute.xlu0 %7457
      %7459 = vrot.lane.b32.xlu0 %v7012, 64
      %v7460 = vpop.permute.xlu0 %7459
      %7461 = vrot.lane.b32.xlu0 %v7013, 64
      %v7462 = vpop.permute.xlu0 %7461
      %7463 = vrot.lane.b32.xlu0 %v7014, 64
      %v7464 = vpop.permute.xlu0 %7463
      %7465 = vrot.lane.b32.xlu0 %v7015, 64
      %v7466 = vpop.permute.xlu0 %7465
      %7467 = vrot.lane.b32.xlu0 %v7016, 64
      %v7468 = vpop.permute.xlu0 %7467
      %7469 = vrot.lane.b32.xlu0 %v7017, 64
      %v7470 = vpop.permute.xlu0 %7469
      %7471 = vrot.lane.b32.xlu0 %v7018, 64
      %v7472 = vpop.permute.xlu0 %7471
      %7473 = vrot.lane.b32.xlu0 %v7019, 64
      %v7474 = vpop.permute.xlu0 %7473
      %7475 = vrot.lane.b32.xlu0 %v7020, 64
      %v7476 = vpop.permute.xlu0 %7475
      %7477 = vrot.lane.b32.xlu0 %v7021, 64
      %v7478 = vpop.permute.xlu0 %7477
      %7479 = vrot.lane.b32.xlu0 %v7022, 64
      %v7480 = vpop.permute.xlu0 %7479
      %7481 = vrot.lane.b32.xlu0 %v7023, 64
      %v7482 = vpop.permute.xlu0 %7481
      %7483 = vrot.lane.b32.xlu0 %v7024, 64
      %v7484 = vpop.permute.xlu0 %7483
      %7485 = vrot.lane.b32.xlu0 %v7025, 64
      %v7486 = vpop.permute.xlu0 %7485
      %7487 = vrot.lane.b32.xlu0 %v7026, 64
      %v7488 = vpop.permute.xlu0 %7487
      %7489 = vrot.lane.b32.xlu0 %v7027, 64
      %v7490 = vpop.permute.xlu0 %7489
      %7491 = vrot.lane.b32.xlu0 %v7028, 64
      %v7492 = vpop.permute.xlu0 %7491
      %7493 = vrot.lane.b32.xlu0 %v7029, 64
      %v7494 = vpop.permute.xlu0 %7493
      %7495 = vrot.lane.b32.xlu0 %v7030, 64
      %v7496 = vpop.permute.xlu0 %7495
      %7497 = vrot.lane.b32.xlu0 %v7031, 64
      %v7498 = vpop.permute.xlu0 %7497
      %7499 = vrot.lane.b32.xlu0 %v7032, 64
      %v7500 = vpop.permute.xlu0 %7499
      %7501 = vrot.lane.b32.xlu0 %v7033, 64
      %v7502 = vpop.permute.xlu0 %7501
      %7503 = vrot.lane.b32.xlu0 %v7034, 64
      %v7504 = vpop.permute.xlu0 %7503
      %7505 = vrot.lane.b32.xlu0 %v7035, 64
      %v7506 = vpop.permute.xlu0 %7505
      %7579 = vrot.lane.b32.xlu0 %v7039, 64
      %v7580 = vpop.permute.xlu0 %7579
      %7581 = vrot.lane.b32.xlu0 %v7040, 64
      %v7582 = vpop.permute.xlu0 %7581
      %7583 = vrot.lane.b32.xlu0 %v7041, 64
      %v7584 = vpop.permute.xlu0 %7583
      %7585 = vrot.lane.b32.xlu0 %v7042, 64
      %v7586 = vpop.permute.xlu0 %7585
      %7587 = vrot.lane.b32.xlu0 %v7043, 64
      %v7588 = vpop.permute.xlu0 %7587
      %7589 = vrot.lane.b32.xlu0 %v7044, 64
      %v7590 = vpop.permute.xlu0 %7589
      %7591 = vrot.lane.b32.xlu0 %v7045, 64
      %v7592 = vpop.permute.xlu0 %7591
      %7593 = vrot.lane.b32.xlu0 %v7046, 64
      %v7594 = vpop.permute.xlu0 %7593
      %7595 = vrot.lane.b32.xlu0 %v7047, 64
      %v7596 = vpop.permute.xlu0 %7595
      %7597 = vrot.lane.b32.xlu0 %v7048, 64
      %v7598 = vpop.permute.xlu0 %7597
      %7599 = vrot.lane.b32.xlu0 %v7049, 64
      %v7600 = vpop.permute.xlu0 %7599
      %7601 = vrot.lane.b32.xlu0 %v7050, 64
      %v7602 = vpop.permute.xlu0 %7601
      %7603 = vrot.lane.b32.xlu0 %v7051, 64
      %v7604 = vpop.permute.xlu0 %7603
      %7605 = vrot.lane.b32.xlu0 %v7052, 64
      %v7606 = vpop.permute.xlu0 %7605
      %7607 = vrot.lane.b32.xlu0 %v7053, 64
      %v7608 = vpop.permute.xlu0 %7607
      %7609 = vrot.lane.b32.xlu0 %v7054, 64
      %v7610 = vpop.permute.xlu0 %7609
      %7611 = vrot.lane.b32.xlu0 %v7055, 64
      %v7612 = vpop.permute.xlu0 %7611
      %7613 = vrot.lane.b32.xlu0 %v7056, 64
      %v7614 = vpop.permute.xlu0 %7613
      %7615 = vrot.lane.b32.xlu0 %v7057, 64
      %v7616 = vpop.permute.xlu0 %7615
      %7617 = vrot.lane.b32.xlu0 %v7058, 64
      %v7618 = vpop.permute.xlu0 %7617
      %7619 = vrot.lane.b32.xlu0 %v7059, 64
      %v7620 = vpop.permute.xlu0 %7619
      %7621 = vrot.lane.b32.xlu0 %v7060, 64
      %v7622 = vpop.permute.xlu0 %7621
      %7623 = vrot.lane.b32.xlu0 %v7061, 64
      %v7624 = vpop.permute.xlu0 %7623
      %7625 = vrot.lane.b32.xlu0 %v7062, 64
      %v7626 = vpop.permute.xlu0 %7625
      %7627 = vrot.lane.b32.xlu0 %v7063, 64
      %v7628 = vpop.permute.xlu0 %7627
      %7629 = vrot.lane.b32.xlu0 %v7064, 64
      %v7630 = vpop.permute.xlu0 %7629
      %7631 = vrot.lane.b32.xlu0 %v7065, 64
      %v7632 = vpop.permute.xlu0 %7631
      %7633 = vrot.lane.b32.xlu0 %v7066, 64
      %v7634 = vpop.permute.xlu0 %7633
      %7635 = vrot.lane.b32.xlu0 %v7067, 64
      %v7636 = vpop.permute.xlu0 %7635
      %7637 = vrot.lane.b32.xlu0 %v7068, 64
      %v7638 = vpop.permute.xlu0 %7637
      %7639 = vrot.lane.b32.xlu0 %v7069, 64
      %v7640 = vpop.permute.xlu0 %7639
      %7641 = vrot.lane.b32.xlu0 %v7070, 64
      %v7642 = vpop.permute.xlu0 %7641
      %7643 = vrot.lane.b32.xlu0 %v7071, 64
      %v7644 = vpop.permute.xlu0 %7643
      %7645 = vrot.lane.b32.xlu0 %v7072, 64
      %v7646 = vpop.permute.xlu0 %7645
      %7647 = vrot.lane.b32.xlu0 %v7073, 64
      %v7648 = vpop.permute.xlu0 %7647
      %7649 = vrot.lane.b32.xlu0 %v7074, 64
      %v7650 = vpop.permute.xlu0 %7649
      %v7687 = vsel %vm308, %v6853, %v7148
      %v7688 = vsel %vm308, %v6854, %v7150
      %v7689 = vsel %vm308, %v6855, %v7152
      %v7690 = vsel %vm308, %v6856, %v7154
      %v7691 = vsel %vm308, %v6857, %v7156
      %v7692 = vsel %vm308, %v6858, %v7158
      %v7693 = vsel %vm308, %v6859, %v7160
      %v7694 = vsel %vm308, %v6860, %v7162
      %v7695 = vsel %vm308, %v6861, %v7164
      %v7696 = vsel %vm308, %v6862, %v7166
      %v7697 = vsel %vm308, %v6863, %v7168
      %v7698 = vsel %vm308, %v6864, %v7170
      %v7699 = vsel %vm308, %v6865, %v7172
      %v7700 = vsel %vm308, %v6866, %v7174
      %v7701 = vsel %vm308, %v6867, %v7176
      %v7702 = vsel %vm308, %v6868, %v7178
      %v7703 = vsel %vm308, %v6869, %v7180
      %v7704 = vsel %vm308, %v6870, %v7182
      %v7705 = vsel %vm308, %v6871, %v7184
      %v7706 = vsel %vm308, %v6872, %v7186
      %v7707 = vsel %vm308, %v6873, %v7188
      %v7708 = vsel %vm308, %v6874, %v7190
      %v7709 = vsel %vm308, %v6875, %v7192
      %v7710 = vsel %vm308, %v6876, %v7194
      %v7711 = vsel %vm308, %v6877, %v7196
      %v7712 = vsel %vm308, %v6878, %v7198
      %v7713 = vsel %vm308, %v6879, %v7200
      %v7714 = vsel %vm308, %v6880, %v7202
      %v7715 = vsel %vm308, %v6881, %v7204
      %v7716 = vsel %vm308, %v6882, %v7206
      %v7717 = vsel %vm308, %v6883, %v7208
      %v7718 = vsel %vm308, %v6884, %v7210
      %v7719 = vsel %vm308, %v6885, %v7212
      %v7720 = vsel %vm308, %v6886, %v7214
      %v7721 = vsel %vm308, %v6887, %v7216
      %v7722 = vsel %vm308, %v6888, %v7218
      %v7723 = vsel %vm308, %v6925, %v7292
      %v7724 = vsel %vm308, %v6926, %v7294
      %v7725 = vsel %vm308, %v6927, %v7296
      %v7726 = vsel %vm308, %v6928, %v7298
      %v7727 = vsel %vm308, %v6929, %v7300
      %v7728 = vsel %vm308, %v6930, %v7302
      %v7729 = vsel %vm308, %v6931, %v7304
      %v7730 = vsel %vm308, %v6932, %v7306
      %v7731 = vsel %vm308, %v6933, %v7308
      %v7732 = vsel %vm308, %v6934, %v7310
      %v7733 = vsel %vm308, %v6935, %v7312
      %v7734 = vsel %vm308, %v6936, %v7314
      %v7735 = vsel %vm308, %v6937, %v7316
      %v7736 = vsel %vm308, %v6938, %v7318
      %v7737 = vsel %vm308, %v6939, %v7320
      %v7738 = vsel %vm308, %v6940, %v7322
      %v7739 = vsel %vm308, %v6941, %v7324
      %v7740 = vsel %vm308, %v6942, %v7326
      %v7741 = vsel %vm308, %v6943, %v7328
      %v7742 = vsel %vm308, %v6944, %v7330
      %v7743 = vsel %vm308, %v6945, %v7332
      %v7744 = vsel %vm308, %v6946, %v7334
      %v7745 = vsel %vm308, %v6947, %v7336
      %v7746 = vsel %vm308, %v6948, %v7338
      %v7747 = vsel %vm308, %v6949, %v7340
      %v7748 = vsel %vm308, %v6950, %v7342
      %v7749 = vsel %vm308, %v6951, %v7344
      %v7750 = vsel %vm308, %v6952, %v7346
      %v7751 = vsel %vm308, %v6953, %v7348
      %v7752 = vsel %vm308, %v6954, %v7350
      %v7753 = vsel %vm308, %v6955, %v7352
      %v7754 = vsel %vm308, %v6956, %v7354
      %v7755 = vsel %vm308, %v6957, %v7356
      %v7756 = vsel %vm308, %v6958, %v7358
      %v7757 = vsel %vm308, %v6959, %v7360
      %v7758 = vsel %vm308, %v6960, %v7362
      %v7759 = vsel %vm308, %v6964, %v7436
      %v7760 = vsel %vm308, %v6965, %v7438
      %v7761 = vsel %vm308, %v6966, %v7440
      %v7762 = vsel %vm308, %v6967, %v7442
      %v7763 = vsel %vm308, %v6968, %v7444
      %v7764 = vsel %vm308, %v6969, %v7446
      %v7765 = vsel %vm308, %v6970, %v7448
      %v7766 = vsel %vm308, %v6971, %v7450
      %v7767 = vsel %vm308, %v6972, %v7452
      %v7768 = vsel %vm308, %v6973, %v7454
      %v7769 = vsel %vm308, %v6974, %v7456
      %v7770 = vsel %vm308, %v6975, %v7458
      %v7771 = vsel %vm308, %v6976, %v7460
      %v7772 = vsel %vm308, %v6977, %v7462
      %v7773 = vsel %vm308, %v6978, %v7464
      %v7774 = vsel %vm308, %v6979, %v7466
      %v7775 = vsel %vm308, %v6980, %v7468
      %v7776 = vsel %vm308, %v6981, %v7470
      %v7777 = vsel %vm308, %v6982, %v7472
      %v7778 = vsel %vm308, %v6983, %v7474
      %v7779 = vsel %vm308, %v6984, %v7476
      %v7780 = vsel %vm308, %v6985, %v7478
      %v7781 = vsel %vm308, %v6986, %v7480
      %v7782 = vsel %vm308, %v6987, %v7482
      %v7783 = vsel %vm308, %v6988, %v7484
      %v7784 = vsel %vm308, %v6989, %v7486
      %v7785 = vsel %vm308, %v6990, %v7488
      %v7786 = vsel %vm308, %v6991, %v7490
      %v7787 = vsel %vm308, %v6992, %v7492
      %v7788 = vsel %vm308, %v6993, %v7494
      %v7789 = vsel %vm308, %v6994, %v7496
      %v7790 = vsel %vm308, %v6995, %v7498
      %v7791 = vsel %vm308, %v6996, %v7500
      %v7792 = vsel %vm308, %v6997, %v7502
      %v7793 = vsel %vm308, %v6998, %v7504
      %v7794 = vsel %vm308, %v6999, %v7506
      %v7795 = vsel %vm308, %v7002, %v7580
      %v7796 = vsel %vm308, %v7003, %v7582
      %v7797 = vsel %vm308, %v7004, %v7584
      %v7798 = vsel %vm308, %v7005, %v7586
      %v7799 = vsel %vm308, %v7006, %v7588
      %v7800 = vsel %vm308, %v7007, %v7590
      %v7801 = vsel %vm308, %v7008, %v7592
      %v7802 = vsel %vm308, %v7009, %v7594
      %v7803 = vsel %vm308, %v7010, %v7596
      %v7804 = vsel %vm308, %v7011, %v7598
      %v7805 = vsel %vm308, %v7012, %v7600
      %v7806 = vsel %vm308, %v7013, %v7602
      %v7807 = vsel %vm308, %v7014, %v7604
      %v7808 = vsel %vm308, %v7015, %v7606
      %v7809 = vsel %vm308, %v7016, %v7608
      %v7810 = vsel %vm308, %v7017, %v7610
      %v7811 = vsel %vm308, %v7018, %v7612
      %v7812 = vsel %vm308, %v7019, %v7614
      %v7813 = vsel %vm308, %v7020, %v7616
      %v7814 = vsel %vm308, %v7021, %v7618
      %v7815 = vsel %vm308, %v7022, %v7620
      %v7816 = vsel %vm308, %v7023, %v7622
      %v7817 = vsel %vm308, %v7024, %v7624
      %v7818 = vsel %vm308, %v7025, %v7626
      %v7819 = vsel %vm308, %v7026, %v7628
      %v7820 = vsel %vm308, %v7027, %v7630
      %v7821 = vsel %vm308, %v7028, %v7632
      %v7822 = vsel %vm308, %v7029, %v7634
      %v7823 = vsel %vm308, %v7030, %v7636
      %v7824 = vsel %vm308, %v7031, %v7638
      %v7825 = vsel %vm308, %v7032, %v7640
      %v7826 = vsel %vm308, %v7033, %v7642
      %v7827 = vsel %vm308, %v7034, %v7644
      %v7828 = vsel %vm308, %v7036, %v7646
      %v7829 = vsel %vm308, %v7037, %v7648
      %v7830 = vsel %vm308, %v7038, %v7650
      %v7831 = vpack.c.bf16 %v7688, %v7687
      %v7832 = vpack.c.bf16 %v7724, %v7723
      %v7833 = vpack.c.bf16 %v7760, %v7759
      %v7834 = vpack.c.bf16 %v7796, %v7795
      %v7835 = vpack.c.bf16 %v7076, %v7075
      %v7836 = vpack.c.bf16 %v7690, %v7689
      %v7837 = vpack.c.bf16 %v7726, %v7725
      %v7838 = vpack.c.bf16 %v7762, %v7761
      %v7839 = vpack.c.bf16 %v7798, %v7797
      %v7840 = vpack.c.bf16 %v7078, %v7077
      %v7841 = vpack.c.bf16 %v7692, %v7691
      %v7842 = vpack.c.bf16 %v7728, %v7727
      %v7843 = vpack.c.bf16 %v7764, %v7763
      %v7844 = vpack.c.bf16 %v7800, %v7799
      %v7845 = vpack.c.bf16 %v7080, %v7079
      %v7846 = vpack.c.bf16 %v7694, %v7693
      %v7847 = vpack.c.bf16 %v7730, %v7729
      %v7848 = vpack.c.bf16 %v7766, %v7765
      %v7849 = vpack.c.bf16 %v7802, %v7801
      %v7850 = vpack.c.bf16 %v7082, %v7081
      %v7851 = vpack.c.bf16 %v7696, %v7695
      %v7852 = vpack.c.bf16 %v7732, %v7731
      %v7853 = vpack.c.bf16 %v7768, %v7767
      %v7854 = vpack.c.bf16 %v7804, %v7803
      %v7855 = vpack.c.bf16 %v7084, %v7083
      %v7856 = vpack.c.bf16 %v7698, %v7697
      %v7857 = vpack.c.bf16 %v7734, %v7733
      %v7858 = vpack.c.bf16 %v7770, %v7769
      %v7859 = vpack.c.bf16 %v7806, %v7805
      %v7860 = vpack.c.bf16 %v7086, %v7085
      %v7861 = vpack.c.bf16 %v7700, %v7699
      %v7862 = vpack.c.bf16 %v7736, %v7735
      %v7863 = vpack.c.bf16 %v7772, %v7771
      %v7864 = vpack.c.bf16 %v7808, %v7807
      %v7865 = vpack.c.bf16 %v7088, %v7087
      %v7866 = vpack.c.bf16 %v7702, %v7701
      %v7867 = vpack.c.bf16 %v7738, %v7737
      %v7868 = vpack.c.bf16 %v7774, %v7773
      %v7869 = vpack.c.bf16 %v7810, %v7809
      %v7870 = vpack.c.bf16 %v7090, %v7089
      %v7871 = vpack.c.bf16 %v7704, %v7703
      %v7872 = vpack.c.bf16 %v7740, %v7739
      %v7873 = vpack.c.bf16 %v7776, %v7775
      %v7874 = vpack.c.bf16 %v7812, %v7811
      %v7875 = vpack.c.bf16 %v7092, %v7091
      %v7876 = vpack.c.bf16 %v7706, %v7705
      %v7877 = vpack.c.bf16 %v7742, %v7741
      %v7878 = vpack.c.bf16 %v7778, %v7777
      %v7879 = vpack.c.bf16 %v7814, %v7813
      %v7880 = vpack.c.bf16 %v7094, %v7093
      %v7881 = vpack.c.bf16 %v7708, %v7707
      %v7882 = vpack.c.bf16 %v7744, %v7743
      %v7883 = vpack.c.bf16 %v7780, %v7779
      %v7884 = vpack.c.bf16 %v7816, %v7815
      %v7885 = vpack.c.bf16 %v7096, %v7095
      %v7886 = vpack.c.bf16 %v7710, %v7709
      %v7887 = vpack.c.bf16 %v7746, %v7745
      %v7888 = vpack.c.bf16 %v7782, %v7781
      %v7889 = vpack.c.bf16 %v7818, %v7817
      %v7890 = vpack.c.bf16 %v7098, %v7097
      %v7891 = vpack.c.bf16 %v7712, %v7711
      %v7892 = vpack.c.bf16 %v7748, %v7747
      %v7893 = vpack.c.bf16 %v7784, %v7783
      %v7894 = vpack.c.bf16 %v7820, %v7819
      %v7895 = vpack.c.bf16 %v7100, %v7099
      %v7896 = vpack.c.bf16 %v7714, %v7713
      %v7897 = vpack.c.bf16 %v7750, %v7749
      %v7898 = vpack.c.bf16 %v7786, %v7785
      %v7899 = vpack.c.bf16 %v7822, %v7821
      %v7900 = vpack.c.bf16 %v7102, %v7101
      %v7901 = vpack.c.bf16 %v7716, %v7715
      %v7902 = vpack.c.bf16 %v7752, %v7751
      %v7903 = vpack.c.bf16 %v7788, %v7787
      %v7904 = vpack.c.bf16 %v7824, %v7823
      %v7905 = vpack.c.bf16 %v7104, %v7103
      %v7906 = vpack.c.bf16 %v7718, %v7717
      %v7907 = vpack.c.bf16 %v7754, %v7753
      %v7908 = vpack.c.bf16 %v7790, %v7789
      %v7909 = vpack.c.bf16 %v7826, %v7825
      %v7910 = vpack.c.bf16 %v7106, %v7105
      %v7911 = vpack.c.bf16 %v7720, %v7719
      %v7912 = vpack.c.bf16 %v7756, %v7755
      %v7913 = vpack.c.bf16 %v7792, %v7791
      %v7914 = vpack.c.bf16 %v7828, %v7827
      %v7915 = vpack.c.bf16 %v7108, %v7107
      %v7916 = vpack.c.bf16 %v7722, %v7721
      %v7917 = vpack.c.bf16 %v7758, %v7757
      %v7918 = vpack.c.bf16 %v7794, %v7793
      %v7919 = vpack.c.bf16 %v7830, %v7829
      %v7920 = vpack.c.bf16 %v7110, %v7109
      %s7921 = scalar_lea.vmem %s2, 864
      %v7922 = vld [vmem:[%s7921] sm:$0xf]
      %v7923 = vld [vmem:[%s7921 + $0x4] sm:$0xf]
      %v7924 = vld [vmem:[%s7921 + $0x8] sm:$0xf]
      %v7925 = vld [vmem:[%s7921 + $0xc] sm:$0xf]
      %v7926 = vld [vmem:[%s7921 + $0x10] sm:$0xf]
      %v7927 = vld [vmem:[%s7921 + $0x14] sm:$0xf]
      %v7928 = vld [vmem:[%s7921 + $0x18] sm:$0xf]
      %v7929 = vld [vmem:[%s7921 + $0x1c] sm:$0xf]
      %v7930 = vld [vmem:[%s7921 + $0x20] sm:$0xf]
      %v7931 = vld [vmem:[%s7921 + $0x24] sm:$0xf]
      %v7932 = vld [vmem:[%s7921 + $0x28] sm:$0xf]
      %v7933 = vld [vmem:[%s7921 + $0x2c] sm:$0xf]
      %v7934 = vld [vmem:[%s7921 + $0x30] sm:$0xf]
      %v7935 = vld [vmem:[%s7921 + $0x34] sm:$0xf]
      %v7936 = vld [vmem:[%s7921 + $0x38] sm:$0xf]
      %v7937 = vld [vmem:[%s7921 + $0x3c] sm:$0xf]
      %v7938 = vld [vmem:[%s7921 + $0x40] sm:$0xf]
      %v7939 = vld [vmem:[%s7921 + $0x44] sm:$0xf]
      %v7940 = vld [vmem:[%s7921 + $0x48] sm:$0xf]
      %v7941 = vld [vmem:[%s7921 + $0x4c] sm:$0xf]
      %v7942 = vld [vmem:[%s7921 + $0x50] sm:$0xf]
      %v7943 = vld [vmem:[%s7921 + $0x54] sm:$0xf]
      %v7944 = vld [vmem:[%s7921 + $0x58] sm:$0xf]
      %v7945 = vld [vmem:[%s7921 + $0x5c] sm:$0xf]
      %v7946 = vld [vmem:[%s7921 + $0x60] sm:$0xf]
      %v7947 = vld [vmem:[%s7921 + $0x64] sm:$0xf]
      %v7948 = vld [vmem:[%s7921 + $0x68] sm:$0xf]
      %v7949 = vld [vmem:[%s7921 + $0x6c] sm:$0xf]
      %v7950 = vld [vmem:[%s7921 + $0x70] sm:$0xf]
      %v7951 = vld [vmem:[%s7921 + $0x74] sm:$0xf]
      %v7952 = vld [vmem:[%s7921 + $0x78] sm:$0xf]
      %v7953 = vld [vmem:[%s7921 + $0x7c] sm:$0xf]
      %v7954 = vld [vmem:[%s7921 + $0x80] sm:$0xf]
      %v7955 = vld [vmem:[%s7921 + $0x84] sm:$0xf]
      %v7956 = vld [vmem:[%s7921 + $0x88] sm:$0xf]
      %v7957 = vld [vmem:[%s7921 + $0x8c] sm:$0xf]
      %v7958 = vld [vmem:[%s7921 + $0x90] sm:$0xf]
      %v7959 = vld [vmem:[%s7921 + $0x94] sm:$0xf]
      %v7960 = vld [vmem:[%s7921 + $0x98] sm:$0xf]
      %v7961 = vld [vmem:[%s7921 + $0x9c] sm:$0xf]
      %v7962 = vld [vmem:[%s7921 + $0xa0] sm:$0xf]
      %v7963 = vld [vmem:[%s7921 + $0xa4] sm:$0xf]
      %v7964 = vld [vmem:[%s7921 + $0xa8] sm:$0xf]
      %v7965 = vld [vmem:[%s7921 + $0xac] sm:$0xf]
      %v7966 = vld [vmem:[%s7921 + $0xb0] sm:$0xf]
      %v7967 = vld [vmem:[%s7921 + $0xb4] sm:$0xf]
      %v7968 = vld [vmem:[%s7921 + $0xb8] sm:$0xf]
      %v7969 = vld [vmem:[%s7921 + $0xbc] sm:$0xf]
      %v7970 = vld [vmem:[%s7921 + $0xc0] sm:$0xf]
      %v7971 = vld [vmem:[%s7921 + $0xc4] sm:$0xf]
      %v7972 = vld [vmem:[%s7921 + $0xc8] sm:$0xf]
      %v7973 = vld [vmem:[%s7921 + $0xcc] sm:$0xf]
      %v7974 = vld [vmem:[%s7921 + $0xd0] sm:$0xf]
      %v7975 = vld [vmem:[%s7921 + $0xd4] sm:$0xf]
      %v7976 = vld [vmem:[%s7921 + $0xd8] sm:$0xf]
      %v7977 = vld [vmem:[%s7921 + $0xdc] sm:$0xf]
      %v7978 = vld [vmem:[%s7921 + $0xe0] sm:$0xf]
      %v7979 = vld [vmem:[%s7921 + $0xe4] sm:$0xf]
      %v7980 = vld [vmem:[%s7921 + $0xe8] sm:$0xf]
      %v7981 = vld [vmem:[%s7921 + $0xec] sm:$0xf]
      %v7982 = vld [vmem:[%s7921 + $0xf0] sm:$0xf]
      %v7983 = vld [vmem:[%s7921 + $0xf4] sm:$0xf]
      %v7984 = vld [vmem:[%s7921 + $0xf8] sm:$0xf]
      %v7985 = vld [vmem:[%s7921 + $0xfc] sm:$0xf]
      %v7986 = vld [vmem:[%s7921 + $0x100] sm:$0xf]
      %v7987 = vld [vmem:[%s7921 + $0x104] sm:$0xf]
      %v7988 = vld [vmem:[%s7921 + $0x108] sm:$0xf]
      %v7989 = vld [vmem:[%s7921 + $0x10c] sm:$0xf]
      %v7990 = vld [vmem:[%s7921 + $0x110] sm:$0xf]
      %v7991 = vld [vmem:[%s7921 + $0x114] sm:$0xf]
      %v7992 = vld [vmem:[%s7921 + $0x118] sm:$0xf]
      %v7993 = vld [vmem:[%s7921 + $0x11c] sm:$0xf]
      %v8066 = vunpack.c.l.b16 %v7922
      %v8067 = vunpack.c.l.b16 %v7923
      %v8068 = vunpack.c.l.b16 %v7924
      %v8069 = vunpack.c.l.b16 %v7925
      %v8070 = vunpack.c.l.b16 %v7926
      %v8071 = vunpack.c.l.b16 %v7927
      %v8072 = vunpack.c.l.b16 %v7928
      %v8073 = vunpack.c.l.b16 %v7929
      %v8074 = vunpack.c.l.b16 %v7930
      %v8075 = vunpack.c.l.b16 %v7931
      %v8076 = vunpack.c.l.b16 %v7932
      %v8077 = vunpack.c.l.b16 %v7933
      %v8078 = vunpack.c.l.b16 %v7934
      %v8079 = vunpack.c.l.b16 %v7935
      %v8080 = vunpack.c.l.b16 %v7936
      %v8081 = vunpack.c.l.b16 %v7937
      %v8082 = vunpack.c.l.b16 %v7938
      %v8083 = vunpack.c.l.b16 %v7939
      %v8084 = vunpack.c.l.b16 %v7940
      %v8085 = vunpack.c.l.b16 %v7941
      %v8086 = vunpack.c.l.b16 %v7942
      %v8087 = vunpack.c.l.b16 %v7943
      %v8088 = vunpack.c.l.b16 %v7944
      %v8089 = vunpack.c.l.b16 %v7945
      %v8090 = vunpack.c.l.b16 %v7946
      %v8091 = vunpack.c.l.b16 %v7947
      %v8092 = vunpack.c.l.b16 %v7948
      %v8093 = vunpack.c.l.b16 %v7949
      %v8094 = vunpack.c.l.b16 %v7950
      %v8095 = vunpack.c.l.b16 %v7951
      %v8096 = vunpack.c.l.b16 %v7952
      %v8097 = vunpack.c.l.b16 %v7953
      %v8098 = vunpack.c.l.b16 %v7954
      %v8099 = vunpack.c.l.b16 %v7955
      %v8100 = vunpack.c.l.b16 %v7956
      %v8101 = vunpack.c.l.b16 %v7957
      %v8102 = vunpack.c.l.b16 %v7958
      %v8103 = vunpack.c.l.b16 %v7959
      %v8104 = vunpack.c.l.b16 %v7960
      %v8105 = vunpack.c.l.b16 %v7961
      %v8106 = vunpack.c.l.b16 %v7962
      %v8107 = vunpack.c.l.b16 %v7963
      %v8108 = vunpack.c.l.b16 %v7964
      %v8109 = vunpack.c.l.b16 %v7965
      %v8110 = vunpack.c.l.b16 %v7966
      %v8111 = vunpack.c.l.b16 %v7967
      %v8112 = vunpack.c.l.b16 %v7968
      %v8113 = vunpack.c.l.b16 %v7969
      %v8114 = vunpack.c.l.b16 %v7970
      %v8115 = vunpack.c.l.b16 %v7971
      %v8116 = vunpack.c.l.b16 %v7972
      %v8117 = vunpack.c.l.b16 %v7973
      %v8118 = vunpack.c.l.b16 %v7974
      %v8119 = vunpack.c.l.b16 %v7975
      %v8120 = vunpack.c.l.b16 %v7976
      %v8121 = vunpack.c.l.b16 %v7977
      %v8122 = vunpack.c.l.b16 %v7978
      %v8123 = vunpack.c.l.b16 %v7979
      %v8124 = vunpack.c.l.b16 %v7980
      %v8125 = vunpack.c.l.b16 %v7981
      %v8126 = vunpack.c.l.b16 %v7982
      %v8127 = vunpack.c.l.b16 %v7983
      %v8128 = vunpack.c.l.b16 %v7984
      %v8129 = vunpack.c.l.b16 %v7985
      %v8130 = vunpack.c.l.b16 %v7986
      %v8131 = vunpack.c.l.b16 %v7987
      %v8132 = vunpack.c.l.b16 %v7988
      %v8133 = vunpack.c.l.b16 %v7989
      %v8134 = vunpack.c.l.b16 %v7990
      %v8135 = vunpack.c.l.b16 %v7991
      %v8136 = vunpack.c.l.b16 %v7992
      %v8137 = vunpack.c.l.b16 %v7993
      %v8138 = vpack.c.b16 %v8067, %v8066
      %v8139 = vpack.c.b16 %v8069, %v8068
      %v8140 = vpack.c.b16 %v8071, %v8070
      %v8141 = vpack.c.b16 %v8073, %v8072
      %v8142 = vpack.c.b16 %v8075, %v8074
      %v8143 = vpack.c.b16 %v8077, %v8076
      %v8144 = vpack.c.b16 %v8079, %v8078
      %v8145 = vpack.c.b16 %v8081, %v8080
      %v8146 = vpack.c.b16 %v8083, %v8082
      %v8147 = vpack.c.b16 %v8085, %v8084
      %v8148 = vpack.c.b16 %v8087, %v8086
      %v8149 = vpack.c.b16 %v8089, %v8088
      %v8150 = vpack.c.b16 %v8091, %v8090
      %v8151 = vpack.c.b16 %v8093, %v8092
      %v8152 = vpack.c.b16 %v8095, %v8094
      %v8153 = vpack.c.b16 %v8097, %v8096
      %v8154 = vpack.c.b16 %v8099, %v8098
      %v8155 = vpack.c.b16 %v8101, %v8100
      %v8156 = vpack.c.b16 %v8103, %v8102
      %v8157 = vpack.c.b16 %v8105, %v8104
      %v8158 = vpack.c.b16 %v8107, %v8106
      %v8159 = vpack.c.b16 %v8109, %v8108
      %v8160 = vpack.c.b16 %v8111, %v8110
      %v8161 = vpack.c.b16 %v8113, %v8112
      %v8162 = vpack.c.b16 %v8115, %v8114
      %v8163 = vpack.c.b16 %v8117, %v8116
      %v8164 = vpack.c.b16 %v8119, %v8118
      %v8165 = vpack.c.b16 %v8121, %v8120
      %v8166 = vpack.c.b16 %v8123, %v8122
      %v8167 = vpack.c.b16 %v8125, %v8124
      %v8168 = vpack.c.b16 %v8127, %v8126
      %v8169 = vpack.c.b16 %v8129, %v8128
      %v8170 = vpack.c.b16 %v8131, %v8130
      %v8171 = vpack.c.b16 %v8133, %v8132
      %v8172 = vpack.c.b16 %v8135, %v8134
      %v8173 = vpack.c.b16 %v8137, %v8136
      %v8211 = vsel %vm308, %v7835, 0
      %v8214 = vsel %vm308, %v7840, 0
      %v8217 = vsel %vm308, %v7845, 0
      %v8220 = vsel %vm308, %v7850, 0
      %v8223 = vsel %vm308, %v7855, 0
      %v8226 = vsel %vm308, %v7860, 0
      %v8229 = vsel %vm308, %v7865, 0
      %v8232 = vsel %vm308, %v7870, 0
      %v8235 = vsel %vm308, %v7875, 0
      %v8238 = vsel %vm308, %v7880, 0
      %v8241 = vsel %vm308, %v7885, 0
      %v8244 = vsel %vm308, %v7890, 0
      %v8247 = vsel %vm308, %v7895, 0
      %v8250 = vsel %vm308, %v7900, 0
      %v8253 = vsel %vm308, %v7905, 0
      %v8256 = vsel %vm308, %v7910, 0
      %v8259 = vsel %vm308, %v7915, 0
      %v8262 = vsel %vm308, %v7920, 0
      %8264 = vmatpush.bf16.msra.mxu0 %v8145
      %8265 = vmatpush.bf16.msra.mxu0 %v8144
      %8266 = vmatpush.bf16.msra.mxu0 %v8143
      %8267 = vmatpush.bf16.msra.mxu0 %v8142
      %8268 = vmatpush.bf16.msra.mxu0 %v8141
      %8269 = vmatpush.bf16.msra.mxu0 %v8140
      %8270 = vmatpush.bf16.msra.mxu0 %v8139
      %8271 = vmatpush.bf16.msra.mxu0 %v8138
      %8272 = vmatmul.bf16.gmra.mxu0 %v7831
      %v8273 = vpop.f32.mrf.mxu0
      %v8274 = vadd.f32 0.0, %v8273
      %v8275 = vpop.f32.mrf.mxu0
      %v8276 = vadd.f32 0.0, %v8275
      %8277 = vmatmul.bf16.gmra.mxu0 %v7836
      %v8278 = vpop.f32.mrf.mxu0
      %v8279 = vadd.f32 0.0, %v8278
      %v8280 = vpop.f32.mrf.mxu0
      %v8281 = vadd.f32 0.0, %v8280
      %8282 = vmatmul.bf16.gmra.mxu0 %v7841
      %v8283 = vpop.f32.mrf.mxu0
      %v8284 = vadd.f32 0.0, %v8283
      %v8285 = vpop.f32.mrf.mxu0
      %v8286 = vadd.f32 0.0, %v8285
      %8287 = vmatmul.bf16.gmra.mxu0 %v7846
      %v8288 = vpop.f32.mrf.mxu0
      %v8289 = vadd.f32 0.0, %v8288
      %v8290 = vpop.f32.mrf.mxu0
      %v8291 = vadd.f32 0.0, %v8290
      %8292 = vmatmul.bf16.gmra.mxu0 %v7851
      %v8293 = vpop.f32.mrf.mxu0
      %v8294 = vadd.f32 0.0, %v8293
      %v8295 = vpop.f32.mrf.mxu0
      %v8296 = vadd.f32 0.0, %v8295
      %8297 = vmatmul.bf16.gmra.mxu0 %v7856
      %v8298 = vpop.f32.mrf.mxu0
      %v8299 = vadd.f32 0.0, %v8298
      %v8300 = vpop.f32.mrf.mxu0
      %v8301 = vadd.f32 0.0, %v8300
      %8302 = vmatmul.bf16.gmra.mxu0 %v7861
      %v8303 = vpop.f32.mrf.mxu0
      %v8304 = vadd.f32 0.0, %v8303
      %v8305 = vpop.f32.mrf.mxu0
      %v8306 = vadd.f32 0.0, %v8305
      %8307 = vmatmul.bf16.gmra.mxu0 %v7866
      %v8308 = vpop.f32.mrf.mxu0
      %v8309 = vadd.f32 0.0, %v8308
      %v8310 = vpop.f32.mrf.mxu0
      %v8311 = vadd.f32 0.0, %v8310
      %8312 = vmatmul.bf16.gmra.mxu0 %v7871
      %v8313 = vpop.f32.mrf.mxu0
      %v8314 = vadd.f32 0.0, %v8313
      %v8315 = vpop.f32.mrf.mxu0
      %v8316 = vadd.f32 0.0, %v8315
      %8317 = vmatmul.bf16.gmra.mxu0 %v7876
      %v8318 = vpop.f32.mrf.mxu0
      %v8319 = vadd.f32 0.0, %v8318
      %v8320 = vpop.f32.mrf.mxu0
      %v8321 = vadd.f32 0.0, %v8320
      %8322 = vmatmul.bf16.gmra.mxu0 %v7881
      %v8323 = vpop.f32.mrf.mxu0
      %v8324 = vadd.f32 0.0, %v8323
      %v8325 = vpop.f32.mrf.mxu0
      %v8326 = vadd.f32 0.0, %v8325
      %8327 = vmatmul.bf16.gmra.mxu0 %v7886
      %v8328 = vpop.f32.mrf.mxu0
      %v8329 = vadd.f32 0.0, %v8328
      %v8330 = vpop.f32.mrf.mxu0
      %v8331 = vadd.f32 0.0, %v8330
      %8332 = vmatmul.bf16.gmra.mxu0 %v7891
      %v8333 = vpop.f32.mrf.mxu0
      %v8334 = vadd.f32 0.0, %v8333
      %v8335 = vpop.f32.mrf.mxu0
      %v8336 = vadd.f32 0.0, %v8335
      %8337 = vmatmul.bf16.gmra.mxu0 %v7896
      %v8338 = vpop.f32.mrf.mxu0
      %v8339 = vadd.f32 0.0, %v8338
      %v8340 = vpop.f32.mrf.mxu0
      %v8341 = vadd.f32 0.0, %v8340
      %8342 = vmatmul.bf16.gmra.mxu0 %v7901
      %v8343 = vpop.f32.mrf.mxu0
      %v8344 = vadd.f32 0.0, %v8343
      %v8345 = vpop.f32.mrf.mxu0
      %v8346 = vadd.f32 0.0, %v8345
      %8347 = vmatmul.bf16.gmra.mxu0 %v7906
      %v8348 = vpop.f32.mrf.mxu0
      %v8349 = vadd.f32 0.0, %v8348
      %v8350 = vpop.f32.mrf.mxu0
      %v8351 = vadd.f32 0.0, %v8350
      %8352 = vmatmul.bf16.gmra.mxu0 %v7911
      %v8353 = vpop.f32.mrf.mxu0
      %v8354 = vadd.f32 0.0, %v8353
      %v8355 = vpop.f32.mrf.mxu0
      %v8356 = vadd.f32 0.0, %v8355
      %8357 = vmatmul.bf16.gmra.mxu0 %v7916
      %v8358 = vpop.f32.mrf.mxu0
      %v8359 = vadd.f32 0.0, %v8358
      %v8360 = vpop.f32.mrf.mxu0
      %v8361 = vadd.f32 0.0, %v8360
      %8362 = vdwg.mxu0
      %8363 = vmatpush.bf16.msra.mxu0 %v8153
      %8364 = vmatpush.bf16.msra.mxu0 %v8152
      %8365 = vmatpush.bf16.msra.mxu0 %v8151
      %8366 = vmatpush.bf16.msra.mxu0 %v8150
      %8367 = vmatpush.bf16.msra.mxu0 %v8149
      %8368 = vmatpush.bf16.msra.mxu0 %v8148
      %8369 = vmatpush.bf16.msra.mxu0 %v8147
      %8370 = vmatpush.bf16.msra.mxu0 %v8146
      %8371 = vmatmul.bf16.gmra.mxu0 %v7832
      %v8372 = vpop.f32.mrf.mxu0
      %v8373 = vadd.f32 %v8274, %v8372
      %v8374 = vpop.f32.mrf.mxu0
      %v8375 = vadd.f32 %v8276, %v8374
      %8376 = vmatmul.bf16.gmra.mxu0 %v7837
      %v8377 = vpop.f32.mrf.mxu0
      %v8378 = vadd.f32 %v8279, %v8377
      %v8379 = vpop.f32.mrf.mxu0
      %v8380 = vadd.f32 %v8281, %v8379
      %8381 = vmatmul.bf16.gmra.mxu0 %v7842
      %v8382 = vpop.f32.mrf.mxu0
      %v8383 = vadd.f32 %v8284, %v8382
      %v8384 = vpop.f32.mrf.mxu0
      %v8385 = vadd.f32 %v8286, %v8384
      %8386 = vmatmul.bf16.gmra.mxu0 %v7847
      %v8387 = vpop.f32.mrf.mxu0
      %v8388 = vadd.f32 %v8289, %v8387
      %v8389 = vpop.f32.mrf.mxu0
      %v8390 = vadd.f32 %v8291, %v8389
      %8391 = vmatmul.bf16.gmra.mxu0 %v7852
      %v8392 = vpop.f32.mrf.mxu0
      %v8393 = vadd.f32 %v8294, %v8392
      %v8394 = vpop.f32.mrf.mxu0
      %v8395 = vadd.f32 %v8296, %v8394
      %8396 = vmatmul.bf16.gmra.mxu0 %v7857
      %v8397 = vpop.f32.mrf.mxu0
      %v8398 = vadd.f32 %v8299, %v8397
      %v8399 = vpop.f32.mrf.mxu0
      %v8400 = vadd.f32 %v8301, %v8399
      %8401 = vmatmul.bf16.gmra.mxu0 %v7862
      %v8402 = vpop.f32.mrf.mxu0
      %v8403 = vadd.f32 %v8304, %v8402
      %v8404 = vpop.f32.mrf.mxu0
      %v8405 = vadd.f32 %v8306, %v8404
      %8406 = vmatmul.bf16.gmra.mxu0 %v7867
      %v8407 = vpop.f32.mrf.mxu0
      %v8408 = vadd.f32 %v8309, %v8407
      %v8409 = vpop.f32.mrf.mxu0
      %v8410 = vadd.f32 %v8311, %v8409
      %8411 = vmatmul.bf16.gmra.mxu0 %v7872
      %v8412 = vpop.f32.mrf.mxu0
      %v8413 = vadd.f32 %v8314, %v8412
      %v8414 = vpop.f32.mrf.mxu0
      %v8415 = vadd.f32 %v8316, %v8414
      %8416 = vmatmul.bf16.gmra.mxu0 %v7877
      %v8417 = vpop.f32.mrf.mxu0
      %v8418 = vadd.f32 %v8319, %v8417
      %v8419 = vpop.f32.mrf.mxu0
      %v8420 = vadd.f32 %v8321, %v8419
      %8421 = vmatmul.bf16.gmra.mxu0 %v7882
      %v8422 = vpop.f32.mrf.mxu0
      %v8423 = vadd.f32 %v8324, %v8422
      %v8424 = vpop.f32.mrf.mxu0
      %v8425 = vadd.f32 %v8326, %v8424
      %8426 = vmatmul.bf16.gmra.mxu0 %v7887
      %v8427 = vpop.f32.mrf.mxu0
      %v8428 = vadd.f32 %v8329, %v8427
      %v8429 = vpop.f32.mrf.mxu0
      %v8430 = vadd.f32 %v8331, %v8429
      %8431 = vmatmul.bf16.gmra.mxu0 %v7892
      %v8432 = vpop.f32.mrf.mxu0
      %v8433 = vadd.f32 %v8334, %v8432
      %v8434 = vpop.f32.mrf.mxu0
      %v8435 = vadd.f32 %v8336, %v8434
      %8436 = vmatmul.bf16.gmra.mxu0 %v7897
      %v8437 = vpop.f32.mrf.mxu0
      %v8438 = vadd.f32 %v8339, %v8437
      %v8439 = vpop.f32.mrf.mxu0
      %v8440 = vadd.f32 %v8341, %v8439
      %8441 = vmatmul.bf16.gmra.mxu0 %v7902
      %v8442 = vpop.f32.mrf.mxu0
      %v8443 = vadd.f32 %v8344, %v8442
      %v8444 = vpop.f32.mrf.mxu0
      %v8445 = vadd.f32 %v8346, %v8444
      %8446 = vmatmul.bf16.gmra.mxu0 %v7907
      %v8447 = vpop.f32.mrf.mxu0
      %v8448 = vadd.f32 %v8349, %v8447
      %v8449 = vpop.f32.mrf.mxu0
      %v8450 = vadd.f32 %v8351, %v8449
      %8451 = vmatmul.bf16.gmra.mxu0 %v7912
      %v8452 = vpop.f32.mrf.mxu0
      %v8453 = vadd.f32 %v8354, %v8452
      %v8454 = vpop.f32.mrf.mxu0
      %v8455 = vadd.f32 %v8356, %v8454
      %8456 = vmatmul.bf16.gmra.mxu0 %v7917
      %v8457 = vpop.f32.mrf.mxu0
      %v8458 = vadd.f32 %v8359, %v8457
      %v8459 = vpop.f32.mrf.mxu0
      %v8460 = vadd.f32 %v8361, %v8459
      %8461 = vdwg.mxu0
      %8462 = vmatpush.bf16.msra.mxu0 %v8161
      %8463 = vmatpush.bf16.msra.mxu0 %v8160
      %8464 = vmatpush.bf16.msra.mxu0 %v8159
      %8465 = vmatpush.bf16.msra.mxu0 %v8158
      %8466 = vmatpush.bf16.msra.mxu0 %v8157
      %8467 = vmatpush.bf16.msra.mxu0 %v8156
      %8468 = vmatpush.bf16.msra.mxu0 %v8155
      %8469 = vmatpush.bf16.msra.mxu0 %v8154
      %8470 = vmatmul.bf16.gmra.mxu0 %v7833
      %v8471 = vpop.f32.mrf.mxu0
      %v8472 = vadd.f32 %v8373, %v8471
      %v8473 = vpop.f32.mrf.mxu0
      %v8474 = vadd.f32 %v8375, %v8473
      %8475 = vmatmul.bf16.gmra.mxu0 %v7838
      %v8476 = vpop.f32.mrf.mxu0
      %v8477 = vadd.f32 %v8378, %v8476
      %v8478 = vpop.f32.mrf.mxu0
      %v8479 = vadd.f32 %v8380, %v8478
      %8480 = vmatmul.bf16.gmra.mxu0 %v7843
      %v8481 = vpop.f32.mrf.mxu0
      %v8482 = vadd.f32 %v8383, %v8481
      %v8483 = vpop.f32.mrf.mxu0
      %v8484 = vadd.f32 %v8385, %v8483
      %8485 = vmatmul.bf16.gmra.mxu0 %v7848
      %v8486 = vpop.f32.mrf.mxu0
      %v8487 = vadd.f32 %v8388, %v8486
      %v8488 = vpop.f32.mrf.mxu0
      %v8489 = vadd.f32 %v8390, %v8488
      %8490 = vmatmul.bf16.gmra.mxu0 %v7853
      %v8491 = vpop.f32.mrf.mxu0
      %v8492 = vadd.f32 %v8393, %v8491
      %v8493 = vpop.f32.mrf.mxu0
      %v8494 = vadd.f32 %v8395, %v8493
      %8495 = vmatmul.bf16.gmra.mxu0 %v7858
      %v8496 = vpop.f32.mrf.mxu0
      %v8497 = vadd.f32 %v8398, %v8496
      %v8498 = vpop.f32.mrf.mxu0
      %v8499 = vadd.f32 %v8400, %v8498
      %8500 = vmatmul.bf16.gmra.mxu0 %v7863
      %v8501 = vpop.f32.mrf.mxu0
      %v8502 = vadd.f32 %v8403, %v8501
      %v8503 = vpop.f32.mrf.mxu0
      %v8504 = vadd.f32 %v8405, %v8503
      %8505 = vmatmul.bf16.gmra.mxu0 %v7868
      %v8506 = vpop.f32.mrf.mxu0
      %v8507 = vadd.f32 %v8408, %v8506
      %v8508 = vpop.f32.mrf.mxu0
      %v8509 = vadd.f32 %v8410, %v8508
      %8510 = vmatmul.bf16.gmra.mxu0 %v7873
      %v8511 = vpop.f32.mrf.mxu0
      %v8512 = vadd.f32 %v8413, %v8511
      %v8513 = vpop.f32.mrf.mxu0
      %v8514 = vadd.f32 %v8415, %v8513
      %8515 = vmatmul.bf16.gmra.mxu0 %v7878
      %v8516 = vpop.f32.mrf.mxu0
      %v8517 = vadd.f32 %v8418, %v8516
      %v8518 = vpop.f32.mrf.mxu0
      %v8519 = vadd.f32 %v8420, %v8518
      %8520 = vmatmul.bf16.gmra.mxu0 %v7883
      %v8521 = vpop.f32.mrf.mxu0
      %v8522 = vadd.f32 %v8423, %v8521
      %v8523 = vpop.f32.mrf.mxu0
      %v8524 = vadd.f32 %v8425, %v8523
      %8525 = vmatmul.bf16.gmra.mxu0 %v7888
      %v8526 = vpop.f32.mrf.mxu0
      %v8527 = vadd.f32 %v8428, %v8526
      %v8528 = vpop.f32.mrf.mxu0
      %v8529 = vadd.f32 %v8430, %v8528
      %8530 = vmatmul.bf16.gmra.mxu0 %v7893
      %v8531 = vpop.f32.mrf.mxu0
      %v8532 = vadd.f32 %v8433, %v8531
      %v8533 = vpop.f32.mrf.mxu0
      %v8534 = vadd.f32 %v8435, %v8533
      %8535 = vmatmul.bf16.gmra.mxu0 %v7898
      %v8536 = vpop.f32.mrf.mxu0
      %v8537 = vadd.f32 %v8438, %v8536
      %v8538 = vpop.f32.mrf.mxu0
      %v8539 = vadd.f32 %v8440, %v8538
      %8540 = vmatmul.bf16.gmra.mxu0 %v7903
      %v8541 = vpop.f32.mrf.mxu0
      %v8542 = vadd.f32 %v8443, %v8541
      %v8543 = vpop.f32.mrf.mxu0
      %v8544 = vadd.f32 %v8445, %v8543
      %8545 = vmatmul.bf16.gmra.mxu0 %v7908
      %v8546 = vpop.f32.mrf.mxu0
      %v8547 = vadd.f32 %v8448, %v8546
      %v8548 = vpop.f32.mrf.mxu0
      %v8549 = vadd.f32 %v8450, %v8548
      %8550 = vmatmul.bf16.gmra.mxu0 %v7913
      %v8551 = vpop.f32.mrf.mxu0
      %v8552 = vadd.f32 %v8453, %v8551
      %v8553 = vpop.f32.mrf.mxu0
      %v8554 = vadd.f32 %v8455, %v8553
      %8555 = vmatmul.bf16.gmra.mxu0 %v7918
      %v8556 = vpop.f32.mrf.mxu0
      %v8557 = vadd.f32 %v8458, %v8556
      %v8558 = vpop.f32.mrf.mxu0
      %v8559 = vadd.f32 %v8460, %v8558
      %8560 = vdwg.mxu0
      %8561 = vmatpush.bf16.msra.mxu0 %v8169
      %8562 = vmatpush.bf16.msra.mxu0 %v8168
      %8563 = vmatpush.bf16.msra.mxu0 %v8167
      %8564 = vmatpush.bf16.msra.mxu0 %v8166
      %8565 = vmatpush.bf16.msra.mxu0 %v8165
      %8566 = vmatpush.bf16.msra.mxu0 %v8164
      %8567 = vmatpush.bf16.msra.mxu0 %v8163
      %8568 = vmatpush.bf16.msra.mxu0 %v8162
      %8569 = vmatmul.bf16.gmra.mxu0 %v7834
      %v8570 = vpop.f32.mrf.mxu0
      %v8571 = vadd.f32 %v8472, %v8570
      %v8572 = vpop.f32.mrf.mxu0
      %v8573 = vadd.f32 %v8474, %v8572
      %8574 = vmatmul.bf16.gmra.mxu0 %v7839
      %v8575 = vpop.f32.mrf.mxu0
      %v8576 = vadd.f32 %v8477, %v8575
      %v8577 = vpop.f32.mrf.mxu0
      %v8578 = vadd.f32 %v8479, %v8577
      %8579 = vmatmul.bf16.gmra.mxu0 %v7844
      %v8580 = vpop.f32.mrf.mxu0
      %v8581 = vadd.f32 %v8482, %v8580
      %v8582 = vpop.f32.mrf.mxu0
      %v8583 = vadd.f32 %v8484, %v8582
      %8584 = vmatmul.bf16.gmra.mxu0 %v7849
      %v8585 = vpop.f32.mrf.mxu0
      %v8586 = vadd.f32 %v8487, %v8585
      %v8587 = vpop.f32.mrf.mxu0
      %v8588 = vadd.f32 %v8489, %v8587
      %8589 = vmatmul.bf16.gmra.mxu0 %v7854
      %v8590 = vpop.f32.mrf.mxu0
      %v8591 = vadd.f32 %v8492, %v8590
      %v8592 = vpop.f32.mrf.mxu0
      %v8593 = vadd.f32 %v8494, %v8592
      %8594 = vmatmul.bf16.gmra.mxu0 %v7859
      %v8595 = vpop.f32.mrf.mxu0
      %v8596 = vadd.f32 %v8497, %v8595
      %v8597 = vpop.f32.mrf.mxu0
      %v8598 = vadd.f32 %v8499, %v8597
      %8599 = vmatmul.bf16.gmra.mxu0 %v7864
      %v8600 = vpop.f32.mrf.mxu0
      %v8601 = vadd.f32 %v8502, %v8600
      %v8602 = vpop.f32.mrf.mxu0
      %v8603 = vadd.f32 %v8504, %v8602
      %8604 = vmatmul.bf16.gmra.mxu0 %v7869
      %v8605 = vpop.f32.mrf.mxu0
      %v8606 = vadd.f32 %v8507, %v8605
      %v8607 = vpop.f32.mrf.mxu0
      %v8608 = vadd.f32 %v8509, %v8607
      %8609 = vmatmul.bf16.gmra.mxu0 %v7874
      %v8610 = vpop.f32.mrf.mxu0
      %v8611 = vadd.f32 %v8512, %v8610
      %v8612 = vpop.f32.mrf.mxu0
      %v8613 = vadd.f32 %v8514, %v8612
      %8614 = vmatmul.bf16.gmra.mxu0 %v7879
      %v8615 = vpop.f32.mrf.mxu0
      %v8616 = vadd.f32 %v8517, %v8615
      %v8617 = vpop.f32.mrf.mxu0
      %v8618 = vadd.f32 %v8519, %v8617
      %8619 = vmatmul.bf16.gmra.mxu0 %v7884
      %v8620 = vpop.f32.mrf.mxu0
      %v8621 = vadd.f32 %v8522, %v8620
      %v8622 = vpop.f32.mrf.mxu0
      %v8623 = vadd.f32 %v8524, %v8622
      %8624 = vmatmul.bf16.gmra.mxu0 %v7889
      %v8625 = vpop.f32.mrf.mxu0
      %v8626 = vadd.f32 %v8527, %v8625
      %v8627 = vpop.f32.mrf.mxu0
      %v8628 = vadd.f32 %v8529, %v8627
      %8629 = vmatmul.bf16.gmra.mxu0 %v7894
      %v8630 = vpop.f32.mrf.mxu0
      %v8631 = vadd.f32 %v8532, %v8630
      %v8632 = vpop.f32.mrf.mxu0
      %v8633 = vadd.f32 %v8534, %v8632
      %8634 = vmatmul.bf16.gmra.mxu0 %v7899
      %v8635 = vpop.f32.mrf.mxu0
      %v8636 = vadd.f32 %v8537, %v8635
      %v8637 = vpop.f32.mrf.mxu0
      %v8638 = vadd.f32 %v8539, %v8637
      %8639 = vmatmul.bf16.gmra.mxu0 %v7904
      %v8640 = vpop.f32.mrf.mxu0
      %v8641 = vadd.f32 %v8542, %v8640
      %v8642 = vpop.f32.mrf.mxu0
      %v8643 = vadd.f32 %v8544, %v8642
      %8644 = vmatmul.bf16.gmra.mxu0 %v7909
      %v8645 = vpop.f32.mrf.mxu0
      %v8646 = vadd.f32 %v8547, %v8645
      %v8647 = vpop.f32.mrf.mxu0
      %v8648 = vadd.f32 %v8549, %v8647
      %8649 = vmatmul.bf16.gmra.mxu0 %v7914
      %v8650 = vpop.f32.mrf.mxu0
      %v8651 = vadd.f32 %v8552, %v8650
      %v8652 = vpop.f32.mrf.mxu0
      %v8653 = vadd.f32 %v8554, %v8652
      %8654 = vmatmul.bf16.gmra.mxu0 %v7919
      %v8655 = vpop.f32.mrf.mxu0
      %v8656 = vadd.f32 %v8557, %v8655
      %v8657 = vpop.f32.mrf.mxu0
      %v8658 = vadd.f32 %v8559, %v8657
      %8659 = vdwg.mxu0
      %8660 = vmatpush.bf16.msra.mxu0 0
      %8661 = vmatpush.bf16.msra.mxu0 0
      %8662 = vmatpush.bf16.msra.mxu0 0
      %8663 = vmatpush.bf16.msra.mxu0 0
      %8664 = vmatpush.bf16.msra.mxu0 %v8173
      %8665 = vmatpush.bf16.msra.mxu0 %v8172
      %8666 = vmatpush.bf16.msra.mxu0 %v8171
      %8667 = vmatpush.bf16.msra.mxu0 %v8170
      %8668 = vmatmul.bf16.gmra.mxu0 %v8211
      %v8669 = vpop.f32.mrf.mxu0
      %v8670 = vadd.f32 %v8571, %v8669
      %v8671 = vpop.f32.mrf.mxu0
      %v8672 = vadd.f32 %v8573, %v8671
      %8673 = vmatmul.bf16.gmra.mxu0 %v8214
      %v8674 = vpop.f32.mrf.mxu0
      %v8675 = vadd.f32 %v8576, %v8674
      %v8676 = vpop.f32.mrf.mxu0
      %v8677 = vadd.f32 %v8578, %v8676
      %8678 = vmatmul.bf16.gmra.mxu0 %v8217
      %v8679 = vpop.f32.mrf.mxu0
      %v8680 = vadd.f32 %v8581, %v8679
      %v8681 = vpop.f32.mrf.mxu0
      %v8682 = vadd.f32 %v8583, %v8681
      %8683 = vmatmul.bf16.gmra.mxu0 %v8220
      %v8684 = vpop.f32.mrf.mxu0
      %v8685 = vadd.f32 %v8586, %v8684
      %v8686 = vpop.f32.mrf.mxu0
      %v8687 = vadd.f32 %v8588, %v8686
      %8688 = vmatmul.bf16.gmra.mxu0 %v8223
      %v8689 = vpop.f32.mrf.mxu0
      %v8690 = vadd.f32 %v8591, %v8689
      %v8691 = vpop.f32.mrf.mxu0
      %v8692 = vadd.f32 %v8593, %v8691
      %8693 = vmatmul.bf16.gmra.mxu0 %v8226
      %v8694 = vpop.f32.mrf.mxu0
      %v8695 = vadd.f32 %v8596, %v8694
      %v8696 = vpop.f32.mrf.mxu0
      %v8697 = vadd.f32 %v8598, %v8696
      %8698 = vmatmul.bf16.gmra.mxu0 %v8229
      %v8699 = vpop.f32.mrf.mxu0
      %v8700 = vadd.f32 %v8601, %v8699
      %v8701 = vpop.f32.mrf.mxu0
      %v8702 = vadd.f32 %v8603, %v8701
      %8703 = vmatmul.bf16.gmra.mxu0 %v8232
      %v8704 = vpop.f32.mrf.mxu0
      %v8705 = vadd.f32 %v8606, %v8704
      %v8706 = vpop.f32.mrf.mxu0
      %v8707 = vadd.f32 %v8608, %v8706
      %8708 = vmatmul.bf16.gmra.mxu0 %v8235
      %v8709 = vpop.f32.mrf.mxu0
      %v8710 = vadd.f32 %v8611, %v8709
      %v8711 = vpop.f32.mrf.mxu0
      %v8712 = vadd.f32 %v8613, %v8711
      %8713 = vmatmul.bf16.gmra.mxu0 %v8238
      %v8714 = vpop.f32.mrf.mxu0
      %v8715 = vadd.f32 %v8616, %v8714
      %v8716 = vpop.f32.mrf.mxu0
      %v8717 = vadd.f32 %v8618, %v8716
      %8718 = vmatmul.bf16.gmra.mxu0 %v8241
      %v8719 = vpop.f32.mrf.mxu0
      %v8720 = vadd.f32 %v8621, %v8719
      %v8721 = vpop.f32.mrf.mxu0
      %v8722 = vadd.f32 %v8623, %v8721
      %8723 = vmatmul.bf16.gmra.mxu0 %v8244
      %v8724 = vpop.f32.mrf.mxu0
      %v8725 = vadd.f32 %v8626, %v8724
      %v8726 = vpop.f32.mrf.mxu0
      %v8727 = vadd.f32 %v8628, %v8726
      %8728 = vmatmul.bf16.gmra.mxu0 %v8247
      %v8729 = vpop.f32.mrf.mxu0
      %v8730 = vadd.f32 %v8631, %v8729
      %v8731 = vpop.f32.mrf.mxu0
      %v8732 = vadd.f32 %v8633, %v8731
      %8733 = vmatmul.bf16.gmra.mxu0 %v8250
      %v8734 = vpop.f32.mrf.mxu0
      %v8735 = vadd.f32 %v8636, %v8734
      %v8736 = vpop.f32.mrf.mxu0
      %v8737 = vadd.f32 %v8638, %v8736
      %8738 = vmatmul.bf16.gmra.mxu0 %v8253
      %v8739 = vpop.f32.mrf.mxu0
      %v8740 = vadd.f32 %v8641, %v8739
      %v8741 = vpop.f32.mrf.mxu0
      %v8742 = vadd.f32 %v8643, %v8741
      %8743 = vmatmul.bf16.gmra.mxu0 %v8256
      %v8744 = vpop.f32.mrf.mxu0
      %v8745 = vadd.f32 %v8646, %v8744
      %v8746 = vpop.f32.mrf.mxu0
      %v8747 = vadd.f32 %v8648, %v8746
      %8748 = vmatmul.bf16.gmra.mxu0 %v8259
      %v8749 = vpop.f32.mrf.mxu0
      %v8750 = vadd.f32 %v8651, %v8749
      %v8751 = vpop.f32.mrf.mxu0
      %v8752 = vadd.f32 %v8653, %v8751
      %8753 = vmatmul.bf16.gmra.mxu0 %v8262
      %v8754 = vpop.f32.mrf.mxu0
      %v8755 = vadd.f32 %v8656, %v8754
      %v8756 = vpop.f32.mrf.mxu0
      %v8757 = vadd.f32 %v8658, %v8756
      %8758 = vdwg.mxu0
      %s8759 = scalar_lea.vmem %s3, 3
      %v8760 = vld [vmem:[%s8759] sm:$0x1]
      %v8762 = vperm.slane %v8760, 0
      %v8764 = vmul.f32 %v8670, %v8762
      %v8765 = vmul.f32 %v8672, %v8762
      %v8766 = vmul.f32 %v8675, %v8762
      %v8767 = vmul.f32 %v8677, %v8762
      %v8768 = vmul.f32 %v8680, %v8762
      %v8769 = vmul.f32 %v8682, %v8762
      %v8770 = vmul.f32 %v8685, %v8762
      %v8771 = vmul.f32 %v8687, %v8762
      %v8772 = vmul.f32 %v8690, %v8762
      %v8773 = vmul.f32 %v8692, %v8762
      %v8774 = vmul.f32 %v8695, %v8762
      %v8775 = vmul.f32 %v8697, %v8762
      %v8776 = vmul.f32 %v8700, %v8762
      %v8777 = vmul.f32 %v8702, %v8762
      %v8778 = vmul.f32 %v8705, %v8762
      %v8779 = vmul.f32 %v8707, %v8762
      %v8780 = vmul.f32 %v8710, %v8762
      %v8781 = vmul.f32 %v8712, %v8762
      %v8782 = vmul.f32 %v8715, %v8762
      %v8783 = vmul.f32 %v8717, %v8762
      %v8784 = vmul.f32 %v8720, %v8762
      %v8785 = vmul.f32 %v8722, %v8762
      %v8786 = vmul.f32 %v8725, %v8762
      %v8787 = vmul.f32 %v8727, %v8762
      %v8788 = vmul.f32 %v8730, %v8762
      %v8789 = vmul.f32 %v8732, %v8762
      %v8790 = vmul.f32 %v8735, %v8762
      %v8791 = vmul.f32 %v8737, %v8762
      %v8792 = vmul.f32 %v8740, %v8762
      %v8793 = vmul.f32 %v8742, %v8762
      %v8794 = vmul.f32 %v8745, %v8762
      %v8795 = vmul.f32 %v8747, %v8762
      %v8796 = vmul.f32 %v8750, %v8762
      %v8797 = vmul.f32 %v8752, %v8762
      %v8798 = vmul.f32 %v8755, %v8762
      %v8799 = vmul.f32 %v8757, %v8762
      %s8800 = scalar_lea.vmem %s4, 3
      %v8801 = vld [vmem:[%s8800] sm:$0x1]
      %v8803 = vperm.slane %v8801, 0
      %v8805 = vadd.f32 %v8764, %v8803
      %v8806 = vadd.f32 %v8765, %v8803
      %v8807 = vadd.f32 %v8766, %v8803
      %v8808 = vadd.f32 %v8767, %v8803
      %v8809 = vadd.f32 %v8768, %v8803
      %v8810 = vadd.f32 %v8769, %v8803
      %v8811 = vadd.f32 %v8770, %v8803
      %v8812 = vadd.f32 %v8771, %v8803
      %v8813 = vadd.f32 %v8772, %v8803
      %v8814 = vadd.f32 %v8773, %v8803
      %v8815 = vadd.f32 %v8774, %v8803
      %v8816 = vadd.f32 %v8775, %v8803
      %v8817 = vadd.f32 %v8776, %v8803
      %v8818 = vadd.f32 %v8777, %v8803
      %v8819 = vadd.f32 %v8778, %v8803
      %v8820 = vadd.f32 %v8779, %v8803
      %v8821 = vadd.f32 %v8780, %v8803
      %v8822 = vadd.f32 %v8781, %v8803
      %v8823 = vadd.f32 %v8782, %v8803
      %v8824 = vadd.f32 %v8783, %v8803
      %v8825 = vadd.f32 %v8784, %v8803
      %v8826 = vadd.f32 %v8785, %v8803
      %v8827 = vadd.f32 %v8786, %v8803
      %v8828 = vadd.f32 %v8787, %v8803
      %v8829 = vadd.f32 %v8788, %v8803
      %v8830 = vadd.f32 %v8789, %v8803
      %v8831 = vadd.f32 %v8790, %v8803
      %v8832 = vadd.f32 %v8791, %v8803
      %v8833 = vadd.f32 %v8792, %v8803
      %v8834 = vadd.f32 %v8793, %v8803
      %v8835 = vadd.f32 %v8794, %v8803
      %v8836 = vadd.f32 %v8795, %v8803
      %v8837 = vadd.f32 %v8796, %v8803
      %v8838 = vadd.f32 %v8797, %v8803
      %v8839 = vadd.f32 %v8798, %v8803
      %v8840 = vadd.f32 %v8799, %v8803
      %v8841 = vmax.f32 %v8805, 0.0
      %v8842 = vmax.f32 %v8806, 0.0
      %v8843 = vmax.f32 %v8807, 0.0
      %v8844 = vmax.f32 %v8808, 0.0
      %v8845 = vmax.f32 %v8809, 0.0
      %v8846 = vmax.f32 %v8810, 0.0
      %v8847 = vmax.f32 %v8811, 0.0
      %v8848 = vmax.f32 %v8812, 0.0
      %v8849 = vmax.f32 %v8813, 0.0
      %v8850 = vmax.f32 %v8814, 0.0
      %v8851 = vmax.f32 %v8815, 0.0
      %v8852 = vmax.f32 %v8816, 0.0
      %v8853 = vmax.f32 %v8817, 0.0
      %v8854 = vmax.f32 %v8818, 0.0
      %v8855 = vmax.f32 %v8819, 0.0
      %v8856 = vmax.f32 %v8820, 0.0
      %v8857 = vmax.f32 %v8821, 0.0
      %v8858 = vmax.f32 %v8822, 0.0
      %v8859 = vmax.f32 %v8823, 0.0
      %v8860 = vmax.f32 %v8824, 0.0
      %v8861 = vmax.f32 %v8825, 0.0
      %v8862 = vmax.f32 %v8826, 0.0
      %v8863 = vmax.f32 %v8827, 0.0
      %v8864 = vmax.f32 %v8828, 0.0
      %v8865 = vmax.f32 %v8829, 0.0
      %v8866 = vmax.f32 %v8830, 0.0
      %v8867 = vmax.f32 %v8831, 0.0
      %v8868 = vmax.f32 %v8832, 0.0
      %v8869 = vmax.f32 %v8833, 0.0
      %v8870 = vmax.f32 %v8834, 0.0
      %v8871 = vmax.f32 %v8835, 0.0
      %v8872 = vmax.f32 %v8836, 0.0
      %v8873 = vmax.f32 %v8837, 0.0
      %v8874 = vmax.f32 %v8838, 0.0
      %v8875 = vmax.f32 %v8839, 0.0
      %v8876 = vmax.f32 %v8840, 0.0
      %v8877 = vmul.f32 %v8841, %v2411
      %v8878 = vmul.f32 %v8842, %v2416
      %v8879 = vmul.f32 %v8843, %v2421
      %v8880 = vmul.f32 %v8844, %v2426
      %v8881 = vmul.f32 %v8845, %v2431
      %v8882 = vmul.f32 %v8846, %v2436
      %v8883 = vmul.f32 %v8847, %v2441
      %v8884 = vmul.f32 %v8848, %v2446
      %v8885 = vmul.f32 %v8849, %v2451
      %v8886 = vmul.f32 %v8850, %v2456
      %v8887 = vmul.f32 %v8851, %v2461
      %v8888 = vmul.f32 %v8852, %v2466
      %v8889 = vmul.f32 %v8853, %v2471
      %v8890 = vmul.f32 %v8854, %v2476
      %v8891 = vmul.f32 %v8855, %v2481
      %v8892 = vmul.f32 %v8856, %v2486
      %v8893 = vmul.f32 %v8857, %v2491
      %v8894 = vmul.f32 %v8858, %v2496
      %v8895 = vmul.f32 %v8859, %v2501
      %v8896 = vmul.f32 %v8860, %v2506
      %v8897 = vmul.f32 %v8861, %v2511
      %v8898 = vmul.f32 %v8862, %v2516
      %v8899 = vmul.f32 %v8863, %v2521
      %v8900 = vmul.f32 %v8864, %v2526
      %v8901 = vmul.f32 %v8865, %v2531
      %v8902 = vmul.f32 %v8866, %v2536
      %v8903 = vmul.f32 %v8867, %v2541
      %v8904 = vmul.f32 %v8868, %v2546
      %v8905 = vmul.f32 %v8869, %v2551
      %v8906 = vmul.f32 %v8870, %v2556
      %v8907 = vmul.f32 %v8871, %v2561
      %v8908 = vmul.f32 %v8872, %v2566
      %v8909 = vmul.f32 %v8873, %v2571
      %v8910 = vmul.f32 %v8874, %v2576
      %v8911 = vmul.f32 %v8875, %v2581
      %v8912 = vmul.f32 %v8876, %v2586
      %8913 = vst.msk [vmem:[#allocation2 + $0x13] sm:$0xff] %vm308, %v8877
      %8914 = vst.msk [vmem:[#allocation2 + $0x1b] sm:$0xff] %vm308, %v8878
      %8915 = vst.msk [vmem:[#allocation2 + $0x23] sm:$0xff] %vm308, %v8879
      %8916 = vst.msk [vmem:[#allocation2 + $0x2b] sm:$0xff] %vm308, %v8880
      %8917 = vst.msk [vmem:[#allocation2 + $0x33] sm:$0xff] %vm308, %v8881
      %8918 = vst.msk [vmem:[#allocation2 + $0x3b] sm:$0xff] %vm308, %v8882
      %8919 = vst.msk [vmem:[#allocation2 + $0x43] sm:$0xff] %vm308, %v8883
      %8920 = vst.msk [vmem:[#allocation2 + $0x4b] sm:$0xff] %vm308, %v8884
      %8921 = vst.msk [vmem:[#allocation2 + $0x53] sm:$0xff] %vm308, %v8885
      %8922 = vst.msk [vmem:[#allocation2 + $0x5b] sm:$0xff] %vm308, %v8886
      %8923 = vst.msk [vmem:[#allocation2 + $0x63] sm:$0xff] %vm308, %v8887
      %8924 = vst.msk [vmem:[#allocation2 + $0x6b] sm:$0xff] %vm308, %v8888
      %8925 = vst.msk [vmem:[#allocation2 + $0x73] sm:$0xff] %vm308, %v8889
      %8926 = vst.msk [vmem:[#allocation2 + $0x7b] sm:$0xff] %vm308, %v8890
      %8927 = vst.msk [vmem:[#allocation2 + $0x83] sm:$0xff] %vm308, %v8891
      %8928 = vst.msk [vmem:[#allocation2 + $0x8b] sm:$0xff] %vm308, %v8892
      %8929 = vst.msk [vmem:[#allocation2 + $0x93] sm:$0xff] %vm308, %v8893
      %8930 = vst.msk [vmem:[#allocation2 + $0x9b] sm:$0xff] %vm308, %v8894
      %8931 = vst.msk [vmem:[#allocation2 + $0xa3] sm:$0xff] %vm308, %v8895
      %8932 = vst.msk [vmem:[#allocation2 + $0xab] sm:$0xff] %vm308, %v8896
      %8933 = vst.msk [vmem:[#allocation2 + $0xb3] sm:$0xff] %vm308, %v8897
      %8934 = vst.msk [vmem:[#allocation2 + $0xbb] sm:$0xff] %vm308, %v8898
      %8935 = vst.msk [vmem:[#allocation2 + $0xc3] sm:$0xff] %vm308, %v8899
      %8936 = vst.msk [vmem:[#allocation2 + $0xcb] sm:$0xff] %vm308, %v8900
      %8937 = vst.msk [vmem:[#allocation2 + $0xd3] sm:$0xff] %vm308, %v8901
      %8938 = vst.msk [vmem:[#allocation2 + $0xdb] sm:$0xff] %vm308, %v8902
      %8939 = vst.msk [vmem:[#allocation2 + $0xe3] sm:$0xff] %vm308, %v8903
      %8940 = vst.msk [vmem:[#allocation2 + $0xeb] sm:$0xff] %vm308, %v8904
      %8941 = vst.msk [vmem:[#allocation2 + $0xf3] sm:$0xff] %vm308, %v8905
      %8942 = vst.msk [vmem:[#allocation2 + $0xfb] sm:$0xff] %vm308, %v8906
      %8943 = vst.msk [vmem:[#allocation2 + $0x103] sm:$0xff] %vm308, %v8907
      %8944 = vst.msk [vmem:[#allocation2 + $0x10b] sm:$0xff] %vm308, %v8908
      %8945 = vst.msk [vmem:[#allocation2 + $0x113] sm:$0xff] %vm308, %v8909
      %8946 = vst.msk [vmem:[#allocation2 + $0x11b] sm:$0xff] %vm308, %v8910
      %8947 = vst.msk [vmem:[#allocation2 + $0x123] sm:$0xff] %vm308, %v8911
      %8948 = vst.msk [vmem:[#allocation2 + $0x12b] sm:$0x3f] %vm2659, %v8912
      %v8949 = vld [vmem:[#allocation2] sm:$0xff]
      %v8950 = vld [vmem:[#allocation2 + $0x8] sm:$0xff]
      %v8951 = vld [vmem:[#allocation2 + $0x10] sm:$0xff]
      %v8952 = vld [vmem:[#allocation2 + $0x18] sm:$0xff]
      %v8953 = vld [vmem:[#allocation2 + $0x20] sm:$0xff]
      %v8954 = vld [vmem:[#allocation2 + $0x28] sm:$0xff]
      %v8955 = vld [vmem:[#allocation2 + $0x30] sm:$0xff]
      %v8956 = vld [vmem:[#allocation2 + $0x38] sm:$0xff]
      %v8957 = vld [vmem:[#allocation2 + $0x40] sm:$0xff]
      %v8958 = vld [vmem:[#allocation2 + $0x48] sm:$0xff]
      %v8959 = vld [vmem:[#allocation2 + $0x50] sm:$0xff]
      %v8960 = vld [vmem:[#allocation2 + $0x58] sm:$0xff]
      %v8961 = vld [vmem:[#allocation2 + $0x60] sm:$0xff]
      %v8962 = vld [vmem:[#allocation2 + $0x68] sm:$0xff]
      %v8963 = vld [vmem:[#allocation2 + $0x70] sm:$0xff]
      %v8964 = vld [vmem:[#allocation2 + $0x78] sm:$0xff]
      %v8965 = vld [vmem:[#allocation2 + $0x80] sm:$0xff]
      %v8966 = vld [vmem:[#allocation2 + $0x88] sm:$0xff]
      %v8967 = vld [vmem:[#allocation2 + $0x90] sm:$0xff]
      %v8968 = vld [vmem:[#allocation2 + $0x98] sm:$0xff]
      %v8969 = vld [vmem:[#allocation2 + $0xa0] sm:$0xff]
      %v8970 = vld [vmem:[#allocation2 + $0xa8] sm:$0xff]
      %v8971 = vld [vmem:[#allocation2 + $0xb0] sm:$0xff]
      %v8972 = vld [vmem:[#allocation2 + $0xb8] sm:$0xff]
      %v8973 = vld [vmem:[#allocation2 + $0xc0] sm:$0xff]
      %v8974 = vld [vmem:[#allocation2 + $0xc8] sm:$0xff]
      %v8975 = vld [vmem:[#allocation2 + $0xd0] sm:$0xff]
      %v8976 = vld [vmem:[#allocation2 + $0xd8] sm:$0xff]
      %v8977 = vld [vmem:[#allocation2 + $0xe0] sm:$0xff]
      %v8978 = vld [vmem:[#allocation2 + $0xe8] sm:$0xff]
      %v8979 = vld [vmem:[#allocation2 + $0xf0] sm:$0xff]
      %v8980 = vld [vmem:[#allocation2 + $0xf8] sm:$0xff]
      %v8981 = vld [vmem:[#allocation2 + $0x100] sm:$0xff]
      %v8982 = vld [vmem:[#allocation2 + $0x108] sm:$0xff]
      %v8983 = vld [vmem:[#allocation2 + $0x110] sm:$0xff]
      %v8984 = vld [vmem:[#allocation2 + $0x118] sm:$0x3f]
      %v8985 = vld [vmem:[#allocation2 + $0x1] sm:$0xff]
      %v8986 = vld [vmem:[#allocation2 + $0x9] sm:$0xff]
      %v8987 = vld [vmem:[#allocation2 + $0x11] sm:$0xff]
      %v8988 = vld [vmem:[#allocation2 + $0x19] sm:$0xff]
      %v8989 = vld [vmem:[#allocation2 + $0x21] sm:$0xff]
      %v8990 = vld [vmem:[#allocation2 + $0x29] sm:$0xff]
      %v8991 = vld [vmem:[#allocation2 + $0x31] sm:$0xff]
      %v8992 = vld [vmem:[#allocation2 + $0x39] sm:$0xff]
      %v8993 = vld [vmem:[#allocation2 + $0x41] sm:$0xff]
      %v8994 = vld [vmem:[#allocation2 + $0x49] sm:$0xff]
      %v8995 = vld [vmem:[#allocation2 + $0x51] sm:$0xff]
      %v8996 = vld [vmem:[#allocation2 + $0x59] sm:$0xff]
      %v8997 = vld [vmem:[#allocation2 + $0x61] sm:$0xff]
      %v8998 = vld [vmem:[#allocation2 + $0x69] sm:$0xff]
      %v8999 = vld [vmem:[#allocation2 + $0x71] sm:$0xff]
      %v9000 = vld [vmem:[#allocation2 + $0x79] sm:$0xff]
      %v9001 = vld [vmem:[#allocation2 + $0x81] sm:$0xff]
      %v9002 = vld [vmem:[#allocation2 + $0x89] sm:$0xff]
      %v9003 = vld [vmem:[#allocation2 + $0x91] sm:$0xff]
      %v9004 = vld [vmem:[#allocation2 + $0x99] sm:$0xff]
      %v9005 = vld [vmem:[#allocation2 + $0xa1] sm:$0xff]
      %v9006 = vld [vmem:[#allocation2 + $0xa9] sm:$0xff]
      %v9007 = vld [vmem:[#allocation2 + $0xb1] sm:$0xff]
      %v9008 = vld [vmem:[#allocation2 + $0xb9] sm:$0xff]
      %v9009 = vld [vmem:[#allocation2 + $0xc1] sm:$0xff]
      %v9010 = vld [vmem:[#allocation2 + $0xc9] sm:$0xff]
      %v9011 = vld [vmem:[#allocation2 + $0xd1] sm:$0xff]
      %v9012 = vld [vmem:[#allocation2 + $0xd9] sm:$0xff]
      %v9013 = vld [vmem:[#allocation2 + $0xe1] sm:$0xff]
      %v9014 = vld [vmem:[#allocation2 + $0xe9] sm:$0xff]
      %v9015 = vld [vmem:[#allocation2 + $0xf1] sm:$0xff]
      %v9016 = vld [vmem:[#allocation2 + $0xf9] sm:$0xff]
      %v9017 = vld [vmem:[#allocation2 + $0x101] sm:$0xff]
      %v9018 = vld [vmem:[#allocation2 + $0x109] sm:$0xff]
      %v9019 = vld [vmem:[#allocation2 + $0x111] sm:$0xff]
      %v9020 = vld [vmem:[#allocation2 + $0x119] sm:$0x3f]
      %v9021 = vld [vmem:[#allocation2 + $0x2] sm:$0xff]
      %v9022 = vld [vmem:[#allocation2 + $0xa] sm:$0xff]
      %v9023 = vld [vmem:[#allocation2 + $0x12] sm:$0xff]
      %v9024 = vld [vmem:[#allocation2 + $0x1a] sm:$0xff]
      %v9025 = vld [vmem:[#allocation2 + $0x22] sm:$0xff]
      %v9026 = vld [vmem:[#allocation2 + $0x2a] sm:$0xff]
      %v9027 = vld [vmem:[#allocation2 + $0x32] sm:$0xff]
      %v9028 = vld [vmem:[#allocation2 + $0x3a] sm:$0xff]
      %v9029 = vld [vmem:[#allocation2 + $0x42] sm:$0xff]
      %v9030 = vld [vmem:[#allocation2 + $0x4a] sm:$0xff]
      %v9031 = vld [vmem:[#allocation2 + $0x52] sm:$0xff]
      %v9032 = vld [vmem:[#allocation2 + $0x5a] sm:$0xff]
      %v9033 = vld [vmem:[#allocation2 + $0x62] sm:$0xff]
      %v9034 = vld [vmem:[#allocation2 + $0x6a] sm:$0xff]
      %v9035 = vld [vmem:[#allocation2 + $0x72] sm:$0xff]
      %v9036 = vld [vmem:[#allocation2 + $0x7a] sm:$0xff]
      %v9037 = vld [vmem:[#allocation2 + $0x82] sm:$0xff]
      %v9038 = vld [vmem:[#allocation2 + $0x8a] sm:$0xff]
      %v9039 = vld [vmem:[#allocation2 + $0x92] sm:$0xff]
      %v9040 = vld [vmem:[#allocation2 + $0x9a] sm:$0xff]
      %v9041 = vld [vmem:[#allocation2 + $0xa2] sm:$0xff]
      %v9042 = vld [vmem:[#allocation2 + $0xaa] sm:$0xff]
      %v9043 = vld [vmem:[#allocation2 + $0xb2] sm:$0xff]
      %v9044 = vld [vmem:[#allocation2 + $0xba] sm:$0xff]
      %v9045 = vld [vmem:[#allocation2 + $0xc2] sm:$0xff]
      %v9046 = vld [vmem:[#allocation2 + $0xca] sm:$0xff]
      %v9047 = vld [vmem:[#allocation2 + $0xd2] sm:$0xff]
      %v9048 = vld [vmem:[#allocation2 + $0xda] sm:$0xff]
      %v9049 = vld [vmem:[#allocation2 + $0xe2] sm:$0xff]
      %v9050 = vld [vmem:[#allocation2 + $0xea] sm:$0xff]
      %v9051 = vld [vmem:[#allocation2 + $0xf2] sm:$0xff]
      %v9052 = vld [vmem:[#allocation2 + $0xfa] sm:$0xff]
      %v9053 = vld [vmem:[#allocation2 + $0x102] sm:$0xff]
      %v9054 = vld [vmem:[#allocation2 + $0x10a] sm:$0xff]
      %v9055 = vld [vmem:[#allocation2 + $0x112] sm:$0xff]
      %v9056 = vld [vmem:[#allocation2 + $0x11a] sm:$0x3f]
      %v9057 = vld [vmem:[#allocation2 + $0x11a] sm:$0xff]
      %v9058 = vld [vmem:[#allocation2 + $0x122] sm:$0xff]
      %v9059 = vld [vmem:[#allocation2 + $0x12a] sm:$0x3f]
      %v9060 = vld [vmem:[#allocation2 + $0x13] sm:$0xff]
      %v9061 = vld [vmem:[#allocation2 + $0x1b] sm:$0xff]
      %v9062 = vld [vmem:[#allocation2 + $0x23] sm:$0xff]
      %v9063 = vld [vmem:[#allocation2 + $0x2b] sm:$0xff]
      %v9064 = vld [vmem:[#allocation2 + $0x33] sm:$0xff]
      %v9065 = vld [vmem:[#allocation2 + $0x3b] sm:$0xff]
      %v9066 = vld [vmem:[#allocation2 + $0x43] sm:$0xff]
      %v9067 = vld [vmem:[#allocation2 + $0x4b] sm:$0xff]
      %v9068 = vld [vmem:[#allocation2 + $0x53] sm:$0xff]
      %v9069 = vld [vmem:[#allocation2 + $0x5b] sm:$0xff]
      %v9070 = vld [vmem:[#allocation2 + $0x63] sm:$0xff]
      %v9071 = vld [vmem:[#allocation2 + $0x6b] sm:$0xff]
      %v9072 = vld [vmem:[#allocation2 + $0x73] sm:$0xff]
      %v9073 = vld [vmem:[#allocation2 + $0x7b] sm:$0xff]
      %v9074 = vld [vmem:[#allocation2 + $0x83] sm:$0xff]
      %v9075 = vld [vmem:[#allocation2 + $0x8b] sm:$0xff]
      %v9076 = vld [vmem:[#allocation2 + $0x93] sm:$0xff]
      %v9077 = vld [vmem:[#allocation2 + $0x9b] sm:$0xff]
      %v9078 = vld [vmem:[#allocation2 + $0xa3] sm:$0xff]
      %v9079 = vld [vmem:[#allocation2 + $0xab] sm:$0xff]
      %v9080 = vld [vmem:[#allocation2 + $0xb3] sm:$0xff]
      %v9081 = vld [vmem:[#allocation2 + $0xbb] sm:$0xff]
      %v9082 = vld [vmem:[#allocation2 + $0xc3] sm:$0xff]
      %v9083 = vld [vmem:[#allocation2 + $0xcb] sm:$0xff]
      %v9084 = vld [vmem:[#allocation2 + $0xd3] sm:$0xff]
      %v9085 = vld [vmem:[#allocation2 + $0xdb] sm:$0xff]
      %v9086 = vld [vmem:[#allocation2 + $0xe3] sm:$0xff]
      %v9087 = vld [vmem:[#allocation2 + $0xeb] sm:$0xff]
      %v9088 = vld [vmem:[#allocation2 + $0xf3] sm:$0xff]
      %v9089 = vld [vmem:[#allocation2 + $0xfb] sm:$0xff]
      %v9090 = vld [vmem:[#allocation2 + $0x103] sm:$0xff]
      %v9091 = vld [vmem:[#allocation2 + $0x10b] sm:$0xff]
      %v9092 = vld [vmem:[#allocation2 + $0x113] sm:$0xff]
      %v9093 = vld [vmem:[#allocation2 + $0x11b] sm:$0xff]
      %v9094 = vld [vmem:[#allocation2 + $0x123] sm:$0xff]
      %v9095 = vld [vmem:[#allocation2 + $0x12b] sm:$0x3f]
      %v9096 = vld [vmem:[#allocation2 + $0x14] sm:$0xff]
      %v9097 = vld [vmem:[#allocation2 + $0x1c] sm:$0xff]
      %v9098 = vld [vmem:[#allocation2 + $0x24] sm:$0xff]
      %v9099 = vld [vmem:[#allocation2 + $0x2c] sm:$0xff]
      %v9100 = vld [vmem:[#allocation2 + $0x34] sm:$0xff]
      %v9101 = vld [vmem:[#allocation2 + $0x3c] sm:$0xff]
      %v9102 = vld [vmem:[#allocation2 + $0x44] sm:$0xff]
      %v9103 = vld [vmem:[#allocation2 + $0x4c] sm:$0xff]
      %v9104 = vld [vmem:[#allocation2 + $0x54] sm:$0xff]
      %v9105 = vld [vmem:[#allocation2 + $0x5c] sm:$0xff]
      %v9106 = vld [vmem:[#allocation2 + $0x64] sm:$0xff]
      %v9107 = vld [vmem:[#allocation2 + $0x6c] sm:$0xff]
      %v9108 = vld [vmem:[#allocation2 + $0x74] sm:$0xff]
      %v9109 = vld [vmem:[#allocation2 + $0x7c] sm:$0xff]
      %v9110 = vld [vmem:[#allocation2 + $0x84] sm:$0xff]
      %v9111 = vld [vmem:[#allocation2 + $0x8c] sm:$0xff]
      %v9112 = vld [vmem:[#allocation2 + $0x94] sm:$0xff]
      %v9113 = vld [vmem:[#allocation2 + $0x9c] sm:$0xff]
      %v9114 = vld [vmem:[#allocation2 + $0xa4] sm:$0xff]
      %v9115 = vld [vmem:[#allocation2 + $0xac] sm:$0xff]
      %v9116 = vld [vmem:[#allocation2 + $0xb4] sm:$0xff]
      %v9117 = vld [vmem:[#allocation2 + $0xbc] sm:$0xff]
      %v9118 = vld [vmem:[#allocation2 + $0xc4] sm:$0xff]
      %v9119 = vld [vmem:[#allocation2 + $0xcc] sm:$0xff]
      %v9120 = vld [vmem:[#allocation2 + $0xd4] sm:$0xff]
      %v9121 = vld [vmem:[#allocation2 + $0xdc] sm:$0xff]
      %v9122 = vld [vmem:[#allocation2 + $0xe4] sm:$0xff]
      %v9123 = vld [vmem:[#allocation2 + $0xec] sm:$0xff]
      %v9124 = vld [vmem:[#allocation2 + $0xf4] sm:$0xff]
      %v9125 = vld [vmem:[#allocation2 + $0xfc] sm:$0xff]
      %v9126 = vld [vmem:[#allocation2 + $0x104] sm:$0xff]
      %v9127 = vld [vmem:[#allocation2 + $0x10c] sm:$0xff]
      %v9128 = vld [vmem:[#allocation2 + $0x114] sm:$0xff]
      %v9129 = vld [vmem:[#allocation2 + $0x11c] sm:$0xff]
      %v9130 = vld [vmem:[#allocation2 + $0x124] sm:$0xff]
      %v9131 = vld [vmem:[#allocation2 + $0x12c] sm:$0x3f]
      %v9132 = vld [vmem:[#allocation2 + $0x12c] sm:$0xff]
      %v9133 = vld [vmem:[#allocation2 + $0x134] sm:$0xff]
      %v9134 = vld [vmem:[#allocation2 + $0x13c] sm:$0x3f]
      %v9135 = vld [vmem:[#allocation2 + $0x25] sm:$0xff]
      %v9136 = vld [vmem:[#allocation2 + $0x2d] sm:$0xff]
      %v9137 = vld [vmem:[#allocation2 + $0x35] sm:$0xff]
      %v9138 = vld [vmem:[#allocation2 + $0x3d] sm:$0xff]
      %v9139 = vld [vmem:[#allocation2 + $0x45] sm:$0xff]
      %v9140 = vld [vmem:[#allocation2 + $0x4d] sm:$0xff]
      %v9141 = vld [vmem:[#allocation2 + $0x55] sm:$0xff]
      %v9142 = vld [vmem:[#allocation2 + $0x5d] sm:$0xff]
      %v9143 = vld [vmem:[#allocation2 + $0x65] sm:$0xff]
      %v9144 = vld [vmem:[#allocation2 + $0x6d] sm:$0xff]
      %v9145 = vld [vmem:[#allocation2 + $0x75] sm:$0xff]
      %v9146 = vld [vmem:[#allocation2 + $0x7d] sm:$0xff]
      %v9147 = vld [vmem:[#allocation2 + $0x85] sm:$0xff]
      %v9148 = vld [vmem:[#allocation2 + $0x8d] sm:$0xff]
      %v9149 = vld [vmem:[#allocation2 + $0x95] sm:$0xff]
      %v9150 = vld [vmem:[#allocation2 + $0x9d] sm:$0xff]
      %v9151 = vld [vmem:[#allocation2 + $0xa5] sm:$0xff]
      %v9152 = vld [vmem:[#allocation2 + $0xad] sm:$0xff]
      %v9153 = vld [vmem:[#allocation2 + $0xb5] sm:$0xff]
      %v9154 = vld [vmem:[#allocation2 + $0xbd] sm:$0xff]
      %v9155 = vld [vmem:[#allocation2 + $0xc5] sm:$0xff]
      %v9156 = vld [vmem:[#allocation2 + $0xcd] sm:$0xff]
      %v9157 = vld [vmem:[#allocation2 + $0xd5] sm:$0xff]
      %v9158 = vld [vmem:[#allocation2 + $0xdd] sm:$0xff]
      %v9159 = vld [vmem:[#allocation2 + $0xe5] sm:$0xff]
      %v9160 = vld [vmem:[#allocation2 + $0xed] sm:$0xff]
      %v9161 = vld [vmem:[#allocation2 + $0xf5] sm:$0xff]
      %v9162 = vld [vmem:[#allocation2 + $0xfd] sm:$0xff]
      %v9163 = vld [vmem:[#allocation2 + $0x105] sm:$0xff]
      %v9164 = vld [vmem:[#allocation2 + $0x10d] sm:$0xff]
      %v9165 = vld [vmem:[#allocation2 + $0x115] sm:$0xff]
      %v9166 = vld [vmem:[#allocation2 + $0x11d] sm:$0xff]
      %v9167 = vld [vmem:[#allocation2 + $0x125] sm:$0xff]
      %v9168 = vld [vmem:[#allocation2 + $0x12d] sm:$0xff]
      %v9169 = vld [vmem:[#allocation2 + $0x135] sm:$0xff]
      %v9170 = vld [vmem:[#allocation2 + $0x13d] sm:$0x3f]
      %v9171 = vld [vmem:[#allocation2 + $0x26] sm:$0xff]
      %v9172 = vld [vmem:[#allocation2 + $0x2e] sm:$0xff]
      %v9173 = vld [vmem:[#allocation2 + $0x36] sm:$0xff]
      %v9174 = vld [vmem:[#allocation2 + $0x3e] sm:$0xff]
      %v9175 = vld [vmem:[#allocation2 + $0x46] sm:$0xff]
      %v9176 = vld [vmem:[#allocation2 + $0x4e] sm:$0xff]
      %v9177 = vld [vmem:[#allocation2 + $0x56] sm:$0xff]
      %v9178 = vld [vmem:[#allocation2 + $0x5e] sm:$0xff]
      %v9179 = vld [vmem:[#allocation2 + $0x66] sm:$0xff]
      %v9180 = vld [vmem:[#allocation2 + $0x6e] sm:$0xff]
      %v9181 = vld [vmem:[#allocation2 + $0x76] sm:$0xff]
      %v9182 = vld [vmem:[#allocation2 + $0x7e] sm:$0xff]
      %v9183 = vld [vmem:[#allocation2 + $0x86] sm:$0xff]
      %v9184 = vld [vmem:[#allocation2 + $0x8e] sm:$0xff]
      %v9185 = vld [vmem:[#allocation2 + $0x96] sm:$0xff]
      %v9186 = vld [vmem:[#allocation2 + $0x9e] sm:$0xff]
      %v9187 = vld [vmem:[#allocation2 + $0xa6] sm:$0xff]
      %v9188 = vld [vmem:[#allocation2 + $0xae] sm:$0xff]
      %v9189 = vld [vmem:[#allocation2 + $0xb6] sm:$0xff]
      %v9190 = vld [vmem:[#allocation2 + $0xbe] sm:$0xff]
      %v9191 = vld [vmem:[#allocation2 + $0xc6] sm:$0xff]
      %v9192 = vld [vmem:[#allocation2 + $0xce] sm:$0xff]
      %v9193 = vld [vmem:[#allocation2 + $0xd6] sm:$0xff]
      %v9194 = vld [vmem:[#allocation2 + $0xde] sm:$0xff]
      %v9195 = vld [vmem:[#allocation2 + $0xe6] sm:$0xff]
      %v9196 = vld [vmem:[#allocation2 + $0xee] sm:$0xff]
      %v9197 = vld [vmem:[#allocation2 + $0xf6] sm:$0xff]
      %v9198 = vld [vmem:[#allocation2 + $0xfe] sm:$0xff]
      %v9199 = vld [vmem:[#allocation2 + $0x106] sm:$0xff]
      %v9200 = vld [vmem:[#allocation2 + $0x10e] sm:$0xff]
      %v9201 = vld [vmem:[#allocation2 + $0x116] sm:$0xff]
      %v9202 = vld [vmem:[#allocation2 + $0x11e] sm:$0xff]
      %v9203 = vld [vmem:[#allocation2 + $0x126] sm:$0xff]
      %v9204 = vld [vmem:[#allocation2 + $0x12e] sm:$0xff]
      %v9205 = vld [vmem:[#allocation2 + $0x136] sm:$0xff]
      %v9206 = vld [vmem:[#allocation2 + $0x13e] sm:$0x3f]
      %9243 = vrot.lane.b32.xlu0 %v8985, 64
      %v9244 = vpop.permute.xlu0 %9243
      %9245 = vrot.lane.b32.xlu0 %v8986, 64
      %v9246 = vpop.permute.xlu0 %9245
      %9247 = vrot.lane.b32.xlu0 %v8987, 64
      %v9248 = vpop.permute.xlu0 %9247
      %9249 = vrot.lane.b32.xlu0 %v8988, 64
      %v9250 = vpop.permute.xlu0 %9249
      %9251 = vrot.lane.b32.xlu0 %v8989, 64
      %v9252 = vpop.permute.xlu0 %9251
      %9253 = vrot.lane.b32.xlu0 %v8990, 64
      %v9254 = vpop.permute.xlu0 %9253
      %9255 = vrot.lane.b32.xlu0 %v8991, 64
      %v9256 = vpop.permute.xlu0 %9255
      %9257 = vrot.lane.b32.xlu0 %v8992, 64
      %v9258 = vpop.permute.xlu0 %9257
      %9259 = vrot.lane.b32.xlu0 %v8993, 64
      %v9260 = vpop.permute.xlu0 %9259
      %9261 = vrot.lane.b32.xlu0 %v8994, 64
      %v9262 = vpop.permute.xlu0 %9261
      %9263 = vrot.lane.b32.xlu0 %v8995, 64
      %v9264 = vpop.permute.xlu0 %9263
      %9265 = vrot.lane.b32.xlu0 %v8996, 64
      %v9266 = vpop.permute.xlu0 %9265
      %9267 = vrot.lane.b32.xlu0 %v8997, 64
      %v9268 = vpop.permute.xlu0 %9267
      %9269 = vrot.lane.b32.xlu0 %v8998, 64
      %v9270 = vpop.permute.xlu0 %9269
      %9271 = vrot.lane.b32.xlu0 %v8999, 64
      %v9272 = vpop.permute.xlu0 %9271
      %9273 = vrot.lane.b32.xlu0 %v9000, 64
      %v9274 = vpop.permute.xlu0 %9273
      %9275 = vrot.lane.b32.xlu0 %v9001, 64
      %v9276 = vpop.permute.xlu0 %9275
      %9277 = vrot.lane.b32.xlu0 %v9002, 64
      %v9278 = vpop.permute.xlu0 %9277
      %9279 = vrot.lane.b32.xlu0 %v9003, 64
      %v9280 = vpop.permute.xlu0 %9279
      %9281 = vrot.lane.b32.xlu0 %v9004, 64
      %v9282 = vpop.permute.xlu0 %9281
      %9283 = vrot.lane.b32.xlu0 %v9005, 64
      %v9284 = vpop.permute.xlu0 %9283
      %9285 = vrot.lane.b32.xlu0 %v9006, 64
      %v9286 = vpop.permute.xlu0 %9285
      %9287 = vrot.lane.b32.xlu0 %v9007, 64
      %v9288 = vpop.permute.xlu0 %9287
      %9289 = vrot.lane.b32.xlu0 %v9008, 64
      %v9290 = vpop.permute.xlu0 %9289
      %9291 = vrot.lane.b32.xlu0 %v9009, 64
      %v9292 = vpop.permute.xlu0 %9291
      %9293 = vrot.lane.b32.xlu0 %v9010, 64
      %v9294 = vpop.permute.xlu0 %9293
      %9295 = vrot.lane.b32.xlu0 %v9011, 64
      %v9296 = vpop.permute.xlu0 %9295
      %9297 = vrot.lane.b32.xlu0 %v9012, 64
      %v9298 = vpop.permute.xlu0 %9297
      %9299 = vrot.lane.b32.xlu0 %v9013, 64
      %v9300 = vpop.permute.xlu0 %9299
      %9301 = vrot.lane.b32.xlu0 %v9014, 64
      %v9302 = vpop.permute.xlu0 %9301
      %9303 = vrot.lane.b32.xlu0 %v9015, 64
      %v9304 = vpop.permute.xlu0 %9303
      %9305 = vrot.lane.b32.xlu0 %v9016, 64
      %v9306 = vpop.permute.xlu0 %9305
      %9307 = vrot.lane.b32.xlu0 %v9017, 64
      %v9308 = vpop.permute.xlu0 %9307
      %9309 = vrot.lane.b32.xlu0 %v9018, 64
      %v9310 = vpop.permute.xlu0 %9309
      %9311 = vrot.lane.b32.xlu0 %v9019, 64
      %v9312 = vpop.permute.xlu0 %9311
      %9313 = vrot.lane.b32.xlu0 %v9020, 64
      %v9314 = vpop.permute.xlu0 %9313
      %9387 = vrot.lane.b32.xlu0 %v9023, 64
      %v9388 = vpop.permute.xlu0 %9387
      %9389 = vrot.lane.b32.xlu0 %v9024, 64
      %v9390 = vpop.permute.xlu0 %9389
      %9391 = vrot.lane.b32.xlu0 %v9025, 64
      %v9392 = vpop.permute.xlu0 %9391
      %9393 = vrot.lane.b32.xlu0 %v9026, 64
      %v9394 = vpop.permute.xlu0 %9393
      %9395 = vrot.lane.b32.xlu0 %v9027, 64
      %v9396 = vpop.permute.xlu0 %9395
      %9397 = vrot.lane.b32.xlu0 %v9028, 64
      %v9398 = vpop.permute.xlu0 %9397
      %9399 = vrot.lane.b32.xlu0 %v9029, 64
      %v9400 = vpop.permute.xlu0 %9399
      %9401 = vrot.lane.b32.xlu0 %v9030, 64
      %v9402 = vpop.permute.xlu0 %9401
      %9403 = vrot.lane.b32.xlu0 %v9031, 64
      %v9404 = vpop.permute.xlu0 %9403
      %9405 = vrot.lane.b32.xlu0 %v9032, 64
      %v9406 = vpop.permute.xlu0 %9405
      %9407 = vrot.lane.b32.xlu0 %v9033, 64
      %v9408 = vpop.permute.xlu0 %9407
      %9409 = vrot.lane.b32.xlu0 %v9034, 64
      %v9410 = vpop.permute.xlu0 %9409
      %9411 = vrot.lane.b32.xlu0 %v9035, 64
      %v9412 = vpop.permute.xlu0 %9411
      %9413 = vrot.lane.b32.xlu0 %v9036, 64
      %v9414 = vpop.permute.xlu0 %9413
      %9415 = vrot.lane.b32.xlu0 %v9037, 64
      %v9416 = vpop.permute.xlu0 %9415
      %9417 = vrot.lane.b32.xlu0 %v9038, 64
      %v9418 = vpop.permute.xlu0 %9417
      %9419 = vrot.lane.b32.xlu0 %v9039, 64
      %v9420 = vpop.permute.xlu0 %9419
      %9421 = vrot.lane.b32.xlu0 %v9040, 64
      %v9422 = vpop.permute.xlu0 %9421
      %9423 = vrot.lane.b32.xlu0 %v9041, 64
      %v9424 = vpop.permute.xlu0 %9423
      %9425 = vrot.lane.b32.xlu0 %v9042, 64
      %v9426 = vpop.permute.xlu0 %9425
      %9427 = vrot.lane.b32.xlu0 %v9043, 64
      %v9428 = vpop.permute.xlu0 %9427
      %9429 = vrot.lane.b32.xlu0 %v9044, 64
      %v9430 = vpop.permute.xlu0 %9429
      %9431 = vrot.lane.b32.xlu0 %v9045, 64
      %v9432 = vpop.permute.xlu0 %9431
      %9433 = vrot.lane.b32.xlu0 %v9046, 64
      %v9434 = vpop.permute.xlu0 %9433
      %9435 = vrot.lane.b32.xlu0 %v9047, 64
      %v9436 = vpop.permute.xlu0 %9435
      %9437 = vrot.lane.b32.xlu0 %v9048, 64
      %v9438 = vpop.permute.xlu0 %9437
      %9439 = vrot.lane.b32.xlu0 %v9049, 64
      %v9440 = vpop.permute.xlu0 %9439
      %9441 = vrot.lane.b32.xlu0 %v9050, 64
      %v9442 = vpop.permute.xlu0 %9441
      %9443 = vrot.lane.b32.xlu0 %v9051, 64
      %v9444 = vpop.permute.xlu0 %9443
      %9445 = vrot.lane.b32.xlu0 %v9052, 64
      %v9446 = vpop.permute.xlu0 %9445
      %9447 = vrot.lane.b32.xlu0 %v9053, 64
      %v9448 = vpop.permute.xlu0 %9447
      %9449 = vrot.lane.b32.xlu0 %v9054, 64
      %v9450 = vpop.permute.xlu0 %9449
      %9451 = vrot.lane.b32.xlu0 %v9055, 64
      %v9452 = vpop.permute.xlu0 %9451
      %9453 = vrot.lane.b32.xlu0 %v9057, 64
      %v9454 = vpop.permute.xlu0 %9453
      %9455 = vrot.lane.b32.xlu0 %v9058, 64
      %v9456 = vpop.permute.xlu0 %9455
      %9457 = vrot.lane.b32.xlu0 %v9059, 64
      %v9458 = vpop.permute.xlu0 %9457
      %9531 = vrot.lane.b32.xlu0 %v9096, 64
      %v9532 = vpop.permute.xlu0 %9531
      %9533 = vrot.lane.b32.xlu0 %v9097, 64
      %v9534 = vpop.permute.xlu0 %9533
      %9535 = vrot.lane.b32.xlu0 %v9098, 64
      %v9536 = vpop.permute.xlu0 %9535
      %9537 = vrot.lane.b32.xlu0 %v9099, 64
      %v9538 = vpop.permute.xlu0 %9537
      %9539 = vrot.lane.b32.xlu0 %v9100, 64
      %v9540 = vpop.permute.xlu0 %9539
      %9541 = vrot.lane.b32.xlu0 %v9101, 64
      %v9542 = vpop.permute.xlu0 %9541
      %9543 = vrot.lane.b32.xlu0 %v9102, 64
      %v9544 = vpop.permute.xlu0 %9543
      %9545 = vrot.lane.b32.xlu0 %v9103, 64
      %v9546 = vpop.permute.xlu0 %9545
      %9547 = vrot.lane.b32.xlu0 %v9104, 64
      %v9548 = vpop.permute.xlu0 %9547
      %9549 = vrot.lane.b32.xlu0 %v9105, 64
      %v9550 = vpop.permute.xlu0 %9549
      %9551 = vrot.lane.b32.xlu0 %v9106, 64
      %v9552 = vpop.permute.xlu0 %9551
      %9553 = vrot.lane.b32.xlu0 %v9107, 64
      %v9554 = vpop.permute.xlu0 %9553
      %9555 = vrot.lane.b32.xlu0 %v9108, 64
      %v9556 = vpop.permute.xlu0 %9555
      %9557 = vrot.lane.b32.xlu0 %v9109, 64
      %v9558 = vpop.permute.xlu0 %9557
      %9559 = vrot.lane.b32.xlu0 %v9110, 64
      %v9560 = vpop.permute.xlu0 %9559
      %9561 = vrot.lane.b32.xlu0 %v9111, 64
      %v9562 = vpop.permute.xlu0 %9561
      %9563 = vrot.lane.b32.xlu0 %v9112, 64
      %v9564 = vpop.permute.xlu0 %9563
      %9565 = vrot.lane.b32.xlu0 %v9113, 64
      %v9566 = vpop.permute.xlu0 %9565
      %9567 = vrot.lane.b32.xlu0 %v9114, 64
      %v9568 = vpop.permute.xlu0 %9567
      %9569 = vrot.lane.b32.xlu0 %v9115, 64
      %v9570 = vpop.permute.xlu0 %9569
      %9571 = vrot.lane.b32.xlu0 %v9116, 64
      %v9572 = vpop.permute.xlu0 %9571
      %9573 = vrot.lane.b32.xlu0 %v9117, 64
      %v9574 = vpop.permute.xlu0 %9573
      %9575 = vrot.lane.b32.xlu0 %v9118, 64
      %v9576 = vpop.permute.xlu0 %9575
      %9577 = vrot.lane.b32.xlu0 %v9119, 64
      %v9578 = vpop.permute.xlu0 %9577
      %9579 = vrot.lane.b32.xlu0 %v9120, 64
      %v9580 = vpop.permute.xlu0 %9579
      %9581 = vrot.lane.b32.xlu0 %v9121, 64
      %v9582 = vpop.permute.xlu0 %9581
      %9583 = vrot.lane.b32.xlu0 %v9122, 64
      %v9584 = vpop.permute.xlu0 %9583
      %9585 = vrot.lane.b32.xlu0 %v9123, 64
      %v9586 = vpop.permute.xlu0 %9585
      %9587 = vrot.lane.b32.xlu0 %v9124, 64
      %v9588 = vpop.permute.xlu0 %9587
      %9589 = vrot.lane.b32.xlu0 %v9125, 64
      %v9590 = vpop.permute.xlu0 %9589
      %9591 = vrot.lane.b32.xlu0 %v9126, 64
      %v9592 = vpop.permute.xlu0 %9591
      %9593 = vrot.lane.b32.xlu0 %v9127, 64
      %v9594 = vpop.permute.xlu0 %9593
      %9595 = vrot.lane.b32.xlu0 %v9128, 64
      %v9596 = vpop.permute.xlu0 %9595
      %9597 = vrot.lane.b32.xlu0 %v9129, 64
      %v9598 = vpop.permute.xlu0 %9597
      %9599 = vrot.lane.b32.xlu0 %v9130, 64
      %v9600 = vpop.permute.xlu0 %9599
      %9601 = vrot.lane.b32.xlu0 %v9131, 64
      %v9602 = vpop.permute.xlu0 %9601
      %9675 = vrot.lane.b32.xlu0 %v9135, 64
      %v9676 = vpop.permute.xlu0 %9675
      %9677 = vrot.lane.b32.xlu0 %v9136, 64
      %v9678 = vpop.permute.xlu0 %9677
      %9679 = vrot.lane.b32.xlu0 %v9137, 64
      %v9680 = vpop.permute.xlu0 %9679
      %9681 = vrot.lane.b32.xlu0 %v9138, 64
      %v9682 = vpop.permute.xlu0 %9681
      %9683 = vrot.lane.b32.xlu0 %v9139, 64
      %v9684 = vpop.permute.xlu0 %9683
      %9685 = vrot.lane.b32.xlu0 %v9140, 64
      %v9686 = vpop.permute.xlu0 %9685
      %9687 = vrot.lane.b32.xlu0 %v9141, 64
      %v9688 = vpop.permute.xlu0 %9687
      %9689 = vrot.lane.b32.xlu0 %v9142, 64
      %v9690 = vpop.permute.xlu0 %9689
      %9691 = vrot.lane.b32.xlu0 %v9143, 64
      %v9692 = vpop.permute.xlu0 %9691
      %9693 = vrot.lane.b32.xlu0 %v9144, 64
      %v9694 = vpop.permute.xlu0 %9693
      %9695 = vrot.lane.b32.xlu0 %v9145, 64
      %v9696 = vpop.permute.xlu0 %9695
      %9697 = vrot.lane.b32.xlu0 %v9146, 64
      %v9698 = vpop.permute.xlu0 %9697
      %9699 = vrot.lane.b32.xlu0 %v9147, 64
      %v9700 = vpop.permute.xlu0 %9699
      %9701 = vrot.lane.b32.xlu0 %v9148, 64
      %v9702 = vpop.permute.xlu0 %9701
      %9703 = vrot.lane.b32.xlu0 %v9149, 64
      %v9704 = vpop.permute.xlu0 %9703
      %9705 = vrot.lane.b32.xlu0 %v9150, 64
      %v9706 = vpop.permute.xlu0 %9705
      %9707 = vrot.lane.b32.xlu0 %v9151, 64
      %v9708 = vpop.permute.xlu0 %9707
      %9709 = vrot.lane.b32.xlu0 %v9152, 64
      %v9710 = vpop.permute.xlu0 %9709
      %9711 = vrot.lane.b32.xlu0 %v9153, 64
      %v9712 = vpop.permute.xlu0 %9711
      %9713 = vrot.lane.b32.xlu0 %v9154, 64
      %v9714 = vpop.permute.xlu0 %9713
      %9715 = vrot.lane.b32.xlu0 %v9155, 64
      %v9716 = vpop.permute.xlu0 %9715
      %9717 = vrot.lane.b32.xlu0 %v9156, 64
      %v9718 = vpop.permute.xlu0 %9717
      %9719 = vrot.lane.b32.xlu0 %v9157, 64
      %v9720 = vpop.permute.xlu0 %9719
      %9721 = vrot.lane.b32.xlu0 %v9158, 64
      %v9722 = vpop.permute.xlu0 %9721
      %9723 = vrot.lane.b32.xlu0 %v9159, 64
      %v9724 = vpop.permute.xlu0 %9723
      %9725 = vrot.lane.b32.xlu0 %v9160, 64
      %v9726 = vpop.permute.xlu0 %9725
      %9727 = vrot.lane.b32.xlu0 %v9161, 64
      %v9728 = vpop.permute.xlu0 %9727
      %9729 = vrot.lane.b32.xlu0 %v9162, 64
      %v9730 = vpop.permute.xlu0 %9729
      %9731 = vrot.lane.b32.xlu0 %v9163, 64
      %v9732 = vpop.permute.xlu0 %9731
      %9733 = vrot.lane.b32.xlu0 %v9164, 64
      %v9734 = vpop.permute.xlu0 %9733
      %9735 = vrot.lane.b32.xlu0 %v9165, 64
      %v9736 = vpop.permute.xlu0 %9735
      %9737 = vrot.lane.b32.xlu0 %v9166, 64
      %v9738 = vpop.permute.xlu0 %9737
      %9739 = vrot.lane.b32.xlu0 %v9167, 64
      %v9740 = vpop.permute.xlu0 %9739
      %9741 = vrot.lane.b32.xlu0 %v9168, 64
      %v9742 = vpop.permute.xlu0 %9741
      %9743 = vrot.lane.b32.xlu0 %v9169, 64
      %v9744 = vpop.permute.xlu0 %9743
      %9745 = vrot.lane.b32.xlu0 %v9170, 64
      %v9746 = vpop.permute.xlu0 %9745
      %v9783 = vsel %vm308, %v8949, %v9244
      %v9784 = vsel %vm308, %v8950, %v9246
      %v9785 = vsel %vm308, %v8951, %v9248
      %v9786 = vsel %vm308, %v8952, %v9250
      %v9787 = vsel %vm308, %v8953, %v9252
      %v9788 = vsel %vm308, %v8954, %v9254
      %v9789 = vsel %vm308, %v8955, %v9256
      %v9790 = vsel %vm308, %v8956, %v9258
      %v9791 = vsel %vm308, %v8957, %v9260
      %v9792 = vsel %vm308, %v8958, %v9262
      %v9793 = vsel %vm308, %v8959, %v9264
      %v9794 = vsel %vm308, %v8960, %v9266
      %v9795 = vsel %vm308, %v8961, %v9268
      %v9796 = vsel %vm308, %v8962, %v9270
      %v9797 = vsel %vm308, %v8963, %v9272
      %v9798 = vsel %vm308, %v8964, %v9274
      %v9799 = vsel %vm308, %v8965, %v9276
      %v9800 = vsel %vm308, %v8966, %v9278
      %v9801 = vsel %vm308, %v8967, %v9280
      %v9802 = vsel %vm308, %v8968, %v9282
      %v9803 = vsel %vm308, %v8969, %v9284
      %v9804 = vsel %vm308, %v8970, %v9286
      %v9805 = vsel %vm308, %v8971, %v9288
      %v9806 = vsel %vm308, %v8972, %v9290
      %v9807 = vsel %vm308, %v8973, %v9292
      %v9808 = vsel %vm308, %v8974, %v9294
      %v9809 = vsel %vm308, %v8975, %v9296
      %v9810 = vsel %vm308, %v8976, %v9298
      %v9811 = vsel %vm308, %v8977, %v9300
      %v9812 = vsel %vm308, %v8978, %v9302
      %v9813 = vsel %vm308, %v8979, %v9304
      %v9814 = vsel %vm308, %v8980, %v9306
      %v9815 = vsel %vm308, %v8981, %v9308
      %v9816 = vsel %vm308, %v8982, %v9310
      %v9817 = vsel %vm308, %v8983, %v9312
      %v9818 = vsel %vm308, %v8984, %v9314
      %v9819 = vsel %vm308, %v9021, %v9388
      %v9820 = vsel %vm308, %v9022, %v9390
      %v9821 = vsel %vm308, %v9023, %v9392
      %v9822 = vsel %vm308, %v9024, %v9394
      %v9823 = vsel %vm308, %v9025, %v9396
      %v9824 = vsel %vm308, %v9026, %v9398
      %v9825 = vsel %vm308, %v9027, %v9400
      %v9826 = vsel %vm308, %v9028, %v9402
      %v9827 = vsel %vm308, %v9029, %v9404
      %v9828 = vsel %vm308, %v9030, %v9406
      %v9829 = vsel %vm308, %v9031, %v9408
      %v9830 = vsel %vm308, %v9032, %v9410
      %v9831 = vsel %vm308, %v9033, %v9412
      %v9832 = vsel %vm308, %v9034, %v9414
      %v9833 = vsel %vm308, %v9035, %v9416
      %v9834 = vsel %vm308, %v9036, %v9418
      %v9835 = vsel %vm308, %v9037, %v9420
      %v9836 = vsel %vm308, %v9038, %v9422
      %v9837 = vsel %vm308, %v9039, %v9424
      %v9838 = vsel %vm308, %v9040, %v9426
      %v9839 = vsel %vm308, %v9041, %v9428
      %v9840 = vsel %vm308, %v9042, %v9430
      %v9841 = vsel %vm308, %v9043, %v9432
      %v9842 = vsel %vm308, %v9044, %v9434
      %v9843 = vsel %vm308, %v9045, %v9436
      %v9844 = vsel %vm308, %v9046, %v9438
      %v9845 = vsel %vm308, %v9047, %v9440
      %v9846 = vsel %vm308, %v9048, %v9442
      %v9847 = vsel %vm308, %v9049, %v9444
      %v9848 = vsel %vm308, %v9050, %v9446
      %v9849 = vsel %vm308, %v9051, %v9448
      %v9850 = vsel %vm308, %v9052, %v9450
      %v9851 = vsel %vm308, %v9053, %v9452
      %v9852 = vsel %vm308, %v9054, %v9454
      %v9853 = vsel %vm308, %v9055, %v9456
      %v9854 = vsel %vm308, %v9056, %v9458
      %v9855 = vsel %vm308, %v9060, %v9532
      %v9856 = vsel %vm308, %v9061, %v9534
      %v9857 = vsel %vm308, %v9062, %v9536
      %v9858 = vsel %vm308, %v9063, %v9538
      %v9859 = vsel %vm308, %v9064, %v9540
      %v9860 = vsel %vm308, %v9065, %v9542
      %v9861 = vsel %vm308, %v9066, %v9544
      %v9862 = vsel %vm308, %v9067, %v9546
      %v9863 = vsel %vm308, %v9068, %v9548
      %v9864 = vsel %vm308, %v9069, %v9550
      %v9865 = vsel %vm308, %v9070, %v9552
      %v9866 = vsel %vm308, %v9071, %v9554
      %v9867 = vsel %vm308, %v9072, %v9556
      %v9868 = vsel %vm308, %v9073, %v9558
      %v9869 = vsel %vm308, %v9074, %v9560
      %v9870 = vsel %vm308, %v9075, %v9562
      %v9871 = vsel %vm308, %v9076, %v9564
      %v9872 = vsel %vm308, %v9077, %v9566
      %v9873 = vsel %vm308, %v9078, %v9568
      %v9874 = vsel %vm308, %v9079, %v9570
      %v9875 = vsel %vm308, %v9080, %v9572
      %v9876 = vsel %vm308, %v9081, %v9574
      %v9877 = vsel %vm308, %v9082, %v9576
      %v9878 = vsel %vm308, %v9083, %v9578
      %v9879 = vsel %vm308, %v9084, %v9580
      %v9880 = vsel %vm308, %v9085, %v9582
      %v9881 = vsel %vm308, %v9086, %v9584
      %v9882 = vsel %vm308, %v9087, %v9586
      %v9883 = vsel %vm308, %v9088, %v9588
      %v9884 = vsel %vm308, %v9089, %v9590
      %v9885 = vsel %vm308, %v9090, %v9592
      %v9886 = vsel %vm308, %v9091, %v9594
      %v9887 = vsel %vm308, %v9092, %v9596
      %v9888 = vsel %vm308, %v9093, %v9598
      %v9889 = vsel %vm308, %v9094, %v9600
      %v9890 = vsel %vm308, %v9095, %v9602
      %v9891 = vsel %vm308, %v9098, %v9676
      %v9892 = vsel %vm308, %v9099, %v9678
      %v9893 = vsel %vm308, %v9100, %v9680
      %v9894 = vsel %vm308, %v9101, %v9682
      %v9895 = vsel %vm308, %v9102, %v9684
      %v9896 = vsel %vm308, %v9103, %v9686
      %v9897 = vsel %vm308, %v9104, %v9688
      %v9898 = vsel %vm308, %v9105, %v9690
      %v9899 = vsel %vm308, %v9106, %v9692
      %v9900 = vsel %vm308, %v9107, %v9694
      %v9901 = vsel %vm308, %v9108, %v9696
      %v9902 = vsel %vm308, %v9109, %v9698
      %v9903 = vsel %vm308, %v9110, %v9700
      %v9904 = vsel %vm308, %v9111, %v9702
      %v9905 = vsel %vm308, %v9112, %v9704
      %v9906 = vsel %vm308, %v9113, %v9706
      %v9907 = vsel %vm308, %v9114, %v9708
      %v9908 = vsel %vm308, %v9115, %v9710
      %v9909 = vsel %vm308, %v9116, %v9712
      %v9910 = vsel %vm308, %v9117, %v9714
      %v9911 = vsel %vm308, %v9118, %v9716
      %v9912 = vsel %vm308, %v9119, %v9718
      %v9913 = vsel %vm308, %v9120, %v9720
      %v9914 = vsel %vm308, %v9121, %v9722
      %v9915 = vsel %vm308, %v9122, %v9724
      %v9916 = vsel %vm308, %v9123, %v9726
      %v9917 = vsel %vm308, %v9124, %v9728
      %v9918 = vsel %vm308, %v9125, %v9730
      %v9919 = vsel %vm308, %v9126, %v9732
      %v9920 = vsel %vm308, %v9127, %v9734
      %v9921 = vsel %vm308, %v9128, %v9736
      %v9922 = vsel %vm308, %v9129, %v9738
      %v9923 = vsel %vm308, %v9130, %v9740
      %v9924 = vsel %vm308, %v9132, %v9742
      %v9925 = vsel %vm308, %v9133, %v9744
      %v9926 = vsel %vm308, %v9134, %v9746
      %v9927 = vpack.c.bf16 %v9784, %v9783
      %v9928 = vpack.c.bf16 %v9820, %v9819
      %v9929 = vpack.c.bf16 %v9856, %v9855
      %v9930 = vpack.c.bf16 %v9892, %v9891
      %v9931 = vpack.c.bf16 %v9172, %v9171
      %v9932 = vpack.c.bf16 %v9786, %v9785
      %v9933 = vpack.c.bf16 %v9822, %v9821
      %v9934 = vpack.c.bf16 %v9858, %v9857
      %v9935 = vpack.c.bf16 %v9894, %v9893
      %v9936 = vpack.c.bf16 %v9174, %v9173
      %v9937 = vpack.c.bf16 %v9788, %v9787
      %v9938 = vpack.c.bf16 %v9824, %v9823
      %v9939 = vpack.c.bf16 %v9860, %v9859
      %v9940 = vpack.c.bf16 %v9896, %v9895
      %v9941 = vpack.c.bf16 %v9176, %v9175
      %v9942 = vpack.c.bf16 %v9790, %v9789
      %v9943 = vpack.c.bf16 %v9826, %v9825
      %v9944 = vpack.c.bf16 %v9862, %v9861
      %v9945 = vpack.c.bf16 %v9898, %v9897
      %v9946 = vpack.c.bf16 %v9178, %v9177
      %v9947 = vpack.c.bf16 %v9792, %v9791
      %v9948 = vpack.c.bf16 %v9828, %v9827
      %v9949 = vpack.c.bf16 %v9864, %v9863
      %v9950 = vpack.c.bf16 %v9900, %v9899
      %v9951 = vpack.c.bf16 %v9180, %v9179
      %v9952 = vpack.c.bf16 %v9794, %v9793
      %v9953 = vpack.c.bf16 %v9830, %v9829
      %v9954 = vpack.c.bf16 %v9866, %v9865
      %v9955 = vpack.c.bf16 %v9902, %v9901
      %v9956 = vpack.c.bf16 %v9182, %v9181
      %v9957 = vpack.c.bf16 %v9796, %v9795
      %v9958 = vpack.c.bf16 %v9832, %v9831
      %v9959 = vpack.c.bf16 %v9868, %v9867
      %v9960 = vpack.c.bf16 %v9904, %v9903
      %v9961 = vpack.c.bf16 %v9184, %v9183
      %v9962 = vpack.c.bf16 %v9798, %v9797
      %v9963 = vpack.c.bf16 %v9834, %v9833
      %v9964 = vpack.c.bf16 %v9870, %v9869
      %v9965 = vpack.c.bf16 %v9906, %v9905
      %v9966 = vpack.c.bf16 %v9186, %v9185
      %v9967 = vpack.c.bf16 %v9800, %v9799
      %v9968 = vpack.c.bf16 %v9836, %v9835
      %v9969 = vpack.c.bf16 %v9872, %v9871
      %v9970 = vpack.c.bf16 %v9908, %v9907
      %v9971 = vpack.c.bf16 %v9188, %v9187
      %v9972 = vpack.c.bf16 %v9802, %v9801
      %v9973 = vpack.c.bf16 %v9838, %v9837
      %v9974 = vpack.c.bf16 %v9874, %v9873
      %v9975 = vpack.c.bf16 %v9910, %v9909
      %v9976 = vpack.c.bf16 %v9190, %v9189
      %v9977 = vpack.c.bf16 %v9804, %v9803
      %v9978 = vpack.c.bf16 %v9840, %v9839
      %v9979 = vpack.c.bf16 %v9876, %v9875
      %v9980 = vpack.c.bf16 %v9912, %v9911
      %v9981 = vpack.c.bf16 %v9192, %v9191
      %v9982 = vpack.c.bf16 %v9806, %v9805
      %v9983 = vpack.c.bf16 %v9842, %v9841
      %v9984 = vpack.c.bf16 %v9878, %v9877
      %v9985 = vpack.c.bf16 %v9914, %v9913
      %v9986 = vpack.c.bf16 %v9194, %v9193
      %v9987 = vpack.c.bf16 %v9808, %v9807
      %v9988 = vpack.c.bf16 %v9844, %v9843
      %v9989 = vpack.c.bf16 %v9880, %v9879
      %v9990 = vpack.c.bf16 %v9916, %v9915
      %v9991 = vpack.c.bf16 %v9196, %v9195
      %v9992 = vpack.c.bf16 %v9810, %v9809
      %v9993 = vpack.c.bf16 %v9846, %v9845
      %v9994 = vpack.c.bf16 %v9882, %v9881
      %v9995 = vpack.c.bf16 %v9918, %v9917
      %v9996 = vpack.c.bf16 %v9198, %v9197
      %v9997 = vpack.c.bf16 %v9812, %v9811
      %v9998 = vpack.c.bf16 %v9848, %v9847
      %v9999 = vpack.c.bf16 %v9884, %v9883
      %v10000 = vpack.c.bf16 %v9920, %v9919
      %v10001 = vpack.c.bf16 %v9200, %v9199
      %v10002 = vpack.c.bf16 %v9814, %v9813
      %v10003 = vpack.c.bf16 %v9850, %v9849
      %v10004 = vpack.c.bf16 %v9886, %v9885
      %v10005 = vpack.c.bf16 %v9922, %v9921
      %v10006 = vpack.c.bf16 %v9202, %v9201
      %v10007 = vpack.c.bf16 %v9816, %v9815
      %v10008 = vpack.c.bf16 %v9852, %v9851
      %v10009 = vpack.c.bf16 %v9888, %v9887
      %v10010 = vpack.c.bf16 %v9924, %v9923
      %v10011 = vpack.c.bf16 %v9204, %v9203
      %v10012 = vpack.c.bf16 %v9818, %v9817
      %v10013 = vpack.c.bf16 %v9854, %v9853
      %v10014 = vpack.c.bf16 %v9890, %v9889
      %v10015 = vpack.c.bf16 %v9926, %v9925
      %v10016 = vpack.c.bf16 %v9206, %v9205
      %s10017 = scalar_lea.vmem %s2, 1152
      %v10018 = vld [vmem:[%s10017] sm:$0xf]
      %v10019 = vld [vmem:[%s10017 + $0x4] sm:$0xf]
      %v10020 = vld [vmem:[%s10017 + $0x8] sm:$0xf]
      %v10021 = vld [vmem:[%s10017 + $0xc] sm:$0xf]
      %v10022 = vld [vmem:[%s10017 + $0x10] sm:$0xf]
      %v10023 = vld [vmem:[%s10017 + $0x14] sm:$0xf]
      %v10024 = vld [vmem:[%s10017 + $0x18] sm:$0xf]
      %v10025 = vld [vmem:[%s10017 + $0x1c] sm:$0xf]
      %v10026 = vld [vmem:[%s10017 + $0x20] sm:$0xf]
      %v10027 = vld [vmem:[%s10017 + $0x24] sm:$0xf]
      %v10028 = vld [vmem:[%s10017 + $0x28] sm:$0xf]
      %v10029 = vld [vmem:[%s10017 + $0x2c] sm:$0xf]
      %v10030 = vld [vmem:[%s10017 + $0x30] sm:$0xf]
      %v10031 = vld [vmem:[%s10017 + $0x34] sm:$0xf]
      %v10032 = vld [vmem:[%s10017 + $0x38] sm:$0xf]
      %v10033 = vld [vmem:[%s10017 + $0x3c] sm:$0xf]
      %v10034 = vld [vmem:[%s10017 + $0x40] sm:$0xf]
      %v10035 = vld [vmem:[%s10017 + $0x44] sm:$0xf]
      %v10036 = vld [vmem:[%s10017 + $0x48] sm:$0xf]
      %v10037 = vld [vmem:[%s10017 + $0x4c] sm:$0xf]
      %v10038 = vld [vmem:[%s10017 + $0x50] sm:$0xf]
      %v10039 = vld [vmem:[%s10017 + $0x54] sm:$0xf]
      %v10040 = vld [vmem:[%s10017 + $0x58] sm:$0xf]
      %v10041 = vld [vmem:[%s10017 + $0x5c] sm:$0xf]
      %v10042 = vld [vmem:[%s10017 + $0x60] sm:$0xf]
      %v10043 = vld [vmem:[%s10017 + $0x64] sm:$0xf]
      %v10044 = vld [vmem:[%s10017 + $0x68] sm:$0xf]
      %v10045 = vld [vmem:[%s10017 + $0x6c] sm:$0xf]
      %v10046 = vld [vmem:[%s10017 + $0x70] sm:$0xf]
      %v10047 = vld [vmem:[%s10017 + $0x74] sm:$0xf]
      %v10048 = vld [vmem:[%s10017 + $0x78] sm:$0xf]
      %v10049 = vld [vmem:[%s10017 + $0x7c] sm:$0xf]
      %v10050 = vld [vmem:[%s10017 + $0x80] sm:$0xf]
      %v10051 = vld [vmem:[%s10017 + $0x84] sm:$0xf]
      %v10052 = vld [vmem:[%s10017 + $0x88] sm:$0xf]
      %v10053 = vld [vmem:[%s10017 + $0x8c] sm:$0xf]
      %v10054 = vld [vmem:[%s10017 + $0x90] sm:$0xf]
      %v10055 = vld [vmem:[%s10017 + $0x94] sm:$0xf]
      %v10056 = vld [vmem:[%s10017 + $0x98] sm:$0xf]
      %v10057 = vld [vmem:[%s10017 + $0x9c] sm:$0xf]
      %v10058 = vld [vmem:[%s10017 + $0xa0] sm:$0xf]
      %v10059 = vld [vmem:[%s10017 + $0xa4] sm:$0xf]
      %v10060 = vld [vmem:[%s10017 + $0xa8] sm:$0xf]
      %v10061 = vld [vmem:[%s10017 + $0xac] sm:$0xf]
      %v10062 = vld [vmem:[%s10017 + $0xb0] sm:$0xf]
      %v10063 = vld [vmem:[%s10017 + $0xb4] sm:$0xf]
      %v10064 = vld [vmem:[%s10017 + $0xb8] sm:$0xf]
      %v10065 = vld [vmem:[%s10017 + $0xbc] sm:$0xf]
      %v10066 = vld [vmem:[%s10017 + $0xc0] sm:$0xf]
      %v10067 = vld [vmem:[%s10017 + $0xc4] sm:$0xf]
      %v10068 = vld [vmem:[%s10017 + $0xc8] sm:$0xf]
      %v10069 = vld [vmem:[%s10017 + $0xcc] sm:$0xf]
      %v10070 = vld [vmem:[%s10017 + $0xd0] sm:$0xf]
      %v10071 = vld [vmem:[%s10017 + $0xd4] sm:$0xf]
      %v10072 = vld [vmem:[%s10017 + $0xd8] sm:$0xf]
      %v10073 = vld [vmem:[%s10017 + $0xdc] sm:$0xf]
      %v10074 = vld [vmem:[%s10017 + $0xe0] sm:$0xf]
      %v10075 = vld [vmem:[%s10017 + $0xe4] sm:$0xf]
      %v10076 = vld [vmem:[%s10017 + $0xe8] sm:$0xf]
      %v10077 = vld [vmem:[%s10017 + $0xec] sm:$0xf]
      %v10078 = vld [vmem:[%s10017 + $0xf0] sm:$0xf]
      %v10079 = vld [vmem:[%s10017 + $0xf4] sm:$0xf]
      %v10080 = vld [vmem:[%s10017 + $0xf8] sm:$0xf]
      %v10081 = vld [vmem:[%s10017 + $0xfc] sm:$0xf]
      %v10082 = vld [vmem:[%s10017 + $0x100] sm:$0xf]
      %v10083 = vld [vmem:[%s10017 + $0x104] sm:$0xf]
      %v10084 = vld [vmem:[%s10017 + $0x108] sm:$0xf]
      %v10085 = vld [vmem:[%s10017 + $0x10c] sm:$0xf]
      %v10086 = vld [vmem:[%s10017 + $0x110] sm:$0xf]
      %v10087 = vld [vmem:[%s10017 + $0x114] sm:$0xf]
      %v10088 = vld [vmem:[%s10017 + $0x118] sm:$0xf]
      %v10089 = vld [vmem:[%s10017 + $0x11c] sm:$0xf]
      %v10162 = vunpack.c.l.b16 %v10018
      %v10163 = vunpack.c.l.b16 %v10019
      %v10164 = vunpack.c.l.b16 %v10020
      %v10165 = vunpack.c.l.b16 %v10021
      %v10166 = vunpack.c.l.b16 %v10022
      %v10167 = vunpack.c.l.b16 %v10023
      %v10168 = vunpack.c.l.b16 %v10024
      %v10169 = vunpack.c.l.b16 %v10025
      %v10170 = vunpack.c.l.b16 %v10026
      %v10171 = vunpack.c.l.b16 %v10027
      %v10172 = vunpack.c.l.b16 %v10028
      %v10173 = vunpack.c.l.b16 %v10029
      %v10174 = vunpack.c.l.b16 %v10030
      %v10175 = vunpack.c.l.b16 %v10031
      %v10176 = vunpack.c.l.b16 %v10032
      %v10177 = vunpack.c.l.b16 %v10033
      %v10178 = vunpack.c.l.b16 %v10034
      %v10179 = vunpack.c.l.b16 %v10035
      %v10180 = vunpack.c.l.b16 %v10036
      %v10181 = vunpack.c.l.b16 %v10037
      %v10182 = vunpack.c.l.b16 %v10038
      %v10183 = vunpack.c.l.b16 %v10039
      %v10184 = vunpack.c.l.b16 %v10040
      %v10185 = vunpack.c.l.b16 %v10041
      %v10186 = vunpack.c.l.b16 %v10042
      %v10187 = vunpack.c.l.b16 %v10043
      %v10188 = vunpack.c.l.b16 %v10044
      %v10189 = vunpack.c.l.b16 %v10045
      %v10190 = vunpack.c.l.b16 %v10046
      %v10191 = vunpack.c.l.b16 %v10047
      %v10192 = vunpack.c.l.b16 %v10048
      %v10193 = vunpack.c.l.b16 %v10049
      %v10194 = vunpack.c.l.b16 %v10050
      %v10195 = vunpack.c.l.b16 %v10051
      %v10196 = vunpack.c.l.b16 %v10052
      %v10197 = vunpack.c.l.b16 %v10053
      %v10198 = vunpack.c.l.b16 %v10054
      %v10199 = vunpack.c.l.b16 %v10055
      %v10200 = vunpack.c.l.b16 %v10056
      %v10201 = vunpack.c.l.b16 %v10057
      %v10202 = vunpack.c.l.b16 %v10058
      %v10203 = vunpack.c.l.b16 %v10059
      %v10204 = vunpack.c.l.b16 %v10060
      %v10205 = vunpack.c.l.b16 %v10061
      %v10206 = vunpack.c.l.b16 %v10062
      %v10207 = vunpack.c.l.b16 %v10063
      %v10208 = vunpack.c.l.b16 %v10064
      %v10209 = vunpack.c.l.b16 %v10065
      %v10210 = vunpack.c.l.b16 %v10066
      %v10211 = vunpack.c.l.b16 %v10067
      %v10212 = vunpack.c.l.b16 %v10068
      %v10213 = vunpack.c.l.b16 %v10069
      %v10214 = vunpack.c.l.b16 %v10070
      %v10215 = vunpack.c.l.b16 %v10071
      %v10216 = vunpack.c.l.b16 %v10072
      %v10217 = vunpack.c.l.b16 %v10073
      %v10218 = vunpack.c.l.b16 %v10074
      %v10219 = vunpack.c.l.b16 %v10075
      %v10220 = vunpack.c.l.b16 %v10076
      %v10221 = vunpack.c.l.b16 %v10077
      %v10222 = vunpack.c.l.b16 %v10078
      %v10223 = vunpack.c.l.b16 %v10079
      %v10224 = vunpack.c.l.b16 %v10080
      %v10225 = vunpack.c.l.b16 %v10081
      %v10226 = vunpack.c.l.b16 %v10082
      %v10227 = vunpack.c.l.b16 %v10083
      %v10228 = vunpack.c.l.b16 %v10084
      %v10229 = vunpack.c.l.b16 %v10085
      %v10230 = vunpack.c.l.b16 %v10086
      %v10231 = vunpack.c.l.b16 %v10087
      %v10232 = vunpack.c.l.b16 %v10088
      %v10233 = vunpack.c.l.b16 %v10089
      %v10234 = vpack.c.b16 %v10163, %v10162
      %v10235 = vpack.c.b16 %v10165, %v10164
      %v10236 = vpack.c.b16 %v10167, %v10166
      %v10237 = vpack.c.b16 %v10169, %v10168
      %v10238 = vpack.c.b16 %v10171, %v10170
      %v10239 = vpack.c.b16 %v10173, %v10172
      %v10240 = vpack.c.b16 %v10175, %v10174
      %v10241 = vpack.c.b16 %v10177, %v10176
      %v10242 = vpack.c.b16 %v10179, %v10178
      %v10243 = vpack.c.b16 %v10181, %v10180
      %v10244 = vpack.c.b16 %v10183, %v10182
      %v10245 = vpack.c.b16 %v10185, %v10184
      %v10246 = vpack.c.b16 %v10187, %v10186
      %v10247 = vpack.c.b16 %v10189, %v10188
      %v10248 = vpack.c.b16 %v10191, %v10190
      %v10249 = vpack.c.b16 %v10193, %v10192
      %v10250 = vpack.c.b16 %v10195, %v10194
      %v10251 = vpack.c.b16 %v10197, %v10196
      %v10252 = vpack.c.b16 %v10199, %v10198
      %v10253 = vpack.c.b16 %v10201, %v10200
      %v10254 = vpack.c.b16 %v10203, %v10202
      %v10255 = vpack.c.b16 %v10205, %v10204
      %v10256 = vpack.c.b16 %v10207, %v10206
      %v10257 = vpack.c.b16 %v10209, %v10208
      %v10258 = vpack.c.b16 %v10211, %v10210
      %v10259 = vpack.c.b16 %v10213, %v10212
      %v10260 = vpack.c.b16 %v10215, %v10214
      %v10261 = vpack.c.b16 %v10217, %v10216
      %v10262 = vpack.c.b16 %v10219, %v10218
      %v10263 = vpack.c.b16 %v10221, %v10220
      %v10264 = vpack.c.b16 %v10223, %v10222
      %v10265 = vpack.c.b16 %v10225, %v10224
      %v10266 = vpack.c.b16 %v10227, %v10226
      %v10267 = vpack.c.b16 %v10229, %v10228
      %v10268 = vpack.c.b16 %v10231, %v10230
      %v10269 = vpack.c.b16 %v10233, %v10232
      %v10307 = vsel %vm308, %v9931, 0
      %v10310 = vsel %vm308, %v9936, 0
      %v10313 = vsel %vm308, %v9941, 0
      %v10316 = vsel %vm308, %v9946, 0
      %v10319 = vsel %vm308, %v9951, 0
      %v10322 = vsel %vm308, %v9956, 0
      %v10325 = vsel %vm308, %v9961, 0
      %v10328 = vsel %vm308, %v9966, 0
      %v10331 = vsel %vm308, %v9971, 0
      %v10334 = vsel %vm308, %v9976, 0
      %v10337 = vsel %vm308, %v9981, 0
      %v10340 = vsel %vm308, %v9986, 0
      %v10343 = vsel %vm308, %v9991, 0
      %v10346 = vsel %vm308, %v9996, 0
      %v10349 = vsel %vm308, %v10001, 0
      %v10352 = vsel %vm308, %v10006, 0
      %v10355 = vsel %vm308, %v10011, 0
      %v10358 = vsel %vm308, %v10016, 0
      %10360 = vmatpush.bf16.msra.mxu0 %v10241
      %10361 = vmatpush.bf16.msra.mxu0 %v10240
      %10362 = vmatpush.bf16.msra.mxu0 %v10239
      %10363 = vmatpush.bf16.msra.mxu0 %v10238
      %10364 = vmatpush.bf16.msra.mxu0 %v10237
      %10365 = vmatpush.bf16.msra.mxu0 %v10236
      %10366 = vmatpush.bf16.msra.mxu0 %v10235
      %10367 = vmatpush.bf16.msra.mxu0 %v10234
      %10368 = vmatmul.bf16.gmra.mxu0 %v9927
      %v10369 = vpop.f32.mrf.mxu0
      %v10370 = vadd.f32 0.0, %v10369
      %v10371 = vpop.f32.mrf.mxu0
      %v10372 = vadd.f32 0.0, %v10371
      %10373 = vmatmul.bf16.gmra.mxu0 %v9932
      %v10374 = vpop.f32.mrf.mxu0
      %v10375 = vadd.f32 0.0, %v10374
      %v10376 = vpop.f32.mrf.mxu0
      %v10377 = vadd.f32 0.0, %v10376
      %10378 = vmatmul.bf16.gmra.mxu0 %v9937
      %v10379 = vpop.f32.mrf.mxu0
      %v10380 = vadd.f32 0.0, %v10379
      %v10381 = vpop.f32.mrf.mxu0
      %v10382 = vadd.f32 0.0, %v10381
      %10383 = vmatmul.bf16.gmra.mxu0 %v9942
      %v10384 = vpop.f32.mrf.mxu0
      %v10385 = vadd.f32 0.0, %v10384
      %v10386 = vpop.f32.mrf.mxu0
      %v10387 = vadd.f32 0.0, %v10386
      %10388 = vmatmul.bf16.gmra.mxu0 %v9947
      %v10389 = vpop.f32.mrf.mxu0
      %v10390 = vadd.f32 0.0, %v10389
      %v10391 = vpop.f32.mrf.mxu0
      %v10392 = vadd.f32 0.0, %v10391
      %10393 = vmatmul.bf16.gmra.mxu0 %v9952
      %v10394 = vpop.f32.mrf.mxu0
      %v10395 = vadd.f32 0.0, %v10394
      %v10396 = vpop.f32.mrf.mxu0
      %v10397 = vadd.f32 0.0, %v10396
      %10398 = vmatmul.bf16.gmra.mxu0 %v9957
      %v10399 = vpop.f32.mrf.mxu0
      %v10400 = vadd.f32 0.0, %v10399
      %v10401 = vpop.f32.mrf.mxu0
      %v10402 = vadd.f32 0.0, %v10401
      %10403 = vmatmul.bf16.gmra.mxu0 %v9962
      %v10404 = vpop.f32.mrf.mxu0
      %v10405 = vadd.f32 0.0, %v10404
      %v10406 = vpop.f32.mrf.mxu0
      %v10407 = vadd.f32 0.0, %v10406
      %10408 = vmatmul.bf16.gmra.mxu0 %v9967
      %v10409 = vpop.f32.mrf.mxu0
      %v10410 = vadd.f32 0.0, %v10409
      %v10411 = vpop.f32.mrf.mxu0
      %v10412 = vadd.f32 0.0, %v10411
      %10413 = vmatmul.bf16.gmra.mxu0 %v9972
      %v10414 = vpop.f32.mrf.mxu0
      %v10415 = vadd.f32 0.0, %v10414
      %v10416 = vpop.f32.mrf.mxu0
      %v10417 = vadd.f32 0.0, %v10416
      %10418 = vmatmul.bf16.gmra.mxu0 %v9977
      %v10419 = vpop.f32.mrf.mxu0
      %v10420 = vadd.f32 0.0, %v10419
      %v10421 = vpop.f32.mrf.mxu0
      %v10422 = vadd.f32 0.0, %v10421
      %10423 = vmatmul.bf16.gmra.mxu0 %v9982
      %v10424 = vpop.f32.mrf.mxu0
      %v10425 = vadd.f32 0.0, %v10424
      %v10426 = vpop.f32.mrf.mxu0
      %v10427 = vadd.f32 0.0, %v10426
      %10428 = vmatmul.bf16.gmra.mxu0 %v9987
      %v10429 = vpop.f32.mrf.mxu0
      %v10430 = vadd.f32 0.0, %v10429
      %v10431 = vpop.f32.mrf.mxu0
      %v10432 = vadd.f32 0.0, %v10431
      %10433 = vmatmul.bf16.gmra.mxu0 %v9992
      %v10434 = vpop.f32.mrf.mxu0
      %v10435 = vadd.f32 0.0, %v10434
      %v10436 = vpop.f32.mrf.mxu0
      %v10437 = vadd.f32 0.0, %v10436
      %10438 = vmatmul.bf16.gmra.mxu0 %v9997
      %v10439 = vpop.f32.mrf.mxu0
      %v10440 = vadd.f32 0.0, %v10439
      %v10441 = vpop.f32.mrf.mxu0
      %v10442 = vadd.f32 0.0, %v10441
      %10443 = vmatmul.bf16.gmra.mxu0 %v10002
      %v10444 = vpop.f32.mrf.mxu0
      %v10445 = vadd.f32 0.0, %v10444
      %v10446 = vpop.f32.mrf.mxu0
      %v10447 = vadd.f32 0.0, %v10446
      %10448 = vmatmul.bf16.gmra.mxu0 %v10007
      %v10449 = vpop.f32.mrf.mxu0
      %v10450 = vadd.f32 0.0, %v10449
      %v10451 = vpop.f32.mrf.mxu0
      %v10452 = vadd.f32 0.0, %v10451
      %10453 = vmatmul.bf16.gmra.mxu0 %v10012
      %v10454 = vpop.f32.mrf.mxu0
      %v10455 = vadd.f32 0.0, %v10454
      %v10456 = vpop.f32.mrf.mxu0
      %v10457 = vadd.f32 0.0, %v10456
      %10458 = vdwg.mxu0
      %10459 = vmatpush.bf16.msra.mxu0 %v10249
      %10460 = vmatpush.bf16.msra.mxu0 %v10248
      %10461 = vmatpush.bf16.msra.mxu0 %v10247
      %10462 = vmatpush.bf16.msra.mxu0 %v10246
      %10463 = vmatpush.bf16.msra.mxu0 %v10245
      %10464 = vmatpush.bf16.msra.mxu0 %v10244
      %10465 = vmatpush.bf16.msra.mxu0 %v10243
      %10466 = vmatpush.bf16.msra.mxu0 %v10242
      %10467 = vmatmul.bf16.gmra.mxu0 %v9928
      %v10468 = vpop.f32.mrf.mxu0
      %v10469 = vadd.f32 %v10370, %v10468
      %v10470 = vpop.f32.mrf.mxu0
      %v10471 = vadd.f32 %v10372, %v10470
      %10472 = vmatmul.bf16.gmra.mxu0 %v9933
      %v10473 = vpop.f32.mrf.mxu0
      %v10474 = vadd.f32 %v10375, %v10473
      %v10475 = vpop.f32.mrf.mxu0
      %v10476 = vadd.f32 %v10377, %v10475
      %10477 = vmatmul.bf16.gmra.mxu0 %v9938
      %v10478 = vpop.f32.mrf.mxu0
      %v10479 = vadd.f32 %v10380, %v10478
      %v10480 = vpop.f32.mrf.mxu0
      %v10481 = vadd.f32 %v10382, %v10480
      %10482 = vmatmul.bf16.gmra.mxu0 %v9943
      %v10483 = vpop.f32.mrf.mxu0
      %v10484 = vadd.f32 %v10385, %v10483
      %v10485 = vpop.f32.mrf.mxu0
      %v10486 = vadd.f32 %v10387, %v10485
      %10487 = vmatmul.bf16.gmra.mxu0 %v9948
      %v10488 = vpop.f32.mrf.mxu0
      %v10489 = vadd.f32 %v10390, %v10488
      %v10490 = vpop.f32.mrf.mxu0
      %v10491 = vadd.f32 %v10392, %v10490
      %10492 = vmatmul.bf16.gmra.mxu0 %v9953
      %v10493 = vpop.f32.mrf.mxu0
      %v10494 = vadd.f32 %v10395, %v10493
      %v10495 = vpop.f32.mrf.mxu0
      %v10496 = vadd.f32 %v10397, %v10495
      %10497 = vmatmul.bf16.gmra.mxu0 %v9958
      %v10498 = vpop.f32.mrf.mxu0
      %v10499 = vadd.f32 %v10400, %v10498
      %v10500 = vpop.f32.mrf.mxu0
      %v10501 = vadd.f32 %v10402, %v10500
      %10502 = vmatmul.bf16.gmra.mxu0 %v9963
      %v10503 = vpop.f32.mrf.mxu0
      %v10504 = vadd.f32 %v10405, %v10503
      %v10505 = vpop.f32.mrf.mxu0
      %v10506 = vadd.f32 %v10407, %v10505
      %10507 = vmatmul.bf16.gmra.mxu0 %v9968
      %v10508 = vpop.f32.mrf.mxu0
      %v10509 = vadd.f32 %v10410, %v10508
      %v10510 = vpop.f32.mrf.mxu0
      %v10511 = vadd.f32 %v10412, %v10510
      %10512 = vmatmul.bf16.gmra.mxu0 %v9973
      %v10513 = vpop.f32.mrf.mxu0
      %v10514 = vadd.f32 %v10415, %v10513
      %v10515 = vpop.f32.mrf.mxu0
      %v10516 = vadd.f32 %v10417, %v10515
      %10517 = vmatmul.bf16.gmra.mxu0 %v9978
      %v10518 = vpop.f32.mrf.mxu0
      %v10519 = vadd.f32 %v10420, %v10518
      %v10520 = vpop.f32.mrf.mxu0
      %v10521 = vadd.f32 %v10422, %v10520
      %10522 = vmatmul.bf16.gmra.mxu0 %v9983
      %v10523 = vpop.f32.mrf.mxu0
      %v10524 = vadd.f32 %v10425, %v10523
      %v10525 = vpop.f32.mrf.mxu0
      %v10526 = vadd.f32 %v10427, %v10525
      %10527 = vmatmul.bf16.gmra.mxu0 %v9988
      %v10528 = vpop.f32.mrf.mxu0
      %v10529 = vadd.f32 %v10430, %v10528
      %v10530 = vpop.f32.mrf.mxu0
      %v10531 = vadd.f32 %v10432, %v10530
      %10532 = vmatmul.bf16.gmra.mxu0 %v9993
      %v10533 = vpop.f32.mrf.mxu0
      %v10534 = vadd.f32 %v10435, %v10533
      %v10535 = vpop.f32.mrf.mxu0
      %v10536 = vadd.f32 %v10437, %v10535
      %10537 = vmatmul.bf16.gmra.mxu0 %v9998
      %v10538 = vpop.f32.mrf.mxu0
      %v10539 = vadd.f32 %v10440, %v10538
      %v10540 = vpop.f32.mrf.mxu0
      %v10541 = vadd.f32 %v10442, %v10540
      %10542 = vmatmul.bf16.gmra.mxu0 %v10003
      %v10543 = vpop.f32.mrf.mxu0
      %v10544 = vadd.f32 %v10445, %v10543
      %v10545 = vpop.f32.mrf.mxu0
      %v10546 = vadd.f32 %v10447, %v10545
      %10547 = vmatmul.bf16.gmra.mxu0 %v10008
      %v10548 = vpop.f32.mrf.mxu0
      %v10549 = vadd.f32 %v10450, %v10548
      %v10550 = vpop.f32.mrf.mxu0
      %v10551 = vadd.f32 %v10452, %v10550
      %10552 = vmatmul.bf16.gmra.mxu0 %v10013
      %v10553 = vpop.f32.mrf.mxu0
      %v10554 = vadd.f32 %v10455, %v10553
      %v10555 = vpop.f32.mrf.mxu0
      %v10556 = vadd.f32 %v10457, %v10555
      %10557 = vdwg.mxu0
      %10558 = vmatpush.bf16.msra.mxu0 %v10257
      %10559 = vmatpush.bf16.msra.mxu0 %v10256
      %10560 = vmatpush.bf16.msra.mxu0 %v10255
      %10561 = vmatpush.bf16.msra.mxu0 %v10254
      %10562 = vmatpush.bf16.msra.mxu0 %v10253
      %10563 = vmatpush.bf16.msra.mxu0 %v10252
      %10564 = vmatpush.bf16.msra.mxu0 %v10251
      %10565 = vmatpush.bf16.msra.mxu0 %v10250
      %10566 = vmatmul.bf16.gmra.mxu0 %v9929
      %v10567 = vpop.f32.mrf.mxu0
      %v10568 = vadd.f32 %v10469, %v10567
      %v10569 = vpop.f32.mrf.mxu0
      %v10570 = vadd.f32 %v10471, %v10569
      %10571 = vmatmul.bf16.gmra.mxu0 %v9934
      %v10572 = vpop.f32.mrf.mxu0
      %v10573 = vadd.f32 %v10474, %v10572
      %v10574 = vpop.f32.mrf.mxu0
      %v10575 = vadd.f32 %v10476, %v10574
      %10576 = vmatmul.bf16.gmra.mxu0 %v9939
      %v10577 = vpop.f32.mrf.mxu0
      %v10578 = vadd.f32 %v10479, %v10577
      %v10579 = vpop.f32.mrf.mxu0
      %v10580 = vadd.f32 %v10481, %v10579
      %10581 = vmatmul.bf16.gmra.mxu0 %v9944
      %v10582 = vpop.f32.mrf.mxu0
      %v10583 = vadd.f32 %v10484, %v10582
      %v10584 = vpop.f32.mrf.mxu0
      %v10585 = vadd.f32 %v10486, %v10584
      %10586 = vmatmul.bf16.gmra.mxu0 %v9949
      %v10587 = vpop.f32.mrf.mxu0
      %v10588 = vadd.f32 %v10489, %v10587
      %v10589 = vpop.f32.mrf.mxu0
      %v10590 = vadd.f32 %v10491, %v10589
      %10591 = vmatmul.bf16.gmra.mxu0 %v9954
      %v10592 = vpop.f32.mrf.mxu0
      %v10593 = vadd.f32 %v10494, %v10592
      %v10594 = vpop.f32.mrf.mxu0
      %v10595 = vadd.f32 %v10496, %v10594
      %10596 = vmatmul.bf16.gmra.mxu0 %v9959
      %v10597 = vpop.f32.mrf.mxu0
      %v10598 = vadd.f32 %v10499, %v10597
      %v10599 = vpop.f32.mrf.mxu0
      %v10600 = vadd.f32 %v10501, %v10599
      %10601 = vmatmul.bf16.gmra.mxu0 %v9964
      %v10602 = vpop.f32.mrf.mxu0
      %v10603 = vadd.f32 %v10504, %v10602
      %v10604 = vpop.f32.mrf.mxu0
      %v10605 = vadd.f32 %v10506, %v10604
      %10606 = vmatmul.bf16.gmra.mxu0 %v9969
      %v10607 = vpop.f32.mrf.mxu0
      %v10608 = vadd.f32 %v10509, %v10607
      %v10609 = vpop.f32.mrf.mxu0
      %v10610 = vadd.f32 %v10511, %v10609
      %10611 = vmatmul.bf16.gmra.mxu0 %v9974
      %v10612 = vpop.f32.mrf.mxu0
      %v10613 = vadd.f32 %v10514, %v10612
      %v10614 = vpop.f32.mrf.mxu0
      %v10615 = vadd.f32 %v10516, %v10614
      %10616 = vmatmul.bf16.gmra.mxu0 %v9979
      %v10617 = vpop.f32.mrf.mxu0
      %v10618 = vadd.f32 %v10519, %v10617
      %v10619 = vpop.f32.mrf.mxu0
      %v10620 = vadd.f32 %v10521, %v10619
      %10621 = vmatmul.bf16.gmra.mxu0 %v9984
      %v10622 = vpop.f32.mrf.mxu0
      %v10623 = vadd.f32 %v10524, %v10622
      %v10624 = vpop.f32.mrf.mxu0
      %v10625 = vadd.f32 %v10526, %v10624
      %10626 = vmatmul.bf16.gmra.mxu0 %v9989
      %v10627 = vpop.f32.mrf.mxu0
      %v10628 = vadd.f32 %v10529, %v10627
      %v10629 = vpop.f32.mrf.mxu0
      %v10630 = vadd.f32 %v10531, %v10629
      %10631 = vmatmul.bf16.gmra.mxu0 %v9994
      %v10632 = vpop.f32.mrf.mxu0
      %v10633 = vadd.f32 %v10534, %v10632
      %v10634 = vpop.f32.mrf.mxu0
      %v10635 = vadd.f32 %v10536, %v10634
      %10636 = vmatmul.bf16.gmra.mxu0 %v9999
      %v10637 = vpop.f32.mrf.mxu0
      %v10638 = vadd.f32 %v10539, %v10637
      %v10639 = vpop.f32.mrf.mxu0
      %v10640 = vadd.f32 %v10541, %v10639
      %10641 = vmatmul.bf16.gmra.mxu0 %v10004
      %v10642 = vpop.f32.mrf.mxu0
      %v10643 = vadd.f32 %v10544, %v10642
      %v10644 = vpop.f32.mrf.mxu0
      %v10645 = vadd.f32 %v10546, %v10644
      %10646 = vmatmul.bf16.gmra.mxu0 %v10009
      %v10647 = vpop.f32.mrf.mxu0
      %v10648 = vadd.f32 %v10549, %v10647
      %v10649 = vpop.f32.mrf.mxu0
      %v10650 = vadd.f32 %v10551, %v10649
      %10651 = vmatmul.bf16.gmra.mxu0 %v10014
      %v10652 = vpop.f32.mrf.mxu0
      %v10653 = vadd.f32 %v10554, %v10652
      %v10654 = vpop.f32.mrf.mxu0
      %v10655 = vadd.f32 %v10556, %v10654
      %10656 = vdwg.mxu0
      %10657 = vmatpush.bf16.msra.mxu0 %v10265
      %10658 = vmatpush.bf16.msra.mxu0 %v10264
      %10659 = vmatpush.bf16.msra.mxu0 %v10263
      %10660 = vmatpush.bf16.msra.mxu0 %v10262
      %10661 = vmatpush.bf16.msra.mxu0 %v10261
      %10662 = vmatpush.bf16.msra.mxu0 %v10260
      %10663 = vmatpush.bf16.msra.mxu0 %v10259
      %10664 = vmatpush.bf16.msra.mxu0 %v10258
      %10665 = vmatmul.bf16.gmra.mxu0 %v9930
      %v10666 = vpop.f32.mrf.mxu0
      %v10667 = vadd.f32 %v10568, %v10666
      %v10668 = vpop.f32.mrf.mxu0
      %v10669 = vadd.f32 %v10570, %v10668
      %10670 = vmatmul.bf16.gmra.mxu0 %v9935
      %v10671 = vpop.f32.mrf.mxu0
      %v10672 = vadd.f32 %v10573, %v10671
      %v10673 = vpop.f32.mrf.mxu0
      %v10674 = vadd.f32 %v10575, %v10673
      %10675 = vmatmul.bf16.gmra.mxu0 %v9940
      %v10676 = vpop.f32.mrf.mxu0
      %v10677 = vadd.f32 %v10578, %v10676
      %v10678 = vpop.f32.mrf.mxu0
      %v10679 = vadd.f32 %v10580, %v10678
      %10680 = vmatmul.bf16.gmra.mxu0 %v9945
      %v10681 = vpop.f32.mrf.mxu0
      %v10682 = vadd.f32 %v10583, %v10681
      %v10683 = vpop.f32.mrf.mxu0
      %v10684 = vadd.f32 %v10585, %v10683
      %10685 = vmatmul.bf16.gmra.mxu0 %v9950
      %v10686 = vpop.f32.mrf.mxu0
      %v10687 = vadd.f32 %v10588, %v10686
      %v10688 = vpop.f32.mrf.mxu0
      %v10689 = vadd.f32 %v10590, %v10688
      %10690 = vmatmul.bf16.gmra.mxu0 %v9955
      %v10691 = vpop.f32.mrf.mxu0
      %v10692 = vadd.f32 %v10593, %v10691
      %v10693 = vpop.f32.mrf.mxu0
      %v10694 = vadd.f32 %v10595, %v10693
      %10695 = vmatmul.bf16.gmra.mxu0 %v9960
      %v10696 = vpop.f32.mrf.mxu0
      %v10697 = vadd.f32 %v10598, %v10696
      %v10698 = vpop.f32.mrf.mxu0
      %v10699 = vadd.f32 %v10600, %v10698
      %10700 = vmatmul.bf16.gmra.mxu0 %v9965
      %v10701 = vpop.f32.mrf.mxu0
      %v10702 = vadd.f32 %v10603, %v10701
      %v10703 = vpop.f32.mrf.mxu0
      %v10704 = vadd.f32 %v10605, %v10703
      %10705 = vmatmul.bf16.gmra.mxu0 %v9970
      %v10706 = vpop.f32.mrf.mxu0
      %v10707 = vadd.f32 %v10608, %v10706
      %v10708 = vpop.f32.mrf.mxu0
      %v10709 = vadd.f32 %v10610, %v10708
      %10710 = vmatmul.bf16.gmra.mxu0 %v9975
      %v10711 = vpop.f32.mrf.mxu0
      %v10712 = vadd.f32 %v10613, %v10711
      %v10713 = vpop.f32.mrf.mxu0
      %v10714 = vadd.f32 %v10615, %v10713
      %10715 = vmatmul.bf16.gmra.mxu0 %v9980
      %v10716 = vpop.f32.mrf.mxu0
      %v10717 = vadd.f32 %v10618, %v10716
      %v10718 = vpop.f32.mrf.mxu0
      %v10719 = vadd.f32 %v10620, %v10718
      %10720 = vmatmul.bf16.gmra.mxu0 %v9985
      %v10721 = vpop.f32.mrf.mxu0
      %v10722 = vadd.f32 %v10623, %v10721
      %v10723 = vpop.f32.mrf.mxu0
      %v10724 = vadd.f32 %v10625, %v10723
      %10725 = vmatmul.bf16.gmra.mxu0 %v9990
      %v10726 = vpop.f32.mrf.mxu0
      %v10727 = vadd.f32 %v10628, %v10726
      %v10728 = vpop.f32.mrf.mxu0
      %v10729 = vadd.f32 %v10630, %v10728
      %10730 = vmatmul.bf16.gmra.mxu0 %v9995
      %v10731 = vpop.f32.mrf.mxu0
      %v10732 = vadd.f32 %v10633, %v10731
      %v10733 = vpop.f32.mrf.mxu0
      %v10734 = vadd.f32 %v10635, %v10733
      %10735 = vmatmul.bf16.gmra.mxu0 %v10000
      %v10736 = vpop.f32.mrf.mxu0
      %v10737 = vadd.f32 %v10638, %v10736
      %v10738 = vpop.f32.mrf.mxu0
      %v10739 = vadd.f32 %v10640, %v10738
      %10740 = vmatmul.bf16.gmra.mxu0 %v10005
      %v10741 = vpop.f32.mrf.mxu0
      %v10742 = vadd.f32 %v10643, %v10741
      %v10743 = vpop.f32.mrf.mxu0
      %v10744 = vadd.f32 %v10645, %v10743
      %10745 = vmatmul.bf16.gmra.mxu0 %v10010
      %v10746 = vpop.f32.mrf.mxu0
      %v10747 = vadd.f32 %v10648, %v10746
      %v10748 = vpop.f32.mrf.mxu0
      %v10749 = vadd.f32 %v10650, %v10748
      %10750 = vmatmul.bf16.gmra.mxu0 %v10015
      %v10751 = vpop.f32.mrf.mxu0
      %v10752 = vadd.f32 %v10653, %v10751
      %v10753 = vpop.f32.mrf.mxu0
      %v10754 = vadd.f32 %v10655, %v10753
      %10755 = vdwg.mxu0
      %10756 = vmatpush.bf16.msra.mxu0 0
      %10757 = vmatpush.bf16.msra.mxu0 0
      %10758 = vmatpush.bf16.msra.mxu0 0
      %10759 = vmatpush.bf16.msra.mxu0 0
      %10760 = vmatpush.bf16.msra.mxu0 %v10269
      %10761 = vmatpush.bf16.msra.mxu0 %v10268
      %10762 = vmatpush.bf16.msra.mxu0 %v10267
      %10763 = vmatpush.bf16.msra.mxu0 %v10266
      %10764 = vmatmul.bf16.gmra.mxu0 %v10307
      %v10765 = vpop.f32.mrf.mxu0
      %v10766 = vadd.f32 %v10667, %v10765
      %v10767 = vpop.f32.mrf.mxu0
      %v10768 = vadd.f32 %v10669, %v10767
      %10769 = vmatmul.bf16.gmra.mxu0 %v10310
      %v10770 = vpop.f32.mrf.mxu0
      %v10771 = vadd.f32 %v10672, %v10770
      %v10772 = vpop.f32.mrf.mxu0
      %v10773 = vadd.f32 %v10674, %v10772
      %10774 = vmatmul.bf16.gmra.mxu0 %v10313
      %v10775 = vpop.f32.mrf.mxu0
      %v10776 = vadd.f32 %v10677, %v10775
      %v10777 = vpop.f32.mrf.mxu0
      %v10778 = vadd.f32 %v10679, %v10777
      %10779 = vmatmul.bf16.gmra.mxu0 %v10316
      %v10780 = vpop.f32.mrf.mxu0
      %v10781 = vadd.f32 %v10682, %v10780
      %v10782 = vpop.f32.mrf.mxu0
      %v10783 = vadd.f32 %v10684, %v10782
      %10784 = vmatmul.bf16.gmra.mxu0 %v10319
      %v10785 = vpop.f32.mrf.mxu0
      %v10786 = vadd.f32 %v10687, %v10785
      %v10787 = vpop.f32.mrf.mxu0
      %v10788 = vadd.f32 %v10689, %v10787
      %10789 = vmatmul.bf16.gmra.mxu0 %v10322
      %v10790 = vpop.f32.mrf.mxu0
      %v10791 = vadd.f32 %v10692, %v10790
      %v10792 = vpop.f32.mrf.mxu0
      %v10793 = vadd.f32 %v10694, %v10792
      %10794 = vmatmul.bf16.gmra.mxu0 %v10325
      %v10795 = vpop.f32.mrf.mxu0
      %v10796 = vadd.f32 %v10697, %v10795
      %v10797 = vpop.f32.mrf.mxu0
      %v10798 = vadd.f32 %v10699, %v10797
      %10799 = vmatmul.bf16.gmra.mxu0 %v10328
      %v10800 = vpop.f32.mrf.mxu0
      %v10801 = vadd.f32 %v10702, %v10800
      %v10802 = vpop.f32.mrf.mxu0
      %v10803 = vadd.f32 %v10704, %v10802
      %10804 = vmatmul.bf16.gmra.mxu0 %v10331
      %v10805 = vpop.f32.mrf.mxu0
      %v10806 = vadd.f32 %v10707, %v10805
      %v10807 = vpop.f32.mrf.mxu0
      %v10808 = vadd.f32 %v10709, %v10807
      %10809 = vmatmul.bf16.gmra.mxu0 %v10334
      %v10810 = vpop.f32.mrf.mxu0
      %v10811 = vadd.f32 %v10712, %v10810
      %v10812 = vpop.f32.mrf.mxu0
      %v10813 = vadd.f32 %v10714, %v10812
      %10814 = vmatmul.bf16.gmra.mxu0 %v10337
      %v10815 = vpop.f32.mrf.mxu0
      %v10816 = vadd.f32 %v10717, %v10815
      %v10817 = vpop.f32.mrf.mxu0
      %v10818 = vadd.f32 %v10719, %v10817
      %10819 = vmatmul.bf16.gmra.mxu0 %v10340
      %v10820 = vpop.f32.mrf.mxu0
      %v10821 = vadd.f32 %v10722, %v10820
      %v10822 = vpop.f32.mrf.mxu0
      %v10823 = vadd.f32 %v10724, %v10822
      %10824 = vmatmul.bf16.gmra.mxu0 %v10343
      %v10825 = vpop.f32.mrf.mxu0
      %v10826 = vadd.f32 %v10727, %v10825
      %v10827 = vpop.f32.mrf.mxu0
      %v10828 = vadd.f32 %v10729, %v10827
      %10829 = vmatmul.bf16.gmra.mxu0 %v10346
      %v10830 = vpop.f32.mrf.mxu0
      %v10831 = vadd.f32 %v10732, %v10830
      %v10832 = vpop.f32.mrf.mxu0
      %v10833 = vadd.f32 %v10734, %v10832
      %10834 = vmatmul.bf16.gmra.mxu0 %v10349
      %v10835 = vpop.f32.mrf.mxu0
      %v10836 = vadd.f32 %v10737, %v10835
      %v10837 = vpop.f32.mrf.mxu0
      %v10838 = vadd.f32 %v10739, %v10837
      %10839 = vmatmul.bf16.gmra.mxu0 %v10352
      %v10840 = vpop.f32.mrf.mxu0
      %v10841 = vadd.f32 %v10742, %v10840
      %v10842 = vpop.f32.mrf.mxu0
      %v10843 = vadd.f32 %v10744, %v10842
      %10844 = vmatmul.bf16.gmra.mxu0 %v10355
      %v10845 = vpop.f32.mrf.mxu0
      %v10846 = vadd.f32 %v10747, %v10845
      %v10847 = vpop.f32.mrf.mxu0
      %v10848 = vadd.f32 %v10749, %v10847
      %10849 = vmatmul.bf16.gmra.mxu0 %v10358
      %v10850 = vpop.f32.mrf.mxu0
      %v10851 = vadd.f32 %v10752, %v10850
      %v10852 = vpop.f32.mrf.mxu0
      %v10853 = vadd.f32 %v10754, %v10852
      %10854 = vdwg.mxu0
      %s10855 = scalar_lea.vmem %s3, 4
      %v10856 = vld [vmem:[%s10855] sm:$0x1]
      %v10858 = vperm.slane %v10856, 0
      %v10860 = vmul.f32 %v10766, %v10858
      %v10861 = vmul.f32 %v10768, %v10858
      %v10862 = vmul.f32 %v10771, %v10858
      %v10863 = vmul.f32 %v10773, %v10858
      %v10864 = vmul.f32 %v10776, %v10858
      %v10865 = vmul.f32 %v10778, %v10858
      %v10866 = vmul.f32 %v10781, %v10858
      %v10867 = vmul.f32 %v10783, %v10858
      %v10868 = vmul.f32 %v10786, %v10858
      %v10869 = vmul.f32 %v10788, %v10858
      %v10870 = vmul.f32 %v10791, %v10858
      %v10871 = vmul.f32 %v10793, %v10858
      %v10872 = vmul.f32 %v10796, %v10858
      %v10873 = vmul.f32 %v10798, %v10858
      %v10874 = vmul.f32 %v10801, %v10858
      %v10875 = vmul.f32 %v10803, %v10858
      %v10876 = vmul.f32 %v10806, %v10858
      %v10877 = vmul.f32 %v10808, %v10858
      %v10878 = vmul.f32 %v10811, %v10858
      %v10879 = vmul.f32 %v10813, %v10858
      %v10880 = vmul.f32 %v10816, %v10858
      %v10881 = vmul.f32 %v10818, %v10858
      %v10882 = vmul.f32 %v10821, %v10858
      %v10883 = vmul.f32 %v10823, %v10858
      %v10884 = vmul.f32 %v10826, %v10858
      %v10885 = vmul.f32 %v10828, %v10858
      %v10886 = vmul.f32 %v10831, %v10858
      %v10887 = vmul.f32 %v10833, %v10858
      %v10888 = vmul.f32 %v10836, %v10858
      %v10889 = vmul.f32 %v10838, %v10858
      %v10890 = vmul.f32 %v10841, %v10858
      %v10891 = vmul.f32 %v10843, %v10858
      %v10892 = vmul.f32 %v10846, %v10858
      %v10893 = vmul.f32 %v10848, %v10858
      %v10894 = vmul.f32 %v10851, %v10858
      %v10895 = vmul.f32 %v10853, %v10858
      %s10896 = scalar_lea.vmem %s4, 4
      %v10897 = vld [vmem:[%s10896] sm:$0x1]
      %v10899 = vperm.slane %v10897, 0
      %v10901 = vadd.f32 %v10860, %v10899
      %v10902 = vadd.f32 %v10861, %v10899
      %v10903 = vadd.f32 %v10862, %v10899
      %v10904 = vadd.f32 %v10863, %v10899
      %v10905 = vadd.f32 %v10864, %v10899
      %v10906 = vadd.f32 %v10865, %v10899
      %v10907 = vadd.f32 %v10866, %v10899
      %v10908 = vadd.f32 %v10867, %v10899
      %v10909 = vadd.f32 %v10868, %v10899
      %v10910 = vadd.f32 %v10869, %v10899
      %v10911 = vadd.f32 %v10870, %v10899
      %v10912 = vadd.f32 %v10871, %v10899
      %v10913 = vadd.f32 %v10872, %v10899
      %v10914 = vadd.f32 %v10873, %v10899
      %v10915 = vadd.f32 %v10874, %v10899
      %v10916 = vadd.f32 %v10875, %v10899
      %v10917 = vadd.f32 %v10876, %v10899
      %v10918 = vadd.f32 %v10877, %v10899
      %v10919 = vadd.f32 %v10878, %v10899
      %v10920 = vadd.f32 %v10879, %v10899
      %v10921 = vadd.f32 %v10880, %v10899
      %v10922 = vadd.f32 %v10881, %v10899
      %v10923 = vadd.f32 %v10882, %v10899
      %v10924 = vadd.f32 %v10883, %v10899
      %v10925 = vadd.f32 %v10884, %v10899
      %v10926 = vadd.f32 %v10885, %v10899
      %v10927 = vadd.f32 %v10886, %v10899
      %v10928 = vadd.f32 %v10887, %v10899
      %v10929 = vadd.f32 %v10888, %v10899
      %v10930 = vadd.f32 %v10889, %v10899
      %v10931 = vadd.f32 %v10890, %v10899
      %v10932 = vadd.f32 %v10891, %v10899
      %v10933 = vadd.f32 %v10892, %v10899
      %v10934 = vadd.f32 %v10893, %v10899
      %v10935 = vadd.f32 %v10894, %v10899
      %v10936 = vadd.f32 %v10895, %v10899
      %10937 = vst.msk [vmem:[%s224] sm:$0xff] %vm308, %v10901
      %10938 = vst.msk [vmem:[%s224 + $0x8] sm:$0xff] %vm308, %v10902
      %10939 = vst.msk [vmem:[%s224 + $0x10] sm:$0xff] %vm308, %v10903
      %10940 = vst.msk [vmem:[%s224 + $0x18] sm:$0xff] %vm308, %v10904
      %10941 = vst.msk [vmem:[%s224 + $0x20] sm:$0xff] %vm308, %v10905
      %10942 = vst.msk [vmem:[%s224 + $0x28] sm:$0xff] %vm308, %v10906
      %10943 = vst.msk [vmem:[%s224 + $0x30] sm:$0xff] %vm308, %v10907
      %10944 = vst.msk [vmem:[%s224 + $0x38] sm:$0xff] %vm308, %v10908
      %10945 = vst.msk [vmem:[%s224 + $0x40] sm:$0xff] %vm308, %v10909
      %10946 = vst.msk [vmem:[%s224 + $0x48] sm:$0xff] %vm308, %v10910
      %10947 = vst.msk [vmem:[%s224 + $0x50] sm:$0xff] %vm308, %v10911
      %10948 = vst.msk [vmem:[%s224 + $0x58] sm:$0xff] %vm308, %v10912
      %10949 = vst.msk [vmem:[%s224 + $0x60] sm:$0xff] %vm308, %v10913
      %10950 = vst.msk [vmem:[%s224 + $0x68] sm:$0xff] %vm308, %v10914
      %10951 = vst.msk [vmem:[%s224 + $0x70] sm:$0xff] %vm308, %v10915
      %10952 = vst.msk [vmem:[%s224 + $0x78] sm:$0xff] %vm308, %v10916
      %10953 = vst.msk [vmem:[%s224 + $0x80] sm:$0xff] %vm308, %v10917
      %10954 = vst.msk [vmem:[%s224 + $0x88] sm:$0xff] %vm308, %v10918
      %10955 = vst.msk [vmem:[%s224 + $0x90] sm:$0xff] %vm308, %v10919
      %10956 = vst.msk [vmem:[%s224 + $0x98] sm:$0xff] %vm308, %v10920
      %10957 = vst.msk [vmem:[%s224 + $0xa0] sm:$0xff] %vm308, %v10921
      %10958 = vst.msk [vmem:[%s224 + $0xa8] sm:$0xff] %vm308, %v10922
      %10959 = vst.msk [vmem:[%s224 + $0xb0] sm:$0xff] %vm308, %v10923
      %10960 = vst.msk [vmem:[%s224 + $0xb8] sm:$0xff] %vm308, %v10924
      %10961 = vst.msk [vmem:[%s224 + $0xc0] sm:$0xff] %vm308, %v10925
      %10962 = vst.msk [vmem:[%s224 + $0xc8] sm:$0xff] %vm308, %v10926
      %10963 = vst.msk [vmem:[%s224 + $0xd0] sm:$0xff] %vm308, %v10927
      %10964 = vst.msk [vmem:[%s224 + $0xd8] sm:$0xff] %vm308, %v10928
      %10965 = vst.msk [vmem:[%s224 + $0xe0] sm:$0xff] %vm308, %v10929
      %10966 = vst.msk [vmem:[%s224 + $0xe8] sm:$0xff] %vm308, %v10930
      %10967 = vst.msk [vmem:[%s224 + $0xf0] sm:$0xff] %vm308, %v10931
      %10968 = vst.msk [vmem:[%s224 + $0xf8] sm:$0xff] %vm308, %v10932
      %10969 = vst.msk [vmem:[%s224 + $0x100] sm:$0xff] %vm308, %v10933
      %10970 = vst.msk [vmem:[%s224 + $0x108] sm:$0xff] %vm308, %v10934
      %10971 = vst.msk [vmem:[%s224 + $0x110] sm:$0xff] %vm308, %v10935
      %10972 = vst.msk [vmem:[%s224 + $0x118] sm:$0x3f] %vm2659, %v10936
      %p10973 = scmp.lt.s32.totalorder %s16, 1
      %s10974 = scalar_select %p10973, %s16, 1
      %s10975 = smul.addr %s10974, 36
      %s10976 = smul.addr %s10975, 8
      %s10977 = scalar_lea.vmem %s5, %s10976
      // Predicated region
      $region41: #{tpu_custom_call.1} parent=39 // pred_check
        %p10978 = pneg %p144
      $region42: #{tpu_custom_call.1} parent=39 // pred_check_branch
        %10980 = sbr.rel (%p10978) target = $region44
      $region43: #{tpu_custom_call.1} parent=39 // pred_region
        _
      $region44: #{tpu_custom_call.1} parent=39 // pred_fallthru
        _
    $region40: #{tpu_custom_call.1} parent=5 // pred_fallthru
      _
    %p10981 = scmp.le.s32.totalorder 2, %s11
    // Predicated region
    $region45: #{tpu_custom_call.1} parent=5 // pred_check
      %p10982 = pneg %p10981
    $region46: #{tpu_custom_call.1} parent=5 // pred_check_branch
      %10984 = sbr.rel (%p10982) target = $region48
    $region47: #{tpu_custom_call.1} parent=5 // pred_region
      %s10985 = ssub.s32 %s11, 2
      // Predicated region
      $region49: #{tpu_custom_call.1} parent=47 // pred_check
        %p10986 = pneg %p150
      $region50: #{tpu_custom_call.1} parent=47 // pred_check_branch
        %10988 = sbr.rel (%p10986) target = $region52
      $region51: #{tpu_custom_call.1} parent=47 // pred_region
        %p10989 = scmp.lt.s32.totalorder %s17, 1
        %s10990 = scalar_select %p10989, %s17, 1
        %s10991 = smul.addr %s10990, 36
        %s10992 = smul.addr %s10991, 8
        %s10993 = scalar_lea.vmem %s5, %s10992
      $region52: #{tpu_custom_call.1} parent=47 // pred_fallthru
        _
    $region48: #{tpu_custom_call.1} parent=5 // pred_fallthru
      _
  $region6: #{tpu_custom_call.1} parent=0 // loop_footer
    %s15 = sadd.s32 1, %s11
  $region7: #{tpu_custom_call.1} parent=0 // loop_footer_branch
    %10 = sbr.rel target = $region3
  $region8: #{tpu_custom_call.1} parent=0 // loop_exit
    _

</llo_original>
